<compile_context>
chip_gen: v7x
topology: tpu7x:2x2x1
jax: 0.10.0
libtpu: 0.0.40
codegen_flags: <defaults>
</compile_context>

<pallas_src>
import functools

import jax
import jax.numpy as jnp
from jax import lax
from jax.experimental import pallas as pl
from jax.experimental.pallas import tpu as pltpu

_NEG_INF = -1e30


def _pick_tile(n, preferred):
    """Largest power-of-two tile <= preferred that divides n (fallback: n)."""
    for t in (preferred, 128, 64, 32, 16, 8):
        if t <= preferred and n % t == 0:
            return t
    return n


# ---------------------------------------------------------------------------
# Stage 1: fused QKV projection  (x @ w_qkv -> per-head q, k, v; scale on q)
# ---------------------------------------------------------------------------
def _qkv_proj_kernel(x_ref, wqkv_ref, q_ref, k_ref, v_ref, *, scale):
    _, H, tn, D = q_ref.shape
    C = H * D
    x = x_ref[0]                                                         # (tn, C) bf16
    qkv = jnp.dot(x, wqkv_ref[...], preferred_element_type=jnp.float32)  # (tn, 3C) f32
    # Per-head static lane slices (offsets are multiples of D); unrolled at
    # trace time.  Scale folded into q here so stage 2 does no extra VPU work.
    for h in range(H):
        q_ref[0, h] = (qkv[:, h * D:(h + 1) * D] * scale).astype(q_ref.dtype)
        k_ref[0, h] = qkv[:, C + h * D:C + (h + 1) * D].astype(k_ref.dtype)
        v_ref[0, h] = qkv[:, 2 * C + h * D:2 * C + (h + 1) * D].astype(v_ref.dtype)


# ---------------------------------------------------------------------------
# Stage 2: flash attention (online softmax over KV blocks, heads batched)
#          + fused output projection on the last KV step.
# ---------------------------------------------------------------------------
def _flash_attn_proj_kernel(q_ref, k_ref, v_ref, wproj_ref, bproj_ref, o_ref,
                            m_scr, l_scr, acc_scr):
    _, H, tq, D = q_ref.shape
    ki = pl.program_id(2)

    @pl.when(ki == 0)
    def _():
        m_scr[...] = jnp.full(m_scr.shape, _NEG_INF, dtype=m_scr.dtype)
        l_scr[...] = jnp.zeros(l_scr.shape, dtype=l_scr.dtype)
        acc_scr[...] = jnp.zeros(acc_scr.shape, dtype=acc_scr.dtype)

    q = q_ref[0]                                                  # (H, tq, D) bf16, pre-scaled
    k = k_ref[0]                                                  # (H, tk, D) bf16
    v = v_ref[0]                                                  # (H, tk, D) bf16

    # s[h, i, j] = sum_d q[h, i, d] * k[h, j, d]   (all heads in one batched matmul)
    s = lax.dot_general(q, k, (((2,), (2,)), ((0,), (0,))),
                        preferred_element_type=jnp.float32)       # (H, tq, tk) f32

    m_prev = m_scr[...]                                           # (H, tq, 1)
    m_new = jnp.maximum(m_prev, jnp.max(s, axis=-1, keepdims=True))
    alpha = jnp.exp(m_prev - m_new)                               # (H, tq, 1)  EUP
    p = jnp.exp(s - m_new)                                        # (H, tq, tk) f32

    l_scr[...] = alpha * l_scr[...] + jnp.sum(p, axis=-1, keepdims=True)
    pv = lax.dot_general(p.astype(v.dtype), v, (((2,), (1,)), ((0,), (0,))),
                         preferred_element_type=jnp.float32)      # (H, tq, D) f32
    acc_scr[...] = alpha * acc_scr[...] + pv
    m_scr[...] = m_new

    @pl.when(ki == pl.num_programs(2) - 1)
    def _():
        inv_l = pl.reciprocal(l_scr[...], approx=True)            # (H, tq, 1)  EUP
        o = acc_scr[...] * inv_l                                  # (H, tq, D) f32
        # merge heads -> (tq, C) lane-dense slab, then fused output projection
        o_flat = jnp.concatenate([o[h] for h in range(H)], axis=-1)
        y = jnp.dot(o_flat.astype(wproj_ref.dtype), wproj_ref[...],
                    preferred_element_type=jnp.float32) + bproj_ref[...]
        o_ref[0] = y.astype(o_ref.dtype)


# ---------------------------------------------------------------------------
# Wrapper
# ---------------------------------------------------------------------------
def attention_pallas(x, w_qkv, w_proj, b_proj, *, num_heads,
                     q_block=128, kv_block=128, proj_block=128):
    B, N, C = x.shape
    assert C % num_heads == 0
    H = num_heads
    D = C // H
    scale = float(D) ** -0.5
    out_dtype = x.dtype

    # bf16 operands for the MXU (all accumulations stay in f32 inside kernels).
    x_bf = x.astype(jnp.bfloat16)
    w_qkv = w_qkv.astype(jnp.bfloat16)
    w_proj = w_proj.astype(jnp.bfloat16)
    b_proj = jnp.asarray(b_proj, jnp.float32).reshape(1, C)

    tn = _pick_tile(N, proj_block)
    tq = _pick_tile(N, q_block)
    tk = _pick_tile(N, kv_block)

    # ---- Stage 1: QKV projection -> q, k, v as (B, H, N, D) bf16 -----------
    qkv_cost = pl.CostEstimate(
        flops=2 * B * N * C * 3 * C,
        transcendentals=0,
        bytes_accessed=B * N * C * 2 + C * 3 * C * 2 + 3 * B * N * C * 2,
    )
    q, k, v = pl.pallas_call(
        functools.partial(_qkv_proj_kernel, scale=scale),
        out_shape=(
            jax.ShapeDtypeStruct((B, H, N, D), jnp.bfloat16),
            jax.ShapeDtypeStruct((B, H, N, D), jnp.bfloat16),
            jax.ShapeDtypeStruct((B, H, N, D), jnp.bfloat16),
        ),
        grid_spec=pltpu.PrefetchScalarGridSpec(
            num_scalar_prefetch=0,
            grid=(B, N // tn),
            in_specs=[
                pl.BlockSpec((1, tn, C), lambda b, i: (b, i, 0)),     # x tile
                pl.BlockSpec((C, 3 * C), lambda b, i: (0, 0)),        # w_qkv (resident)
            ],
            out_specs=(
                pl.BlockSpec((1, H, tn, D), lambda b, i: (b, 0, i, 0)),
                pl.BlockSpec((1, H, tn, D), lambda b, i: (b, 0, i, 0)),
                pl.BlockSpec((1, H, tn, D), lambda b, i: (b, 0, i, 0)),
            ),
        ),
        compiler_params=pltpu.CompilerParams(
            dimension_semantics=("parallel", "parallel"),
            vmem_limit_bytes=32 * 1024 * 1024,
        ),
        cost_estimate=qkv_cost,
    )(x_bf, w_qkv)

    # ---- Stage 2: flash attention + fused output projection ----------------
    n_q = N // tq
    attn_cost = pl.CostEstimate(
        flops=B * (2 * N * N * C * 2 + 2 * N * C * C),
        transcendentals=2 * B * H * N * N,
        bytes_accessed=(B * N * C * 2                       # q
                        + n_q * 2 * B * N * C * 2           # k, v re-read per q tile
                        + C * C * 2 + C * 4                 # w_proj, bias
                        + B * N * C * jnp.dtype(out_dtype).itemsize),
    )
    out = pl.pallas_call(
        _flash_attn_proj_kernel,
        out_shape=jax.ShapeDtypeStruct((B, N, C), out_dtype),
        grid_spec=pltpu.PrefetchScalarGridSpec(
            num_scalar_prefetch=0,
            grid=(B, n_q, N // tk),
            in_specs=[
                pl.BlockSpec((1, H, tq, D), lambda b, qi, ki: (b, 0, qi, 0)),  # q
                pl.BlockSpec((1, H, tk, D), lambda b, qi, ki: (b, 0, ki, 0)),  # k
                pl.BlockSpec((1, H, tk, D), lambda b, qi, ki: (b, 0, ki, 0)),  # v
                pl.BlockSpec((C, C), lambda b, qi, ki: (0, 0)),                # w_proj
                pl.BlockSpec((1, C), lambda b, qi, ki: (0, 0)),                # b_proj
            ],
            out_specs=pl.BlockSpec((1, tq, C), lambda b, qi, ki: (b, qi, 0)),
            scratch_shapes=[
                pltpu.VMEM((H, tq, 1), jnp.float32),   # running max  m
                pltpu.VMEM((H, tq, 1), jnp.float32),   # running sum  l
                pltpu.VMEM((H, tq, D), jnp.float32),   # running acc  (numerator)
            ],
        ),
        compiler_params=pltpu.CompilerParams(
            dimension_semantics=("parallel", "parallel", "arbitrary"),
            vmem_limit_bytes=32 * 1024 * 1024,
        ),
        cost_estimate=attn_cost,
    )(q, k, v, w_proj, b_proj)
    return out


def attention_reference(x, w_qkv, w_proj, b_proj, *, num_heads):
    """Pure-JAX (f32) mirror of the PyTorch forward for verification."""
    B, N, C = x.shape
    D = C // num_heads
    scale = D ** (-0.5)
    qkv = x @ w_qkv                                   # (B, N, 3C)
    qkv = qkv.reshape(B, N, 3, num_heads, D).transpose(2, 0, 3, 1, 4)
    q, k, v = qkv[0], qkv[1], qkv[2]                  # (B, H, N, D)
    attn = (q @ jnp.swapaxes(k, -2, -1)) * scale      # (B, H, N, N)
    attn = jax.nn.softmax(attn, axis=-1)
    out = (attn @ v).transpose(0, 2, 1, 3).reshape(B, N, C)
    return out @ w_proj + b_proj.reshape(1, C)


if __name__ == "__main__":
    B, N, C, H = 2, 256, 256, 4    # small but exercises the tiled path (2x2x2 grid)

    key = jax.random.PRNGKey(0)
    kx, kqkv, kproj, kb = jax.random.split(key, 4)

    x = jax.random.normal(kx, (B, N, C), dtype=jnp.float32)
    # nn.Linear(dim, dim*3, bias=False): weight (3C, C); pre-transpose -> (C, 3C)
    w_qkv = (jax.random.normal(kqkv, (3 * C, C), dtype=jnp.float32) * 0.02).T
    # nn.Linear(dim, dim): weight (C, C), bias (C,)
    w_proj = (jax.random.normal(kproj, (C, C), dtype=jnp.float32) * 0.02).T
    b_proj = jax.random.normal(kb, (C,), dtype=jnp.float32) * 0.02

    attn_fn = jax.jit(functools.partial(attention_pallas, num_heads=H))
    out = attn_fn(x, w_qkv, w_proj, b_proj)
    out = jax.block_until_ready(out)

    ref = attention_reference(x, w_qkv, w_proj, b_proj, num_heads=H)
    assert out.shape == (B, N, C)
    err = float(jnp.max(jnp.abs(out.astype(jnp.float32) - ref)))
    # bf16 MXU operands + approx reciprocal -> loose tolerance vs f32 reference
    assert err < 2e-2, f"mismatch vs reference: max abs err {err}"

    print("KERNEL_OK")
</pallas_src>

<mosaic_0001>
module attributes {stable_mosaic.version = 11 : i64} {
  func.func @_qkv_proj_kernel(%arg0: i32, %arg1: i32, %arg2: memref<1x128x256xbf16, #tpu.memory_space<vmem>>, %arg3: memref<256x768xbf16, #tpu.memory_space<vmem>>, %arg4: memref<1x4x128x64xbf16, #tpu.memory_space<vmem>>, %arg5: memref<1x4x128x64xbf16, #tpu.memory_space<vmem>>, %arg6: memref<1x4x128x64xbf16, #tpu.memory_space<vmem>>) attributes {dimension_semantics = [#tpu.dimension_semantics<parallel>, #tpu.dimension_semantics<parallel>], iteration_bounds = array<i64: 2, 2>, scalar_prefetch = 0 : i64, scratch_operands = 0 : i64, tpu.core_type = #tpu.core_type<tc>, window_params = [{transform_indices = @transform_0, window_bounds = array<i64: 1, 128, 256>}, {pipeline_mode = #tpu.pipeline_mode<synchronous>, transform_indices = @transform_1, window_bounds = array<i64: 256, 768>}, {transform_indices = @transform_2, window_bounds = array<i64: 1, 4, 128, 64>}, {transform_indices = @transform_3, window_bounds = array<i64: 1, 4, 128, 64>}, {transform_indices = @transform_4, window_bounds = array<i64: 1, 4, 128, 64>}]} {
    %c0 = arith.constant 0 : index
    %c0_0 = arith.constant 0 : index
    %c0_1 = arith.constant 0 : index
    %0 = vector.load %arg2[%c0, %c0_0, %c0_1] : memref<1x128x256xbf16, #tpu.memory_space<vmem>>, vector<1x128x256xbf16>
    %1 = vector.shape_cast %0 : vector<1x128x256xbf16> to vector<128x256xbf16>
    %c0_2 = arith.constant 0 : index
    %c0_3 = arith.constant 0 : index
    %2 = vector.load %arg3[%c0_2, %c0_3] : memref<256x768xbf16, #tpu.memory_space<vmem>>, vector<256x768xbf16>
    %cst = arith.constant dense<0.000000e+00> : vector<128x768xf32>
    %3 = tpu.matmul %1, %2, %cst {dimension_numbers = #tpu.dot_dimension_numbers<[1], [0], [0], [1], [0, 0, 1, 1], [], []>} : vector<128x256xbf16>, vector<256x768xbf16>, vector<128x768xf32> -> vector<128x768xf32>
    %4 = vector.extract_strided_slice %3 {offsets = [0, 0], sizes = [128, 64], strides = [1, 1]} : vector<128x768xf32> to vector<128x64xf32>
    %cst_4 = arith.constant 1.250000e-01 : f32
    %5 = vector.broadcast %cst_4 : f32 to vector<128x64xf32>
    %6 = arith.mulf %4, %5 : vector<128x64xf32>
    %7 = arith.truncf %6 : vector<128x64xf32> to vector<128x64xbf16>
    %c0_5 = arith.constant 0 : index
    %c0_6 = arith.constant 0 : index
    %c0_7 = arith.constant 0 : index
    %c0_8 = arith.constant 0 : index
    %8 = vector.load %arg4[%c0_5, %c0_6, %c0_7, %c0_8] : memref<1x4x128x64xbf16, #tpu.memory_space<vmem>>, vector<1x1x128x64xbf16>
    %9 = vector.shape_cast %8 : vector<1x1x128x64xbf16> to vector<128x64xbf16>
    %10 = vector.shape_cast %7 : vector<128x64xbf16> to vector<1x1x128x64xbf16>
    tpu.vector_store %arg4[%c0_5, %c0_6, %c0_7, %c0_8], %10 {strides = array<i32>} : memref<1x4x128x64xbf16, #tpu.memory_space<vmem>>, vector<1x1x128x64xbf16>,
    %11 = vector.extract_strided_slice %3 {offsets = [0, 256], sizes = [128, 64], strides = [1, 1]} : vector<128x768xf32> to vector<128x64xf32>
    %12 = arith.truncf %11 : vector<128x64xf32> to vector<128x64xbf16>
    %c0_9 = arith.constant 0 : index
    %c0_10 = arith.constant 0 : index
    %c0_11 = arith.constant 0 : index
    %c0_12 = arith.constant 0 : index
    %13 = vector.load %arg5[%c0_9, %c0_10, %c0_11, %c0_12] : memref<1x4x128x64xbf16, #tpu.memory_space<vmem>>, vector<1x1x128x64xbf16>
    %14 = vector.shape_cast %13 : vector<1x1x128x64xbf16> to vector<128x64xbf16>
    %15 = vector.shape_cast %12 : vector<128x64xbf16> to vector<1x1x128x64xbf16>
    tpu.vector_store %arg5[%c0_9, %c0_10, %c0_11, %c0_12], %15 {strides = array<i32>} : memref<1x4x128x64xbf16, #tpu.memory_space<vmem>>, vector<1x1x128x64xbf16>,
    %16 = vector.extract_strided_slice %3 {offsets = [0, 512], sizes = [128, 64], strides = [1, 1]} : vector<128x768xf32> to vector<128x64xf32>
    %17 = arith.truncf %16 : vector<128x64xf32> to vector<128x64xbf16>
    %c0_13 = arith.constant 0 : index
    %c0_14 = arith.constant 0 : index
    %c0_15 = arith.constant 0 : index
    %c0_16 = arith.constant 0 : index
    %18 = vector.load %arg6[%c0_13, %c0_14, %c0_15, %c0_16] : memref<1x4x128x64xbf16, #tpu.memory_space<vmem>>, vector<1x1x128x64xbf16>
    %19 = vector.shape_cast %18 : vector<1x1x128x64xbf16> to vector<128x64xbf16>
    %20 = vector.shape_cast %17 : vector<128x64xbf16> to vector<1x1x128x64xbf16>
    tpu.vector_store %arg6[%c0_13, %c0_14, %c0_15, %c0_16], %20 {strides = array<i32>} : memref<1x4x128x64xbf16, #tpu.memory_space<vmem>>, vector<1x1x128x64xbf16>,
    %21 = vector.extract_strided_slice %3 {offsets = [0, 64], sizes = [128, 64], strides = [1, 1]} : vector<128x768xf32> to vector<128x64xf32>
    %cst_17 = arith.constant 1.250000e-01 : f32
    %22 = vector.broadcast %cst_17 : f32 to vector<128x64xf32>
    %23 = arith.mulf %21, %22 : vector<128x64xf32>
    %24 = arith.truncf %23 : vector<128x64xf32> to vector<128x64xbf16>
    %c0_18 = arith.constant 0 : index
    %c1 = arith.constant 1 : index
    %c0_19 = arith.constant 0 : index
    %c0_20 = arith.constant 0 : index
    %25 = vector.load %arg4[%c0_18, %c1, %c0_19, %c0_20] : memref<1x4x128x64xbf16, #tpu.memory_space<vmem>>, vector<1x1x128x64xbf16>
    %26 = vector.shape_cast %25 : vector<1x1x128x64xbf16> to vector<128x64xbf16>
    %27 = vector.shape_cast %24 : vector<128x64xbf16> to vector<1x1x128x64xbf16>
    tpu.vector_store %arg4[%c0_18, %c1, %c0_19, %c0_20], %27 {strides = array<i32>} : memref<1x4x128x64xbf16, #tpu.memory_space<vmem>>, vector<1x1x128x64xbf16>,
    %28 = vector.extract_strided_slice %3 {offsets = [0, 320], sizes = [128, 64], strides = [1, 1]} : vector<128x768xf32> to vector<128x64xf32>
    %29 = arith.truncf %28 : vector<128x64xf32> to vector<128x64xbf16>
    %c0_21 = arith.constant 0 : index
    %c1_22 = arith.constant 1 : index
    %c0_23 = arith.constant 0 : index
    %c0_24 = arith.constant 0 : index
    %30 = vector.load %arg5[%c0_21, %c1_22, %c0_23, %c0_24] : memref<1x4x128x64xbf16, #tpu.memory_space<vmem>>, vector<1x1x128x64xbf16>
    %31 = vector.shape_cast %30 : vector<1x1x128x64xbf16> to vector<128x64xbf16>
    %32 = vector.shape_cast %29 : vector<128x64xbf16> to vector<1x1x128x64xbf16>
    tpu.vector_store %arg5[%c0_21, %c1_22, %c0_23, %c0_24], %32 {strides = array<i32>} : memref<1x4x128x64xbf16, #tpu.memory_space<vmem>>, vector<1x1x128x64xbf16>,
    %33 = vector.extract_strided_slice %3 {offsets = [0, 576], sizes = [128, 64], strides = [1, 1]} : vector<128x768xf32> to vector<128x64xf32>
    %34 = arith.truncf %33 : vector<128x64xf32> to vector<128x64xbf16>
    %c0_25 = arith.constant 0 : index
    %c1_26 = arith.constant 1 : index
    %c0_27 = arith.constant 0 : index
    %c0_28 = arith.constant 0 : index
    %35 = vector.load %arg6[%c0_25, %c1_26, %c0_27, %c0_28] : memref<1x4x128x64xbf16, #tpu.memory_space<vmem>>, vector<1x1x128x64xbf16>
    %36 = vector.shape_cast %35 : vector<1x1x128x64xbf16> to vector<128x64xbf16>
    %37 = vector.shape_cast %34 : vector<128x64xbf16> to vector<1x1x128x64xbf16>
    tpu.vector_store %arg6[%c0_25, %c1_26, %c0_27, %c0_28], %37 {strides = array<i32>} : memref<1x4x128x64xbf16, #tpu.memory_space<vmem>>, vector<1x1x128x64xbf16>,
    %38 = vector.extract_strided_slice %3 {offsets = [0, 128], sizes = [128, 64], strides = [1, 1]} : vector<128x768xf32> to vector<128x64xf32>
    %cst_29 = arith.constant 1.250000e-01 : f32
    %39 = vector.broadcast %cst_29 : f32 to vector<128x64xf32>
    %40 = arith.mulf %38, %39 : vector<128x64xf32>
    %41 = arith.truncf %40 : vector<128x64xf32> to vector<128x64xbf16>
    %c0_30 = arith.constant 0 : index
    %c2 = arith.constant 2 : index
    %c0_31 = arith.constant 0 : index
    %c0_32 = arith.constant 0 : index
    %42 = vector.load %arg4[%c0_30, %c2, %c0_31, %c0_32] : memref<1x4x128x64xbf16, #tpu.memory_space<vmem>>, vector<1x1x128x64xbf16>
    %43 = vector.shape_cast %42 : vector<1x1x128x64xbf16> to vector<128x64xbf16>
    %44 = vector.shape_cast %41 : vector<128x64xbf16> to vector<1x1x128x64xbf16>
    tpu.vector_store %arg4[%c0_30, %c2, %c0_31, %c0_32], %44 {strides = array<i32>} : memref<1x4x128x64xbf16, #tpu.memory_space<vmem>>, vector<1x1x128x64xbf16>,
    %45 = vector.extract_strided_slice %3 {offsets = [0, 384], sizes = [128, 64], strides = [1, 1]} : vector<128x768xf32> to vector<128x64xf32>
    %46 = arith.truncf %45 : vector<128x64xf32> to vector<128x64xbf16>
    %c0_33 = arith.constant 0 : index
    %c2_34 = arith.constant 2 : index
    %c0_35 = arith.constant 0 : index
    %c0_36 = arith.constant 0 : index
    %47 = vector.load %arg5[%c0_33, %c2_34, %c0_35, %c0_36] : memref<1x4x128x64xbf16, #tpu.memory_space<vmem>>, vector<1x1x128x64xbf16>
    %48 = vector.shape_cast %47 : vector<1x1x128x64xbf16> to vector<128x64xbf16>
    %49 = vector.shape_cast %46 : vector<128x64xbf16> to vector<1x1x128x64xbf16>
    tpu.vector_store %arg5[%c0_33, %c2_34, %c0_35, %c0_36], %49 {strides = array<i32>} : memref<1x4x128x64xbf16, #tpu.memory_space<vmem>>, vector<1x1x128x64xbf16>,
    %50 = vector.extract_strided_slice %3 {offsets = [0, 640], sizes = [128, 64], strides = [1, 1]} : vector<128x768xf32> to vector<128x64xf32>
    %51 = arith.truncf %50 : vector<128x64xf32> to vector<128x64xbf16>
    %c0_37 = arith.constant 0 : index
    %c2_38 = arith.constant 2 : index
    %c0_39 = arith.constant 0 : index
    %c0_40 = arith.constant 0 : index
    %52 = vector.load %arg6[%c0_37, %c2_38, %c0_39, %c0_40] : memref<1x4x128x64xbf16, #tpu.memory_space<vmem>>, vector<1x1x128x64xbf16>
    %53 = vector.shape_cast %52 : vector<1x1x128x64xbf16> to vector<128x64xbf16>
    %54 = vector.shape_cast %51 : vector<128x64xbf16> to vector<1x1x128x64xbf16>
    tpu.vector_store %arg6[%c0_37, %c2_38, %c0_39, %c0_40], %54 {strides = array<i32>} : memref<1x4x128x64xbf16, #tpu.memory_space<vmem>>, vector<1x1x128x64xbf16>,
    %55 = vector.extract_strided_slice %3 {offsets = [0, 192], sizes = [128, 64], strides = [1, 1]} : vector<128x768xf32> to vector<128x64xf32>
    %cst_41 = arith.constant 1.250000e-01 : f32
    %56 = vector.broadcast %cst_41 : f32 to vector<128x64xf32>
    %57 = arith.mulf %55, %56 : vector<128x64xf32>
    %58 = arith.truncf %57 : vector<128x64xf32> to vector<128x64xbf16>
    %c0_42 = arith.constant 0 : index
    %c3 = arith.constant 3 : index
    %c0_43 = arith.constant 0 : index
    %c0_44 = arith.constant 0 : index
    %59 = vector.load %arg4[%c0_42, %c3, %c0_43, %c0_44] : memref<1x4x128x64xbf16, #tpu.memory_space<vmem>>, vector<1x1x128x64xbf16>
    %60 = vector.shape_cast %59 : vector<1x1x128x64xbf16> to vector<128x64xbf16>
    %61 = vector.shape_cast %58 : vector<128x64xbf16> to vector<1x1x128x64xbf16>
    tpu.vector_store %arg4[%c0_42, %c3, %c0_43, %c0_44], %61 {strides = array<i32>} : memref<1x4x128x64xbf16, #tpu.memory_space<vmem>>, vector<1x1x128x64xbf16>,
    %62 = vector.extract_strided_slice %3 {offsets = [0, 448], sizes = [128, 64], strides = [1, 1]} : vector<128x768xf32> to vector<128x64xf32>
    %63 = arith.truncf %62 : vector<128x64xf32> to vector<128x64xbf16>
    %c0_45 = arith.constant 0 : index
    %c3_46 = arith.constant 3 : index
    %c0_47 = arith.constant 0 : index
    %c0_48 = arith.constant 0 : index
    %64 = vector.load %arg5[%c0_45, %c3_46, %c0_47, %c0_48] : memref<1x4x128x64xbf16, #tpu.memory_space<vmem>>, vector<1x1x128x64xbf16>
    %65 = vector.shape_cast %64 : vector<1x1x128x64xbf16> to vector<128x64xbf16>
    %66 = vector.shape_cast %63 : vector<128x64xbf16> to vector<1x1x128x64xbf16>
    tpu.vector_store %arg5[%c0_45, %c3_46, %c0_47, %c0_48], %66 {strides = array<i32>} : memref<1x4x128x64xbf16, #tpu.memory_space<vmem>>, vector<1x1x128x64xbf16>,
    %67 = vector.extract_strided_slice %3 {offsets = [0, 704], sizes = [128, 64], strides = [1, 1]} : vector<128x768xf32> to vector<128x64xf32>
    %68 = arith.truncf %67 : vector<128x64xf32> to vector<128x64xbf16>
    %c0_49 = arith.constant 0 : index
    %c3_50 = arith.constant 3 : index
    %c0_51 = arith.constant 0 : index
    %c0_52 = arith.constant 0 : index
    %69 = vector.load %arg6[%c0_49, %c3_50, %c0_51, %c0_52] : memref<1x4x128x64xbf16, #tpu.memory_space<vmem>>, vector<1x1x128x64xbf16>
    %70 = vector.shape_cast %69 : vector<1x1x128x64xbf16> to vector<128x64xbf16>
    %71 = vector.shape_cast %68 : vector<128x64xbf16> to vector<1x1x128x64xbf16>
    tpu.vector_store %arg6[%c0_49, %c3_50, %c0_51, %c0_52], %71 {strides = array<i32>} : memref<1x4x128x64xbf16, #tpu.memory_space<vmem>>, vector<1x1x128x64xbf16>,
    return
  }
  func.func @transform_0(%arg0: i32, %arg1: i32) -> (i32, i32, i32) {
    %c0_i32 = arith.constant 0 : i32
    %c0_i32_0 = arith.constant 0 : i32
    return %arg0, %arg1, %c0_i32 : i32, i32, i32
  }
  func.func @transform_1(%arg0: i32, %arg1: i32) -> (i32, i32) {
    %c0_i32 = arith.constant 0 : i32
    %c0_i32_0 = arith.constant 0 : i32
    %c0_i32_1 = arith.constant 0 : i32
    return %c0_i32, %c0_i32_0 : i32, i32
  }
  func.func @transform_2(%arg0: i32, %arg1: i32) -> (i32, i32, i32, i32) {
    %c0_i32 = arith.constant 0 : i32
    %c0_i32_0 = arith.constant 0 : i32
    %c0_i32_1 = arith.constant 0 : i32
    return %arg0, %c0_i32, %arg1, %c0_i32_0 : i32, i32, i32, i32
  }
  func.func @transform_3(%arg0: i32, %arg1: i32) -> (i32, i32, i32, i32) {
    %c0_i32 = arith.constant 0 : i32
    %c0_i32_0 = arith.constant 0 : i32
    %c0_i32_1 = arith.constant 0 : i32
    return %arg0, %c0_i32, %arg1, %c0_i32_0 : i32, i32, i32, i32
  }
  func.func @transform_4(%arg0: i32, %arg1: i32) -> (i32, i32, i32, i32) {
    %c0_i32 = arith.constant 0 : i32
    %c0_i32_0 = arith.constant 0 : i32
    %c0_i32_1 = arith.constant 0 : i32
    return %arg0, %c0_i32, %arg1, %c0_i32_0 : i32, i32, i32, i32
  }
}

module attributes {stable_mosaic.version = 11 : i64} {
  func.func @_flash_attn_proj_kernel(%arg0: i32, %arg1: i32, %arg2: i32, %arg3: memref<1x4x128x64xbf16, #tpu.memory_space<vmem>>, %arg4: memref<1x4x128x64xbf16, #tpu.memory_space<vmem>>, %arg5: memref<1x4x128x64xbf16, #tpu.memory_space<vmem>>, %arg6: memref<256x256xbf16, #tpu.memory_space<vmem>>, %arg7: memref<1x256xf32, #tpu.memory_space<vmem>>, %arg8: memref<1x128x256xf32, #tpu.memory_space<vmem>>, %arg9: memref<4x128x1xf32, #tpu.memory_space<vmem>>, %arg10: memref<4x128x1xf32, #tpu.memory_space<vmem>>, %arg11: memref<4x128x64xf32, #tpu.memory_space<vmem>>) attributes {dimension_semantics = [#tpu.dimension_semantics<parallel>, #tpu.dimension_semantics<parallel>, #tpu.dimension_semantics<arbitrary>], iteration_bounds = array<i64: 2, 2, 2>, scalar_prefetch = 0 : i64, scratch_operands = 3 : i64, tpu.core_type = #tpu.core_type<tc>, window_params = [{transform_indices = @transform_0, window_bounds = array<i64: 1, 4, 128, 64>}, {transform_indices = @transform_1, window_bounds = array<i64: 1, 4, 128, 64>}, {transform_indices = @transform_2, window_bounds = array<i64: 1, 4, 128, 64>}, {pipeline_mode = #tpu.pipeline_mode<synchronous>, transform_indices = @transform_3, window_bounds = array<i64: 256, 256>}, {pipeline_mode = #tpu.pipeline_mode<synchronous>, transform_indices = @transform_4, window_bounds = array<i64: 1, 256>}, {transform_indices = @transform_5, window_bounds = array<i64: 1, 128, 256>}]} {
    %c0_i32 = arith.constant 0 : i32
    %0 = arith.cmpi eq, %arg2, %c0_i32 : i32
    %1 = arith.extui %0 : i1 to i32
    %c0_i32_0 = arith.constant 0 : i32
    %2 = arith.cmpi ne, %1, %c0_i32_0 : i32
    scf.if %2 {
      %cst_34 = arith.constant -1.000000e+30 : f32
      %36 = vector.broadcast %cst_34 : f32 to vector<4x128x1xf32>
      %c0_35 = arith.constant 0 : index
      %c0_36 = arith.constant 0 : index
      %c0_37 = arith.constant 0 : index
      %37 = vector.load %arg9[%c0_35, %c0_36, %c0_37] : memref<4x128x1xf32, #tpu.memory_space<vmem>>, vector<4x128x1xf32>
      tpu.vector_store %arg9[%c0_35, %c0_36, %c0_37], %36 {strides = array<i32>} : memref<4x128x1xf32, #tpu.memory_space<vmem>>, vector<4x128x1xf32>,
      %cst_38 = arith.constant 0.000000e+00 : f32
      %38 = vector.broadcast %cst_38 : f32 to vector<4x128x1xf32>
      %c0_39 = arith.constant 0 : index
      %c0_40 = arith.constant 0 : index
      %c0_41 = arith.constant 0 : index
      %39 = vector.load %arg10[%c0_39, %c0_40, %c0_41] : memref<4x128x1xf32, #tpu.memory_space<vmem>>, vector<4x128x1xf32>
      tpu.vector_store %arg10[%c0_39, %c0_40, %c0_41], %38 {strides = array<i32>} : memref<4x128x1xf32, #tpu.memory_space<vmem>>, vector<4x128x1xf32>,
      %cst_42 = arith.constant 0.000000e+00 : f32
      %40 = vector.broadcast %cst_42 : f32 to vector<4x128x64xf32>
      %c0_43 = arith.constant 0 : index
      %c0_44 = arith.constant 0 : index
      %c0_45 = arith.constant 0 : index
      %41 = vector.load %arg11[%c0_43, %c0_44, %c0_45] : memref<4x128x64xf32, #tpu.memory_space<vmem>>, vector<4x128x64xf32>
      tpu.vector_store %arg11[%c0_43, %c0_44, %c0_45], %40 {strides = array<i32>} : memref<4x128x64xf32, #tpu.memory_space<vmem>>, vector<4x128x64xf32>,
    } else {
    }
    %c0 = arith.constant 0 : index
    %c0_1 = arith.constant 0 : index
    %c0_2 = arith.constant 0 : index
    %c0_3 = arith.constant 0 : index
    %3 = vector.load %arg3[%c0, %c0_1, %c0_2, %c0_3] : memref<1x4x128x64xbf16, #tpu.memory_space<vmem>>, vector<1x4x128x64xbf16>
    %4 = vector.shape_cast %3 : vector<1x4x128x64xbf16> to vector<4x128x64xbf16>
    %c0_4 = arith.constant 0 : index
    %c0_5 = arith.constant 0 : index
    %c0_6 = arith.constant 0 : index
    %c0_7 = arith.constant 0 : index
    %5 = vector.load %arg4[%c0_4, %c0_5, %c0_6, %c0_7] : memref<1x4x128x64xbf16, #tpu.memory_space<vmem>>, vector<1x4x128x64xbf16>
    %6 = vector.shape_cast %5 : vector<1x4x128x64xbf16> to vector<4x128x64xbf16>
    %c0_8 = arith.constant 0 : index
    %c0_9 = arith.constant 0 : index
    %c0_10 = arith.constant 0 : index
    %c0_11 = arith.constant 0 : index
    %7 = vector.load %arg5[%c0_8, %c0_9, %c0_10, %c0_11] : memref<1x4x128x64xbf16, #tpu.memory_space<vmem>>, vector<1x4x128x64xbf16>
    %8 = vector.shape_cast %7 : vector<1x4x128x64xbf16> to vector<4x128x64xbf16>
    %cst = arith.constant dense<0.000000e+00> : vector<4x128x128xf32>
    %9 = tpu.matmul %4, %6, %cst {dimension_numbers = #tpu.dot_dimension_numbers<[2], [2], [1], [1], [0, 0, 0, 1, 1, 1], [0], [0]>} : vector<4x128x64xbf16>, vector<4x128x64xbf16>, vector<4x128x128xf32> -> vector<4x128x128xf32>
    %c0_12 = arith.constant 0 : index
    %c0_13 = arith.constant 0 : index
    %c0_14 = arith.constant 0 : index
    %10 = vector.load %arg9[%c0_12, %c0_13, %c0_14] : memref<4x128x1xf32, #tpu.memory_space<vmem>>, vector<4x128x1xf32>
    %cst_15 = arith.constant dense<0xFF800000> : vector<4x128xf32>
    %11 = vector.multi_reduction <maximumf>, %9, %cst_15 [2] : vector<4x128x128xf32> to vector<4x128xf32>
    %12 = vector.shape_cast %11 : vector<4x128xf32> to vector<4x128x1xf32>
    %13 = arith.maximumf %10, %12 : vector<4x128x1xf32>
    %14 = arith.subf %10, %13 : vector<4x128x1xf32>
    %15 = math.exp %14 : vector<4x128x1xf32>
    %16 = vector.broadcast %13 : vector<4x128x1xf32> to vector<4x128x128xf32>
    %17 = arith.subf %9, %16 : vector<4x128x128xf32>
    %18 = math.exp %17 : vector<4x128x128xf32>
    %c0_16 = arith.constant 0 : index
    %c0_17 = arith.constant 0 : index
    %c0_18 = arith.constant 0 : index
    %19 = vector.load %arg10[%c0_16, %c0_17, %c0_18] : memref<4x128x1xf32, #tpu.memory_space<vmem>>, vector<4x128x1xf32>
    %20 = arith.mulf %15, %19 : vector<4x128x1xf32>
    %cst_19 = arith.constant dense<0.000000e+00> : vector<4x128xf32>
    %21 = vector.multi_reduction <add>, %18, %cst_19 [2] : vector<4x128x128xf32> to vector<4x128xf32>
    %22 = vector.shape_cast %21 : vector<4x128xf32> to vector<4x128x1xf32>
    %23 = arith.addf %20, %22 : vector<4x128x1xf32>
    %c0_20 = arith.constant 0 : index
    %c0_21 = arith.constant 0 : index
    %c0_22 = arith.constant 0 : index
    %24 = vector.load %arg10[%c0_20, %c0_21, %c0_22] : memref<4x128x1xf32, #tpu.memory_space<vmem>>, vector<4x128x1xf32>
    tpu.vector_store %arg10[%c0_20, %c0_21, %c0_22], %23 {strides = array<i32>} : memref<4x128x1xf32, #tpu.memory_space<vmem>>, vector<4x128x1xf32>,
    %25 = arith.truncf %18 : vector<4x128x128xf32> to vector<4x128x128xbf16>
    %cst_23 = arith.constant dense<0.000000e+00> : vector<4x128x64xf32>
    %26 = tpu.matmul %25, %8, %cst_23 {dimension_numbers = #tpu.dot_dimension_numbers<[2], [1], [1], [2], [0, 0, 0, 1, 1, 2], [0], [0]>} : vector<4x128x128xbf16>, vector<4x128x64xbf16>, vector<4x128x64xf32> -> vector<4x128x64xf32>
    %c0_24 = arith.constant 0 : index
    %c0_25 = arith.constant 0 : index
    %c0_26 = arith.constant 0 : index
    %27 = vector.load %arg11[%c0_24, %c0_25, %c0_26] : memref<4x128x64xf32, #tpu.memory_space<vmem>>, vector<4x128x64xf32>
    %28 = vector.broadcast %15 : vector<4x128x1xf32> to vector<4x128x64xf32>
    %29 = arith.mulf %28, %27 : vector<4x128x64xf32>
    %30 = arith.addf %29, %26 : vector<4x128x64xf32>
    %c0_27 = arith.constant 0 : index
    %c0_28 = arith.constant 0 : index
    %c0_29 = arith.constant 0 : index
    %31 = vector.load %arg11[%c0_27, %c0_28, %c0_29] : memref<4x128x64xf32, #tpu.memory_space<vmem>>, vector<4x128x64xf32>
    tpu.vector_store %arg11[%c0_27, %c0_28, %c0_29], %30 {strides = array<i32>} : memref<4x128x64xf32, #tpu.memory_space<vmem>>, vector<4x128x64xf32>,
    %c0_30 = arith.constant 0 : index
    %c0_31 = arith.constant 0 : index
    %c0_32 = arith.constant 0 : index
    %32 = vector.load %arg9[%c0_30, %c0_31, %c0_32] : memref<4x128x1xf32, #tpu.memory_space<vmem>>, vector<4x128x1xf32>
    tpu.vector_store %arg9[%c0_30, %c0_31, %c0_32], %13 {strides = array<i32>} : memref<4x128x1xf32, #tpu.memory_space<vmem>>, vector<4x128x1xf32>,
    %c1_i32 = arith.constant 1 : i32
    %33 = arith.cmpi eq, %arg2, %c1_i32 : i32
    %34 = arith.extui %33 : i1 to i32
    %c0_i32_33 = arith.constant 0 : i32
    %35 = arith.cmpi ne, %34, %c0_i32_33 : i32
    scf.if %35 {
      %c0_34 = arith.constant 0 : index
      %c0_35 = arith.constant 0 : index
      %c0_36 = arith.constant 0 : index
      %36 = vector.load %arg10[%c0_34, %c0_35, %c0_36] : memref<4x128x1xf32, #tpu.memory_space<vmem>>, vector<4x128x1xf32>
      %37 = tpu.reciprocal %36 {approx = true} : vector<4x128x1xf32> -> vector<4x128x1xf32>
      %c0_37 = arith.constant 0 : index
      %c0_38 = arith.constant 0 : index
      %c0_39 = arith.constant 0 : index
      %38 = vector.load %arg11[%c0_37, %c0_38, %c0_39] : memref<4x128x64xf32, #tpu.memory_space<vmem>>, vector<4x128x64xf32>
      %39 = vector.broadcast %37 : vector<4x128x1xf32> to vector<4x128x64xf32>
      %40 = arith.mulf %38, %39 : vector<4x128x64xf32>
      %41 = vector.extract_strided_slice %40 {offsets = [0, 0, 0], sizes = [1, 128, 64], strides = [1, 1, 1]} : vector<4x128x64xf32> to vector<1x128x64xf32>
      %42 = vector.shape_cast %41 : vector<1x128x64xf32> to vector<128x64xf32>
      %43 = vector.extract_strided_slice %40 {offsets = [1, 0, 0], sizes = [1, 128, 64], strides = [1, 1, 1]} : vector<4x128x64xf32> to vector<1x128x64xf32>
      %44 = vector.shape_cast %43 : vector<1x128x64xf32> to vector<128x64xf32>
      %45 = vector.extract_strided_slice %40 {offsets = [2, 0, 0], sizes = [1, 128, 64], strides = [1, 1, 1]} : vector<4x128x64xf32> to vector<1x128x64xf32>
      %46 = vector.shape_cast %45 : vector<1x128x64xf32> to vector<128x64xf32>
      %47 = vector.extract_strided_slice %40 {offsets = [3, 0, 0], sizes = [1, 128, 64], strides = [1, 1, 1]} : vector<4x128x64xf32> to vector<1x128x64xf32>
      %48 = vector.shape_cast %47 : vector<1x128x64xf32> to vector<128x64xf32>
      %49 = tpu.concatenate %42, %44, %46, %48 in 1 : vector<128x64xf32>, vector<128x64xf32>, vector<128x64xf32>, vector<128x64xf32> -> vector<128x256xf32>
      %50 = arith.truncf %49 : vector<128x256xf32> to vector<128x256xbf16>
      %c0_40 = arith.constant 0 : index
      %c0_41 = arith.constant 0 : index
      %51 = vector.load %arg6[%c0_40, %c0_41] : memref<256x256xbf16, #tpu.memory_space<vmem>>, vector<256x256xbf16>
      %cst_42 = arith.constant dense<0.000000e+00> : vector<128x256xf32>
      %52 = tpu.matmul %50, %51, %cst_42 {dimension_numbers = #tpu.dot_dimension_numbers<[1], [0], [0], [1], [0, 0, 1, 1], [], []>} : vector<128x256xbf16>, vector<256x256xbf16>, vector<128x256xf32> -> vector<128x256xf32>
      %c0_43 = arith.constant 0 : index
      %c0_44 = arith.constant 0 : index
      %53 = vector.load %arg7[%c0_43, %c0_44] : memref<1x256xf32, #tpu.memory_space<vmem>>, vector<1x256xf32>
      %54 = vector.broadcast %53 : vector<1x256xf32> to vector<128x256xf32>
      %55 = arith.addf %52, %54 : vector<128x256xf32>
      %c0_45 = arith.constant 0 : index
      %c0_46 = arith.constant 0 : index
      %c0_47 = arith.constant 0 : index
      %56 = vector.load %arg8[%c0_45, %c0_46, %c0_47] : memref<1x128x256xf32, #tpu.memory_space<vmem>>, vector<1x128x256xf32>
      %57 = vector.shape_cast %56 : vector<1x128x256xf32> to vector<128x256xf32>
      %58 = vector.shape_cast %55 : vector<128x256xf32> to vector<1x128x256xf32>
      tpu.vector_store %arg8[%c0_45, %c0_46, %c0_47], %58 {strides = array<i32>} : memref<1x128x256xf32, #tpu.memory_space<vmem>>, vector<1x128x256xf32>,
    } else {
    }
    return
  }
  func.func @transform_0(%arg0: i32, %arg1: i32, %arg2: i32) -> (i32, i32, i32, i32) {
    %c0_i32 = arith.constant 0 : i32
    %c0_i32_0 = arith.constant 0 : i32
    %c0_i32_1 = arith.constant 0 : i32
    return %arg0, %c0_i32, %arg1, %c0_i32_0 : i32, i32, i32, i32
  }
  func.func @transform_1(%arg0: i32, %arg1: i32, %arg2: i32) -> (i32, i32, i32, i32) {
    %c0_i32 = arith.constant 0 : i32
    %c0_i32_0 = arith.constant 0 : i32
    %c0_i32_1 = arith.constant 0 : i32
    return %arg0, %c0_i32, %arg2, %c0_i32_0 : i32, i32, i32, i32
  }
  func.func @transform_2(%arg0: i32, %arg1: i32, %arg2: i32) -> (i32, i32, i32, i32) {
    %c0_i32 = arith.constant 0 : i32
    %c0_i32_0 = arith.constant 0 : i32
    %c0_i32_1 = arith.constant 0 : i32
    return %arg0, %c0_i32, %arg2, %c0_i32_0 : i32, i32, i32, i32
  }
  func.func @transform_3(%arg0: i32, %arg1: i32, %arg2: i32) -> (i32, i32) {
    %c0_i32 = arith.constant 0 : i32
    %c0_i32_0 = arith.constant 0 : i32
    %c0_i32_1 = arith.constant 0 : i32
    return %c0_i32, %c0_i32_0 : i32, i32
  }
  func.func @transform_4(%arg0: i32, %arg1: i32, %arg2: i32) -> (i32, i32) {
    %c0_i32 = arith.constant 0 : i32
    %c0_i32_0 = arith.constant 0 : i32
    %c0_i32_1 = arith.constant 0 : i32
    return %c0_i32, %c0_i32_0 : i32, i32
  }
  func.func @transform_5(%arg0: i32, %arg1: i32, %arg2: i32) -> (i32, i32, i32) {
    %c0_i32 = arith.constant 0 : i32
    %c0_i32_0 = arith.constant 0 : i32
    return %arg0, %arg1, %c0_i32 : i32, i32, i32
  }
}

</mosaic_0001>

<llo_original>
// kernel: attention_pallas.2
$region0: #{attention_pallas.2}
  #allocation0 [shape = 'u32[]', space=smem, size = 0x4, offset = 0x4, fixed_abs, tag = 'smem constant byte address 0x4 - core index']
  #allocation1 [shape = 'u32[144,128]{1,0:T(1,128)}', space=vmem, size = 0x12000, scoped, tag = 'internal scratch']
  %s0 = inlined_call_operand.vmem [shape: bf16[2,256,256], index: 0, kind: input, shape index: {}]
  %s1 = inlined_call_operand.vmem [shape: bf16[256,768], index: 1, kind: input, shape index: {}]
  %s2 = inlined_call_operand.vmem [shape: bf16[2,4,256,64], index: 2, kind: output, shape index: {0}]
  %s3 = inlined_call_operand.vmem [shape: bf16[2,4,256,64], index: 3, kind: output, shape index: {1}]
  %s4 = inlined_call_operand.vmem [shape: bf16[2,4,256,64], index: 4, kind: output, shape index: {2}]
  %5 = xla_tuple %s2, %s3, %s4
  %s6 = sld [smem:[#allocation0]]
  $region168: #{attention_pallas.2} parent=0
    _
  %s8 = ssub.s32 1, %s6
  %s9 = scalar_select 0, %s8, %s6
  $region1: #{attention_pallas.2} parent=0
    #allocation2 [shape = 'u8[262144]{0}', space=vmem, size = 0x40000, scoped, tag = 'output window, operand 0']
    #allocation3 [shape = 'u8[262144]{0}', space=vmem, size = 0x40000, scoped, tag = 'output window, operand 1']
    #allocation4 [shape = 'u8[262144]{0}', space=vmem, size = 0x40000, scoped, tag = 'output window, operand 2']
    loop: start=0, step=1, limit=6
    $region2: #{attention_pallas.2} parent=1 // loop_pre_header
      _
    $region3: #{attention_pallas.2} parent=1 // loop_header
      %s11 = sphi 0, %s15
      %p12 = scmp.ge.s32.totalorder %s11, 6
      %s18 = sphi 0, %s30
      %s19 = sphi 0, %s26
      %s20 = sphi 0, %s18
      %s21 = sphi 0, %s19
      %s22 = sphi 0, %s20
      %s23 = sphi 0, %s21
      %s35 = sphi 0, %s37
      %s38 = sphi 0, %s35
      %s39 = sphi 0, %s38
      %s55 = sphi 0, %s39
      %s59 = sphi 0, %s59
      %s61 = sphi 0, %s59
      %s62 = sphi 0, %s61
      %s76 = sphi 0, %s62
      %s84 = sphi 0, %s86
      %s87 = sphi 0, %s84
      %s88 = sphi 0, %s87
      %s104 = sphi 0, %s88
      %s112 = sphi 0, %s114
      %s115 = sphi 0, %s112
      %s116 = sphi 0, %s115
      %s132 = sphi 0, %s116
      %s140 = sphi 0, %s142
      %s143 = sphi 0, %s140
      %s144 = sphi 0, %s143
      %s160 = sphi 0, %s144
    $region4: #{attention_pallas.2} parent=1 // loop_header_branch
      %14 = sbr.rel (%p12) target = $region8
    $region5: #{attention_pallas.2} parent=1 // loop_body
      %s16 = ssub.s32 %s11, 1
      %s17 = ssub.s32 %s11, 2
      %s24 = sadd.s32 1, %s19
      %p25 = scmp.ge.s32.totalorder %s24, 2
      %s26 = scalar_select %p25, 0, %s24
      %s27 = sadd.s32 1, %s18
      %s28 = scalar_select %p25, %s27, %s18
      %p29 = scmp.ge.s32.totalorder %s28, 2
      %s30 = scalar_select %p29, 0, %s28
      %s31 = ssub.s32 %s18, %s30
      %s32 = ssub.s32 %s19, %s26
      %s33 = sor.u32 %s31, %s32
      %p34 = scmp.eq.s32.totalorder %s33, 0
      %s36 = sadd.s32 %s35, 1
      %s37 = scalar_select %p34, %s35, %s36
      %p40 = pneg %p34
      %p41 = scmp.eq.s32.totalorder %s11, 3
      %p42 = por %p40, %p41
      %p43 = scmp.ne.s32.totalorder %s35, %s38
      %p44 = scmp.eq.s32.totalorder %s11, 0
      %p45 = por %p43, %p44
      %p46 = scmp.ne.s32.totalorder %s35, %s38
      %p47 = scmp.eq.s32.totalorder %s16, 3
      %p48 = por %p46, %p47
      %p49 = scmp.ne.s32.totalorder %s38, %s39
      %p50 = scmp.eq.s32.totalorder %s16, 0
      %p51 = por %p49, %p50
      %p52 = scmp.ne.s32.totalorder %s38, %s39
      %p53 = scmp.eq.s32.totalorder %s17, 3
      %p54 = por %p52, %p53
      %p56 = scmp.ne.s32.totalorder %s39, %s55
      %p57 = scmp.eq.s32.totalorder %s17, 0
      %p58 = por %p56, %p57
      %s60 = sadd.s32 %s59, 1
      %p63 = scmp.eq.s32.totalorder %s11, 3
      %p64 = scmp.ne.s32.totalorder %s59, %s61
      %p65 = scmp.eq.s32.totalorder %s11, 0
      %p66 = por %p64, %p65
      %p67 = scmp.ne.s32.totalorder %s59, %s61
      %p68 = scmp.eq.s32.totalorder %s16, 3
      %p69 = por %p67, %p68
      %p70 = scmp.ne.s32.totalorder %s61, %s62
      %p71 = scmp.eq.s32.totalorder %s16, 0
      %p72 = por %p70, %p71
      %p73 = scmp.ne.s32.totalorder %s61, %s62
      %p74 = scmp.eq.s32.totalorder %s17, 3
      %p75 = por %p73, %p74
      %p77 = scmp.ne.s32.totalorder %s62, %s76
      %p78 = scmp.eq.s32.totalorder %s17, 0
      %p79 = por %p77, %p78
      %s80 = ssub.s32 %s18, %s30
      %s81 = ssub.s32 %s19, %s26
      %s82 = sor.u32 %s80, %s81
      %p83 = scmp.eq.s32.totalorder %s82, 0
      %s85 = sadd.s32 %s84, 1
      %s86 = scalar_select %p83, %s84, %s85
      %p89 = pneg %p83
      %p90 = scmp.eq.s32.totalorder %s11, 3
      %p91 = por %p89, %p90
      %p92 = scmp.ne.s32.totalorder %s84, %s87
      %p93 = scmp.eq.s32.totalorder %s11, 0
      %p94 = por %p92, %p93
      %p95 = scmp.ne.s32.totalorder %s84, %s87
      %p96 = scmp.eq.s32.totalorder %s16, 3
      %p97 = por %p95, %p96
      %p98 = scmp.ne.s32.totalorder %s87, %s88
      %p99 = scmp.eq.s32.totalorder %s16, 0
      %p100 = por %p98, %p99
      %p101 = scmp.ne.s32.totalorder %s87, %s88
      %p102 = scmp.eq.s32.totalorder %s17, 3
      %p103 = por %p101, %p102
      %p105 = scmp.ne.s32.totalorder %s88, %s104
      %p106 = scmp.eq.s32.totalorder %s17, 0
      %p107 = por %p105, %p106
      %s108 = ssub.s32 %s18, %s30
      %s109 = ssub.s32 %s19, %s26
      %s110 = sor.u32 %s108, %s109
      %p111 = scmp.eq.s32.totalorder %s110, 0
      %s113 = sadd.s32 %s112, 1
      %s114 = scalar_select %p111, %s112, %s113
      %p117 = pneg %p111
      %p118 = scmp.eq.s32.totalorder %s11, 3
      %p119 = por %p117, %p118
      %p120 = scmp.ne.s32.totalorder %s112, %s115
      %p121 = scmp.eq.s32.totalorder %s11, 0
      %p122 = por %p120, %p121
      %p123 = scmp.ne.s32.totalorder %s112, %s115
      %p124 = scmp.eq.s32.totalorder %s16, 3
      %p125 = por %p123, %p124
      %p126 = scmp.ne.s32.totalorder %s115, %s116
      %p127 = scmp.eq.s32.totalorder %s16, 0
      %p128 = por %p126, %p127
      %p129 = scmp.ne.s32.totalorder %s115, %s116
      %p130 = scmp.eq.s32.totalorder %s17, 3
      %p131 = por %p129, %p130
      %p133 = scmp.ne.s32.totalorder %s116, %s132
      %p134 = scmp.eq.s32.totalorder %s17, 0
      %p135 = por %p133, %p134
      %s136 = ssub.s32 %s18, %s30
      %s137 = ssub.s32 %s19, %s26
      %s138 = sor.u32 %s136, %s137
      %p139 = scmp.eq.s32.totalorder %s138, 0
      %s141 = sadd.s32 %s140, 1
      %s142 = scalar_select %p139, %s140, %s141
      %p145 = pneg %p139
      %p146 = scmp.eq.s32.totalorder %s11, 3
      %p147 = por %p145, %p146
      %p148 = scmp.ne.s32.totalorder %s140, %s143
      %p149 = scmp.eq.s32.totalorder %s11, 0
      %p150 = por %p148, %p149
      %p151 = scmp.ne.s32.totalorder %s140, %s143
      %p152 = scmp.eq.s32.totalorder %s16, 3
      %p153 = por %p151, %p152
      %p154 = scmp.ne.s32.totalorder %s143, %s144
      %p155 = scmp.eq.s32.totalorder %s16, 0
      %p156 = por %p154, %p155
      %p157 = scmp.ne.s32.totalorder %s143, %s144
      %p158 = scmp.eq.s32.totalorder %s17, 3
      %p159 = por %p157, %p158
      %p161 = scmp.ne.s32.totalorder %s144, %s160
      %p162 = scmp.eq.s32.totalorder %s17, 0
      %p163 = por %p161, %p162
      %p164 = scmp.le.s32.totalorder 1, %s11
      %p165 = scmp.lt.s32.totalorder %s11, 5
      %p166 = pnand %p164, %p165
      %p167 = pneg %p166
      // Predicated region
      $region9: #{attention_pallas.2} parent=5 // pred_check
        _
      $region10: #{attention_pallas.2} parent=5 // pred_check_branch
        %169 = sbr.rel (%p166) target = $region12
      $region11: #{attention_pallas.2} parent=5 // pred_region
        %s170 = ssub.s32 %s11, 1
        // Predicated region
        $region13: #{attention_pallas.2} parent=11 // pred_check
          %p171 = pneg %p72
        $region14: #{attention_pallas.2} parent=11 // pred_check_branch
          %173 = sbr.rel (%p171) target = $region16
        $region15: #{attention_pallas.2} parent=11 // pred_region
          _
        $region16: #{attention_pallas.2} parent=11 // pred_fallthru
          _
      $region12: #{attention_pallas.2} parent=5 // pred_fallthru
        _
      %p174 = scmp.lt.s32.totalorder %s11, 4
      // Predicated region
      $region17: #{attention_pallas.2} parent=5 // pred_check
        %p175 = pneg %p174
      $region18: #{attention_pallas.2} parent=5 // pred_check_branch
        %177 = sbr.rel (%p175) target = $region20
      $region19: #{attention_pallas.2} parent=5 // pred_region
        // Predicated region
        $region21: #{attention_pallas.2} parent=19 // pred_check
          %p178 = pneg %p45
        $region22: #{attention_pallas.2} parent=19 // pred_check_branch
          %180 = sbr.rel (%p178) target = $region24
        $region23: #{attention_pallas.2} parent=19 // pred_region
          %s181 = smul.u32 16, %s19
          %p182 = scmp.lt.s32.totalorder %s18, 1
          %s183 = scalar_select %p182, %s18, 1
          %p184 = scmp.lt.s32.totalorder %s181, 31
          %s185 = scalar_select %p184, %s181, 31
          %s186 = smul.addr %s185, 2
          %s187 = smul.addr %s183, 64
          %s188 = sadd.s32 %s186, %s187
          %s189 = smul.addr %s188, 4
          %s190 = scalar_lea.vmem %s0, %s189
          %s191 = smul.u32 16, %s19
        $region24: #{attention_pallas.2} parent=19 // pred_fallthru
          _
      $region20: #{attention_pallas.2} parent=5 // pred_fallthru
        _
      %p192 = scmp.le.s32.totalorder 1, %s11
      %p193 = scmp.lt.s32.totalorder %s11, 5
      %p194 = pnand %p192, %p193
      %p195 = pneg %p194
      // Predicated region
      $region25: #{attention_pallas.2} parent=5 // pred_check
        _
      $region26: #{attention_pallas.2} parent=5 // pred_check_branch
        %197 = sbr.rel (%p194) target = $region28
      $region27: #{attention_pallas.2} parent=5 // pred_region
        %s198 = ssub.s32 %s11, 1
        %s199 = smul.u32 16, %s21
        %p200 = scmp.lt.s32.totalorder %s20, 1
        %s201 = scalar_select %p200, %s20, 1
        %p202 = scmp.lt.s32.totalorder %s199, 31
        %s203 = scalar_select %p202, %s199, 31
        %s204 = smul.addr %s203, 2
        %s205 = smul.addr %s201, 64
        %s206 = sadd.s32 %s204, %s205
        %s207 = smul.addr %s206, 4
        %s208 = scalar_lea.vmem %s0, %s207
        %p209 = pneg %p51
        %p210 = pneg %p48
        %p211 = pneg %p72
        %p212 = pneg %p69
        %p213 = pneg %p100
        %p214 = pneg %p97
        %s215 = sand.u32 %s87, 1
        %s216 = sand.u32 %s87, 1
        %s217 = smul.addr %s216, 256
        %s218 = scalar_lea.vmem [#allocation2], %s217
        %p219 = pneg %p128
        %p220 = pneg %p125
        %s221 = sand.u32 %s115, 1
        %s222 = sand.u32 %s115, 1
        %s223 = smul.addr %s222, 256
        %s224 = scalar_lea.vmem [#allocation3], %s223
        %p225 = pneg %p156
        %p226 = pneg %p153
        %s227 = sand.u32 %s143, 1
        %s228 = sand.u32 %s143, 1
        %s229 = smul.addr %s228, 256
        %s230 = scalar_lea.vmem [#allocation4], %s229
        %s231 = smul.u32 16, %s21
        %p232 = scmp.lt.s32.totalorder %s20, 1
        %s233 = scalar_select %p232, %s20, 1
        %p234 = scmp.lt.s32.totalorder %s231, 31
        %s235 = scalar_select %p234, %s231, 31
        %s236 = smul.addr %s235, 2
        %s237 = smul.addr %s233, 64
        %s238 = sadd.s32 %s236, %s237
        %s239 = smul.addr %s238, 4
        %s240 = scalar_lea.vmem %s0, %s239
        %s241 = smul.u32 16, %s21
        %s242 = smul.u32 16, %s21
        %s243 = smul.u32 16, %s21
        %s244 = smul.u32 16, %s21
        %v245 = vld [vmem:[%s240] sm:$0xff]
        %v246 = vld [vmem:[%s240 + $0x8] sm:$0xff]
        %v247 = vld [vmem:[%s240 + $0x10] sm:$0xff]
        %v248 = vld [vmem:[%s240 + $0x18] sm:$0xff]
        %v249 = vld [vmem:[%s240 + $0x20] sm:$0xff]
        %v250 = vld [vmem:[%s240 + $0x28] sm:$0xff]
        %v251 = vld [vmem:[%s240 + $0x30] sm:$0xff]
        %v252 = vld [vmem:[%s240 + $0x38] sm:$0xff]
        %v253 = vld [vmem:[%s240 + $0x40] sm:$0xff]
        %v254 = vld [vmem:[%s240 + $0x48] sm:$0xff]
        %v255 = vld [vmem:[%s240 + $0x50] sm:$0xff]
        %v256 = vld [vmem:[%s240 + $0x58] sm:$0xff]
        %v257 = vld [vmem:[%s240 + $0x60] sm:$0xff]
        %v258 = vld [vmem:[%s240 + $0x68] sm:$0xff]
        %v259 = vld [vmem:[%s240 + $0x70] sm:$0xff]
        %v260 = vld [vmem:[%s240 + $0x78] sm:$0xff]
        %v261 = vld [vmem:[%s1] sm:$0xff]
        %v262 = vld [vmem:[%s1 + $0x8] sm:$0xff]
        %v263 = vld [vmem:[%s1 + $0x10] sm:$0xff]
        %v264 = vld [vmem:[%s1 + $0x18] sm:$0xff]
        %v265 = vld [vmem:[%s1 + $0x20] sm:$0xff]
        %v266 = vld [vmem:[%s1 + $0x28] sm:$0xff]
        %v267 = vld [vmem:[%s1 + $0x30] sm:$0xff]
        %v268 = vld [vmem:[%s1 + $0x38] sm:$0xff]
        %v269 = vld [vmem:[%s1 + $0x40] sm:$0xff]
        %v270 = vld [vmem:[%s1 + $0x48] sm:$0xff]
        %v271 = vld [vmem:[%s1 + $0x50] sm:$0xff]
        %v272 = vld [vmem:[%s1 + $0x58] sm:$0xff]
        %v273 = vld [vmem:[%s1 + $0x60] sm:$0xff]
        %v274 = vld [vmem:[%s1 + $0x68] sm:$0xff]
        %v275 = vld [vmem:[%s1 + $0x70] sm:$0xff]
        %v276 = vld [vmem:[%s1 + $0x78] sm:$0xff]
        %v277 = vld [vmem:[%s1 + $0x80] sm:$0xff]
        %v278 = vld [vmem:[%s1 + $0x88] sm:$0xff]
        %v279 = vld [vmem:[%s1 + $0x90] sm:$0xff]
        %v280 = vld [vmem:[%s1 + $0x98] sm:$0xff]
        %v281 = vld [vmem:[%s1 + $0xa0] sm:$0xff]
        %v282 = vld [vmem:[%s1 + $0xa8] sm:$0xff]
        %v283 = vld [vmem:[%s1 + $0xb0] sm:$0xff]
        %v284 = vld [vmem:[%s1 + $0xb8] sm:$0xff]
        %v285 = vld [vmem:[%s1 + $0xc0] sm:$0xff]
        %v286 = vld [vmem:[%s1 + $0xc8] sm:$0xff]
        %v287 = vld [vmem:[%s1 + $0xd0] sm:$0xff]
        %v288 = vld [vmem:[%s1 + $0xd8] sm:$0xff]
        %v289 = vld [vmem:[%s1 + $0xe0] sm:$0xff]
        %v290 = vld [vmem:[%s1 + $0xe8] sm:$0xff]
        %v291 = vld [vmem:[%s1 + $0xf0] sm:$0xff]
        %v292 = vld [vmem:[%s1 + $0xf8] sm:$0xff]
        %v293 = vld [vmem:[%s1 + $0x100] sm:$0xff]
        %v294 = vld [vmem:[%s1 + $0x108] sm:$0xff]
        %v295 = vld [vmem:[%s1 + $0x110] sm:$0xff]
        %v296 = vld [vmem:[%s1 + $0x118] sm:$0xff]
        %v297 = vld [vmem:[%s1 + $0x120] sm:$0xff]
        %v298 = vld [vmem:[%s1 + $0x128] sm:$0xff]
        %v299 = vld [vmem:[%s1 + $0x130] sm:$0xff]
        %v300 = vld [vmem:[%s1 + $0x138] sm:$0xff]
        %v301 = vld [vmem:[%s1 + $0x140] sm:$0xff]
        %v302 = vld [vmem:[%s1 + $0x148] sm:$0xff]
        %v303 = vld [vmem:[%s1 + $0x150] sm:$0xff]
        %v304 = vld [vmem:[%s1 + $0x158] sm:$0xff]
        %v305 = vld [vmem:[%s1 + $0x160] sm:$0xff]
        %v306 = vld [vmem:[%s1 + $0x168] sm:$0xff]
        %v307 = vld [vmem:[%s1 + $0x170] sm:$0xff]
        %v308 = vld [vmem:[%s1 + $0x178] sm:$0xff]
        %v309 = vld [vmem:[%s1 + $0x180] sm:$0xff]
        %v310 = vld [vmem:[%s1 + $0x188] sm:$0xff]
        %v311 = vld [vmem:[%s1 + $0x190] sm:$0xff]
        %v312 = vld [vmem:[%s1 + $0x198] sm:$0xff]
        %v313 = vld [vmem:[%s1 + $0x1a0] sm:$0xff]
        %v314 = vld [vmem:[%s1 + $0x1a8] sm:$0xff]
        %v315 = vld [vmem:[%s1 + $0x1b0] sm:$0xff]
        %v316 = vld [vmem:[%s1 + $0x1b8] sm:$0xff]
        %v317 = vld [vmem:[%s1 + $0x1c0] sm:$0xff]
        %v318 = vld [vmem:[%s1 + $0x1c8] sm:$0xff]
        %v319 = vld [vmem:[%s1 + $0x1d0] sm:$0xff]
        %v320 = vld [vmem:[%s1 + $0x1d8] sm:$0xff]
        %v321 = vld [vmem:[%s1 + $0x1e0] sm:$0xff]
        %v322 = vld [vmem:[%s1 + $0x1e8] sm:$0xff]
        %v323 = vld [vmem:[%s1 + $0x1f0] sm:$0xff]
        %v324 = vld [vmem:[%s1 + $0x1f8] sm:$0xff]
        %v325 = vld [vmem:[%s1 + $0x200] sm:$0xff]
        %v326 = vld [vmem:[%s1 + $0x208] sm:$0xff]
        %v327 = vld [vmem:[%s1 + $0x210] sm:$0xff]
        %v328 = vld [vmem:[%s1 + $0x218] sm:$0xff]
        %v329 = vld [vmem:[%s1 + $0x220] sm:$0xff]
        %v330 = vld [vmem:[%s1 + $0x228] sm:$0xff]
        %v331 = vld [vmem:[%s1 + $0x230] sm:$0xff]
        %v332 = vld [vmem:[%s1 + $0x238] sm:$0xff]
        %v333 = vld [vmem:[%s1 + $0x240] sm:$0xff]
        %v334 = vld [vmem:[%s1 + $0x248] sm:$0xff]
        %v335 = vld [vmem:[%s1 + $0x250] sm:$0xff]
        %v336 = vld [vmem:[%s1 + $0x258] sm:$0xff]
        %v337 = vld [vmem:[%s1 + $0x260] sm:$0xff]
        %v338 = vld [vmem:[%s1 + $0x268] sm:$0xff]
        %v339 = vld [vmem:[%s1 + $0x270] sm:$0xff]
        %v340 = vld [vmem:[%s1 + $0x278] sm:$0xff]
        %v341 = vld [vmem:[%s1 + $0x280] sm:$0xff]
        %v342 = vld [vmem:[%s1 + $0x288] sm:$0xff]
        %v343 = vld [vmem:[%s1 + $0x290] sm:$0xff]
        %v344 = vld [vmem:[%s1 + $0x298] sm:$0xff]
        %v345 = vld [vmem:[%s1 + $0x2a0] sm:$0xff]
        %v346 = vld [vmem:[%s1 + $0x2a8] sm:$0xff]
        %v347 = vld [vmem:[%s1 + $0x2b0] sm:$0xff]
        %v348 = vld [vmem:[%s1 + $0x2b8] sm:$0xff]
        %v349 = vld [vmem:[%s1 + $0x2c0] sm:$0xff]
        %v350 = vld [vmem:[%s1 + $0x2c8] sm:$0xff]
        %v351 = vld [vmem:[%s1 + $0x2d0] sm:$0xff]
        %v352 = vld [vmem:[%s1 + $0x2d8] sm:$0xff]
        %v353 = vld [vmem:[%s1 + $0x2e0] sm:$0xff]
        %v354 = vld [vmem:[%s1 + $0x2e8] sm:$0xff]
        %v355 = vld [vmem:[%s1 + $0x2f0] sm:$0xff]
        %v356 = vld [vmem:[%s1 + $0x2f8] sm:$0xff]
        %v373 = vunpack.c.l.b16 %v245
        %v374 = vunpack.c.h.b16 %v245
        %v375 = vunpack.c.l.b16 %v246
        %v376 = vunpack.c.h.b16 %v246
        %v377 = vunpack.c.l.b16 %v247
        %v378 = vunpack.c.h.b16 %v247
        %v379 = vunpack.c.l.b16 %v248
        %v380 = vunpack.c.h.b16 %v248
        %v381 = vunpack.c.l.b16 %v249
        %v382 = vunpack.c.h.b16 %v249
        %v383 = vunpack.c.l.b16 %v250
        %v384 = vunpack.c.h.b16 %v250
        %v385 = vunpack.c.l.b16 %v251
        %v386 = vunpack.c.h.b16 %v251
        %v387 = vunpack.c.l.b16 %v252
        %v388 = vunpack.c.h.b16 %v252
        %v389 = vunpack.c.l.b16 %v253
        %v390 = vunpack.c.h.b16 %v253
        %v391 = vunpack.c.l.b16 %v254
        %v392 = vunpack.c.h.b16 %v254
        %v393 = vunpack.c.l.b16 %v255
        %v394 = vunpack.c.h.b16 %v255
        %v395 = vunpack.c.l.b16 %v256
        %v396 = vunpack.c.h.b16 %v256
        %v397 = vunpack.c.l.b16 %v257
        %v398 = vunpack.c.h.b16 %v257
        %v399 = vunpack.c.l.b16 %v258
        %v400 = vunpack.c.h.b16 %v258
        %v401 = vunpack.c.l.b16 %v259
        %v402 = vunpack.c.h.b16 %v259
        %v403 = vunpack.c.l.b16 %v260
        %v404 = vunpack.c.h.b16 %v260
        %v405 = vpack.c.b16 %v375, %v373
        %v406 = vpack.c.b16 %v376, %v374
        %v407 = vpack.c.b16 %v379, %v377
        %v408 = vpack.c.b16 %v380, %v378
        %v409 = vpack.c.b16 %v383, %v381
        %v410 = vpack.c.b16 %v384, %v382
        %v411 = vpack.c.b16 %v387, %v385
        %v412 = vpack.c.b16 %v388, %v386
        %v413 = vpack.c.b16 %v391, %v389
        %v414 = vpack.c.b16 %v392, %v390
        %v415 = vpack.c.b16 %v395, %v393
        %v416 = vpack.c.b16 %v396, %v394
        %v417 = vpack.c.b16 %v399, %v397
        %v418 = vpack.c.b16 %v400, %v398
        %v419 = vpack.c.b16 %v403, %v401
        %v420 = vpack.c.b16 %v404, %v402
        %v533 = vunpack.c.l.b16 %v261
        %v534 = vunpack.c.h.b16 %v261
        %v535 = vunpack.c.l.b16 %v262
        %v536 = vunpack.c.h.b16 %v262
        %v537 = vunpack.c.l.b16 %v263
        %v538 = vunpack.c.h.b16 %v263
        %v539 = vunpack.c.l.b16 %v264
        %v540 = vunpack.c.h.b16 %v264
        %v541 = vunpack.c.l.b16 %v265
        %v542 = vunpack.c.h.b16 %v265
        %v543 = vunpack.c.l.b16 %v266
        %v544 = vunpack.c.h.b16 %v266
        %v545 = vunpack.c.l.b16 %v267
        %v546 = vunpack.c.h.b16 %v267
        %v547 = vunpack.c.l.b16 %v268
        %v548 = vunpack.c.h.b16 %v268
        %v549 = vunpack.c.l.b16 %v269
        %v550 = vunpack.c.h.b16 %v269
        %v551 = vunpack.c.l.b16 %v270
        %v552 = vunpack.c.h.b16 %v270
        %v553 = vunpack.c.l.b16 %v271
        %v554 = vunpack.c.h.b16 %v271
        %v555 = vunpack.c.l.b16 %v272
        %v556 = vunpack.c.h.b16 %v272
        %v557 = vunpack.c.l.b16 %v273
        %v558 = vunpack.c.h.b16 %v273
        %v559 = vunpack.c.l.b16 %v274
        %v560 = vunpack.c.h.b16 %v274
        %v561 = vunpack.c.l.b16 %v275
        %v562 = vunpack.c.h.b16 %v275
        %v563 = vunpack.c.l.b16 %v276
        %v564 = vunpack.c.h.b16 %v276
        %v565 = vunpack.c.l.b16 %v277
        %v566 = vunpack.c.h.b16 %v277
        %v567 = vunpack.c.l.b16 %v278
        %v568 = vunpack.c.h.b16 %v278
        %v569 = vunpack.c.l.b16 %v279
        %v570 = vunpack.c.h.b16 %v279
        %v571 = vunpack.c.l.b16 %v280
        %v572 = vunpack.c.h.b16 %v280
        %v573 = vunpack.c.l.b16 %v281
        %v574 = vunpack.c.h.b16 %v281
        %v575 = vunpack.c.l.b16 %v282
        %v576 = vunpack.c.h.b16 %v282
        %v577 = vunpack.c.l.b16 %v283
        %v578 = vunpack.c.h.b16 %v283
        %v579 = vunpack.c.l.b16 %v284
        %v580 = vunpack.c.h.b16 %v284
        %v581 = vunpack.c.l.b16 %v285
        %v582 = vunpack.c.h.b16 %v285
        %v583 = vunpack.c.l.b16 %v286
        %v584 = vunpack.c.h.b16 %v286
        %v585 = vunpack.c.l.b16 %v287
        %v586 = vunpack.c.h.b16 %v287
        %v587 = vunpack.c.l.b16 %v288
        %v588 = vunpack.c.h.b16 %v288
        %v589 = vunpack.c.l.b16 %v289
        %v590 = vunpack.c.h.b16 %v289
        %v591 = vunpack.c.l.b16 %v290
        %v592 = vunpack.c.h.b16 %v290
        %v593 = vunpack.c.l.b16 %v291
        %v594 = vunpack.c.h.b16 %v291
        %v595 = vunpack.c.l.b16 %v292
        %v596 = vunpack.c.h.b16 %v292
        %v597 = vunpack.c.l.b16 %v293
        %v598 = vunpack.c.h.b16 %v293
        %v599 = vunpack.c.l.b16 %v294
        %v600 = vunpack.c.h.b16 %v294
        %v601 = vunpack.c.l.b16 %v295
        %v602 = vunpack.c.h.b16 %v295
        %v603 = vunpack.c.l.b16 %v296
        %v604 = vunpack.c.h.b16 %v296
        %v605 = vunpack.c.l.b16 %v297
        %v606 = vunpack.c.h.b16 %v297
        %v607 = vunpack.c.l.b16 %v298
        %v608 = vunpack.c.h.b16 %v298
        %v609 = vunpack.c.l.b16 %v299
        %v610 = vunpack.c.h.b16 %v299
        %v611 = vunpack.c.l.b16 %v300
        %v612 = vunpack.c.h.b16 %v300
        %v613 = vunpack.c.l.b16 %v301
        %v614 = vunpack.c.h.b16 %v301
        %v615 = vunpack.c.l.b16 %v302
        %v616 = vunpack.c.h.b16 %v302
        %v617 = vunpack.c.l.b16 %v303
        %v618 = vunpack.c.h.b16 %v303
        %v619 = vunpack.c.l.b16 %v304
        %v620 = vunpack.c.h.b16 %v304
        %v621 = vunpack.c.l.b16 %v305
        %v622 = vunpack.c.h.b16 %v305
        %v623 = vunpack.c.l.b16 %v306
        %v624 = vunpack.c.h.b16 %v306
        %v625 = vunpack.c.l.b16 %v307
        %v626 = vunpack.c.h.b16 %v307
        %v627 = vunpack.c.l.b16 %v308
        %v628 = vunpack.c.h.b16 %v308
        %v629 = vunpack.c.l.b16 %v309
        %v630 = vunpack.c.h.b16 %v309
        %v631 = vunpack.c.l.b16 %v310
        %v632 = vunpack.c.h.b16 %v310
        %v633 = vunpack.c.l.b16 %v311
        %v634 = vunpack.c.h.b16 %v311
        %v635 = vunpack.c.l.b16 %v312
        %v636 = vunpack.c.h.b16 %v312
        %v637 = vunpack.c.l.b16 %v313
        %v638 = vunpack.c.h.b16 %v313
        %v639 = vunpack.c.l.b16 %v314
        %v640 = vunpack.c.h.b16 %v314
        %v641 = vunpack.c.l.b16 %v315
        %v642 = vunpack.c.h.b16 %v315
        %v643 = vunpack.c.l.b16 %v316
        %v644 = vunpack.c.h.b16 %v316
        %v645 = vunpack.c.l.b16 %v317
        %v646 = vunpack.c.h.b16 %v317
        %v647 = vunpack.c.l.b16 %v318
        %v648 = vunpack.c.h.b16 %v318
        %v649 = vunpack.c.l.b16 %v319
        %v650 = vunpack.c.h.b16 %v319
        %v651 = vunpack.c.l.b16 %v320
        %v652 = vunpack.c.h.b16 %v320
        %v653 = vunpack.c.l.b16 %v321
        %v654 = vunpack.c.h.b16 %v321
        %v655 = vunpack.c.l.b16 %v322
        %v656 = vunpack.c.h.b16 %v322
        %v657 = vunpack.c.l.b16 %v323
        %v658 = vunpack.c.h.b16 %v323
        %v659 = vunpack.c.l.b16 %v324
        %v660 = vunpack.c.h.b16 %v324
        %v661 = vunpack.c.l.b16 %v325
        %v662 = vunpack.c.h.b16 %v325
        %v663 = vunpack.c.l.b16 %v326
        %v664 = vunpack.c.h.b16 %v326
        %v665 = vunpack.c.l.b16 %v327
        %v666 = vunpack.c.h.b16 %v327
        %v667 = vunpack.c.l.b16 %v328
        %v668 = vunpack.c.h.b16 %v328
        %v669 = vunpack.c.l.b16 %v329
        %v670 = vunpack.c.h.b16 %v329
        %v671 = vunpack.c.l.b16 %v330
        %v672 = vunpack.c.h.b16 %v330
        %v673 = vunpack.c.l.b16 %v331
        %v674 = vunpack.c.h.b16 %v331
        %v675 = vunpack.c.l.b16 %v332
        %v676 = vunpack.c.h.b16 %v332
        %v677 = vunpack.c.l.b16 %v333
        %v678 = vunpack.c.h.b16 %v333
        %v679 = vunpack.c.l.b16 %v334
        %v680 = vunpack.c.h.b16 %v334
        %v681 = vunpack.c.l.b16 %v335
        %v682 = vunpack.c.h.b16 %v335
        %v683 = vunpack.c.l.b16 %v336
        %v684 = vunpack.c.h.b16 %v336
        %v685 = vunpack.c.l.b16 %v337
        %v686 = vunpack.c.h.b16 %v337
        %v687 = vunpack.c.l.b16 %v338
        %v688 = vunpack.c.h.b16 %v338
        %v689 = vunpack.c.l.b16 %v339
        %v690 = vunpack.c.h.b16 %v339
        %v691 = vunpack.c.l.b16 %v340
        %v692 = vunpack.c.h.b16 %v340
        %v693 = vunpack.c.l.b16 %v341
        %v694 = vunpack.c.h.b16 %v341
        %v695 = vunpack.c.l.b16 %v342
        %v696 = vunpack.c.h.b16 %v342
        %v697 = vunpack.c.l.b16 %v343
        %v698 = vunpack.c.h.b16 %v343
        %v699 = vunpack.c.l.b16 %v344
        %v700 = vunpack.c.h.b16 %v344
        %v701 = vunpack.c.l.b16 %v345
        %v702 = vunpack.c.h.b16 %v345
        %v703 = vunpack.c.l.b16 %v346
        %v704 = vunpack.c.h.b16 %v346
        %v705 = vunpack.c.l.b16 %v347
        %v706 = vunpack.c.h.b16 %v347
        %v707 = vunpack.c.l.b16 %v348
        %v708 = vunpack.c.h.b16 %v348
        %v709 = vunpack.c.l.b16 %v349
        %v710 = vunpack.c.h.b16 %v349
        %v711 = vunpack.c.l.b16 %v350
        %v712 = vunpack.c.h.b16 %v350
        %v713 = vunpack.c.l.b16 %v351
        %v714 = vunpack.c.h.b16 %v351
        %v715 = vunpack.c.l.b16 %v352
        %v716 = vunpack.c.h.b16 %v352
        %v717 = vunpack.c.l.b16 %v353
        %v718 = vunpack.c.h.b16 %v353
        %v719 = vunpack.c.l.b16 %v354
        %v720 = vunpack.c.h.b16 %v354
        %v721 = vunpack.c.l.b16 %v355
        %v722 = vunpack.c.h.b16 %v355
        %v723 = vunpack.c.l.b16 %v356
        %v724 = vunpack.c.h.b16 %v356
        %v725 = vpack.c.b16 %v539, %v533
        %v726 = vpack.c.b16 %v540, %v534
        %v727 = vpack.c.b16 %v541, %v535
        %v728 = vpack.c.b16 %v542, %v536
        %v729 = vpack.c.b16 %v543, %v537
        %v730 = vpack.c.b16 %v544, %v538
        %v731 = vpack.c.b16 %v551, %v545
        %v732 = vpack.c.b16 %v552, %v546
        %v733 = vpack.c.b16 %v553, %v547
        %v734 = vpack.c.b16 %v554, %v548
        %v735 = vpack.c.b16 %v555, %v549
        %v736 = vpack.c.b16 %v556, %v550
        %v737 = vpack.c.b16 %v563, %v557
        %v738 = vpack.c.b16 %v564, %v558
        %v739 = vpack.c.b16 %v565, %v559
        %v740 = vpack.c.b16 %v566, %v560
        %v741 = vpack.c.b16 %v567, %v561
        %v742 = vpack.c.b16 %v568, %v562
        %v743 = vpack.c.b16 %v575, %v569
        %v744 = vpack.c.b16 %v576, %v570
        %v745 = vpack.c.b16 %v577, %v571
        %v746 = vpack.c.b16 %v578, %v572
        %v747 = vpack.c.b16 %v579, %v573
        %v748 = vpack.c.b16 %v580, %v574
        %v749 = vpack.c.b16 %v587, %v581
        %v750 = vpack.c.b16 %v588, %v582
        %v751 = vpack.c.b16 %v589, %v583
        %v752 = vpack.c.b16 %v590, %v584
        %v753 = vpack.c.b16 %v591, %v585
        %v754 = vpack.c.b16 %v592, %v586
        %v755 = vpack.c.b16 %v599, %v593
        %v756 = vpack.c.b16 %v600, %v594
        %v757 = vpack.c.b16 %v601, %v595
        %v758 = vpack.c.b16 %v602, %v596
        %v759 = vpack.c.b16 %v603, %v597
        %v760 = vpack.c.b16 %v604, %v598
        %v761 = vpack.c.b16 %v611, %v605
        %v762 = vpack.c.b16 %v612, %v606
        %v763 = vpack.c.b16 %v613, %v607
        %v764 = vpack.c.b16 %v614, %v608
        %v765 = vpack.c.b16 %v615, %v609
        %v766 = vpack.c.b16 %v616, %v610
        %v767 = vpack.c.b16 %v623, %v617
        %v768 = vpack.c.b16 %v624, %v618
        %v769 = vpack.c.b16 %v625, %v619
        %v770 = vpack.c.b16 %v626, %v620
        %v771 = vpack.c.b16 %v627, %v621
        %v772 = vpack.c.b16 %v628, %v622
        %v773 = vpack.c.b16 %v635, %v629
        %v774 = vpack.c.b16 %v636, %v630
        %v775 = vpack.c.b16 %v637, %v631
        %v776 = vpack.c.b16 %v638, %v632
        %v777 = vpack.c.b16 %v639, %v633
        %v778 = vpack.c.b16 %v640, %v634
        %v779 = vpack.c.b16 %v647, %v641
        %v780 = vpack.c.b16 %v648, %v642
        %v781 = vpack.c.b16 %v649, %v643
        %v782 = vpack.c.b16 %v650, %v644
        %v783 = vpack.c.b16 %v651, %v645
        %v784 = vpack.c.b16 %v652, %v646
        %v785 = vpack.c.b16 %v659, %v653
        %v786 = vpack.c.b16 %v660, %v654
        %v787 = vpack.c.b16 %v661, %v655
        %v788 = vpack.c.b16 %v662, %v656
        %v789 = vpack.c.b16 %v663, %v657
        %v790 = vpack.c.b16 %v664, %v658
        %v791 = vpack.c.b16 %v671, %v665
        %v792 = vpack.c.b16 %v672, %v666
        %v793 = vpack.c.b16 %v673, %v667
        %v794 = vpack.c.b16 %v674, %v668
        %v795 = vpack.c.b16 %v675, %v669
        %v796 = vpack.c.b16 %v676, %v670
        %v797 = vpack.c.b16 %v683, %v677
        %v798 = vpack.c.b16 %v684, %v678
        %v799 = vpack.c.b16 %v685, %v679
        %v800 = vpack.c.b16 %v686, %v680
        %v801 = vpack.c.b16 %v687, %v681
        %v802 = vpack.c.b16 %v688, %v682
        %v803 = vpack.c.b16 %v695, %v689
        %v804 = vpack.c.b16 %v696, %v690
        %v805 = vpack.c.b16 %v697, %v691
        %v806 = vpack.c.b16 %v698, %v692
        %v807 = vpack.c.b16 %v699, %v693
        %v808 = vpack.c.b16 %v700, %v694
        %v809 = vpack.c.b16 %v707, %v701
        %v810 = vpack.c.b16 %v708, %v702
        %v811 = vpack.c.b16 %v709, %v703
        %v812 = vpack.c.b16 %v710, %v704
        %v813 = vpack.c.b16 %v711, %v705
        %v814 = vpack.c.b16 %v712, %v706
        %v815 = vpack.c.b16 %v719, %v713
        %v816 = vpack.c.b16 %v720, %v714
        %v817 = vpack.c.b16 %v721, %v715
        %v818 = vpack.c.b16 %v722, %v716
        %v819 = vpack.c.b16 %v723, %v717
        %v820 = vpack.c.b16 %v724, %v718
        %917 = vmatprep.subr.bf16.mxu0 %v726
        %918 = vmatpush1.bf16.msra.mxu0 %v725
        %919 = vmatprep.subr.bf16.mxu0 %v732
        %920 = vmatpush1.bf16.msra.mxu0 %v731
        %921 = vmatprep.subr.bf16.mxu0 %v738
        %922 = vmatpush1.bf16.msra.mxu0 %v737
        %923 = vmatprep.subr.bf16.mxu0 %v744
        %924 = vmatpush1.bf16.msra.mxu0 %v743
        %925 = vmatprep.subr.bf16.mxu0 %v750
        %926 = vmatpush1.bf16.msra.mxu0 %v749
        %927 = vmatprep.subr.bf16.mxu0 %v756
        %928 = vmatpush1.bf16.msra.mxu0 %v755
        %929 = vmatprep.subr.bf16.mxu0 %v762
        %930 = vmatpush1.bf16.msra.mxu0 %v761
        %931 = vmatprep.subr.bf16.mxu0 %v768
        %932 = vmatpush1.bf16.msra.mxu0 %v767
        %933 = vmatprep.subr.bf16.mxu0 %v774
        %934 = vmatpush1.bf16.msra.mxu0 %v773
        %935 = vmatprep.subr.bf16.mxu0 %v780
        %936 = vmatpush1.bf16.msra.mxu0 %v779
        %937 = vmatprep.subr.bf16.mxu0 %v786
        %938 = vmatpush1.bf16.msra.mxu0 %v785
        %939 = vmatprep.subr.bf16.mxu0 %v792
        %940 = vmatpush1.bf16.msra.mxu0 %v791
        %941 = vmatprep.subr.bf16.mxu0 %v798
        %942 = vmatpush1.bf16.msra.mxu0 %v797
        %943 = vmatprep.subr.bf16.mxu0 %v804
        %944 = vmatpush1.bf16.msra.mxu0 %v803
        %945 = vmatprep.subr.bf16.mxu0 %v810
        %946 = vmatpush1.bf16.msra.mxu0 %v809
        %947 = vmatprep.subr.bf16.mxu0 %v816
        %948 = vmatpush1.bf16.msra.mxu0 %v815
        %949 = vmatprep.mubr.bf16.mxu0 %v406
        %950 = vmatmul.mubr.bf16.gmra.mrb[0].mxu0 %v405
        %v951 = vpop.f32.mrb[0].mxu0
        %v952 = vadd.f32 0.0, %v951
        %v953 = vpop.f32.mrb[0].mxu0
        %v954 = vadd.f32 0.0, %v953
        %v955 = vpop.f32.mrb[0].mxu0
        %v956 = vadd.f32 0.0, %v955
        %v957 = vpop.f32.mrb[0].mxu0
        %v958 = vadd.f32 0.0, %v957
        %959 = vmatprep.mubr.bf16.mxu0 %v408
        %960 = vmatmul.mubr.bf16.gmra.mrb[0].mxu0 %v407
        %v961 = vpop.f32.mrb[0].mxu0
        %v962 = vadd.f32 0.0, %v961
        %v963 = vpop.f32.mrb[0].mxu0
        %v964 = vadd.f32 0.0, %v963
        %v965 = vpop.f32.mrb[0].mxu0
        %v966 = vadd.f32 0.0, %v965
        %v967 = vpop.f32.mrb[0].mxu0
        %v968 = vadd.f32 0.0, %v967
        %969 = vmatprep.mubr.bf16.mxu0 %v410
        %970 = vmatmul.mubr.bf16.gmra.mrb[0].mxu0 %v409
        %v971 = vpop.f32.mrb[0].mxu0
        %v972 = vadd.f32 0.0, %v971
        %v973 = vpop.f32.mrb[0].mxu0
        %v974 = vadd.f32 0.0, %v973
        %v975 = vpop.f32.mrb[0].mxu0
        %v976 = vadd.f32 0.0, %v975
        %v977 = vpop.f32.mrb[0].mxu0
        %v978 = vadd.f32 0.0, %v977
        %979 = vmatprep.mubr.bf16.mxu0 %v412
        %980 = vmatmul.mubr.bf16.gmra.mrb[0].mxu0 %v411
        %v981 = vpop.f32.mrb[0].mxu0
        %v982 = vadd.f32 0.0, %v981
        %v983 = vpop.f32.mrb[0].mxu0
        %v984 = vadd.f32 0.0, %v983
        %v985 = vpop.f32.mrb[0].mxu0
        %v986 = vadd.f32 0.0, %v985
        %v987 = vpop.f32.mrb[0].mxu0
        %v988 = vadd.f32 0.0, %v987
        %989 = vmatprep.mubr.bf16.mxu0 %v414
        %990 = vmatmul.mubr.bf16.gmra.mrb[0].mxu0 %v413
        %v991 = vpop.f32.mrb[0].mxu0
        %v992 = vadd.f32 0.0, %v991
        %v993 = vpop.f32.mrb[0].mxu0
        %v994 = vadd.f32 0.0, %v993
        %v995 = vpop.f32.mrb[0].mxu0
        %v996 = vadd.f32 0.0, %v995
        %v997 = vpop.f32.mrb[0].mxu0
        %v998 = vadd.f32 0.0, %v997
        %999 = vmatprep.mubr.bf16.mxu0 %v416
        %1000 = vmatmul.mubr.bf16.gmra.mrb[0].mxu0 %v415
        %v1001 = vpop.f32.mrb[0].mxu0
        %v1002 = vadd.f32 0.0, %v1001
        %v1003 = vpop.f32.mrb[0].mxu0
        %v1004 = vadd.f32 0.0, %v1003
        %v1005 = vpop.f32.mrb[0].mxu0
        %v1006 = vadd.f32 0.0, %v1005
        %v1007 = vpop.f32.mrb[0].mxu0
        %v1008 = vadd.f32 0.0, %v1007
        %1009 = vmatprep.mubr.bf16.mxu0 %v418
        %1010 = vmatmul.mubr.bf16.gmra.mrb[0].mxu0 %v417
        %v1011 = vpop.f32.mrb[0].mxu0
        %v1012 = vadd.f32 0.0, %v1011
        %v1013 = vpop.f32.mrb[0].mxu0
        %v1014 = vadd.f32 0.0, %v1013
        %v1015 = vpop.f32.mrb[0].mxu0
        %v1016 = vadd.f32 0.0, %v1015
        %v1017 = vpop.f32.mrb[0].mxu0
        %v1018 = vadd.f32 0.0, %v1017
        %1019 = vmatprep.mubr.bf16.mxu0 %v420
        %1020 = vmatmul.mubr.bf16.gmra.mrb[0].mxu0 %v419
        %v1021 = vpop.f32.mrb[0].mxu0
        %v1022 = vadd.f32 0.0, %v1021
        %v1023 = vpop.f32.mrb[0].mxu0
        %v1024 = vadd.f32 0.0, %v1023
        %v1025 = vpop.f32.mrb[0].mxu0
        %v1026 = vadd.f32 0.0, %v1025
        %v1027 = vpop.f32.mrb[0].mxu0
        %v1028 = vadd.f32 0.0, %v1027
        %1029 = vdwg.mxu0
        %1030 = vmatprep.subr.bf16.mxu0 %v728
        %1031 = vmatpush1.bf16.msra.mxu0 %v727
        %1032 = vmatprep.subr.bf16.mxu0 %v734
        %1033 = vmatpush1.bf16.msra.mxu0 %v733
        %1034 = vmatprep.subr.bf16.mxu0 %v740
        %1035 = vmatpush1.bf16.msra.mxu0 %v739
        %1036 = vmatprep.subr.bf16.mxu0 %v746
        %1037 = vmatpush1.bf16.msra.mxu0 %v745
        %1038 = vmatprep.subr.bf16.mxu0 %v752
        %1039 = vmatpush1.bf16.msra.mxu0 %v751
        %1040 = vmatprep.subr.bf16.mxu0 %v758
        %1041 = vmatpush1.bf16.msra.mxu0 %v757
        %1042 = vmatprep.subr.bf16.mxu0 %v764
        %1043 = vmatpush1.bf16.msra.mxu0 %v763
        %1044 = vmatprep.subr.bf16.mxu0 %v770
        %1045 = vmatpush1.bf16.msra.mxu0 %v769
        %1046 = vmatprep.subr.bf16.mxu0 %v776
        %1047 = vmatpush1.bf16.msra.mxu0 %v775
        %1048 = vmatprep.subr.bf16.mxu0 %v782
        %1049 = vmatpush1.bf16.msra.mxu0 %v781
        %1050 = vmatprep.subr.bf16.mxu0 %v788
        %1051 = vmatpush1.bf16.msra.mxu0 %v787
        %1052 = vmatprep.subr.bf16.mxu0 %v794
        %1053 = vmatpush1.bf16.msra.mxu0 %v793
        %1054 = vmatprep.subr.bf16.mxu0 %v800
        %1055 = vmatpush1.bf16.msra.mxu0 %v799
        %1056 = vmatprep.subr.bf16.mxu0 %v806
        %1057 = vmatpush1.bf16.msra.mxu0 %v805
        %1058 = vmatprep.subr.bf16.mxu0 %v812
        %1059 = vmatpush1.bf16.msra.mxu0 %v811
        %1060 = vmatprep.subr.bf16.mxu0 %v818
        %1061 = vmatpush1.bf16.msra.mxu0 %v817
        %1062 = vmatprep.mubr.bf16.mxu0 %v406
        %1063 = vmatmul.mubr.bf16.gmra.mrb[0].mxu0 %v405
        %v1064 = vpop.f32.mrb[0].mxu0
        %v1065 = vadd.f32 0.0, %v1064
        %v1066 = vpop.f32.mrb[0].mxu0
        %v1067 = vadd.f32 0.0, %v1066
        %v1068 = vpop.f32.mrb[0].mxu0
        %v1069 = vadd.f32 0.0, %v1068
        %v1070 = vpop.f32.mrb[0].mxu0
        %v1071 = vadd.f32 0.0, %v1070
        %1072 = vmatprep.mubr.bf16.mxu0 %v408
        %1073 = vmatmul.mubr.bf16.gmra.mrb[0].mxu0 %v407
        %v1074 = vpop.f32.mrb[0].mxu0
        %v1075 = vadd.f32 0.0, %v1074
        %v1076 = vpop.f32.mrb[0].mxu0
        %v1077 = vadd.f32 0.0, %v1076
        %v1078 = vpop.f32.mrb[0].mxu0
        %v1079 = vadd.f32 0.0, %v1078
        %v1080 = vpop.f32.mrb[0].mxu0
        %v1081 = vadd.f32 0.0, %v1080
        %1082 = vmatprep.mubr.bf16.mxu0 %v410
        %1083 = vmatmul.mubr.bf16.gmra.mrb[0].mxu0 %v409
        %v1084 = vpop.f32.mrb[0].mxu0
        %v1085 = vadd.f32 0.0, %v1084
        %v1086 = vpop.f32.mrb[0].mxu0
        %v1087 = vadd.f32 0.0, %v1086
        %v1088 = vpop.f32.mrb[0].mxu0
        %v1089 = vadd.f32 0.0, %v1088
        %v1090 = vpop.f32.mrb[0].mxu0
        %v1091 = vadd.f32 0.0, %v1090
        %1092 = vmatprep.mubr.bf16.mxu0 %v412
        %1093 = vmatmul.mubr.bf16.gmra.mrb[0].mxu0 %v411
        %v1094 = vpop.f32.mrb[0].mxu0
        %v1095 = vadd.f32 0.0, %v1094
        %v1096 = vpop.f32.mrb[0].mxu0
        %v1097 = vadd.f32 0.0, %v1096
        %v1098 = vpop.f32.mrb[0].mxu0
        %v1099 = vadd.f32 0.0, %v1098
        %v1100 = vpop.f32.mrb[0].mxu0
        %v1101 = vadd.f32 0.0, %v1100
        %1102 = vmatprep.mubr.bf16.mxu0 %v414
        %1103 = vmatmul.mubr.bf16.gmra.mrb[0].mxu0 %v413
        %v1104 = vpop.f32.mrb[0].mxu0
        %v1105 = vadd.f32 0.0, %v1104
        %v1106 = vpop.f32.mrb[0].mxu0
        %v1107 = vadd.f32 0.0, %v1106
        %v1108 = vpop.f32.mrb[0].mxu0
        %v1109 = vadd.f32 0.0, %v1108
        %v1110 = vpop.f32.mrb[0].mxu0
        %v1111 = vadd.f32 0.0, %v1110
        %1112 = vmatprep.mubr.bf16.mxu0 %v416
        %1113 = vmatmul.mubr.bf16.gmra.mrb[0].mxu0 %v415
        %v1114 = vpop.f32.mrb[0].mxu0
        %v1115 = vadd.f32 0.0, %v1114
        %v1116 = vpop.f32.mrb[0].mxu0
        %v1117 = vadd.f32 0.0, %v1116
        %v1118 = vpop.f32.mrb[0].mxu0
        %v1119 = vadd.f32 0.0, %v1118
        %v1120 = vpop.f32.mrb[0].mxu0
        %v1121 = vadd.f32 0.0, %v1120
        %1122 = vmatprep.mubr.bf16.mxu0 %v418
        %1123 = vmatmul.mubr.bf16.gmra.mrb[0].mxu0 %v417
        %v1124 = vpop.f32.mrb[0].mxu0
        %v1125 = vadd.f32 0.0, %v1124
        %v1126 = vpop.f32.mrb[0].mxu0
        %v1127 = vadd.f32 0.0, %v1126
        %v1128 = vpop.f32.mrb[0].mxu0
        %v1129 = vadd.f32 0.0, %v1128
        %v1130 = vpop.f32.mrb[0].mxu0
        %v1131 = vadd.f32 0.0, %v1130
        %1132 = vmatprep.mubr.bf16.mxu0 %v420
        %1133 = vmatmul.mubr.bf16.gmra.mrb[0].mxu0 %v419
        %v1134 = vpop.f32.mrb[0].mxu0
        %v1135 = vadd.f32 0.0, %v1134
        %v1136 = vpop.f32.mrb[0].mxu0
        %v1137 = vadd.f32 0.0, %v1136
        %v1138 = vpop.f32.mrb[0].mxu0
        %v1139 = vadd.f32 0.0, %v1138
        %v1140 = vpop.f32.mrb[0].mxu0
        %v1141 = vadd.f32 0.0, %v1140
        %1142 = vdwg.mxu0
        %1143 = vmatprep.subr.bf16.mxu0 %v730
        %1144 = vmatpush1.bf16.msra.mxu0 %v729
        %1145 = vmatprep.subr.bf16.mxu0 %v736
        %1146 = vmatpush1.bf16.msra.mxu0 %v735
        %1147 = vmatprep.subr.bf16.mxu0 %v742
        %1148 = vmatpush1.bf16.msra.mxu0 %v741
        %1149 = vmatprep.subr.bf16.mxu0 %v748
        %1150 = vmatpush1.bf16.msra.mxu0 %v747
        %1151 = vmatprep.subr.bf16.mxu0 %v754
        %1152 = vmatpush1.bf16.msra.mxu0 %v753
        %1153 = vmatprep.subr.bf16.mxu0 %v760
        %1154 = vmatpush1.bf16.msra.mxu0 %v759
        %1155 = vmatprep.subr.bf16.mxu0 %v766
        %1156 = vmatpush1.bf16.msra.mxu0 %v765
        %1157 = vmatprep.subr.bf16.mxu0 %v772
        %1158 = vmatpush1.bf16.msra.mxu0 %v771
        %1159 = vmatprep.subr.bf16.mxu0 %v778
        %1160 = vmatpush1.bf16.msra.mxu0 %v777
        %1161 = vmatprep.subr.bf16.mxu0 %v784
        %1162 = vmatpush1.bf16.msra.mxu0 %v783
        %1163 = vmatprep.subr.bf16.mxu0 %v790
        %1164 = vmatpush1.bf16.msra.mxu0 %v789
        %1165 = vmatprep.subr.bf16.mxu0 %v796
        %1166 = vmatpush1.bf16.msra.mxu0 %v795
        %1167 = vmatprep.subr.bf16.mxu0 %v802
        %1168 = vmatpush1.bf16.msra.mxu0 %v801
        %1169 = vmatprep.subr.bf16.mxu0 %v808
        %1170 = vmatpush1.bf16.msra.mxu0 %v807
        %1171 = vmatprep.subr.bf16.mxu0 %v814
        %1172 = vmatpush1.bf16.msra.mxu0 %v813
        %1173 = vmatprep.subr.bf16.mxu0 %v820
        %1174 = vmatpush1.bf16.msra.mxu0 %v819
        %1175 = vmatprep.mubr.bf16.mxu0 %v406
        %1176 = vmatmul.mubr.bf16.gmra.mrb[0].mxu0 %v405
        %v1177 = vpop.f32.mrb[0].mxu0
        %v1178 = vadd.f32 0.0, %v1177
        %v1179 = vpop.f32.mrb[0].mxu0
        %v1180 = vadd.f32 0.0, %v1179
        %v1181 = vpop.f32.mrb[0].mxu0
        %v1182 = vadd.f32 0.0, %v1181
        %v1183 = vpop.f32.mrb[0].mxu0
        %v1184 = vadd.f32 0.0, %v1183
        %1185 = vmatprep.mubr.bf16.mxu0 %v408
        %1186 = vmatmul.mubr.bf16.gmra.mrb[0].mxu0 %v407
        %v1187 = vpop.f32.mrb[0].mxu0
        %v1188 = vadd.f32 0.0, %v1187
        %v1189 = vpop.f32.mrb[0].mxu0
        %v1190 = vadd.f32 0.0, %v1189
        %v1191 = vpop.f32.mrb[0].mxu0
        %v1192 = vadd.f32 0.0, %v1191
        %v1193 = vpop.f32.mrb[0].mxu0
        %v1194 = vadd.f32 0.0, %v1193
        %1195 = vmatprep.mubr.bf16.mxu0 %v410
        %1196 = vmatmul.mubr.bf16.gmra.mrb[0].mxu0 %v409
        %v1197 = vpop.f32.mrb[0].mxu0
        %v1198 = vadd.f32 0.0, %v1197
        %v1199 = vpop.f32.mrb[0].mxu0
        %v1200 = vadd.f32 0.0, %v1199
        %v1201 = vpop.f32.mrb[0].mxu0
        %v1202 = vadd.f32 0.0, %v1201
        %v1203 = vpop.f32.mrb[0].mxu0
        %v1204 = vadd.f32 0.0, %v1203
        %1205 = vmatprep.mubr.bf16.mxu0 %v412
        %1206 = vmatmul.mubr.bf16.gmra.mrb[0].mxu0 %v411
        %v1207 = vpop.f32.mrb[0].mxu0
        %v1208 = vadd.f32 0.0, %v1207
        %v1209 = vpop.f32.mrb[0].mxu0
        %v1210 = vadd.f32 0.0, %v1209
        %v1211 = vpop.f32.mrb[0].mxu0
        %v1212 = vadd.f32 0.0, %v1211
        %v1213 = vpop.f32.mrb[0].mxu0
        %v1214 = vadd.f32 0.0, %v1213
        %1215 = vmatprep.mubr.bf16.mxu0 %v414
        %1216 = vmatmul.mubr.bf16.gmra.mrb[0].mxu0 %v413
        %v1217 = vpop.f32.mrb[0].mxu0
        %v1218 = vadd.f32 0.0, %v1217
        %v1219 = vpop.f32.mrb[0].mxu0
        %v1220 = vadd.f32 0.0, %v1219
        %v1221 = vpop.f32.mrb[0].mxu0
        %v1222 = vadd.f32 0.0, %v1221
        %v1223 = vpop.f32.mrb[0].mxu0
        %v1224 = vadd.f32 0.0, %v1223
        %1225 = vmatprep.mubr.bf16.mxu0 %v416
        %1226 = vmatmul.mubr.bf16.gmra.mrb[0].mxu0 %v415
        %v1227 = vpop.f32.mrb[0].mxu0
        %v1228 = vadd.f32 0.0, %v1227
        %v1229 = vpop.f32.mrb[0].mxu0
        %v1230 = vadd.f32 0.0, %v1229
        %v1231 = vpop.f32.mrb[0].mxu0
        %v1232 = vadd.f32 0.0, %v1231
        %v1233 = vpop.f32.mrb[0].mxu0
        %v1234 = vadd.f32 0.0, %v1233
        %1235 = vmatprep.mubr.bf16.mxu0 %v418
        %1236 = vmatmul.mubr.bf16.gmra.mrb[0].mxu0 %v417
        %v1237 = vpop.f32.mrb[0].mxu0
        %v1238 = vadd.f32 0.0, %v1237
        %v1239 = vpop.f32.mrb[0].mxu0
        %v1240 = vadd.f32 0.0, %v1239
        %v1241 = vpop.f32.mrb[0].mxu0
        %v1242 = vadd.f32 0.0, %v1241
        %v1243 = vpop.f32.mrb[0].mxu0
        %v1244 = vadd.f32 0.0, %v1243
        %1245 = vmatprep.mubr.bf16.mxu0 %v420
        %1246 = vmatmul.mubr.bf16.gmra.mrb[0].mxu0 %v419
        %v1247 = vpop.f32.mrb[0].mxu0
        %v1248 = vadd.f32 0.0, %v1247
        %v1249 = vpop.f32.mrb[0].mxu0
        %v1250 = vadd.f32 0.0, %v1249
        %v1251 = vpop.f32.mrb[0].mxu0
        %v1252 = vadd.f32 0.0, %v1251
        %v1253 = vpop.f32.mrb[0].mxu0
        %v1254 = vadd.f32 0.0, %v1253
        %1255 = vdwg.mxu0
        %v1256 = vmul.f32 %v952, 0.125
        %v1257 = vmul.f32 %v956, 0.125
        %v1258 = vmul.f32 %v962, 0.125
        %v1259 = vmul.f32 %v966, 0.125
        %v1260 = vmul.f32 %v972, 0.125
        %v1261 = vmul.f32 %v976, 0.125
        %v1262 = vmul.f32 %v982, 0.125
        %v1263 = vmul.f32 %v986, 0.125
        %v1264 = vmul.f32 %v992, 0.125
        %v1265 = vmul.f32 %v996, 0.125
        %v1266 = vmul.f32 %v1002, 0.125
        %v1267 = vmul.f32 %v1006, 0.125
        %v1268 = vmul.f32 %v1012, 0.125
        %v1269 = vmul.f32 %v1016, 0.125
        %v1270 = vmul.f32 %v1022, 0.125
        %v1271 = vmul.f32 %v1026, 0.125
        %v1272 = vpack.c.bf16 %v1257, %v1256
        %v1273 = vpack.c.bf16 %v1259, %v1258
        %v1274 = vpack.c.bf16 %v1261, %v1260
        %v1275 = vpack.c.bf16 %v1263, %v1262
        %v1276 = vpack.c.bf16 %v1265, %v1264
        %v1277 = vpack.c.bf16 %v1267, %v1266
        %v1278 = vpack.c.bf16 %v1269, %v1268
        %v1279 = vpack.c.bf16 %v1271, %v1270
        %v1288 = vunpack.c.l.b16 %v1272
        %v1289 = vunpack.c.h.b16 %v1272
        %v1290 = vunpack.c.l.b16 %v1273
        %v1291 = vunpack.c.h.b16 %v1273
        %v1292 = vunpack.c.l.b16 %v1274
        %v1293 = vunpack.c.h.b16 %v1274
        %v1294 = vunpack.c.l.b16 %v1275
        %v1295 = vunpack.c.h.b16 %v1275
        %v1296 = vunpack.c.l.b16 %v1276
        %v1297 = vunpack.c.h.b16 %v1276
        %v1298 = vunpack.c.l.b16 %v1277
        %v1299 = vunpack.c.h.b16 %v1277
        %v1300 = vunpack.c.l.b16 %v1278
        %v1301 = vunpack.c.h.b16 %v1278
        %v1302 = vunpack.c.l.b16 %v1279
        %v1303 = vunpack.c.h.b16 %v1279
        %v1304 = vpack.c.b16 %v1288, %v1288
        %v1305 = vpack.c.b16 %v1289, %v1289
        %v1306 = vpack.c.b16 %v1290, %v1290
        %v1307 = vpack.c.b16 %v1291, %v1291
        %v1308 = vpack.c.b16 %v1292, %v1292
        %v1309 = vpack.c.b16 %v1293, %v1293
        %v1310 = vpack.c.b16 %v1294, %v1294
        %v1311 = vpack.c.b16 %v1295, %v1295
        %v1312 = vpack.c.b16 %v1296, %v1296
        %v1313 = vpack.c.b16 %v1297, %v1297
        %v1314 = vpack.c.b16 %v1298, %v1298
        %v1315 = vpack.c.b16 %v1299, %v1299
        %v1316 = vpack.c.b16 %v1300, %v1300
        %v1317 = vpack.c.b16 %v1301, %v1301
        %v1318 = vpack.c.b16 %v1302, %v1302
        %v1319 = vpack.c.b16 %v1303, %v1303
        %vm1336 = vcmask 519168
        %1337 = vst.msk [vmem:[%s218] sm:$0xf] %vm1336, %v1304
        %1338 = vst.msk [vmem:[%s218 + $0x4] sm:$0xf] %vm1336, %v1305
        %1339 = vst.msk [vmem:[%s218 + $0x8] sm:$0xf] %vm1336, %v1306
        %1340 = vst.msk [vmem:[%s218 + $0xc] sm:$0xf] %vm1336, %v1307
        %1341 = vst.msk [vmem:[%s218 + $0x10] sm:$0xf] %vm1336, %v1308
        %1342 = vst.msk [vmem:[%s218 + $0x14] sm:$0xf] %vm1336, %v1309
        %1343 = vst.msk [vmem:[%s218 + $0x18] sm:$0xf] %vm1336, %v1310
        %1344 = vst.msk [vmem:[%s218 + $0x1c] sm:$0xf] %vm1336, %v1311
        %1345 = vst.msk [vmem:[%s218 + $0x20] sm:$0xf] %vm1336, %v1312
        %1346 = vst.msk [vmem:[%s218 + $0x24] sm:$0xf] %vm1336, %v1313
        %1347 = vst.msk [vmem:[%s218 + $0x28] sm:$0xf] %vm1336, %v1314
        %1348 = vst.msk [vmem:[%s218 + $0x2c] sm:$0xf] %vm1336, %v1315
        %1349 = vst.msk [vmem:[%s218 + $0x30] sm:$0xf] %vm1336, %v1316
        %1350 = vst.msk [vmem:[%s218 + $0x34] sm:$0xf] %vm1336, %v1317
        %1351 = vst.msk [vmem:[%s218 + $0x38] sm:$0xf] %vm1336, %v1318
        %1352 = vst.msk [vmem:[%s218 + $0x3c] sm:$0xf] %vm1336, %v1319
        %v1353 = vpack.c.bf16 %v1069, %v1065
        %v1354 = vpack.c.bf16 %v1079, %v1075
        %v1355 = vpack.c.bf16 %v1089, %v1085
        %v1356 = vpack.c.bf16 %v1099, %v1095
        %v1357 = vpack.c.bf16 %v1109, %v1105
        %v1358 = vpack.c.bf16 %v1119, %v1115
        %v1359 = vpack.c.bf16 %v1129, %v1125
        %v1360 = vpack.c.bf16 %v1139, %v1135
        %v1369 = vunpack.c.l.b16 %v1353
        %v1370 = vunpack.c.h.b16 %v1353
        %v1371 = vunpack.c.l.b16 %v1354
        %v1372 = vunpack.c.h.b16 %v1354
        %v1373 = vunpack.c.l.b16 %v1355
        %v1374 = vunpack.c.h.b16 %v1355
        %v1375 = vunpack.c.l.b16 %v1356
        %v1376 = vunpack.c.h.b16 %v1356
        %v1377 = vunpack.c.l.b16 %v1357
        %v1378 = vunpack.c.h.b16 %v1357
        %v1379 = vunpack.c.l.b16 %v1358
        %v1380 = vunpack.c.h.b16 %v1358
        %v1381 = vunpack.c.l.b16 %v1359
        %v1382 = vunpack.c.h.b16 %v1359
        %v1383 = vunpack.c.l.b16 %v1360
        %v1384 = vunpack.c.h.b16 %v1360
        %v1385 = vpack.c.b16 %v1369, %v1369
        %v1386 = vpack.c.b16 %v1370, %v1370
        %v1387 = vpack.c.b16 %v1371, %v1371
        %v1388 = vpack.c.b16 %v1372, %v1372
        %v1389 = vpack.c.b16 %v1373, %v1373
        %v1390 = vpack.c.b16 %v1374, %v1374
        %v1391 = vpack.c.b16 %v1375, %v1375
        %v1392 = vpack.c.b16 %v1376, %v1376
        %v1393 = vpack.c.b16 %v1377, %v1377
        %v1394 = vpack.c.b16 %v1378, %v1378
        %v1395 = vpack.c.b16 %v1379, %v1379
        %v1396 = vpack.c.b16 %v1380, %v1380
        %v1397 = vpack.c.b16 %v1381, %v1381
        %v1398 = vpack.c.b16 %v1382, %v1382
        %v1399 = vpack.c.b16 %v1383, %v1383
        %v1400 = vpack.c.b16 %v1384, %v1384
        %1417 = vst.msk [vmem:[%s224] sm:$0xf] %vm1336, %v1385
        %1418 = vst.msk [vmem:[%s224 + $0x4] sm:$0xf] %vm1336, %v1386
        %1419 = vst.msk [vmem:[%s224 + $0x8] sm:$0xf] %vm1336, %v1387
        %1420 = vst.msk [vmem:[%s224 + $0xc] sm:$0xf] %vm1336, %v1388
        %1421 = vst.msk [vmem:[%s224 + $0x10] sm:$0xf] %vm1336, %v1389
        %1422 = vst.msk [vmem:[%s224 + $0x14] sm:$0xf] %vm1336, %v1390
        %1423 = vst.msk [vmem:[%s224 + $0x18] sm:$0xf] %vm1336, %v1391
        %1424 = vst.msk [vmem:[%s224 + $0x1c] sm:$0xf] %vm1336, %v1392
        %1425 = vst.msk [vmem:[%s224 + $0x20] sm:$0xf] %vm1336, %v1393
        %1426 = vst.msk [vmem:[%s224 + $0x24] sm:$0xf] %vm1336, %v1394
        %1427 = vst.msk [vmem:[%s224 + $0x28] sm:$0xf] %vm1336, %v1395
        %1428 = vst.msk [vmem:[%s224 + $0x2c] sm:$0xf] %vm1336, %v1396
        %1429 = vst.msk [vmem:[%s224 + $0x30] sm:$0xf] %vm1336, %v1397
        %1430 = vst.msk [vmem:[%s224 + $0x34] sm:$0xf] %vm1336, %v1398
        %1431 = vst.msk [vmem:[%s224 + $0x38] sm:$0xf] %vm1336, %v1399
        %1432 = vst.msk [vmem:[%s224 + $0x3c] sm:$0xf] %vm1336, %v1400
        %v1433 = vpack.c.bf16 %v1182, %v1178
        %v1434 = vpack.c.bf16 %v1192, %v1188
        %v1435 = vpack.c.bf16 %v1202, %v1198
        %v1436 = vpack.c.bf16 %v1212, %v1208
        %v1437 = vpack.c.bf16 %v1222, %v1218
        %v1438 = vpack.c.bf16 %v1232, %v1228
        %v1439 = vpack.c.bf16 %v1242, %v1238
        %v1440 = vpack.c.bf16 %v1252, %v1248
        %v1449 = vunpack.c.l.b16 %v1433
        %v1450 = vunpack.c.h.b16 %v1433
        %v1451 = vunpack.c.l.b16 %v1434
        %v1452 = vunpack.c.h.b16 %v1434
        %v1453 = vunpack.c.l.b16 %v1435
        %v1454 = vunpack.c.h.b16 %v1435
        %v1455 = vunpack.c.l.b16 %v1436
        %v1456 = vunpack.c.h.b16 %v1436
        %v1457 = vunpack.c.l.b16 %v1437
        %v1458 = vunpack.c.h.b16 %v1437
        %v1459 = vunpack.c.l.b16 %v1438
        %v1460 = vunpack.c.h.b16 %v1438
        %v1461 = vunpack.c.l.b16 %v1439
        %v1462 = vunpack.c.h.b16 %v1439
        %v1463 = vunpack.c.l.b16 %v1440
        %v1464 = vunpack.c.h.b16 %v1440
        %v1465 = vpack.c.b16 %v1449, %v1449
        %v1466 = vpack.c.b16 %v1450, %v1450
        %v1467 = vpack.c.b16 %v1451, %v1451
        %v1468 = vpack.c.b16 %v1452, %v1452
        %v1469 = vpack.c.b16 %v1453, %v1453
        %v1470 = vpack.c.b16 %v1454, %v1454
        %v1471 = vpack.c.b16 %v1455, %v1455
        %v1472 = vpack.c.b16 %v1456, %v1456
        %v1473 = vpack.c.b16 %v1457, %v1457
        %v1474 = vpack.c.b16 %v1458, %v1458
        %v1475 = vpack.c.b16 %v1459, %v1459
        %v1476 = vpack.c.b16 %v1460, %v1460
        %v1477 = vpack.c.b16 %v1461, %v1461
        %v1478 = vpack.c.b16 %v1462, %v1462
        %v1479 = vpack.c.b16 %v1463, %v1463
        %v1480 = vpack.c.b16 %v1464, %v1464
        %1497 = vst.msk [vmem:[%s230] sm:$0xf] %vm1336, %v1465
        %1498 = vst.msk [vmem:[%s230 + $0x4] sm:$0xf] %vm1336, %v1466
        %1499 = vst.msk [vmem:[%s230 + $0x8] sm:$0xf] %vm1336, %v1467
        %1500 = vst.msk [vmem:[%s230 + $0xc] sm:$0xf] %vm1336, %v1468
        %1501 = vst.msk [vmem:[%s230 + $0x10] sm:$0xf] %vm1336, %v1469
        %1502 = vst.msk [vmem:[%s230 + $0x14] sm:$0xf] %vm1336, %v1470
        %1503 = vst.msk [vmem:[%s230 + $0x18] sm:$0xf] %vm1336, %v1471
        %1504 = vst.msk [vmem:[%s230 + $0x1c] sm:$0xf] %vm1336, %v1472
        %1505 = vst.msk [vmem:[%s230 + $0x20] sm:$0xf] %vm1336, %v1473
        %1506 = vst.msk [vmem:[%s230 + $0x24] sm:$0xf] %vm1336, %v1474
        %1507 = vst.msk [vmem:[%s230 + $0x28] sm:$0xf] %vm1336, %v1475
        %1508 = vst.msk [vmem:[%s230 + $0x2c] sm:$0xf] %vm1336, %v1476
        %1509 = vst.msk [vmem:[%s230 + $0x30] sm:$0xf] %vm1336, %v1477
        %1510 = vst.msk [vmem:[%s230 + $0x34] sm:$0xf] %vm1336, %v1478
        %1511 = vst.msk [vmem:[%s230 + $0x38] sm:$0xf] %vm1336, %v1479
        %1512 = vst.msk [vmem:[%s230 + $0x3c] sm:$0xf] %vm1336, %v1480
        %1513 = vrot.lane.b32.xlu0 %v1304, 64
        %v1514 = vpop.permute.xlu0 %1513
        %1515 = vrot.lane.b32.xlu0 %v1305, 64
        %v1516 = vpop.permute.xlu0 %1515
        %1517 = vrot.lane.b32.xlu0 %v1306, 64
        %v1518 = vpop.permute.xlu0 %1517
        %1519 = vrot.lane.b32.xlu0 %v1307, 64
        %v1520 = vpop.permute.xlu0 %1519
        %1521 = vrot.lane.b32.xlu0 %v1308, 64
        %v1522 = vpop.permute.xlu0 %1521
        %1523 = vrot.lane.b32.xlu0 %v1309, 64
        %v1524 = vpop.permute.xlu0 %1523
        %1525 = vrot.lane.b32.xlu0 %v1310, 64
        %v1526 = vpop.permute.xlu0 %1525
        %1527 = vrot.lane.b32.xlu0 %v1311, 64
        %v1528 = vpop.permute.xlu0 %1527
        %1529 = vrot.lane.b32.xlu0 %v1312, 64
        %v1530 = vpop.permute.xlu0 %1529
        %1531 = vrot.lane.b32.xlu0 %v1313, 64
        %v1532 = vpop.permute.xlu0 %1531
        %1533 = vrot.lane.b32.xlu0 %v1314, 64
        %v1534 = vpop.permute.xlu0 %1533
        %1535 = vrot.lane.b32.xlu0 %v1315, 64
        %v1536 = vpop.permute.xlu0 %1535
        %1537 = vrot.lane.b32.xlu0 %v1316, 64
        %v1538 = vpop.permute.xlu0 %1537
        %1539 = vrot.lane.b32.xlu0 %v1317, 64
        %v1540 = vpop.permute.xlu0 %1539
        %1541 = vrot.lane.b32.xlu0 %v1318, 64
        %v1542 = vpop.permute.xlu0 %1541
        %1543 = vrot.lane.b32.xlu0 %v1319, 64
        %v1544 = vpop.permute.xlu0 %1543
        %s1561 = scalar_lea.vmem %s218, 64 [#allocation2]
        %1562 = vst.msk [vmem:[%s1561] sm:$0xf] %vm1336, %v1514
        %1563 = vst.msk [vmem:[%s1561 + $0x4] sm:$0xf] %vm1336, %v1516
        %1564 = vst.msk [vmem:[%s1561 + $0x8] sm:$0xf] %vm1336, %v1518
        %1565 = vst.msk [vmem:[%s1561 + $0xc] sm:$0xf] %vm1336, %v1520
        %1566 = vst.msk [vmem:[%s1561 + $0x10] sm:$0xf] %vm1336, %v1522
        %1567 = vst.msk [vmem:[%s1561 + $0x14] sm:$0xf] %vm1336, %v1524
        %1568 = vst.msk [vmem:[%s1561 + $0x18] sm:$0xf] %vm1336, %v1526
        %1569 = vst.msk [vmem:[%s1561 + $0x1c] sm:$0xf] %vm1336, %v1528
        %1570 = vst.msk [vmem:[%s1561 + $0x20] sm:$0xf] %vm1336, %v1530
        %1571 = vst.msk [vmem:[%s1561 + $0x24] sm:$0xf] %vm1336, %v1532
        %1572 = vst.msk [vmem:[%s1561 + $0x28] sm:$0xf] %vm1336, %v1534
        %1573 = vst.msk [vmem:[%s1561 + $0x2c] sm:$0xf] %vm1336, %v1536
        %1574 = vst.msk [vmem:[%s1561 + $0x30] sm:$0xf] %vm1336, %v1538
        %1575 = vst.msk [vmem:[%s1561 + $0x34] sm:$0xf] %vm1336, %v1540
        %1576 = vst.msk [vmem:[%s1561 + $0x38] sm:$0xf] %vm1336, %v1542
        %1577 = vst.msk [vmem:[%s1561 + $0x3c] sm:$0xf] %vm1336, %v1544
        %1578 = vrot.lane.b32.xlu0 %v1385, 64
        %v1579 = vpop.permute.xlu0 %1578
        %1580 = vrot.lane.b32.xlu0 %v1386, 64
        %v1581 = vpop.permute.xlu0 %1580
        %1582 = vrot.lane.b32.xlu0 %v1387, 64
        %v1583 = vpop.permute.xlu0 %1582
        %1584 = vrot.lane.b32.xlu0 %v1388, 64
        %v1585 = vpop.permute.xlu0 %1584
        %1586 = vrot.lane.b32.xlu0 %v1389, 64
        %v1587 = vpop.permute.xlu0 %1586
        %1588 = vrot.lane.b32.xlu0 %v1390, 64
        %v1589 = vpop.permute.xlu0 %1588
        %1590 = vrot.lane.b32.xlu0 %v1391, 64
        %v1591 = vpop.permute.xlu0 %1590
        %1592 = vrot.lane.b32.xlu0 %v1392, 64
        %v1593 = vpop.permute.xlu0 %1592
        %1594 = vrot.lane.b32.xlu0 %v1393, 64
        %v1595 = vpop.permute.xlu0 %1594
        %1596 = vrot.lane.b32.xlu0 %v1394, 64
        %v1597 = vpop.permute.xlu0 %1596
        %1598 = vrot.lane.b32.xlu0 %v1395, 64
        %v1599 = vpop.permute.xlu0 %1598
        %1600 = vrot.lane.b32.xlu0 %v1396, 64
        %v1601 = vpop.permute.xlu0 %1600
        %1602 = vrot.lane.b32.xlu0 %v1397, 64
        %v1603 = vpop.permute.xlu0 %1602
        %1604 = vrot.lane.b32.xlu0 %v1398, 64
        %v1605 = vpop.permute.xlu0 %1604
        %1606 = vrot.lane.b32.xlu0 %v1399, 64
        %v1607 = vpop.permute.xlu0 %1606
        %1608 = vrot.lane.b32.xlu0 %v1400, 64
        %v1609 = vpop.permute.xlu0 %1608
        %s1626 = scalar_lea.vmem %s224, 64 [#allocation3]
        %1627 = vst.msk [vmem:[%s1626] sm:$0xf] %vm1336, %v1579
        %1628 = vst.msk [vmem:[%s1626 + $0x4] sm:$0xf] %vm1336, %v1581
        %1629 = vst.msk [vmem:[%s1626 + $0x8] sm:$0xf] %vm1336, %v1583
        %1630 = vst.msk [vmem:[%s1626 + $0xc] sm:$0xf] %vm1336, %v1585
        %1631 = vst.msk [vmem:[%s1626 + $0x10] sm:$0xf] %vm1336, %v1587
        %1632 = vst.msk [vmem:[%s1626 + $0x14] sm:$0xf] %vm1336, %v1589
        %1633 = vst.msk [vmem:[%s1626 + $0x18] sm:$0xf] %vm1336, %v1591
        %1634 = vst.msk [vmem:[%s1626 + $0x1c] sm:$0xf] %vm1336, %v1593
        %1635 = vst.msk [vmem:[%s1626 + $0x20] sm:$0xf] %vm1336, %v1595
        %1636 = vst.msk [vmem:[%s1626 + $0x24] sm:$0xf] %vm1336, %v1597
        %1637 = vst.msk [vmem:[%s1626 + $0x28] sm:$0xf] %vm1336, %v1599
        %1638 = vst.msk [vmem:[%s1626 + $0x2c] sm:$0xf] %vm1336, %v1601
        %1639 = vst.msk [vmem:[%s1626 + $0x30] sm:$0xf] %vm1336, %v1603
        %1640 = vst.msk [vmem:[%s1626 + $0x34] sm:$0xf] %vm1336, %v1605
        %1641 = vst.msk [vmem:[%s1626 + $0x38] sm:$0xf] %vm1336, %v1607
        %1642 = vst.msk [vmem:[%s1626 + $0x3c] sm:$0xf] %vm1336, %v1609
        %1643 = vrot.lane.b32.xlu0 %v1465, 64
        %v1644 = vpop.permute.xlu0 %1643
        %1645 = vrot.lane.b32.xlu0 %v1466, 64
        %v1646 = vpop.permute.xlu0 %1645
        %1647 = vrot.lane.b32.xlu0 %v1467, 64
        %v1648 = vpop.permute.xlu0 %1647
        %1649 = vrot.lane.b32.xlu0 %v1468, 64
        %v1650 = vpop.permute.xlu0 %1649
        %1651 = vrot.lane.b32.xlu0 %v1469, 64
        %v1652 = vpop.permute.xlu0 %1651
        %1653 = vrot.lane.b32.xlu0 %v1470, 64
        %v1654 = vpop.permute.xlu0 %1653
        %1655 = vrot.lane.b32.xlu0 %v1471, 64
        %v1656 = vpop.permute.xlu0 %1655
        %1657 = vrot.lane.b32.xlu0 %v1472, 64
        %v1658 = vpop.permute.xlu0 %1657
        %1659 = vrot.lane.b32.xlu0 %v1473, 64
        %v1660 = vpop.permute.xlu0 %1659
        %1661 = vrot.lane.b32.xlu0 %v1474, 64
        %v1662 = vpop.permute.xlu0 %1661
        %1663 = vrot.lane.b32.xlu0 %v1475, 64
        %v1664 = vpop.permute.xlu0 %1663
        %1665 = vrot.lane.b32.xlu0 %v1476, 64
        %v1666 = vpop.permute.xlu0 %1665
        %1667 = vrot.lane.b32.xlu0 %v1477, 64
        %v1668 = vpop.permute.xlu0 %1667
        %1669 = vrot.lane.b32.xlu0 %v1478, 64
        %v1670 = vpop.permute.xlu0 %1669
        %1671 = vrot.lane.b32.xlu0 %v1479, 64
        %v1672 = vpop.permute.xlu0 %1671
        %1673 = vrot.lane.b32.xlu0 %v1480, 64
        %v1674 = vpop.permute.xlu0 %1673
        %s1691 = scalar_lea.vmem %s230, 64 [#allocation4]
        %1692 = vst.msk [vmem:[%s1691] sm:$0xf] %vm1336, %v1644
        %1693 = vst.msk [vmem:[%s1691 + $0x4] sm:$0xf] %vm1336, %v1646
        %1694 = vst.msk [vmem:[%s1691 + $0x8] sm:$0xf] %vm1336, %v1648
        %1695 = vst.msk [vmem:[%s1691 + $0xc] sm:$0xf] %vm1336, %v1650
        %1696 = vst.msk [vmem:[%s1691 + $0x10] sm:$0xf] %vm1336, %v1652
        %1697 = vst.msk [vmem:[%s1691 + $0x14] sm:$0xf] %vm1336, %v1654
        %1698 = vst.msk [vmem:[%s1691 + $0x18] sm:$0xf] %vm1336, %v1656
        %1699 = vst.msk [vmem:[%s1691 + $0x1c] sm:$0xf] %vm1336, %v1658
        %1700 = vst.msk [vmem:[%s1691 + $0x20] sm:$0xf] %vm1336, %v1660
        %1701 = vst.msk [vmem:[%s1691 + $0x24] sm:$0xf] %vm1336, %v1662
        %1702 = vst.msk [vmem:[%s1691 + $0x28] sm:$0xf] %vm1336, %v1664
        %1703 = vst.msk [vmem:[%s1691 + $0x2c] sm:$0xf] %vm1336, %v1666
        %1704 = vst.msk [vmem:[%s1691 + $0x30] sm:$0xf] %vm1336, %v1668
        %1705 = vst.msk [vmem:[%s1691 + $0x34] sm:$0xf] %vm1336, %v1670
        %1706 = vst.msk [vmem:[%s1691 + $0x38] sm:$0xf] %vm1336, %v1672
        %1707 = vst.msk [vmem:[%s1691 + $0x3c] sm:$0xf] %vm1336, %v1674
        %v1708 = vmul.f32 %v954, 0.125
        %v1709 = vmul.f32 %v958, 0.125
        %v1710 = vmul.f32 %v964, 0.125
        %v1711 = vmul.f32 %v968, 0.125
        %v1712 = vmul.f32 %v974, 0.125
        %v1713 = vmul.f32 %v978, 0.125
        %v1714 = vmul.f32 %v984, 0.125
        %v1715 = vmul.f32 %v988, 0.125
        %v1716 = vmul.f32 %v994, 0.125
        %v1717 = vmul.f32 %v998, 0.125
        %v1718 = vmul.f32 %v1004, 0.125
        %v1719 = vmul.f32 %v1008, 0.125
        %v1720 = vmul.f32 %v1014, 0.125
        %v1721 = vmul.f32 %v1018, 0.125
        %v1722 = vmul.f32 %v1024, 0.125
        %v1723 = vmul.f32 %v1028, 0.125
        %v1724 = vpack.c.bf16 %v1709, %v1708
        %v1725 = vpack.c.bf16 %v1711, %v1710
        %v1726 = vpack.c.bf16 %v1713, %v1712
        %v1727 = vpack.c.bf16 %v1715, %v1714
        %v1728 = vpack.c.bf16 %v1717, %v1716
        %v1729 = vpack.c.bf16 %v1719, %v1718
        %v1730 = vpack.c.bf16 %v1721, %v1720
        %v1731 = vpack.c.bf16 %v1723, %v1722
        %v1740 = vunpack.c.l.b16 %v1724
        %v1741 = vunpack.c.h.b16 %v1724
        %v1742 = vunpack.c.l.b16 %v1725
        %v1743 = vunpack.c.h.b16 %v1725
        %v1744 = vunpack.c.l.b16 %v1726
        %v1745 = vunpack.c.h.b16 %v1726
        %v1746 = vunpack.c.l.b16 %v1727
        %v1747 = vunpack.c.h.b16 %v1727
        %v1748 = vunpack.c.l.b16 %v1728
        %v1749 = vunpack.c.h.b16 %v1728
        %v1750 = vunpack.c.l.b16 %v1729
        %v1751 = vunpack.c.h.b16 %v1729
        %v1752 = vunpack.c.l.b16 %v1730
        %v1753 = vunpack.c.h.b16 %v1730
        %v1754 = vunpack.c.l.b16 %v1731
        %v1755 = vunpack.c.h.b16 %v1731
        %v1756 = vpack.c.b16 %v1740, %v1740
        %v1757 = vpack.c.b16 %v1741, %v1741
        %v1758 = vpack.c.b16 %v1742, %v1742
        %v1759 = vpack.c.b16 %v1743, %v1743
        %v1760 = vpack.c.b16 %v1744, %v1744
        %v1761 = vpack.c.b16 %v1745, %v1745
        %v1762 = vpack.c.b16 %v1746, %v1746
        %v1763 = vpack.c.b16 %v1747, %v1747
        %v1764 = vpack.c.b16 %v1748, %v1748
        %v1765 = vpack.c.b16 %v1749, %v1749
        %v1766 = vpack.c.b16 %v1750, %v1750
        %v1767 = vpack.c.b16 %v1751, %v1751
        %v1768 = vpack.c.b16 %v1752, %v1752
        %v1769 = vpack.c.b16 %v1753, %v1753
        %v1770 = vpack.c.b16 %v1754, %v1754
        %v1771 = vpack.c.b16 %v1755, %v1755
        %s1788 = scalar_lea.vmem %s218, 128 [#allocation2]
        %1789 = vst.msk [vmem:[%s1788] sm:$0xf] %vm1336, %v1756
        %1790 = vst.msk [vmem:[%s1788 + $0x4] sm:$0xf] %vm1336, %v1757
        %1791 = vst.msk [vmem:[%s1788 + $0x8] sm:$0xf] %vm1336, %v1758
        %1792 = vst.msk [vmem:[%s1788 + $0xc] sm:$0xf] %vm1336, %v1759
        %1793 = vst.msk [vmem:[%s1788 + $0x10] sm:$0xf] %vm1336, %v1760
        %1794 = vst.msk [vmem:[%s1788 + $0x14] sm:$0xf] %vm1336, %v1761
        %1795 = vst.msk [vmem:[%s1788 + $0x18] sm:$0xf] %vm1336, %v1762
        %1796 = vst.msk [vmem:[%s1788 + $0x1c] sm:$0xf] %vm1336, %v1763
        %1797 = vst.msk [vmem:[%s1788 + $0x20] sm:$0xf] %vm1336, %v1764
        %1798 = vst.msk [vmem:[%s1788 + $0x24] sm:$0xf] %vm1336, %v1765
        %1799 = vst.msk [vmem:[%s1788 + $0x28] sm:$0xf] %vm1336, %v1766
        %1800 = vst.msk [vmem:[%s1788 + $0x2c] sm:$0xf] %vm1336, %v1767
        %1801 = vst.msk [vmem:[%s1788 + $0x30] sm:$0xf] %vm1336, %v1768
        %1802 = vst.msk [vmem:[%s1788 + $0x34] sm:$0xf] %vm1336, %v1769
        %1803 = vst.msk [vmem:[%s1788 + $0x38] sm:$0xf] %vm1336, %v1770
        %1804 = vst.msk [vmem:[%s1788 + $0x3c] sm:$0xf] %vm1336, %v1771
        %v1805 = vpack.c.bf16 %v1071, %v1067
        %v1806 = vpack.c.bf16 %v1081, %v1077
        %v1807 = vpack.c.bf16 %v1091, %v1087
        %v1808 = vpack.c.bf16 %v1101, %v1097
        %v1809 = vpack.c.bf16 %v1111, %v1107
        %v1810 = vpack.c.bf16 %v1121, %v1117
        %v1811 = vpack.c.bf16 %v1131, %v1127
        %v1812 = vpack.c.bf16 %v1141, %v1137
        %v1821 = vunpack.c.l.b16 %v1805
        %v1822 = vunpack.c.h.b16 %v1805
        %v1823 = vunpack.c.l.b16 %v1806
        %v1824 = vunpack.c.h.b16 %v1806
        %v1825 = vunpack.c.l.b16 %v1807
        %v1826 = vunpack.c.h.b16 %v1807
        %v1827 = vunpack.c.l.b16 %v1808
        %v1828 = vunpack.c.h.b16 %v1808
        %v1829 = vunpack.c.l.b16 %v1809
        %v1830 = vunpack.c.h.b16 %v1809
        %v1831 = vunpack.c.l.b16 %v1810
        %v1832 = vunpack.c.h.b16 %v1810
        %v1833 = vunpack.c.l.b16 %v1811
        %v1834 = vunpack.c.h.b16 %v1811
        %v1835 = vunpack.c.l.b16 %v1812
        %v1836 = vunpack.c.h.b16 %v1812
        %v1837 = vpack.c.b16 %v1821, %v1821
        %v1838 = vpack.c.b16 %v1822, %v1822
        %v1839 = vpack.c.b16 %v1823, %v1823
        %v1840 = vpack.c.b16 %v1824, %v1824
        %v1841 = vpack.c.b16 %v1825, %v1825
        %v1842 = vpack.c.b16 %v1826, %v1826
        %v1843 = vpack.c.b16 %v1827, %v1827
        %v1844 = vpack.c.b16 %v1828, %v1828
        %v1845 = vpack.c.b16 %v1829, %v1829
        %v1846 = vpack.c.b16 %v1830, %v1830
        %v1847 = vpack.c.b16 %v1831, %v1831
        %v1848 = vpack.c.b16 %v1832, %v1832
        %v1849 = vpack.c.b16 %v1833, %v1833
        %v1850 = vpack.c.b16 %v1834, %v1834
        %v1851 = vpack.c.b16 %v1835, %v1835
        %v1852 = vpack.c.b16 %v1836, %v1836
        %s1869 = scalar_lea.vmem %s224, 128 [#allocation3]
        %1870 = vst.msk [vmem:[%s1869] sm:$0xf] %vm1336, %v1837
        %1871 = vst.msk [vmem:[%s1869 + $0x4] sm:$0xf] %vm1336, %v1838
        %1872 = vst.msk [vmem:[%s1869 + $0x8] sm:$0xf] %vm1336, %v1839
        %1873 = vst.msk [vmem:[%s1869 + $0xc] sm:$0xf] %vm1336, %v1840
        %1874 = vst.msk [vmem:[%s1869 + $0x10] sm:$0xf] %vm1336, %v1841
        %1875 = vst.msk [vmem:[%s1869 + $0x14] sm:$0xf] %vm1336, %v1842
        %1876 = vst.msk [vmem:[%s1869 + $0x18] sm:$0xf] %vm1336, %v1843
        %1877 = vst.msk [vmem:[%s1869 + $0x1c] sm:$0xf] %vm1336, %v1844
        %1878 = vst.msk [vmem:[%s1869 + $0x20] sm:$0xf] %vm1336, %v1845
        %1879 = vst.msk [vmem:[%s1869 + $0x24] sm:$0xf] %vm1336, %v1846
        %1880 = vst.msk [vmem:[%s1869 + $0x28] sm:$0xf] %vm1336, %v1847
        %1881 = vst.msk [vmem:[%s1869 + $0x2c] sm:$0xf] %vm1336, %v1848
        %1882 = vst.msk [vmem:[%s1869 + $0x30] sm:$0xf] %vm1336, %v1849
        %1883 = vst.msk [vmem:[%s1869 + $0x34] sm:$0xf] %vm1336, %v1850
        %1884 = vst.msk [vmem:[%s1869 + $0x38] sm:$0xf] %vm1336, %v1851
        %1885 = vst.msk [vmem:[%s1869 + $0x3c] sm:$0xf] %vm1336, %v1852
        %v1886 = vpack.c.bf16 %v1184, %v1180
        %v1887 = vpack.c.bf16 %v1194, %v1190
        %v1888 = vpack.c.bf16 %v1204, %v1200
        %v1889 = vpack.c.bf16 %v1214, %v1210
        %v1890 = vpack.c.bf16 %v1224, %v1220
        %v1891 = vpack.c.bf16 %v1234, %v1230
        %v1892 = vpack.c.bf16 %v1244, %v1240
        %v1893 = vpack.c.bf16 %v1254, %v1250
        %v1902 = vunpack.c.l.b16 %v1886
        %v1903 = vunpack.c.h.b16 %v1886
        %v1904 = vunpack.c.l.b16 %v1887
        %v1905 = vunpack.c.h.b16 %v1887
        %v1906 = vunpack.c.l.b16 %v1888
        %v1907 = vunpack.c.h.b16 %v1888
        %v1908 = vunpack.c.l.b16 %v1889
        %v1909 = vunpack.c.h.b16 %v1889
        %v1910 = vunpack.c.l.b16 %v1890
        %v1911 = vunpack.c.h.b16 %v1890
        %v1912 = vunpack.c.l.b16 %v1891
        %v1913 = vunpack.c.h.b16 %v1891
        %v1914 = vunpack.c.l.b16 %v1892
        %v1915 = vunpack.c.h.b16 %v1892
        %v1916 = vunpack.c.l.b16 %v1893
        %v1917 = vunpack.c.h.b16 %v1893
        %v1918 = vpack.c.b16 %v1902, %v1902
        %v1919 = vpack.c.b16 %v1903, %v1903
        %v1920 = vpack.c.b16 %v1904, %v1904
        %v1921 = vpack.c.b16 %v1905, %v1905
        %v1922 = vpack.c.b16 %v1906, %v1906
        %v1923 = vpack.c.b16 %v1907, %v1907
        %v1924 = vpack.c.b16 %v1908, %v1908
        %v1925 = vpack.c.b16 %v1909, %v1909
        %v1926 = vpack.c.b16 %v1910, %v1910
        %v1927 = vpack.c.b16 %v1911, %v1911
        %v1928 = vpack.c.b16 %v1912, %v1912
        %v1929 = vpack.c.b16 %v1913, %v1913
        %v1930 = vpack.c.b16 %v1914, %v1914
        %v1931 = vpack.c.b16 %v1915, %v1915
        %v1932 = vpack.c.b16 %v1916, %v1916
        %v1933 = vpack.c.b16 %v1917, %v1917
        %s1950 = scalar_lea.vmem %s230, 128 [#allocation4]
        %1951 = vst.msk [vmem:[%s1950] sm:$0xf] %vm1336, %v1918
        %1952 = vst.msk [vmem:[%s1950 + $0x4] sm:$0xf] %vm1336, %v1919
        %1953 = vst.msk [vmem:[%s1950 + $0x8] sm:$0xf] %vm1336, %v1920
        %1954 = vst.msk [vmem:[%s1950 + $0xc] sm:$0xf] %vm1336, %v1921
        %1955 = vst.msk [vmem:[%s1950 + $0x10] sm:$0xf] %vm1336, %v1922
        %1956 = vst.msk [vmem:[%s1950 + $0x14] sm:$0xf] %vm1336, %v1923
        %1957 = vst.msk [vmem:[%s1950 + $0x18] sm:$0xf] %vm1336, %v1924
        %1958 = vst.msk [vmem:[%s1950 + $0x1c] sm:$0xf] %vm1336, %v1925
        %1959 = vst.msk [vmem:[%s1950 + $0x20] sm:$0xf] %vm1336, %v1926
        %1960 = vst.msk [vmem:[%s1950 + $0x24] sm:$0xf] %vm1336, %v1927
        %1961 = vst.msk [vmem:[%s1950 + $0x28] sm:$0xf] %vm1336, %v1928
        %1962 = vst.msk [vmem:[%s1950 + $0x2c] sm:$0xf] %vm1336, %v1929
        %1963 = vst.msk [vmem:[%s1950 + $0x30] sm:$0xf] %vm1336, %v1930
        %1964 = vst.msk [vmem:[%s1950 + $0x34] sm:$0xf] %vm1336, %v1931
        %1965 = vst.msk [vmem:[%s1950 + $0x38] sm:$0xf] %vm1336, %v1932
        %1966 = vst.msk [vmem:[%s1950 + $0x3c] sm:$0xf] %vm1336, %v1933
        %1967 = vrot.lane.b32.xlu0 %v1756, 64
        %v1968 = vpop.permute.xlu0 %1967
        %1969 = vrot.lane.b32.xlu0 %v1757, 64
        %v1970 = vpop.permute.xlu0 %1969
        %1971 = vrot.lane.b32.xlu0 %v1758, 64
        %v1972 = vpop.permute.xlu0 %1971
        %1973 = vrot.lane.b32.xlu0 %v1759, 64
        %v1974 = vpop.permute.xlu0 %1973
        %1975 = vrot.lane.b32.xlu0 %v1760, 64
        %v1976 = vpop.permute.xlu0 %1975
        %1977 = vrot.lane.b32.xlu0 %v1761, 64
        %v1978 = vpop.permute.xlu0 %1977
        %1979 = vrot.lane.b32.xlu0 %v1762, 64
        %v1980 = vpop.permute.xlu0 %1979
        %1981 = vrot.lane.b32.xlu0 %v1763, 64
        %v1982 = vpop.permute.xlu0 %1981
        %1983 = vrot.lane.b32.xlu0 %v1764, 64
        %v1984 = vpop.permute.xlu0 %1983
        %1985 = vrot.lane.b32.xlu0 %v1765, 64
        %v1986 = vpop.permute.xlu0 %1985
        %1987 = vrot.lane.b32.xlu0 %v1766, 64
        %v1988 = vpop.permute.xlu0 %1987
        %1989 = vrot.lane.b32.xlu0 %v1767, 64
        %v1990 = vpop.permute.xlu0 %1989
        %1991 = vrot.lane.b32.xlu0 %v1768, 64
        %v1992 = vpop.permute.xlu0 %1991
        %1993 = vrot.lane.b32.xlu0 %v1769, 64
        %v1994 = vpop.permute.xlu0 %1993
        %1995 = vrot.lane.b32.xlu0 %v1770, 64
        %v1996 = vpop.permute.xlu0 %1995
        %1997 = vrot.lane.b32.xlu0 %v1771, 64
        %v1998 = vpop.permute.xlu0 %1997
        %s2015 = scalar_lea.vmem %s218, 192 [#allocation2]
        %2016 = vst.msk [vmem:[%s2015] sm:$0xf] %vm1336, %v1968
        %2017 = vst.msk [vmem:[%s2015 + $0x4] sm:$0xf] %vm1336, %v1970
        %2018 = vst.msk [vmem:[%s2015 + $0x8] sm:$0xf] %vm1336, %v1972
        %2019 = vst.msk [vmem:[%s2015 + $0xc] sm:$0xf] %vm1336, %v1974
        %2020 = vst.msk [vmem:[%s2015 + $0x10] sm:$0xf] %vm1336, %v1976
        %2021 = vst.msk [vmem:[%s2015 + $0x14] sm:$0xf] %vm1336, %v1978
        %2022 = vst.msk [vmem:[%s2015 + $0x18] sm:$0xf] %vm1336, %v1980
        %2023 = vst.msk [vmem:[%s2015 + $0x1c] sm:$0xf] %vm1336, %v1982
        %2024 = vst.msk [vmem:[%s2015 + $0x20] sm:$0xf] %vm1336, %v1984
        %2025 = vst.msk [vmem:[%s2015 + $0x24] sm:$0xf] %vm1336, %v1986
        %2026 = vst.msk [vmem:[%s2015 + $0x28] sm:$0xf] %vm1336, %v1988
        %2027 = vst.msk [vmem:[%s2015 + $0x2c] sm:$0xf] %vm1336, %v1990
        %2028 = vst.msk [vmem:[%s2015 + $0x30] sm:$0xf] %vm1336, %v1992
        %2029 = vst.msk [vmem:[%s2015 + $0x34] sm:$0xf] %vm1336, %v1994
        %2030 = vst.msk [vmem:[%s2015 + $0x38] sm:$0xf] %vm1336, %v1996
        %2031 = vst.msk [vmem:[%s2015 + $0x3c] sm:$0xf] %vm1336, %v1998
        %2032 = vrot.lane.b32.xlu0 %v1837, 64
        %v2033 = vpop.permute.xlu0 %2032
        %2034 = vrot.lane.b32.xlu0 %v1838, 64
        %v2035 = vpop.permute.xlu0 %2034
        %2036 = vrot.lane.b32.xlu0 %v1839, 64
        %v2037 = vpop.permute.xlu0 %2036
        %2038 = vrot.lane.b32.xlu0 %v1840, 64
        %v2039 = vpop.permute.xlu0 %2038
        %2040 = vrot.lane.b32.xlu0 %v1841, 64
        %v2041 = vpop.permute.xlu0 %2040
        %2042 = vrot.lane.b32.xlu0 %v1842, 64
        %v2043 = vpop.permute.xlu0 %2042
        %2044 = vrot.lane.b32.xlu0 %v1843, 64
        %v2045 = vpop.permute.xlu0 %2044
        %2046 = vrot.lane.b32.xlu0 %v1844, 64
        %v2047 = vpop.permute.xlu0 %2046
        %2048 = vrot.lane.b32.xlu0 %v1845, 64
        %v2049 = vpop.permute.xlu0 %2048
        %2050 = vrot.lane.b32.xlu0 %v1846, 64
        %v2051 = vpop.permute.xlu0 %2050
        %2052 = vrot.lane.b32.xlu0 %v1847, 64
        %v2053 = vpop.permute.xlu0 %2052
        %2054 = vrot.lane.b32.xlu0 %v1848, 64
        %v2055 = vpop.permute.xlu0 %2054
        %2056 = vrot.lane.b32.xlu0 %v1849, 64
        %v2057 = vpop.permute.xlu0 %2056
        %2058 = vrot.lane.b32.xlu0 %v1850, 64
        %v2059 = vpop.permute.xlu0 %2058
        %2060 = vrot.lane.b32.xlu0 %v1851, 64
        %v2061 = vpop.permute.xlu0 %2060
        %2062 = vrot.lane.b32.xlu0 %v1852, 64
        %v2063 = vpop.permute.xlu0 %2062
        %s2080 = scalar_lea.vmem %s224, 192 [#allocation3]
        %2081 = vst.msk [vmem:[%s2080] sm:$0xf] %vm1336, %v2033
        %2082 = vst.msk [vmem:[%s2080 + $0x4] sm:$0xf] %vm1336, %v2035
        %2083 = vst.msk [vmem:[%s2080 + $0x8] sm:$0xf] %vm1336, %v2037
        %2084 = vst.msk [vmem:[%s2080 + $0xc] sm:$0xf] %vm1336, %v2039
        %2085 = vst.msk [vmem:[%s2080 + $0x10] sm:$0xf] %vm1336, %v2041
        %2086 = vst.msk [vmem:[%s2080 + $0x14] sm:$0xf] %vm1336, %v2043
        %2087 = vst.msk [vmem:[%s2080 + $0x18] sm:$0xf] %vm1336, %v2045
        %2088 = vst.msk [vmem:[%s2080 + $0x1c] sm:$0xf] %vm1336, %v2047
        %2089 = vst.msk [vmem:[%s2080 + $0x20] sm:$0xf] %vm1336, %v2049
        %2090 = vst.msk [vmem:[%s2080 + $0x24] sm:$0xf] %vm1336, %v2051
        %2091 = vst.msk [vmem:[%s2080 + $0x28] sm:$0xf] %vm1336, %v2053
        %2092 = vst.msk [vmem:[%s2080 + $0x2c] sm:$0xf] %vm1336, %v2055
        %2093 = vst.msk [vmem:[%s2080 + $0x30] sm:$0xf] %vm1336, %v2057
        %2094 = vst.msk [vmem:[%s2080 + $0x34] sm:$0xf] %vm1336, %v2059
        %2095 = vst.msk [vmem:[%s2080 + $0x38] sm:$0xf] %vm1336, %v2061
        %2096 = vst.msk [vmem:[%s2080 + $0x3c] sm:$0xf] %vm1336, %v2063
        %2097 = vrot.lane.b32.xlu0 %v1918, 64
        %v2098 = vpop.permute.xlu0 %2097
        %2099 = vrot.lane.b32.xlu0 %v1919, 64
        %v2100 = vpop.permute.xlu0 %2099
        %2101 = vrot.lane.b32.xlu0 %v1920, 64
        %v2102 = vpop.permute.xlu0 %2101
        %2103 = vrot.lane.b32.xlu0 %v1921, 64
        %v2104 = vpop.permute.xlu0 %2103
        %2105 = vrot.lane.b32.xlu0 %v1922, 64
        %v2106 = vpop.permute.xlu0 %2105
        %2107 = vrot.lane.b32.xlu0 %v1923, 64
        %v2108 = vpop.permute.xlu0 %2107
        %2109 = vrot.lane.b32.xlu0 %v1924, 64
        %v2110 = vpop.permute.xlu0 %2109
        %2111 = vrot.lane.b32.xlu0 %v1925, 64
        %v2112 = vpop.permute.xlu0 %2111
        %2113 = vrot.lane.b32.xlu0 %v1926, 64
        %v2114 = vpop.permute.xlu0 %2113
        %2115 = vrot.lane.b32.xlu0 %v1927, 64
        %v2116 = vpop.permute.xlu0 %2115
        %2117 = vrot.lane.b32.xlu0 %v1928, 64
        %v2118 = vpop.permute.xlu0 %2117
        %2119 = vrot.lane.b32.xlu0 %v1929, 64
        %v2120 = vpop.permute.xlu0 %2119
        %2121 = vrot.lane.b32.xlu0 %v1930, 64
        %v2122 = vpop.permute.xlu0 %2121
        %2123 = vrot.lane.b32.xlu0 %v1931, 64
        %v2124 = vpop.permute.xlu0 %2123
        %2125 = vrot.lane.b32.xlu0 %v1932, 64
        %v2126 = vpop.permute.xlu0 %2125
        %2127 = vrot.lane.b32.xlu0 %v1933, 64
        %v2128 = vpop.permute.xlu0 %2127
        %s2145 = scalar_lea.vmem %s230, 192 [#allocation4]
        %2146 = vst.msk [vmem:[%s2145] sm:$0xf] %vm1336, %v2098
        %2147 = vst.msk [vmem:[%s2145 + $0x4] sm:$0xf] %vm1336, %v2100
        %2148 = vst.msk [vmem:[%s2145 + $0x8] sm:$0xf] %vm1336, %v2102
        %2149 = vst.msk [vmem:[%s2145 + $0xc] sm:$0xf] %vm1336, %v2104
        %2150 = vst.msk [vmem:[%s2145 + $0x10] sm:$0xf] %vm1336, %v2106
        %2151 = vst.msk [vmem:[%s2145 + $0x14] sm:$0xf] %vm1336, %v2108
        %2152 = vst.msk [vmem:[%s2145 + $0x18] sm:$0xf] %vm1336, %v2110
        %2153 = vst.msk [vmem:[%s2145 + $0x1c] sm:$0xf] %vm1336, %v2112
        %2154 = vst.msk [vmem:[%s2145 + $0x20] sm:$0xf] %vm1336, %v2114
        %2155 = vst.msk [vmem:[%s2145 + $0x24] sm:$0xf] %vm1336, %v2116
        %2156 = vst.msk [vmem:[%s2145 + $0x28] sm:$0xf] %vm1336, %v2118
        %2157 = vst.msk [vmem:[%s2145 + $0x2c] sm:$0xf] %vm1336, %v2120
        %2158 = vst.msk [vmem:[%s2145 + $0x30] sm:$0xf] %vm1336, %v2122
        %2159 = vst.msk [vmem:[%s2145 + $0x34] sm:$0xf] %vm1336, %v2124
        %2160 = vst.msk [vmem:[%s2145 + $0x38] sm:$0xf] %vm1336, %v2126
        %2161 = vst.msk [vmem:[%s2145 + $0x3c] sm:$0xf] %vm1336, %v2128
        %s2162 = sand.u32 %s87, 1
        %s2163 = sand.u32 %s87, 1
        %s2164 = smul.addr %s2163, 256
        %s2165 = scalar_lea.vmem [#allocation2], %s2164
        %s2166 = sand.u32 %s115, 1
        %s2167 = sand.u32 %s115, 1
        %s2168 = smul.addr %s2167, 256
        %s2169 = scalar_lea.vmem [#allocation3], %s2168
        %s2170 = sand.u32 %s143, 1
        %s2171 = sand.u32 %s143, 1
        %s2172 = smul.addr %s2171, 256
        %s2173 = scalar_lea.vmem [#allocation4], %s2172
        // Predicated region
        $region29: #{attention_pallas.2} parent=27 // pred_check
          %p2174 = pneg %p97
        $region30: #{attention_pallas.2} parent=27 // pred_check_branch
          %2176 = sbr.rel (%p2174) target = $region32
        $region31: #{attention_pallas.2} parent=27 // pred_region
          %s2177 = smul.u32 16, %s21
          %s2178 = smul.addr %s20, 128
          %s2179 = sadd.s32 %s2177, %s2178
          %s2180 = smul.addr %s2179, 4
          %s2181 = scalar_lea.vmem %s2, %s2180
          // Predicated region
          $region33: #{attention_pallas.2} parent=31 // pred_check
            _
          $region34: #{attention_pallas.2} parent=31 // pred_check_branch
            %2183 = sbr.rel (0) target = $region36
          $region35: #{attention_pallas.2} parent=31 // pred_region
            // Predicated region
            $region37: #{attention_pallas.2} parent=35 // pred_check
              _
            $region38: #{attention_pallas.2} parent=35 // pred_check_branch
              %2185 = sbr.rel target = $region40
            $region39: #{attention_pallas.2} parent=35 // pred_region
              // Predicated region
              $region52: #{attention_pallas.2} parent=39 // pred_check
                _
              $region53: #{attention_pallas.2} parent=39 // pred_check_branch
                %2326 = sbr.rel (0) target = $region55
              $region54: #{attention_pallas.2} parent=39 // pred_region
                loop: start=0, step=1, limit=1
                $region56: #{attention_pallas.2} parent=54 // loop_pre_header
                  _
                $region57: #{attention_pallas.2} parent=54 // loop_header
                  %s2328 = sphi 0, %s2332
                  %p2329 = scmp.ge.s32.totalorder %s2328, 1
                  %s2333 = sphi %s2165, %s2165
                  %s2334 = sphi %s2181, %s2181
                $region58: #{attention_pallas.2} parent=54 // loop_header_branch
                  %2331 = sbr.rel (%p2329) target = $region62
                $region59: #{attention_pallas.2} parent=54 // loop_body
                  _
                $region60: #{attention_pallas.2} parent=54 // loop_footer
                  %s2332 = sadd.s32 1, %s2328
                $region61: #{attention_pallas.2} parent=54 // loop_footer_branch
                  %2327 = sbr.rel target = $region57
                $region62: #{attention_pallas.2} parent=54 // loop_exit
                  _
                loop: start=0, step=1, limit=1
                $region63: #{attention_pallas.2} parent=54 // loop_pre_header
                  _
                $region64: #{attention_pallas.2} parent=54 // loop_header
                  %s2337 = sphi 0, %s2341
                  %p2338 = scmp.ge.s32.totalorder %s2337, 1
                  %s2342 = sphi %s2165, %s2165
                  %s2343 = sphi %s2181, %s2181
                $region65: #{attention_pallas.2} parent=54 // loop_header_branch
                  %2340 = sbr.rel (%p2338) target = $region69
                $region66: #{attention_pallas.2} parent=54 // loop_body
                  %v2344 = vld [vmem:[%s2342] sm:$0xf]
                  %2345 = vst [vmem:[%s2343] sm:$0xf] %v2344
                  %v2346 = vld [vmem:[%s2342 + $0x4] sm:$0xf]
                  %2347 = vst [vmem:[%s2343 + $0x4] sm:$0xf] %v2346
                  %v2348 = vld [vmem:[%s2342 + $0x8] sm:$0xf]
                  %2349 = vst [vmem:[%s2343 + $0x8] sm:$0xf] %v2348
                  %v2350 = vld [vmem:[%s2342 + $0xc] sm:$0xf]
                  %2351 = vst [vmem:[%s2343 + $0xc] sm:$0xf] %v2350
                  %v2352 = vld [vmem:[%s2342 + $0x10] sm:$0xf]
                  %2353 = vst [vmem:[%s2343 + $0x10] sm:$0xf] %v2352
                  %v2354 = vld [vmem:[%s2342 + $0x14] sm:$0xf]
                  %2355 = vst [vmem:[%s2343 + $0x14] sm:$0xf] %v2354
                  %v2356 = vld [vmem:[%s2342 + $0x18] sm:$0xf]
                  %2357 = vst [vmem:[%s2343 + $0x18] sm:$0xf] %v2356
                  %v2358 = vld [vmem:[%s2342 + $0x1c] sm:$0xf]
                  %2359 = vst [vmem:[%s2343 + $0x1c] sm:$0xf] %v2358
                  %v2360 = vld [vmem:[%s2342 + $0x20] sm:$0xf]
                  %2361 = vst [vmem:[%s2343 + $0x20] sm:$0xf] %v2360
                  %v2362 = vld [vmem:[%s2342 + $0x24] sm:$0xf]
                  %2363 = vst [vmem:[%s2343 + $0x24] sm:$0xf] %v2362
                  %v2364 = vld [vmem:[%s2342 + $0x28] sm:$0xf]
                  %2365 = vst [vmem:[%s2343 + $0x28] sm:$0xf] %v2364
                  %v2366 = vld [vmem:[%s2342 + $0x2c] sm:$0xf]
                  %2367 = vst [vmem:[%s2343 + $0x2c] sm:$0xf] %v2366
                  %v2368 = vld [vmem:[%s2342 + $0x30] sm:$0xf]
                  %2369 = vst [vmem:[%s2343 + $0x30] sm:$0xf] %v2368
                  %v2370 = vld [vmem:[%s2342 + $0x34] sm:$0xf]
                  %2371 = vst [vmem:[%s2343 + $0x34] sm:$0xf] %v2370
                  %v2372 = vld [vmem:[%s2342 + $0x38] sm:$0xf]
                  %2373 = vst [vmem:[%s2343 + $0x38] sm:$0xf] %v2372
                  %v2374 = vld [vmem:[%s2342 + $0x3c] sm:$0xf]
                  %2375 = vst [vmem:[%s2343 + $0x3c] sm:$0xf] %v2374
                  %v2376 = vld [vmem:[%s2342 + $0x40] sm:$0xf]
                  %2377 = vst [vmem:[%s2343 + $0x80] sm:$0xf] %v2376
                  %v2378 = vld [vmem:[%s2342 + $0x44] sm:$0xf]
                  %2379 = vst [vmem:[%s2343 + $0x84] sm:$0xf] %v2378
                  %v2380 = vld [vmem:[%s2342 + $0x48] sm:$0xf]
                  %2381 = vst [vmem:[%s2343 + $0x88] sm:$0xf] %v2380
                  %v2382 = vld [vmem:[%s2342 + $0x4c] sm:$0xf]
                  %2383 = vst [vmem:[%s2343 + $0x8c] sm:$0xf] %v2382
                  %v2384 = vld [vmem:[%s2342 + $0x50] sm:$0xf]
                  %2385 = vst [vmem:[%s2343 + $0x90] sm:$0xf] %v2384
                  %v2386 = vld [vmem:[%s2342 + $0x54] sm:$0xf]
                  %2387 = vst [vmem:[%s2343 + $0x94] sm:$0xf] %v2386
                  %v2388 = vld [vmem:[%s2342 + $0x58] sm:$0xf]
                  %2389 = vst [vmem:[%s2343 + $0x98] sm:$0xf] %v2388
                  %v2390 = vld [vmem:[%s2342 + $0x5c] sm:$0xf]
                  %2391 = vst [vmem:[%s2343 + $0x9c] sm:$0xf] %v2390
                  %v2392 = vld [vmem:[%s2342 + $0x60] sm:$0xf]
                  %2393 = vst [vmem:[%s2343 + $0xa0] sm:$0xf] %v2392
                  %v2394 = vld [vmem:[%s2342 + $0x64] sm:$0xf]
                  %2395 = vst [vmem:[%s2343 + $0xa4] sm:$0xf] %v2394
                  %v2396 = vld [vmem:[%s2342 + $0x68] sm:$0xf]
                  %2397 = vst [vmem:[%s2343 + $0xa8] sm:$0xf] %v2396
                  %v2398 = vld [vmem:[%s2342 + $0x6c] sm:$0xf]
                  %2399 = vst [vmem:[%s2343 + $0xac] sm:$0xf] %v2398
                  %v2400 = vld [vmem:[%s2342 + $0x70] sm:$0xf]
                  %2401 = vst [vmem:[%s2343 + $0xb0] sm:$0xf] %v2400
                  %v2402 = vld [vmem:[%s2342 + $0x74] sm:$0xf]
                  %2403 = vst [vmem:[%s2343 + $0xb4] sm:$0xf] %v2402
                  %v2404 = vld [vmem:[%s2342 + $0x78] sm:$0xf]
                  %2405 = vst [vmem:[%s2343 + $0xb8] sm:$0xf] %v2404
                  %v2406 = vld [vmem:[%s2342 + $0x7c] sm:$0xf]
                  %2407 = vst [vmem:[%s2343 + $0xbc] sm:$0xf] %v2406
                  %v2408 = vld [vmem:[%s2342 + $0x80] sm:$0xf]
                  %2409 = vst [vmem:[%s2343 + $0x100] sm:$0xf] %v2408
                  %v2410 = vld [vmem:[%s2342 + $0x84] sm:$0xf]
                  %2411 = vst [vmem:[%s2343 + $0x104] sm:$0xf] %v2410
                  %v2412 = vld [vmem:[%s2342 + $0x88] sm:$0xf]
                  %2413 = vst [vmem:[%s2343 + $0x108] sm:$0xf] %v2412
                  %v2414 = vld [vmem:[%s2342 + $0x8c] sm:$0xf]
                  %2415 = vst [vmem:[%s2343 + $0x10c] sm:$0xf] %v2414
                  %v2416 = vld [vmem:[%s2342 + $0x90] sm:$0xf]
                  %2417 = vst [vmem:[%s2343 + $0x110] sm:$0xf] %v2416
                  %v2418 = vld [vmem:[%s2342 + $0x94] sm:$0xf]
                  %2419 = vst [vmem:[%s2343 + $0x114] sm:$0xf] %v2418
                  %v2420 = vld [vmem:[%s2342 + $0x98] sm:$0xf]
                  %2421 = vst [vmem:[%s2343 + $0x118] sm:$0xf] %v2420
                  %v2422 = vld [vmem:[%s2342 + $0x9c] sm:$0xf]
                  %2423 = vst [vmem:[%s2343 + $0x11c] sm:$0xf] %v2422
                  %v2424 = vld [vmem:[%s2342 + $0xa0] sm:$0xf]
                  %2425 = vst [vmem:[%s2343 + $0x120] sm:$0xf] %v2424
                  %v2426 = vld [vmem:[%s2342 + $0xa4] sm:$0xf]
                  %2427 = vst [vmem:[%s2343 + $0x124] sm:$0xf] %v2426
                  %v2428 = vld [vmem:[%s2342 + $0xa8] sm:$0xf]
                  %2429 = vst [vmem:[%s2343 + $0x128] sm:$0xf] %v2428
                  %v2430 = vld [vmem:[%s2342 + $0xac] sm:$0xf]
                  %2431 = vst [vmem:[%s2343 + $0x12c] sm:$0xf] %v2430
                  %v2432 = vld [vmem:[%s2342 + $0xb0] sm:$0xf]
                  %2433 = vst [vmem:[%s2343 + $0x130] sm:$0xf] %v2432
                  %v2434 = vld [vmem:[%s2342 + $0xb4] sm:$0xf]
                  %2435 = vst [vmem:[%s2343 + $0x134] sm:$0xf] %v2434
                  %v2436 = vld [vmem:[%s2342 + $0xb8] sm:$0xf]
                  %2437 = vst [vmem:[%s2343 + $0x138] sm:$0xf] %v2436
                  %v2438 = vld [vmem:[%s2342 + $0xbc] sm:$0xf]
                  %2439 = vst [vmem:[%s2343 + $0x13c] sm:$0xf] %v2438
                  %v2440 = vld [vmem:[%s2342 + $0xc0] sm:$0xf]
                  %2441 = vst [vmem:[%s2343 + $0x180] sm:$0xf] %v2440
                  %v2442 = vld [vmem:[%s2342 + $0xc4] sm:$0xf]
                  %2443 = vst [vmem:[%s2343 + $0x184] sm:$0xf] %v2442
                  %v2444 = vld [vmem:[%s2342 + $0xc8] sm:$0xf]
                  %2445 = vst [vmem:[%s2343 + $0x188] sm:$0xf] %v2444
                  %v2446 = vld [vmem:[%s2342 + $0xcc] sm:$0xf]
                  %2447 = vst [vmem:[%s2343 + $0x18c] sm:$0xf] %v2446
                  %v2448 = vld [vmem:[%s2342 + $0xd0] sm:$0xf]
                  %2449 = vst [vmem:[%s2343 + $0x190] sm:$0xf] %v2448
                  %v2450 = vld [vmem:[%s2342 + $0xd4] sm:$0xf]
                  %2451 = vst [vmem:[%s2343 + $0x194] sm:$0xf] %v2450
                  %v2452 = vld [vmem:[%s2342 + $0xd8] sm:$0xf]
                  %2453 = vst [vmem:[%s2343 + $0x198] sm:$0xf] %v2452
                  %v2454 = vld [vmem:[%s2342 + $0xdc] sm:$0xf]
                  %2455 = vst [vmem:[%s2343 + $0x19c] sm:$0xf] %v2454
                  %v2456 = vld [vmem:[%s2342 + $0xe0] sm:$0xf]
                  %2457 = vst [vmem:[%s2343 + $0x1a0] sm:$0xf] %v2456
                  %v2458 = vld [vmem:[%s2342 + $0xe4] sm:$0xf]
                  %2459 = vst [vmem:[%s2343 + $0x1a4] sm:$0xf] %v2458
                  %v2460 = vld [vmem:[%s2342 + $0xe8] sm:$0xf]
                  %2461 = vst [vmem:[%s2343 + $0x1a8] sm:$0xf] %v2460
                  %v2462 = vld [vmem:[%s2342 + $0xec] sm:$0xf]
                  %2463 = vst [vmem:[%s2343 + $0x1ac] sm:$0xf] %v2462
                  %v2464 = vld [vmem:[%s2342 + $0xf0] sm:$0xf]
                  %2465 = vst [vmem:[%s2343 + $0x1b0] sm:$0xf] %v2464
                  %v2466 = vld [vmem:[%s2342 + $0xf4] sm:$0xf]
                  %2467 = vst [vmem:[%s2343 + $0x1b4] sm:$0xf] %v2466
                  %v2468 = vld [vmem:[%s2342 + $0xf8] sm:$0xf]
                  %2469 = vst [vmem:[%s2343 + $0x1b8] sm:$0xf] %v2468
                  %v2470 = vld [vmem:[%s2342 + $0xfc] sm:$0xf]
                  %2471 = vst [vmem:[%s2343 + $0x1bc] sm:$0xf] %v2470
                $region67: #{attention_pallas.2} parent=54 // loop_footer
                  %s2341 = sadd.s32 1, %s2337
                $region68: #{attention_pallas.2} parent=54 // loop_footer_branch
                  %2336 = sbr.rel target = $region64
                $region69: #{attention_pallas.2} parent=54 // loop_exit
                  _
              $region55: #{attention_pallas.2} parent=39 // pred_fallthru
                _
            $region40: #{attention_pallas.2} parent=35 // pred_fallthru
              _
            // Predicated region
            $region41: #{attention_pallas.2} parent=35 // pred_check
              _
            $region42: #{attention_pallas.2} parent=35 // pred_check_branch
              %2187 = sbr.rel (0) target = $region44
            $region43: #{attention_pallas.2} parent=35 // pred_region
              loop: start=0, step=1, limit=1
              $region45: #{attention_pallas.2} parent=43 // loop_pre_header
                _
              $region46: #{attention_pallas.2} parent=43 // loop_header
                %s2190 = sphi 0, %s2194
                %p2191 = scmp.ge.s32.totalorder %s2190, 1
                %s2195 = sphi %s2165, %s2165
                %s2196 = sphi %s2181, %s2181
              $region47: #{attention_pallas.2} parent=43 // loop_header_branch
                %2193 = sbr.rel (%p2191) target = $region51
              $region48: #{attention_pallas.2} parent=43 // loop_body
                %v2197 = vld [vmem:[%s2195] sm:$0xf]
                %2198 = vst [vmem:[%s2196] sm:$0xf] %v2197
                %v2199 = vld [vmem:[%s2195 + $0x4] sm:$0xf]
                %2200 = vst [vmem:[%s2196 + $0x4] sm:$0xf] %v2199
                %v2201 = vld [vmem:[%s2195 + $0x8] sm:$0xf]
                %2202 = vst [vmem:[%s2196 + $0x8] sm:$0xf] %v2201
                %v2203 = vld [vmem:[%s2195 + $0xc] sm:$0xf]
                %2204 = vst [vmem:[%s2196 + $0xc] sm:$0xf] %v2203
                %v2205 = vld [vmem:[%s2195 + $0x10] sm:$0xf]
                %2206 = vst [vmem:[%s2196 + $0x10] sm:$0xf] %v2205
                %v2207 = vld [vmem:[%s2195 + $0x14] sm:$0xf]
                %2208 = vst [vmem:[%s2196 + $0x14] sm:$0xf] %v2207
                %v2209 = vld [vmem:[%s2195 + $0x18] sm:$0xf]
                %2210 = vst [vmem:[%s2196 + $0x18] sm:$0xf] %v2209
                %v2211 = vld [vmem:[%s2195 + $0x1c] sm:$0xf]
                %2212 = vst [vmem:[%s2196 + $0x1c] sm:$0xf] %v2211
                %v2213 = vld [vmem:[%s2195 + $0x20] sm:$0xf]
                %2214 = vst [vmem:[%s2196 + $0x20] sm:$0xf] %v2213
                %v2215 = vld [vmem:[%s2195 + $0x24] sm:$0xf]
                %2216 = vst [vmem:[%s2196 + $0x24] sm:$0xf] %v2215
                %v2217 = vld [vmem:[%s2195 + $0x28] sm:$0xf]
                %2218 = vst [vmem:[%s2196 + $0x28] sm:$0xf] %v2217
                %v2219 = vld [vmem:[%s2195 + $0x2c] sm:$0xf]
                %2220 = vst [vmem:[%s2196 + $0x2c] sm:$0xf] %v2219
                %v2221 = vld [vmem:[%s2195 + $0x30] sm:$0xf]
                %2222 = vst [vmem:[%s2196 + $0x30] sm:$0xf] %v2221
                %v2223 = vld [vmem:[%s2195 + $0x34] sm:$0xf]
                %2224 = vst [vmem:[%s2196 + $0x34] sm:$0xf] %v2223
                %v2225 = vld [vmem:[%s2195 + $0x38] sm:$0xf]
                %2226 = vst [vmem:[%s2196 + $0x38] sm:$0xf] %v2225
                %v2227 = vld [vmem:[%s2195 + $0x3c] sm:$0xf]
                %2228 = vst [vmem:[%s2196 + $0x3c] sm:$0xf] %v2227
                %v2229 = vld [vmem:[%s2195 + $0x40] sm:$0xf]
                %2230 = vst [vmem:[%s2196 + $0x80] sm:$0xf] %v2229
                %v2231 = vld [vmem:[%s2195 + $0x44] sm:$0xf]
                %2232 = vst [vmem:[%s2196 + $0x84] sm:$0xf] %v2231
                %v2233 = vld [vmem:[%s2195 + $0x48] sm:$0xf]
                %2234 = vst [vmem:[%s2196 + $0x88] sm:$0xf] %v2233
                %v2235 = vld [vmem:[%s2195 + $0x4c] sm:$0xf]
                %2236 = vst [vmem:[%s2196 + $0x8c] sm:$0xf] %v2235
                %v2237 = vld [vmem:[%s2195 + $0x50] sm:$0xf]
                %2238 = vst [vmem:[%s2196 + $0x90] sm:$0xf] %v2237
                %v2239 = vld [vmem:[%s2195 + $0x54] sm:$0xf]
                %2240 = vst [vmem:[%s2196 + $0x94] sm:$0xf] %v2239
                %v2241 = vld [vmem:[%s2195 + $0x58] sm:$0xf]
                %2242 = vst [vmem:[%s2196 + $0x98] sm:$0xf] %v2241
                %v2243 = vld [vmem:[%s2195 + $0x5c] sm:$0xf]
                %2244 = vst [vmem:[%s2196 + $0x9c] sm:$0xf] %v2243
                %v2245 = vld [vmem:[%s2195 + $0x60] sm:$0xf]
                %2246 = vst [vmem:[%s2196 + $0xa0] sm:$0xf] %v2245
                %v2247 = vld [vmem:[%s2195 + $0x64] sm:$0xf]
                %2248 = vst [vmem:[%s2196 + $0xa4] sm:$0xf] %v2247
                %v2249 = vld [vmem:[%s2195 + $0x68] sm:$0xf]
                %2250 = vst [vmem:[%s2196 + $0xa8] sm:$0xf] %v2249
                %v2251 = vld [vmem:[%s2195 + $0x6c] sm:$0xf]
                %2252 = vst [vmem:[%s2196 + $0xac] sm:$0xf] %v2251
                %v2253 = vld [vmem:[%s2195 + $0x70] sm:$0xf]
                %2254 = vst [vmem:[%s2196 + $0xb0] sm:$0xf] %v2253
                %v2255 = vld [vmem:[%s2195 + $0x74] sm:$0xf]
                %2256 = vst [vmem:[%s2196 + $0xb4] sm:$0xf] %v2255
                %v2257 = vld [vmem:[%s2195 + $0x78] sm:$0xf]
                %2258 = vst [vmem:[%s2196 + $0xb8] sm:$0xf] %v2257
                %v2259 = vld [vmem:[%s2195 + $0x7c] sm:$0xf]
                %2260 = vst [vmem:[%s2196 + $0xbc] sm:$0xf] %v2259
                %v2261 = vld [vmem:[%s2195 + $0x80] sm:$0xf]
                %2262 = vst [vmem:[%s2196 + $0x100] sm:$0xf] %v2261
                %v2263 = vld [vmem:[%s2195 + $0x84] sm:$0xf]
                %2264 = vst [vmem:[%s2196 + $0x104] sm:$0xf] %v2263
                %v2265 = vld [vmem:[%s2195 + $0x88] sm:$0xf]
                %2266 = vst [vmem:[%s2196 + $0x108] sm:$0xf] %v2265
                %v2267 = vld [vmem:[%s2195 + $0x8c] sm:$0xf]
                %2268 = vst [vmem:[%s2196 + $0x10c] sm:$0xf] %v2267
                %v2269 = vld [vmem:[%s2195 + $0x90] sm:$0xf]
                %2270 = vst [vmem:[%s2196 + $0x110] sm:$0xf] %v2269
                %v2271 = vld [vmem:[%s2195 + $0x94] sm:$0xf]
                %2272 = vst [vmem:[%s2196 + $0x114] sm:$0xf] %v2271
                %v2273 = vld [vmem:[%s2195 + $0x98] sm:$0xf]
                %2274 = vst [vmem:[%s2196 + $0x118] sm:$0xf] %v2273
                %v2275 = vld [vmem:[%s2195 + $0x9c] sm:$0xf]
                %2276 = vst [vmem:[%s2196 + $0x11c] sm:$0xf] %v2275
                %v2277 = vld [vmem:[%s2195 + $0xa0] sm:$0xf]
                %2278 = vst [vmem:[%s2196 + $0x120] sm:$0xf] %v2277
                %v2279 = vld [vmem:[%s2195 + $0xa4] sm:$0xf]
                %2280 = vst [vmem:[%s2196 + $0x124] sm:$0xf] %v2279
                %v2281 = vld [vmem:[%s2195 + $0xa8] sm:$0xf]
                %2282 = vst [vmem:[%s2196 + $0x128] sm:$0xf] %v2281
                %v2283 = vld [vmem:[%s2195 + $0xac] sm:$0xf]
                %2284 = vst [vmem:[%s2196 + $0x12c] sm:$0xf] %v2283
                %v2285 = vld [vmem:[%s2195 + $0xb0] sm:$0xf]
                %2286 = vst [vmem:[%s2196 + $0x130] sm:$0xf] %v2285
                %v2287 = vld [vmem:[%s2195 + $0xb4] sm:$0xf]
                %2288 = vst [vmem:[%s2196 + $0x134] sm:$0xf] %v2287
                %v2289 = vld [vmem:[%s2195 + $0xb8] sm:$0xf]
                %2290 = vst [vmem:[%s2196 + $0x138] sm:$0xf] %v2289
                %v2291 = vld [vmem:[%s2195 + $0xbc] sm:$0xf]
                %2292 = vst [vmem:[%s2196 + $0x13c] sm:$0xf] %v2291
                %v2293 = vld [vmem:[%s2195 + $0xc0] sm:$0xf]
                %2294 = vst [vmem:[%s2196 + $0x180] sm:$0xf] %v2293
                %v2295 = vld [vmem:[%s2195 + $0xc4] sm:$0xf]
                %2296 = vst [vmem:[%s2196 + $0x184] sm:$0xf] %v2295
                %v2297 = vld [vmem:[%s2195 + $0xc8] sm:$0xf]
                %2298 = vst [vmem:[%s2196 + $0x188] sm:$0xf] %v2297
                %v2299 = vld [vmem:[%s2195 + $0xcc] sm:$0xf]
                %2300 = vst [vmem:[%s2196 + $0x18c] sm:$0xf] %v2299
                %v2301 = vld [vmem:[%s2195 + $0xd0] sm:$0xf]
                %2302 = vst [vmem:[%s2196 + $0x190] sm:$0xf] %v2301
                %v2303 = vld [vmem:[%s2195 + $0xd4] sm:$0xf]
                %2304 = vst [vmem:[%s2196 + $0x194] sm:$0xf] %v2303
                %v2305 = vld [vmem:[%s2195 + $0xd8] sm:$0xf]
                %2306 = vst [vmem:[%s2196 + $0x198] sm:$0xf] %v2305
                %v2307 = vld [vmem:[%s2195 + $0xdc] sm:$0xf]
                %2308 = vst [vmem:[%s2196 + $0x19c] sm:$0xf] %v2307
                %v2309 = vld [vmem:[%s2195 + $0xe0] sm:$0xf]
                %2310 = vst [vmem:[%s2196 + $0x1a0] sm:$0xf] %v2309
                %v2311 = vld [vmem:[%s2195 + $0xe4] sm:$0xf]
                %2312 = vst [vmem:[%s2196 + $0x1a4] sm:$0xf] %v2311
                %v2313 = vld [vmem:[%s2195 + $0xe8] sm:$0xf]
                %2314 = vst [vmem:[%s2196 + $0x1a8] sm:$0xf] %v2313
                %v2315 = vld [vmem:[%s2195 + $0xec] sm:$0xf]
                %2316 = vst [vmem:[%s2196 + $0x1ac] sm:$0xf] %v2315
                %v2317 = vld [vmem:[%s2195 + $0xf0] sm:$0xf]
                %2318 = vst [vmem:[%s2196 + $0x1b0] sm:$0xf] %v2317
                %v2319 = vld [vmem:[%s2195 + $0xf4] sm:$0xf]
                %2320 = vst [vmem:[%s2196 + $0x1b4] sm:$0xf] %v2319
                %v2321 = vld [vmem:[%s2195 + $0xf8] sm:$0xf]
                %2322 = vst [vmem:[%s2196 + $0x1b8] sm:$0xf] %v2321
                %v2323 = vld [vmem:[%s2195 + $0xfc] sm:$0xf]
                %2324 = vst [vmem:[%s2196 + $0x1bc] sm:$0xf] %v2323
              $region49: #{attention_pallas.2} parent=43 // loop_footer
                %s2194 = sadd.s32 1, %s2190
              $region50: #{attention_pallas.2} parent=43 // loop_footer_branch
                %2189 = sbr.rel target = $region46
              $region51: #{attention_pallas.2} parent=43 // loop_exit
                _
            $region44: #{attention_pallas.2} parent=35 // pred_fallthru
              _
          $region36: #{attention_pallas.2} parent=31 // pred_fallthru
            _
          %2472 = vnop
        $region32: #{attention_pallas.2} parent=27 // pred_fallthru
          _
        // Predicated region
        $region70: #{attention_pallas.2} parent=27 // pred_check
          %p2473 = pneg %p125
        $region71: #{attention_pallas.2} parent=27 // pred_check_branch
          %2475 = sbr.rel (%p2473) target = $region73
        $region72: #{attention_pallas.2} parent=27 // pred_region
          %s2476 = smul.u32 16, %s21
          %s2477 = smul.addr %s20, 128
          %s2478 = sadd.s32 %s2476, %s2477
          %s2479 = smul.addr %s2478, 4
          %s2480 = scalar_lea.vmem %s3, %s2479
          // Predicated region
          $region74: #{attention_pallas.2} parent=72 // pred_check
            _
          $region75: #{attention_pallas.2} parent=72 // pred_check_branch
            %2482 = sbr.rel (0) target = $region77
          $region76: #{attention_pallas.2} parent=72 // pred_region
            // Predicated region
            $region78: #{attention_pallas.2} parent=76 // pred_check
              _
            $region79: #{attention_pallas.2} parent=76 // pred_check_branch
              %2484 = sbr.rel target = $region81
            $region80: #{attention_pallas.2} parent=76 // pred_region
              // Predicated region
              $region93: #{attention_pallas.2} parent=80 // pred_check
                _
              $region94: #{attention_pallas.2} parent=80 // pred_check_branch
                %2625 = sbr.rel (0) target = $region96
              $region95: #{attention_pallas.2} parent=80 // pred_region
                loop: start=0, step=1, limit=1
                $region97: #{attention_pallas.2} parent=95 // loop_pre_header
                  _
                $region98: #{attention_pallas.2} parent=95 // loop_header
                  %s2627 = sphi 0, %s2631
                  %p2628 = scmp.ge.s32.totalorder %s2627, 1
                  %s2632 = sphi %s2169, %s2169
                  %s2633 = sphi %s2480, %s2480
                $region99: #{attention_pallas.2} parent=95 // loop_header_branch
                  %2630 = sbr.rel (%p2628) target = $region103
                $region100: #{attention_pallas.2} parent=95 // loop_body
                  _
                $region101: #{attention_pallas.2} parent=95 // loop_footer
                  %s2631 = sadd.s32 1, %s2627
                $region102: #{attention_pallas.2} parent=95 // loop_footer_branch
                  %2626 = sbr.rel target = $region98
                $region103: #{attention_pallas.2} parent=95 // loop_exit
                  _
                loop: start=0, step=1, limit=1
                $region104: #{attention_pallas.2} parent=95 // loop_pre_header
                  _
                $region105: #{attention_pallas.2} parent=95 // loop_header
                  %s2636 = sphi 0, %s2640
                  %p2637 = scmp.ge.s32.totalorder %s2636, 1
                  %s2641 = sphi %s2169, %s2169
                  %s2642 = sphi %s2480, %s2480
                $region106: #{attention_pallas.2} parent=95 // loop_header_branch
                  %2639 = sbr.rel (%p2637) target = $region110
                $region107: #{attention_pallas.2} parent=95 // loop_body
                  %v2643 = vld [vmem:[%s2641] sm:$0xf]
                  %2644 = vst [vmem:[%s2642] sm:$0xf] %v2643
                  %v2645 = vld [vmem:[%s2641 + $0x4] sm:$0xf]
                  %2646 = vst [vmem:[%s2642 + $0x4] sm:$0xf] %v2645
                  %v2647 = vld [vmem:[%s2641 + $0x8] sm:$0xf]
                  %2648 = vst [vmem:[%s2642 + $0x8] sm:$0xf] %v2647
                  %v2649 = vld [vmem:[%s2641 + $0xc] sm:$0xf]
                  %2650 = vst [vmem:[%s2642 + $0xc] sm:$0xf] %v2649
                  %v2651 = vld [vmem:[%s2641 + $0x10] sm:$0xf]
                  %2652 = vst [vmem:[%s2642 + $0x10] sm:$0xf] %v2651
                  %v2653 = vld [vmem:[%s2641 + $0x14] sm:$0xf]
                  %2654 = vst [vmem:[%s2642 + $0x14] sm:$0xf] %v2653
                  %v2655 = vld [vmem:[%s2641 + $0x18] sm:$0xf]
                  %2656 = vst [vmem:[%s2642 + $0x18] sm:$0xf] %v2655
                  %v2657 = vld [vmem:[%s2641 + $0x1c] sm:$0xf]
                  %2658 = vst [vmem:[%s2642 + $0x1c] sm:$0xf] %v2657
                  %v2659 = vld [vmem:[%s2641 + $0x20] sm:$0xf]
                  %2660 = vst [vmem:[%s2642 + $0x20] sm:$0xf] %v2659
                  %v2661 = vld [vmem:[%s2641 + $0x24] sm:$0xf]
                  %2662 = vst [vmem:[%s2642 + $0x24] sm:$0xf] %v2661
                  %v2663 = vld [vmem:[%s2641 + $0x28] sm:$0xf]
                  %2664 = vst [vmem:[%s2642 + $0x28] sm:$0xf] %v2663
                  %v2665 = vld [vmem:[%s2641 + $0x2c] sm:$0xf]
                  %2666 = vst [vmem:[%s2642 + $0x2c] sm:$0xf] %v2665
                  %v2667 = vld [vmem:[%s2641 + $0x30] sm:$0xf]
                  %2668 = vst [vmem:[%s2642 + $0x30] sm:$0xf] %v2667
                  %v2669 = vld [vmem:[%s2641 + $0x34] sm:$0xf]
                  %2670 = vst [vmem:[%s2642 + $0x34] sm:$0xf] %v2669
                  %v2671 = vld [vmem:[%s2641 + $0x38] sm:$0xf]
                  %2672 = vst [vmem:[%s2642 + $0x38] sm:$0xf] %v2671
                  %v2673 = vld [vmem:[%s2641 + $0x3c] sm:$0xf]
                  %2674 = vst [vmem:[%s2642 + $0x3c] sm:$0xf] %v2673
                  %v2675 = vld [vmem:[%s2641 + $0x40] sm:$0xf]
                  %2676 = vst [vmem:[%s2642 + $0x80] sm:$0xf] %v2675
                  %v2677 = vld [vmem:[%s2641 + $0x44] sm:$0xf]
                  %2678 = vst [vmem:[%s2642 + $0x84] sm:$0xf] %v2677
                  %v2679 = vld [vmem:[%s2641 + $0x48] sm:$0xf]
                  %2680 = vst [vmem:[%s2642 + $0x88] sm:$0xf] %v2679
                  %v2681 = vld [vmem:[%s2641 + $0x4c] sm:$0xf]
                  %2682 = vst [vmem:[%s2642 + $0x8c] sm:$0xf] %v2681
                  %v2683 = vld [vmem:[%s2641 + $0x50] sm:$0xf]
                  %2684 = vst [vmem:[%s2642 + $0x90] sm:$0xf] %v2683
                  %v2685 = vld [vmem:[%s2641 + $0x54] sm:$0xf]
                  %2686 = vst [vmem:[%s2642 + $0x94] sm:$0xf] %v2685
                  %v2687 = vld [vmem:[%s2641 + $0x58] sm:$0xf]
                  %2688 = vst [vmem:[%s2642 + $0x98] sm:$0xf] %v2687
                  %v2689 = vld [vmem:[%s2641 + $0x5c] sm:$0xf]
                  %2690 = vst [vmem:[%s2642 + $0x9c] sm:$0xf] %v2689
                  %v2691 = vld [vmem:[%s2641 + $0x60] sm:$0xf]
                  %2692 = vst [vmem:[%s2642 + $0xa0] sm:$0xf] %v2691
                  %v2693 = vld [vmem:[%s2641 + $0x64] sm:$0xf]
                  %2694 = vst [vmem:[%s2642 + $0xa4] sm:$0xf] %v2693
                  %v2695 = vld [vmem:[%s2641 + $0x68] sm:$0xf]
                  %2696 = vst [vmem:[%s2642 + $0xa8] sm:$0xf] %v2695
                  %v2697 = vld [vmem:[%s2641 + $0x6c] sm:$0xf]
                  %2698 = vst [vmem:[%s2642 + $0xac] sm:$0xf] %v2697
                  %v2699 = vld [vmem:[%s2641 + $0x70] sm:$0xf]
                  %2700 = vst [vmem:[%s2642 + $0xb0] sm:$0xf] %v2699
                  %v2701 = vld [vmem:[%s2641 + $0x74] sm:$0xf]
                  %2702 = vst [vmem:[%s2642 + $0xb4] sm:$0xf] %v2701
                  %v2703 = vld [vmem:[%s2641 + $0x78] sm:$0xf]
                  %2704 = vst [vmem:[%s2642 + $0xb8] sm:$0xf] %v2703
                  %v2705 = vld [vmem:[%s2641 + $0x7c] sm:$0xf]
                  %2706 = vst [vmem:[%s2642 + $0xbc] sm:$0xf] %v2705
                  %v2707 = vld [vmem:[%s2641 + $0x80] sm:$0xf]
                  %2708 = vst [vmem:[%s2642 + $0x100] sm:$0xf] %v2707
                  %v2709 = vld [vmem:[%s2641 + $0x84] sm:$0xf]
                  %2710 = vst [vmem:[%s2642 + $0x104] sm:$0xf] %v2709
                  %v2711 = vld [vmem:[%s2641 + $0x88] sm:$0xf]
                  %2712 = vst [vmem:[%s2642 + $0x108] sm:$0xf] %v2711
                  %v2713 = vld [vmem:[%s2641 + $0x8c] sm:$0xf]
                  %2714 = vst [vmem:[%s2642 + $0x10c] sm:$0xf] %v2713
                  %v2715 = vld [vmem:[%s2641 + $0x90] sm:$0xf]
                  %2716 = vst [vmem:[%s2642 + $0x110] sm:$0xf] %v2715
                  %v2717 = vld [vmem:[%s2641 + $0x94] sm:$0xf]
                  %2718 = vst [vmem:[%s2642 + $0x114] sm:$0xf] %v2717
                  %v2719 = vld [vmem:[%s2641 + $0x98] sm:$0xf]
                  %2720 = vst [vmem:[%s2642 + $0x118] sm:$0xf] %v2719
                  %v2721 = vld [vmem:[%s2641 + $0x9c] sm:$0xf]
                  %2722 = vst [vmem:[%s2642 + $0x11c] sm:$0xf] %v2721
                  %v2723 = vld [vmem:[%s2641 + $0xa0] sm:$0xf]
                  %2724 = vst [vmem:[%s2642 + $0x120] sm:$0xf] %v2723
                  %v2725 = vld [vmem:[%s2641 + $0xa4] sm:$0xf]
                  %2726 = vst [vmem:[%s2642 + $0x124] sm:$0xf] %v2725
                  %v2727 = vld [vmem:[%s2641 + $0xa8] sm:$0xf]
                  %2728 = vst [vmem:[%s2642 + $0x128] sm:$0xf] %v2727
                  %v2729 = vld [vmem:[%s2641 + $0xac] sm:$0xf]
                  %2730 = vst [vmem:[%s2642 + $0x12c] sm:$0xf] %v2729
                  %v2731 = vld [vmem:[%s2641 + $0xb0] sm:$0xf]
                  %2732 = vst [vmem:[%s2642 + $0x130] sm:$0xf] %v2731
                  %v2733 = vld [vmem:[%s2641 + $0xb4] sm:$0xf]
                  %2734 = vst [vmem:[%s2642 + $0x134] sm:$0xf] %v2733
                  %v2735 = vld [vmem:[%s2641 + $0xb8] sm:$0xf]
                  %2736 = vst [vmem:[%s2642 + $0x138] sm:$0xf] %v2735
                  %v2737 = vld [vmem:[%s2641 + $0xbc] sm:$0xf]
                  %2738 = vst [vmem:[%s2642 + $0x13c] sm:$0xf] %v2737
                  %v2739 = vld [vmem:[%s2641 + $0xc0] sm:$0xf]
                  %2740 = vst [vmem:[%s2642 + $0x180] sm:$0xf] %v2739
                  %v2741 = vld [vmem:[%s2641 + $0xc4] sm:$0xf]
                  %2742 = vst [vmem:[%s2642 + $0x184] sm:$0xf] %v2741
                  %v2743 = vld [vmem:[%s2641 + $0xc8] sm:$0xf]
                  %2744 = vst [vmem:[%s2642 + $0x188] sm:$0xf] %v2743
                  %v2745 = vld [vmem:[%s2641 + $0xcc] sm:$0xf]
                  %2746 = vst [vmem:[%s2642 + $0x18c] sm:$0xf] %v2745
                  %v2747 = vld [vmem:[%s2641 + $0xd0] sm:$0xf]
                  %2748 = vst [vmem:[%s2642 + $0x190] sm:$0xf] %v2747
                  %v2749 = vld [vmem:[%s2641 + $0xd4] sm:$0xf]
                  %2750 = vst [vmem:[%s2642 + $0x194] sm:$0xf] %v2749
                  %v2751 = vld [vmem:[%s2641 + $0xd8] sm:$0xf]
                  %2752 = vst [vmem:[%s2642 + $0x198] sm:$0xf] %v2751
                  %v2753 = vld [vmem:[%s2641 + $0xdc] sm:$0xf]
                  %2754 = vst [vmem:[%s2642 + $0x19c] sm:$0xf] %v2753
                  %v2755 = vld [vmem:[%s2641 + $0xe0] sm:$0xf]
                  %2756 = vst [vmem:[%s2642 + $0x1a0] sm:$0xf] %v2755
                  %v2757 = vld [vmem:[%s2641 + $0xe4] sm:$0xf]
                  %2758 = vst [vmem:[%s2642 + $0x1a4] sm:$0xf] %v2757
                  %v2759 = vld [vmem:[%s2641 + $0xe8] sm:$0xf]
                  %2760 = vst [vmem:[%s2642 + $0x1a8] sm:$0xf] %v2759
                  %v2761 = vld [vmem:[%s2641 + $0xec] sm:$0xf]
                  %2762 = vst [vmem:[%s2642 + $0x1ac] sm:$0xf] %v2761
                  %v2763 = vld [vmem:[%s2641 + $0xf0] sm:$0xf]
                  %2764 = vst [vmem:[%s2642 + $0x1b0] sm:$0xf] %v2763
                  %v2765 = vld [vmem:[%s2641 + $0xf4] sm:$0xf]
                  %2766 = vst [vmem:[%s2642 + $0x1b4] sm:$0xf] %v2765
                  %v2767 = vld [vmem:[%s2641 + $0xf8] sm:$0xf]
                  %2768 = vst [vmem:[%s2642 + $0x1b8] sm:$0xf] %v2767
                  %v2769 = vld [vmem:[%s2641 + $0xfc] sm:$0xf]
                  %2770 = vst [vmem:[%s2642 + $0x1bc] sm:$0xf] %v2769
                $region108: #{attention_pallas.2} parent=95 // loop_footer
                  %s2640 = sadd.s32 1, %s2636
                $region109: #{attention_pallas.2} parent=95 // loop_footer_branch
                  %2635 = sbr.rel target = $region105
                $region110: #{attention_pallas.2} parent=95 // loop_exit
                  _
              $region96: #{attention_pallas.2} parent=80 // pred_fallthru
                _
            $region81: #{attention_pallas.2} parent=76 // pred_fallthru
              _
            // Predicated region
            $region82: #{attention_pallas.2} parent=76 // pred_check
              _
            $region83: #{attention_pallas.2} parent=76 // pred_check_branch
              %2486 = sbr.rel (0) target = $region85
            $region84: #{attention_pallas.2} parent=76 // pred_region
              loop: start=0, step=1, limit=1
              $region86: #{attention_pallas.2} parent=84 // loop_pre_header
                _
              $region87: #{attention_pallas.2} parent=84 // loop_header
                %s2489 = sphi 0, %s2493
                %p2490 = scmp.ge.s32.totalorder %s2489, 1
                %s2494 = sphi %s2169, %s2169
                %s2495 = sphi %s2480, %s2480
              $region88: #{attention_pallas.2} parent=84 // loop_header_branch
                %2492 = sbr.rel (%p2490) target = $region92
              $region89: #{attention_pallas.2} parent=84 // loop_body
                %v2496 = vld [vmem:[%s2494] sm:$0xf]
                %2497 = vst [vmem:[%s2495] sm:$0xf] %v2496
                %v2498 = vld [vmem:[%s2494 + $0x4] sm:$0xf]
                %2499 = vst [vmem:[%s2495 + $0x4] sm:$0xf] %v2498
                %v2500 = vld [vmem:[%s2494 + $0x8] sm:$0xf]
                %2501 = vst [vmem:[%s2495 + $0x8] sm:$0xf] %v2500
                %v2502 = vld [vmem:[%s2494 + $0xc] sm:$0xf]
                %2503 = vst [vmem:[%s2495 + $0xc] sm:$0xf] %v2502
                %v2504 = vld [vmem:[%s2494 + $0x10] sm:$0xf]
                %2505 = vst [vmem:[%s2495 + $0x10] sm:$0xf] %v2504
                %v2506 = vld [vmem:[%s2494 + $0x14] sm:$0xf]
                %2507 = vst [vmem:[%s2495 + $0x14] sm:$0xf] %v2506
                %v2508 = vld [vmem:[%s2494 + $0x18] sm:$0xf]
                %2509 = vst [vmem:[%s2495 + $0x18] sm:$0xf] %v2508
                %v2510 = vld [vmem:[%s2494 + $0x1c] sm:$0xf]
                %2511 = vst [vmem:[%s2495 + $0x1c] sm:$0xf] %v2510
                %v2512 = vld [vmem:[%s2494 + $0x20] sm:$0xf]
                %2513 = vst [vmem:[%s2495 + $0x20] sm:$0xf] %v2512
                %v2514 = vld [vmem:[%s2494 + $0x24] sm:$0xf]
                %2515 = vst [vmem:[%s2495 + $0x24] sm:$0xf] %v2514
                %v2516 = vld [vmem:[%s2494 + $0x28] sm:$0xf]
                %2517 = vst [vmem:[%s2495 + $0x28] sm:$0xf] %v2516
                %v2518 = vld [vmem:[%s2494 + $0x2c] sm:$0xf]
                %2519 = vst [vmem:[%s2495 + $0x2c] sm:$0xf] %v2518
                %v2520 = vld [vmem:[%s2494 + $0x30] sm:$0xf]
                %2521 = vst [vmem:[%s2495 + $0x30] sm:$0xf] %v2520
                %v2522 = vld [vmem:[%s2494 + $0x34] sm:$0xf]
                %2523 = vst [vmem:[%s2495 + $0x34] sm:$0xf] %v2522
                %v2524 = vld [vmem:[%s2494 + $0x38] sm:$0xf]
                %2525 = vst [vmem:[%s2495 + $0x38] sm:$0xf] %v2524
                %v2526 = vld [vmem:[%s2494 + $0x3c] sm:$0xf]
                %2527 = vst [vmem:[%s2495 + $0x3c] sm:$0xf] %v2526
                %v2528 = vld [vmem:[%s2494 + $0x40] sm:$0xf]
                %2529 = vst [vmem:[%s2495 + $0x80] sm:$0xf] %v2528
                %v2530 = vld [vmem:[%s2494 + $0x44] sm:$0xf]
                %2531 = vst [vmem:[%s2495 + $0x84] sm:$0xf] %v2530
                %v2532 = vld [vmem:[%s2494 + $0x48] sm:$0xf]
                %2533 = vst [vmem:[%s2495 + $0x88] sm:$0xf] %v2532
                %v2534 = vld [vmem:[%s2494 + $0x4c] sm:$0xf]
                %2535 = vst [vmem:[%s2495 + $0x8c] sm:$0xf] %v2534
                %v2536 = vld [vmem:[%s2494 + $0x50] sm:$0xf]
                %2537 = vst [vmem:[%s2495 + $0x90] sm:$0xf] %v2536
                %v2538 = vld [vmem:[%s2494 + $0x54] sm:$0xf]
                %2539 = vst [vmem:[%s2495 + $0x94] sm:$0xf] %v2538
                %v2540 = vld [vmem:[%s2494 + $0x58] sm:$0xf]
                %2541 = vst [vmem:[%s2495 + $0x98] sm:$0xf] %v2540
                %v2542 = vld [vmem:[%s2494 + $0x5c] sm:$0xf]
                %2543 = vst [vmem:[%s2495 + $0x9c] sm:$0xf] %v2542
                %v2544 = vld [vmem:[%s2494 + $0x60] sm:$0xf]
                %2545 = vst [vmem:[%s2495 + $0xa0] sm:$0xf] %v2544
                %v2546 = vld [vmem:[%s2494 + $0x64] sm:$0xf]
                %2547 = vst [vmem:[%s2495 + $0xa4] sm:$0xf] %v2546
                %v2548 = vld [vmem:[%s2494 + $0x68] sm:$0xf]
                %2549 = vst [vmem:[%s2495 + $0xa8] sm:$0xf] %v2548
                %v2550 = vld [vmem:[%s2494 + $0x6c] sm:$0xf]
                %2551 = vst [vmem:[%s2495 + $0xac] sm:$0xf] %v2550
                %v2552 = vld [vmem:[%s2494 + $0x70] sm:$0xf]
                %2553 = vst [vmem:[%s2495 + $0xb0] sm:$0xf] %v2552
                %v2554 = vld [vmem:[%s2494 + $0x74] sm:$0xf]
                %2555 = vst [vmem:[%s2495 + $0xb4] sm:$0xf] %v2554
                %v2556 = vld [vmem:[%s2494 + $0x78] sm:$0xf]
                %2557 = vst [vmem:[%s2495 + $0xb8] sm:$0xf] %v2556
                %v2558 = vld [vmem:[%s2494 + $0x7c] sm:$0xf]
                %2559 = vst [vmem:[%s2495 + $0xbc] sm:$0xf] %v2558
                %v2560 = vld [vmem:[%s2494 + $0x80] sm:$0xf]
                %2561 = vst [vmem:[%s2495 + $0x100] sm:$0xf] %v2560
                %v2562 = vld [vmem:[%s2494 + $0x84] sm:$0xf]
                %2563 = vst [vmem:[%s2495 + $0x104] sm:$0xf] %v2562
                %v2564 = vld [vmem:[%s2494 + $0x88] sm:$0xf]
                %2565 = vst [vmem:[%s2495 + $0x108] sm:$0xf] %v2564
                %v2566 = vld [vmem:[%s2494 + $0x8c] sm:$0xf]
                %2567 = vst [vmem:[%s2495 + $0x10c] sm:$0xf] %v2566
                %v2568 = vld [vmem:[%s2494 + $0x90] sm:$0xf]
                %2569 = vst [vmem:[%s2495 + $0x110] sm:$0xf] %v2568
                %v2570 = vld [vmem:[%s2494 + $0x94] sm:$0xf]
                %2571 = vst [vmem:[%s2495 + $0x114] sm:$0xf] %v2570
                %v2572 = vld [vmem:[%s2494 + $0x98] sm:$0xf]
                %2573 = vst [vmem:[%s2495 + $0x118] sm:$0xf] %v2572
                %v2574 = vld [vmem:[%s2494 + $0x9c] sm:$0xf]
                %2575 = vst [vmem:[%s2495 + $0x11c] sm:$0xf] %v2574
                %v2576 = vld [vmem:[%s2494 + $0xa0] sm:$0xf]
                %2577 = vst [vmem:[%s2495 + $0x120] sm:$0xf] %v2576
                %v2578 = vld [vmem:[%s2494 + $0xa4] sm:$0xf]
                %2579 = vst [vmem:[%s2495 + $0x124] sm:$0xf] %v2578
                %v2580 = vld [vmem:[%s2494 + $0xa8] sm:$0xf]
                %2581 = vst [vmem:[%s2495 + $0x128] sm:$0xf] %v2580
                %v2582 = vld [vmem:[%s2494 + $0xac] sm:$0xf]
                %2583 = vst [vmem:[%s2495 + $0x12c] sm:$0xf] %v2582
                %v2584 = vld [vmem:[%s2494 + $0xb0] sm:$0xf]
                %2585 = vst [vmem:[%s2495 + $0x130] sm:$0xf] %v2584
                %v2586 = vld [vmem:[%s2494 + $0xb4] sm:$0xf]
                %2587 = vst [vmem:[%s2495 + $0x134] sm:$0xf] %v2586
                %v2588 = vld [vmem:[%s2494 + $0xb8] sm:$0xf]
                %2589 = vst [vmem:[%s2495 + $0x138] sm:$0xf] %v2588
                %v2590 = vld [vmem:[%s2494 + $0xbc] sm:$0xf]
                %2591 = vst [vmem:[%s2495 + $0x13c] sm:$0xf] %v2590
                %v2592 = vld [vmem:[%s2494 + $0xc0] sm:$0xf]
                %2593 = vst [vmem:[%s2495 + $0x180] sm:$0xf] %v2592
                %v2594 = vld [vmem:[%s2494 + $0xc4] sm:$0xf]
                %2595 = vst [vmem:[%s2495 + $0x184] sm:$0xf] %v2594
                %v2596 = vld [vmem:[%s2494 + $0xc8] sm:$0xf]
                %2597 = vst [vmem:[%s2495 + $0x188] sm:$0xf] %v2596
                %v2598 = vld [vmem:[%s2494 + $0xcc] sm:$0xf]
                %2599 = vst [vmem:[%s2495 + $0x18c] sm:$0xf] %v2598
                %v2600 = vld [vmem:[%s2494 + $0xd0] sm:$0xf]
                %2601 = vst [vmem:[%s2495 + $0x190] sm:$0xf] %v2600
                %v2602 = vld [vmem:[%s2494 + $0xd4] sm:$0xf]
                %2603 = vst [vmem:[%s2495 + $0x194] sm:$0xf] %v2602
                %v2604 = vld [vmem:[%s2494 + $0xd8] sm:$0xf]
                %2605 = vst [vmem:[%s2495 + $0x198] sm:$0xf] %v2604
                %v2606 = vld [vmem:[%s2494 + $0xdc] sm:$0xf]
                %2607 = vst [vmem:[%s2495 + $0x19c] sm:$0xf] %v2606
                %v2608 = vld [vmem:[%s2494 + $0xe0] sm:$0xf]
                %2609 = vst [vmem:[%s2495 + $0x1a0] sm:$0xf] %v2608
                %v2610 = vld [vmem:[%s2494 + $0xe4] sm:$0xf]
                %2611 = vst [vmem:[%s2495 + $0x1a4] sm:$0xf] %v2610
                %v2612 = vld [vmem:[%s2494 + $0xe8] sm:$0xf]
                %2613 = vst [vmem:[%s2495 + $0x1a8] sm:$0xf] %v2612
                %v2614 = vld [vmem:[%s2494 + $0xec] sm:$0xf]
                %2615 = vst [vmem:[%s2495 + $0x1ac] sm:$0xf] %v2614
                %v2616 = vld [vmem:[%s2494 + $0xf0] sm:$0xf]
                %2617 = vst [vmem:[%s2495 + $0x1b0] sm:$0xf] %v2616
                %v2618 = vld [vmem:[%s2494 + $0xf4] sm:$0xf]
                %2619 = vst [vmem:[%s2495 + $0x1b4] sm:$0xf] %v2618
                %v2620 = vld [vmem:[%s2494 + $0xf8] sm:$0xf]
                %2621 = vst [vmem:[%s2495 + $0x1b8] sm:$0xf] %v2620
                %v2622 = vld [vmem:[%s2494 + $0xfc] sm:$0xf]
                %2623 = vst [vmem:[%s2495 + $0x1bc] sm:$0xf] %v2622
              $region90: #{attention_pallas.2} parent=84 // loop_footer
                %s2493 = sadd.s32 1, %s2489
              $region91: #{attention_pallas.2} parent=84 // loop_footer_branch
                %2488 = sbr.rel target = $region87
              $region92: #{attention_pallas.2} parent=84 // loop_exit
                _
            $region85: #{attention_pallas.2} parent=76 // pred_fallthru
              _
          $region77: #{attention_pallas.2} parent=72 // pred_fallthru
            _
          %2771 = vnop
        $region73: #{attention_pallas.2} parent=27 // pred_fallthru
          _
        // Predicated region
        $region111: #{attention_pallas.2} parent=27 // pred_check
          %p2772 = pneg %p153
        $region112: #{attention_pallas.2} parent=27 // pred_check_branch
          %2774 = sbr.rel (%p2772) target = $region114
        $region113: #{attention_pallas.2} parent=27 // pred_region
          %s2775 = smul.u32 16, %s21
          %s2776 = smul.addr %s20, 128
          %s2777 = sadd.s32 %s2775, %s2776
          %s2778 = smul.addr %s2777, 4
          %s2779 = scalar_lea.vmem %s4, %s2778
          // Predicated region
          $region115: #{attention_pallas.2} parent=113 // pred_check
            _
          $region116: #{attention_pallas.2} parent=113 // pred_check_branch
            %2781 = sbr.rel (0) target = $region118
          $region117: #{attention_pallas.2} parent=113 // pred_region
            // Predicated region
            $region119: #{attention_pallas.2} parent=117 // pred_check
              _
            $region120: #{attention_pallas.2} parent=117 // pred_check_branch
              %2783 = sbr.rel target = $region122
            $region121: #{attention_pallas.2} parent=117 // pred_region
              // Predicated region
              $region134: #{attention_pallas.2} parent=121 // pred_check
                _
              $region135: #{attention_pallas.2} parent=121 // pred_check_branch
                %2924 = sbr.rel (0) target = $region137
              $region136: #{attention_pallas.2} parent=121 // pred_region
                loop: start=0, step=1, limit=1
                $region138: #{attention_pallas.2} parent=136 // loop_pre_header
                  _
                $region139: #{attention_pallas.2} parent=136 // loop_header
                  %s2926 = sphi 0, %s2930
                  %p2927 = scmp.ge.s32.totalorder %s2926, 1
                  %s2931 = sphi %s2173, %s2173
                  %s2932 = sphi %s2779, %s2779
                $region140: #{attention_pallas.2} parent=136 // loop_header_branch
                  %2929 = sbr.rel (%p2927) target = $region144
                $region141: #{attention_pallas.2} parent=136 // loop_body
                  _
                $region142: #{attention_pallas.2} parent=136 // loop_footer
                  %s2930 = sadd.s32 1, %s2926
                $region143: #{attention_pallas.2} parent=136 // loop_footer_branch
                  %2925 = sbr.rel target = $region139
                $region144: #{attention_pallas.2} parent=136 // loop_exit
                  _
                loop: start=0, step=1, limit=1
                $region145: #{attention_pallas.2} parent=136 // loop_pre_header
                  _
                $region146: #{attention_pallas.2} parent=136 // loop_header
                  %s2935 = sphi 0, %s2939
                  %p2936 = scmp.ge.s32.totalorder %s2935, 1
                  %s2940 = sphi %s2173, %s2173
                  %s2941 = sphi %s2779, %s2779
                $region147: #{attention_pallas.2} parent=136 // loop_header_branch
                  %2938 = sbr.rel (%p2936) target = $region151
                $region148: #{attention_pallas.2} parent=136 // loop_body
                  %v2942 = vld [vmem:[%s2940] sm:$0xf]
                  %2943 = vst [vmem:[%s2941] sm:$0xf] %v2942
                  %v2944 = vld [vmem:[%s2940 + $0x4] sm:$0xf]
                  %2945 = vst [vmem:[%s2941 + $0x4] sm:$0xf] %v2944
                  %v2946 = vld [vmem:[%s2940 + $0x8] sm:$0xf]
                  %2947 = vst [vmem:[%s2941 + $0x8] sm:$0xf] %v2946
                  %v2948 = vld [vmem:[%s2940 + $0xc] sm:$0xf]
                  %2949 = vst [vmem:[%s2941 + $0xc] sm:$0xf] %v2948
                  %v2950 = vld [vmem:[%s2940 + $0x10] sm:$0xf]
                  %2951 = vst [vmem:[%s2941 + $0x10] sm:$0xf] %v2950
                  %v2952 = vld [vmem:[%s2940 + $0x14] sm:$0xf]
                  %2953 = vst [vmem:[%s2941 + $0x14] sm:$0xf] %v2952
                  %v2954 = vld [vmem:[%s2940 + $0x18] sm:$0xf]
                  %2955 = vst [vmem:[%s2941 + $0x18] sm:$0xf] %v2954
                  %v2956 = vld [vmem:[%s2940 + $0x1c] sm:$0xf]
                  %2957 = vst [vmem:[%s2941 + $0x1c] sm:$0xf] %v2956
                  %v2958 = vld [vmem:[%s2940 + $0x20] sm:$0xf]
                  %2959 = vst [vmem:[%s2941 + $0x20] sm:$0xf] %v2958
                  %v2960 = vld [vmem:[%s2940 + $0x24] sm:$0xf]
                  %2961 = vst [vmem:[%s2941 + $0x24] sm:$0xf] %v2960
                  %v2962 = vld [vmem:[%s2940 + $0x28] sm:$0xf]
                  %2963 = vst [vmem:[%s2941 + $0x28] sm:$0xf] %v2962
                  %v2964 = vld [vmem:[%s2940 + $0x2c] sm:$0xf]
                  %2965 = vst [vmem:[%s2941 + $0x2c] sm:$0xf] %v2964
                  %v2966 = vld [vmem:[%s2940 + $0x30] sm:$0xf]
                  %2967 = vst [vmem:[%s2941 + $0x30] sm:$0xf] %v2966
                  %v2968 = vld [vmem:[%s2940 + $0x34] sm:$0xf]
                  %2969 = vst [vmem:[%s2941 + $0x34] sm:$0xf] %v2968
                  %v2970 = vld [vmem:[%s2940 + $0x38] sm:$0xf]
                  %2971 = vst [vmem:[%s2941 + $0x38] sm:$0xf] %v2970
                  %v2972 = vld [vmem:[%s2940 + $0x3c] sm:$0xf]
                  %2973 = vst [vmem:[%s2941 + $0x3c] sm:$0xf] %v2972
                  %v2974 = vld [vmem:[%s2940 + $0x40] sm:$0xf]
                  %2975 = vst [vmem:[%s2941 + $0x80] sm:$0xf] %v2974
                  %v2976 = vld [vmem:[%s2940 + $0x44] sm:$0xf]
                  %2977 = vst [vmem:[%s2941 + $0x84] sm:$0xf] %v2976
                  %v2978 = vld [vmem:[%s2940 + $0x48] sm:$0xf]
                  %2979 = vst [vmem:[%s2941 + $0x88] sm:$0xf] %v2978
                  %v2980 = vld [vmem:[%s2940 + $0x4c] sm:$0xf]
                  %2981 = vst [vmem:[%s2941 + $0x8c] sm:$0xf] %v2980
                  %v2982 = vld [vmem:[%s2940 + $0x50] sm:$0xf]
                  %2983 = vst [vmem:[%s2941 + $0x90] sm:$0xf] %v2982
                  %v2984 = vld [vmem:[%s2940 + $0x54] sm:$0xf]
                  %2985 = vst [vmem:[%s2941 + $0x94] sm:$0xf] %v2984
                  %v2986 = vld [vmem:[%s2940 + $0x58] sm:$0xf]
                  %2987 = vst [vmem:[%s2941 + $0x98] sm:$0xf] %v2986
                  %v2988 = vld [vmem:[%s2940 + $0x5c] sm:$0xf]
                  %2989 = vst [vmem:[%s2941 + $0x9c] sm:$0xf] %v2988
                  %v2990 = vld [vmem:[%s2940 + $0x60] sm:$0xf]
                  %2991 = vst [vmem:[%s2941 + $0xa0] sm:$0xf] %v2990
                  %v2992 = vld [vmem:[%s2940 + $0x64] sm:$0xf]
                  %2993 = vst [vmem:[%s2941 + $0xa4] sm:$0xf] %v2992
                  %v2994 = vld [vmem:[%s2940 + $0x68] sm:$0xf]
                  %2995 = vst [vmem:[%s2941 + $0xa8] sm:$0xf] %v2994
                  %v2996 = vld [vmem:[%s2940 + $0x6c] sm:$0xf]
                  %2997 = vst [vmem:[%s2941 + $0xac] sm:$0xf] %v2996
                  %v2998 = vld [vmem:[%s2940 + $0x70] sm:$0xf]
                  %2999 = vst [vmem:[%s2941 + $0xb0] sm:$0xf] %v2998
                  %v3000 = vld [vmem:[%s2940 + $0x74] sm:$0xf]
                  %3001 = vst [vmem:[%s2941 + $0xb4] sm:$0xf] %v3000
                  %v3002 = vld [vmem:[%s2940 + $0x78] sm:$0xf]
                  %3003 = vst [vmem:[%s2941 + $0xb8] sm:$0xf] %v3002
                  %v3004 = vld [vmem:[%s2940 + $0x7c] sm:$0xf]
                  %3005 = vst [vmem:[%s2941 + $0xbc] sm:$0xf] %v3004
                  %v3006 = vld [vmem:[%s2940 + $0x80] sm:$0xf]
                  %3007 = vst [vmem:[%s2941 + $0x100] sm:$0xf] %v3006
                  %v3008 = vld [vmem:[%s2940 + $0x84] sm:$0xf]
                  %3009 = vst [vmem:[%s2941 + $0x104] sm:$0xf] %v3008
                  %v3010 = vld [vmem:[%s2940 + $0x88] sm:$0xf]
                  %3011 = vst [vmem:[%s2941 + $0x108] sm:$0xf] %v3010
                  %v3012 = vld [vmem:[%s2940 + $0x8c] sm:$0xf]
                  %3013 = vst [vmem:[%s2941 + $0x10c] sm:$0xf] %v3012
                  %v3014 = vld [vmem:[%s2940 + $0x90] sm:$0xf]
                  %3015 = vst [vmem:[%s2941 + $0x110] sm:$0xf] %v3014
                  %v3016 = vld [vmem:[%s2940 + $0x94] sm:$0xf]
                  %3017 = vst [vmem:[%s2941 + $0x114] sm:$0xf] %v3016
                  %v3018 = vld [vmem:[%s2940 + $0x98] sm:$0xf]
                  %3019 = vst [vmem:[%s2941 + $0x118] sm:$0xf] %v3018
                  %v3020 = vld [vmem:[%s2940 + $0x9c] sm:$0xf]
                  %3021 = vst [vmem:[%s2941 + $0x11c] sm:$0xf] %v3020
                  %v3022 = vld [vmem:[%s2940 + $0xa0] sm:$0xf]
                  %3023 = vst [vmem:[%s2941 + $0x120] sm:$0xf] %v3022
                  %v3024 = vld [vmem:[%s2940 + $0xa4] sm:$0xf]
                  %3025 = vst [vmem:[%s2941 + $0x124] sm:$0xf] %v3024
                  %v3026 = vld [vmem:[%s2940 + $0xa8] sm:$0xf]
                  %3027 = vst [vmem:[%s2941 + $0x128] sm:$0xf] %v3026
                  %v3028 = vld [vmem:[%s2940 + $0xac] sm:$0xf]
                  %3029 = vst [vmem:[%s2941 + $0x12c] sm:$0xf] %v3028
                  %v3030 = vld [vmem:[%s2940 + $0xb0] sm:$0xf]
                  %3031 = vst [vmem:[%s2941 + $0x130] sm:$0xf] %v3030
                  %v3032 = vld [vmem:[%s2940 + $0xb4] sm:$0xf]
                  %3033 = vst [vmem:[%s2941 + $0x134] sm:$0xf] %v3032
                  %v3034 = vld [vmem:[%s2940 + $0xb8] sm:$0xf]
                  %3035 = vst [vmem:[%s2941 + $0x138] sm:$0xf] %v3034
                  %v3036 = vld [vmem:[%s2940 + $0xbc] sm:$0xf]
                  %3037 = vst [vmem:[%s2941 + $0x13c] sm:$0xf] %v3036
                  %v3038 = vld [vmem:[%s2940 + $0xc0] sm:$0xf]
                  %3039 = vst [vmem:[%s2941 + $0x180] sm:$0xf] %v3038
                  %v3040 = vld [vmem:[%s2940 + $0xc4] sm:$0xf]
                  %3041 = vst [vmem:[%s2941 + $0x184] sm:$0xf] %v3040
                  %v3042 = vld [vmem:[%s2940 + $0xc8] sm:$0xf]
                  %3043 = vst [vmem:[%s2941 + $0x188] sm:$0xf] %v3042
                  %v3044 = vld [vmem:[%s2940 + $0xcc] sm:$0xf]
                  %3045 = vst [vmem:[%s2941 + $0x18c] sm:$0xf] %v3044
                  %v3046 = vld [vmem:[%s2940 + $0xd0] sm:$0xf]
                  %3047 = vst [vmem:[%s2941 + $0x190] sm:$0xf] %v3046
                  %v3048 = vld [vmem:[%s2940 + $0xd4] sm:$0xf]
                  %3049 = vst [vmem:[%s2941 + $0x194] sm:$0xf] %v3048
                  %v3050 = vld [vmem:[%s2940 + $0xd8] sm:$0xf]
                  %3051 = vst [vmem:[%s2941 + $0x198] sm:$0xf] %v3050
                  %v3052 = vld [vmem:[%s2940 + $0xdc] sm:$0xf]
                  %3053 = vst [vmem:[%s2941 + $0x19c] sm:$0xf] %v3052
                  %v3054 = vld [vmem:[%s2940 + $0xe0] sm:$0xf]
                  %3055 = vst [vmem:[%s2941 + $0x1a0] sm:$0xf] %v3054
                  %v3056 = vld [vmem:[%s2940 + $0xe4] sm:$0xf]
                  %3057 = vst [vmem:[%s2941 + $0x1a4] sm:$0xf] %v3056
                  %v3058 = vld [vmem:[%s2940 + $0xe8] sm:$0xf]
                  %3059 = vst [vmem:[%s2941 + $0x1a8] sm:$0xf] %v3058
                  %v3060 = vld [vmem:[%s2940 + $0xec] sm:$0xf]
                  %3061 = vst [vmem:[%s2941 + $0x1ac] sm:$0xf] %v3060
                  %v3062 = vld [vmem:[%s2940 + $0xf0] sm:$0xf]
                  %3063 = vst [vmem:[%s2941 + $0x1b0] sm:$0xf] %v3062
                  %v3064 = vld [vmem:[%s2940 + $0xf4] sm:$0xf]
                  %3065 = vst [vmem:[%s2941 + $0x1b4] sm:$0xf] %v3064
                  %v3066 = vld [vmem:[%s2940 + $0xf8] sm:$0xf]
                  %3067 = vst [vmem:[%s2941 + $0x1b8] sm:$0xf] %v3066
                  %v3068 = vld [vmem:[%s2940 + $0xfc] sm:$0xf]
                  %3069 = vst [vmem:[%s2941 + $0x1bc] sm:$0xf] %v3068
                $region149: #{attention_pallas.2} parent=136 // loop_footer
                  %s2939 = sadd.s32 1, %s2935
                $region150: #{attention_pallas.2} parent=136 // loop_footer_branch
                  %2934 = sbr.rel target = $region146
                $region151: #{attention_pallas.2} parent=136 // loop_exit
                  _
              $region137: #{attention_pallas.2} parent=121 // pred_fallthru
                _
            $region122: #{attention_pallas.2} parent=117 // pred_fallthru
              _
            // Predicated region
            $region123: #{attention_pallas.2} parent=117 // pred_check
              _
            $region124: #{attention_pallas.2} parent=117 // pred_check_branch
              %2785 = sbr.rel (0) target = $region126
            $region125: #{attention_pallas.2} parent=117 // pred_region
              loop: start=0, step=1, limit=1
              $region127: #{attention_pallas.2} parent=125 // loop_pre_header
                _
              $region128: #{attention_pallas.2} parent=125 // loop_header
                %s2788 = sphi 0, %s2792
                %p2789 = scmp.ge.s32.totalorder %s2788, 1
                %s2793 = sphi %s2173, %s2173
                %s2794 = sphi %s2779, %s2779
              $region129: #{attention_pallas.2} parent=125 // loop_header_branch
                %2791 = sbr.rel (%p2789) target = $region133
              $region130: #{attention_pallas.2} parent=125 // loop_body
                %v2795 = vld [vmem:[%s2793] sm:$0xf]
                %2796 = vst [vmem:[%s2794] sm:$0xf] %v2795
                %v2797 = vld [vmem:[%s2793 + $0x4] sm:$0xf]
                %2798 = vst [vmem:[%s2794 + $0x4] sm:$0xf] %v2797
                %v2799 = vld [vmem:[%s2793 + $0x8] sm:$0xf]
                %2800 = vst [vmem:[%s2794 + $0x8] sm:$0xf] %v2799
                %v2801 = vld [vmem:[%s2793 + $0xc] sm:$0xf]
                %2802 = vst [vmem:[%s2794 + $0xc] sm:$0xf] %v2801
                %v2803 = vld [vmem:[%s2793 + $0x10] sm:$0xf]
                %2804 = vst [vmem:[%s2794 + $0x10] sm:$0xf] %v2803
                %v2805 = vld [vmem:[%s2793 + $0x14] sm:$0xf]
                %2806 = vst [vmem:[%s2794 + $0x14] sm:$0xf] %v2805
                %v2807 = vld [vmem:[%s2793 + $0x18] sm:$0xf]
                %2808 = vst [vmem:[%s2794 + $0x18] sm:$0xf] %v2807
                %v2809 = vld [vmem:[%s2793 + $0x1c] sm:$0xf]
                %2810 = vst [vmem:[%s2794 + $0x1c] sm:$0xf] %v2809
                %v2811 = vld [vmem:[%s2793 + $0x20] sm:$0xf]
                %2812 = vst [vmem:[%s2794 + $0x20] sm:$0xf] %v2811
                %v2813 = vld [vmem:[%s2793 + $0x24] sm:$0xf]
                %2814 = vst [vmem:[%s2794 + $0x24] sm:$0xf] %v2813
                %v2815 = vld [vmem:[%s2793 + $0x28] sm:$0xf]
                %2816 = vst [vmem:[%s2794 + $0x28] sm:$0xf] %v2815
                %v2817 = vld [vmem:[%s2793 + $0x2c] sm:$0xf]
                %2818 = vst [vmem:[%s2794 + $0x2c] sm:$0xf] %v2817
                %v2819 = vld [vmem:[%s2793 + $0x30] sm:$0xf]
                %2820 = vst [vmem:[%s2794 + $0x30] sm:$0xf] %v2819
                %v2821 = vld [vmem:[%s2793 + $0x34] sm:$0xf]
                %2822 = vst [vmem:[%s2794 + $0x34] sm:$0xf] %v2821
                %v2823 = vld [vmem:[%s2793 + $0x38] sm:$0xf]
                %2824 = vst [vmem:[%s2794 + $0x38] sm:$0xf] %v2823
                %v2825 = vld [vmem:[%s2793 + $0x3c] sm:$0xf]
                %2826 = vst [vmem:[%s2794 + $0x3c] sm:$0xf] %v2825
                %v2827 = vld [vmem:[%s2793 + $0x40] sm:$0xf]
                %2828 = vst [vmem:[%s2794 + $0x80] sm:$0xf] %v2827
                %v2829 = vld [vmem:[%s2793 + $0x44] sm:$0xf]
                %2830 = vst [vmem:[%s2794 + $0x84] sm:$0xf] %v2829
                %v2831 = vld [vmem:[%s2793 + $0x48] sm:$0xf]
                %2832 = vst [vmem:[%s2794 + $0x88] sm:$0xf] %v2831
                %v2833 = vld [vmem:[%s2793 + $0x4c] sm:$0xf]
                %2834 = vst [vmem:[%s2794 + $0x8c] sm:$0xf] %v2833
                %v2835 = vld [vmem:[%s2793 + $0x50] sm:$0xf]
                %2836 = vst [vmem:[%s2794 + $0x90] sm:$0xf] %v2835
                %v2837 = vld [vmem:[%s2793 + $0x54] sm:$0xf]
                %2838 = vst [vmem:[%s2794 + $0x94] sm:$0xf] %v2837
                %v2839 = vld [vmem:[%s2793 + $0x58] sm:$0xf]
                %2840 = vst [vmem:[%s2794 + $0x98] sm:$0xf] %v2839
                %v2841 = vld [vmem:[%s2793 + $0x5c] sm:$0xf]
                %2842 = vst [vmem:[%s2794 + $0x9c] sm:$0xf] %v2841
                %v2843 = vld [vmem:[%s2793 + $0x60] sm:$0xf]
                %2844 = vst [vmem:[%s2794 + $0xa0] sm:$0xf] %v2843
                %v2845 = vld [vmem:[%s2793 + $0x64] sm:$0xf]
                %2846 = vst [vmem:[%s2794 + $0xa4] sm:$0xf] %v2845
                %v2847 = vld [vmem:[%s2793 + $0x68] sm:$0xf]
                %2848 = vst [vmem:[%s2794 + $0xa8] sm:$0xf] %v2847
                %v2849 = vld [vmem:[%s2793 + $0x6c] sm:$0xf]
                %2850 = vst [vmem:[%s2794 + $0xac] sm:$0xf] %v2849
                %v2851 = vld [vmem:[%s2793 + $0x70] sm:$0xf]
                %2852 = vst [vmem:[%s2794 + $0xb0] sm:$0xf] %v2851
                %v2853 = vld [vmem:[%s2793 + $0x74] sm:$0xf]
                %2854 = vst [vmem:[%s2794 + $0xb4] sm:$0xf] %v2853
                %v2855 = vld [vmem:[%s2793 + $0x78] sm:$0xf]
                %2856 = vst [vmem:[%s2794 + $0xb8] sm:$0xf] %v2855
                %v2857 = vld [vmem:[%s2793 + $0x7c] sm:$0xf]
                %2858 = vst [vmem:[%s2794 + $0xbc] sm:$0xf] %v2857
                %v2859 = vld [vmem:[%s2793 + $0x80] sm:$0xf]
                %2860 = vst [vmem:[%s2794 + $0x100] sm:$0xf] %v2859
                %v2861 = vld [vmem:[%s2793 + $0x84] sm:$0xf]
                %2862 = vst [vmem:[%s2794 + $0x104] sm:$0xf] %v2861
                %v2863 = vld [vmem:[%s2793 + $0x88] sm:$0xf]
                %2864 = vst [vmem:[%s2794 + $0x108] sm:$0xf] %v2863
                %v2865 = vld [vmem:[%s2793 + $0x8c] sm:$0xf]
                %2866 = vst [vmem:[%s2794 + $0x10c] sm:$0xf] %v2865
                %v2867 = vld [vmem:[%s2793 + $0x90] sm:$0xf]
                %2868 = vst [vmem:[%s2794 + $0x110] sm:$0xf] %v2867
                %v2869 = vld [vmem:[%s2793 + $0x94] sm:$0xf]
                %2870 = vst [vmem:[%s2794 + $0x114] sm:$0xf] %v2869
                %v2871 = vld [vmem:[%s2793 + $0x98] sm:$0xf]
                %2872 = vst [vmem:[%s2794 + $0x118] sm:$0xf] %v2871
                %v2873 = vld [vmem:[%s2793 + $0x9c] sm:$0xf]
                %2874 = vst [vmem:[%s2794 + $0x11c] sm:$0xf] %v2873
                %v2875 = vld [vmem:[%s2793 + $0xa0] sm:$0xf]
                %2876 = vst [vmem:[%s2794 + $0x120] sm:$0xf] %v2875
                %v2877 = vld [vmem:[%s2793 + $0xa4] sm:$0xf]
                %2878 = vst [vmem:[%s2794 + $0x124] sm:$0xf] %v2877
                %v2879 = vld [vmem:[%s2793 + $0xa8] sm:$0xf]
                %2880 = vst [vmem:[%s2794 + $0x128] sm:$0xf] %v2879
                %v2881 = vld [vmem:[%s2793 + $0xac] sm:$0xf]
                %2882 = vst [vmem:[%s2794 + $0x12c] sm:$0xf] %v2881
                %v2883 = vld [vmem:[%s2793 + $0xb0] sm:$0xf]
                %2884 = vst [vmem:[%s2794 + $0x130] sm:$0xf] %v2883
                %v2885 = vld [vmem:[%s2793 + $0xb4] sm:$0xf]
                %2886 = vst [vmem:[%s2794 + $0x134] sm:$0xf] %v2885
                %v2887 = vld [vmem:[%s2793 + $0xb8] sm:$0xf]
                %2888 = vst [vmem:[%s2794 + $0x138] sm:$0xf] %v2887
                %v2889 = vld [vmem:[%s2793 + $0xbc] sm:$0xf]
                %2890 = vst [vmem:[%s2794 + $0x13c] sm:$0xf] %v2889
                %v2891 = vld [vmem:[%s2793 + $0xc0] sm:$0xf]
                %2892 = vst [vmem:[%s2794 + $0x180] sm:$0xf] %v2891
                %v2893 = vld [vmem:[%s2793 + $0xc4] sm:$0xf]
                %2894 = vst [vmem:[%s2794 + $0x184] sm:$0xf] %v2893
                %v2895 = vld [vmem:[%s2793 + $0xc8] sm:$0xf]
                %2896 = vst [vmem:[%s2794 + $0x188] sm:$0xf] %v2895
                %v2897 = vld [vmem:[%s2793 + $0xcc] sm:$0xf]
                %2898 = vst [vmem:[%s2794 + $0x18c] sm:$0xf] %v2897
                %v2899 = vld [vmem:[%s2793 + $0xd0] sm:$0xf]
                %2900 = vst [vmem:[%s2794 + $0x190] sm:$0xf] %v2899
                %v2901 = vld [vmem:[%s2793 + $0xd4] sm:$0xf]
                %2902 = vst [vmem:[%s2794 + $0x194] sm:$0xf] %v2901
                %v2903 = vld [vmem:[%s2793 + $0xd8] sm:$0xf]
                %2904 = vst [vmem:[%s2794 + $0x198] sm:$0xf] %v2903
                %v2905 = vld [vmem:[%s2793 + $0xdc] sm:$0xf]
                %2906 = vst [vmem:[%s2794 + $0x19c] sm:$0xf] %v2905
                %v2907 = vld [vmem:[%s2793 + $0xe0] sm:$0xf]
                %2908 = vst [vmem:[%s2794 + $0x1a0] sm:$0xf] %v2907
                %v2909 = vld [vmem:[%s2793 + $0xe4] sm:$0xf]
                %2910 = vst [vmem:[%s2794 + $0x1a4] sm:$0xf] %v2909
                %v2911 = vld [vmem:[%s2793 + $0xe8] sm:$0xf]
                %2912 = vst [vmem:[%s2794 + $0x1a8] sm:$0xf] %v2911
                %v2913 = vld [vmem:[%s2793 + $0xec] sm:$0xf]
                %2914 = vst [vmem:[%s2794 + $0x1ac] sm:$0xf] %v2913
                %v2915 = vld [vmem:[%s2793 + $0xf0] sm:$0xf]
                %2916 = vst [vmem:[%s2794 + $0x1b0] sm:$0xf] %v2915
                %v2917 = vld [vmem:[%s2793 + $0xf4] sm:$0xf]
                %2918 = vst [vmem:[%s2794 + $0x1b4] sm:$0xf] %v2917
                %v2919 = vld [vmem:[%s2793 + $0xf8] sm:$0xf]
                %2920 = vst [vmem:[%s2794 + $0x1b8] sm:$0xf] %v2919
                %v2921 = vld [vmem:[%s2793 + $0xfc] sm:$0xf]
                %2922 = vst [vmem:[%s2794 + $0x1bc] sm:$0xf] %v2921
              $region131: #{attention_pallas.2} parent=125 // loop_footer
                %s2792 = sadd.s32 1, %s2788
              $region132: #{attention_pallas.2} parent=125 // loop_footer_branch
                %2787 = sbr.rel target = $region128
              $region133: #{attention_pallas.2} parent=125 // loop_exit
                _
            $region126: #{attention_pallas.2} parent=117 // pred_fallthru
              _
          $region118: #{attention_pallas.2} parent=113 // pred_fallthru
            _
          %3070 = vnop
        $region114: #{attention_pallas.2} parent=27 // pred_fallthru
          _
      $region28: #{attention_pallas.2} parent=5 // pred_fallthru
        _
      %p3071 = scmp.le.s32.totalorder 2, %s11
      // Predicated region
      $region152: #{attention_pallas.2} parent=5 // pred_check
        %p3072 = pneg %p3071
      $region153: #{attention_pallas.2} parent=5 // pred_check_branch
        %3074 = sbr.rel (%p3072) target = $region155
      $region154: #{attention_pallas.2} parent=5 // pred_region
        %s3075 = ssub.s32 %s11, 2
        // Predicated region
        $region156: #{attention_pallas.2} parent=154 // pred_check
          %p3076 = pneg %p103
        $region157: #{attention_pallas.2} parent=154 // pred_check_branch
          %3078 = sbr.rel (%p3076) target = $region159
        $region158: #{attention_pallas.2} parent=154 // pred_region
          %s3079 = sand.u32 %s88, 1
          %s3080 = sand.u32 %s88, 1
          %s3081 = smul.addr %s3080, 256
          %s3082 = scalar_lea.vmem [#allocation2], %s3081
        $region159: #{attention_pallas.2} parent=154 // pred_fallthru
          _
        // Predicated region
        $region160: #{attention_pallas.2} parent=154 // pred_check
          %p3083 = pneg %p131
        $region161: #{attention_pallas.2} parent=154 // pred_check_branch
          %3085 = sbr.rel (%p3083) target = $region163
        $region162: #{attention_pallas.2} parent=154 // pred_region
          %s3086 = sand.u32 %s116, 1
          %s3087 = sand.u32 %s116, 1
          %s3088 = smul.addr %s3087, 256
          %s3089 = scalar_lea.vmem [#allocation3], %s3088
        $region163: #{attention_pallas.2} parent=154 // pred_fallthru
          _
        // Predicated region
        $region164: #{attention_pallas.2} parent=154 // pred_check
          %p3090 = pneg %p159
        $region165: #{attention_pallas.2} parent=154 // pred_check_branch
          %3092 = sbr.rel (%p3090) target = $region167
        $region166: #{attention_pallas.2} parent=154 // pred_region
          %s3093 = sand.u32 %s144, 1
          %s3094 = sand.u32 %s144, 1
          %s3095 = smul.addr %s3094, 256
          %s3096 = scalar_lea.vmem [#allocation4], %s3095
        $region167: #{attention_pallas.2} parent=154 // pred_fallthru
          _
      $region155: #{attention_pallas.2} parent=5 // pred_fallthru
        _
    $region6: #{attention_pallas.2} parent=1 // loop_footer
      %s15 = sadd.s32 1, %s11
    $region7: #{attention_pallas.2} parent=1 // loop_footer_branch
      %10 = sbr.rel target = $region3
    $region8: #{attention_pallas.2} parent=1 // loop_exit
      _

// kernel: attention_pallas.3
$region0: #{attention_pallas.3}
  #allocation0 [shape = 'u32[]', space=smem, size = 0x4, offset = 0x4, fixed_abs, tag = 'smem constant byte address 0x4 - core index']
  #allocation1 [shape = 'u32[144,128]{1,0:T(1,128)}', space=vmem, size = 0x12000, scoped, tag = 'internal scratch']
  #allocation2 [shape = 'f32[4,128,1]{2,1,0:T(8,128)}', space=vmem, size = 0x40000, scoped, tag = 'scratch operand']
  #allocation3 [shape = 'f32[4,128,1]{2,1,0:T(8,128)}', space=vmem, size = 0x40000, scoped, tag = 'scratch operand']
  #allocation4 [shape = 'f32[4,128,64]{2,1,0:T(8,128)}', space=vmem, size = 0x40000, scoped, tag = 'scratch operand']
  %s0 = inlined_call_operand.vmem [shape: bf16[2,4,256,64], index: 0, kind: input, shape index: {}]
  %s1 = inlined_call_operand.vmem [shape: bf16[2,4,256,64], index: 1, kind: input, shape index: {}]
  %s2 = inlined_call_operand.vmem [shape: bf16[2,4,256,64], index: 2, kind: input, shape index: {}]
  %s3 = inlined_call_operand.vmem [shape: bf16[256,256], index: 3, kind: input, shape index: {}]
  %s4 = inlined_call_operand.vmem [shape: f32[1,256], index: 4, kind: input, shape index: {}]
  %s5 = inlined_call_operand.hbm [shape: f32[2,256,256], index: 5, kind: output, shape index: {}]
  %s6 = sld [smem:[#allocation0]]
  $region184: #{attention_pallas.3} parent=0
    _
  %s8 = ssub.s32 1, %s6
  %s9 = scalar_select 0, %s8, %s6
  $region1: #{attention_pallas.3} parent=0
    #allocation5 [shape = 'u8[262144]{0}', space=vmem, size = 0x40000, scoped, tag = 'input window, operand 0']
    #allocation6 [shape = 'u8[262144]{0}', space=vmem, size = 0x40000, scoped, tag = 'input window, operand 1']
    #allocation7 [shape = 'u8[262144]{0}', space=vmem, size = 0x40000, scoped, tag = 'input window, operand 2']
    #allocation8 [shape = 'u8[262144]{0}', space=vmem, size = 0x40000, scoped, tag = 'output window, operand 0']
    #allocation9 [shape = 's32[2]{0}', space=sflag, size = 0x8, scoped, tag = 'scoped memory for attention_pallas.3']
    %10 = vsyncpa [#allocation9], 0
    %s11 = scalar_lea.sflag [#allocation9], 1
    %12 = vsyncpa %s11, 0
    loop: start=0, step=1, limit=10
    $region2: #{attention_pallas.3} parent=1 // loop_pre_header
      _
    $region3: #{attention_pallas.3} parent=1 // loop_header
      %s14 = sphi 0, %s18
      %p15 = scmp.ge.s32.totalorder %s14, 10
      %s21 = sphi 0, %s40
      %s22 = sphi 0, %s36
      %s23 = sphi 0, %s32
      %s24 = sphi 0, %s21
      %s25 = sphi 0, %s22
      %s26 = sphi 0, %s23
      %s27 = sphi 0, %s24
      %s28 = sphi 0, %s25
      %s29 = sphi 0, %s26
      %s45 = sphi 0, %s47
      %s48 = sphi 0, %s45
      %s49 = sphi 0, %s48
      %s65 = sphi 0, %s49
      %s73 = sphi 0, %s75
      %s76 = sphi 0, %s73
      %s77 = sphi 0, %s76
      %s93 = sphi 0, %s77
      %s101 = sphi 0, %s103
      %s104 = sphi 0, %s101
      %s105 = sphi 0, %s104
      %s121 = sphi 0, %s105
      %s125 = sphi 0, %s125
      %s127 = sphi 0, %s125
      %s128 = sphi 0, %s127
      %s142 = sphi 0, %s128
      %s146 = sphi 0, %s146
      %s148 = sphi 0, %s146
      %s149 = sphi 0, %s148
      %s163 = sphi 0, %s149
      %s171 = sphi 0, %s173
      %s174 = sphi 0, %s171
      %s175 = sphi 0, %s174
      %s191 = sphi 0, %s175
    $region4: #{attention_pallas.3} parent=1 // loop_header_branch
      %17 = sbr.rel (%p15) target = $region8
    $region5: #{attention_pallas.3} parent=1 // loop_body
      %s19 = ssub.s32 %s14, 1
      %s20 = ssub.s32 %s14, 2
      %s30 = sadd.s32 1, %s23
      %p31 = scmp.ge.s32.totalorder %s30, 2
      %s32 = scalar_select %p31, 0, %s30
      %s33 = sadd.s32 1, %s22
      %s34 = scalar_select %p31, %s33, %s22
      %p35 = scmp.ge.s32.totalorder %s34, 2
      %s36 = scalar_select %p35, 0, %s34
      %s37 = sadd.s32 1, %s21
      %s38 = scalar_select %p35, %s37, %s21
      %p39 = scmp.ge.s32.totalorder %s38, 2
      %s40 = scalar_select %p39, 0, %s38
      %s41 = ssub.s32 %s21, %s40
      %s42 = ssub.s32 %s22, %s36
      %s43 = sor.u32 %s41, %s42
      %p44 = scmp.eq.s32.totalorder %s43, 0
      %s46 = sadd.s32 %s45, 1
      %s47 = scalar_select %p44, %s45, %s46
      %p50 = pneg %p44
      %p51 = scmp.eq.s32.totalorder %s14, 7
      %p52 = por %p50, %p51
      %p53 = scmp.ne.s32.totalorder %s45, %s48
      %p54 = scmp.eq.s32.totalorder %s14, 0
      %p55 = por %p53, %p54
      %p56 = scmp.ne.s32.totalorder %s45, %s48
      %p57 = scmp.eq.s32.totalorder %s19, 7
      %p58 = por %p56, %p57
      %p59 = scmp.ne.s32.totalorder %s48, %s49
      %p60 = scmp.eq.s32.totalorder %s19, 0
      %p61 = por %p59, %p60
      %p62 = scmp.ne.s32.totalorder %s48, %s49
      %p63 = scmp.eq.s32.totalorder %s20, 7
      %p64 = por %p62, %p63
      %p66 = scmp.ne.s32.totalorder %s49, %s65
      %p67 = scmp.eq.s32.totalorder %s20, 0
      %p68 = por %p66, %p67
      %s69 = ssub.s32 %s21, %s40
      %s70 = ssub.s32 %s23, %s32
      %s71 = sor.u32 %s69, %s70
      %p72 = scmp.eq.s32.totalorder %s71, 0
      %s74 = sadd.s32 %s73, 1
      %s75 = scalar_select %p72, %s73, %s74
      %p78 = pneg %p72
      %p79 = scmp.eq.s32.totalorder %s14, 7
      %p80 = por %p78, %p79
      %p81 = scmp.ne.s32.totalorder %s73, %s76
      %p82 = scmp.eq.s32.totalorder %s14, 0
      %p83 = por %p81, %p82
      %p84 = scmp.ne.s32.totalorder %s73, %s76
      %p85 = scmp.eq.s32.totalorder %s19, 7
      %p86 = por %p84, %p85
      %p87 = scmp.ne.s32.totalorder %s76, %s77
      %p88 = scmp.eq.s32.totalorder %s19, 0
      %p89 = por %p87, %p88
      %p90 = scmp.ne.s32.totalorder %s76, %s77
      %p91 = scmp.eq.s32.totalorder %s20, 7
      %p92 = por %p90, %p91
      %p94 = scmp.ne.s32.totalorder %s77, %s93
      %p95 = scmp.eq.s32.totalorder %s20, 0
      %p96 = por %p94, %p95
      %s97 = ssub.s32 %s21, %s40
      %s98 = ssub.s32 %s23, %s32
      %s99 = sor.u32 %s97, %s98
      %p100 = scmp.eq.s32.totalorder %s99, 0
      %s102 = sadd.s32 %s101, 1
      %s103 = scalar_select %p100, %s101, %s102
      %p106 = pneg %p100
      %p107 = scmp.eq.s32.totalorder %s14, 7
      %p108 = por %p106, %p107
      %p109 = scmp.ne.s32.totalorder %s101, %s104
      %p110 = scmp.eq.s32.totalorder %s14, 0
      %p111 = por %p109, %p110
      %p112 = scmp.ne.s32.totalorder %s101, %s104
      %p113 = scmp.eq.s32.totalorder %s19, 7
      %p114 = por %p112, %p113
      %p115 = scmp.ne.s32.totalorder %s104, %s105
      %p116 = scmp.eq.s32.totalorder %s19, 0
      %p117 = por %p115, %p116
      %p118 = scmp.ne.s32.totalorder %s104, %s105
      %p119 = scmp.eq.s32.totalorder %s20, 7
      %p120 = por %p118, %p119
      %p122 = scmp.ne.s32.totalorder %s105, %s121
      %p123 = scmp.eq.s32.totalorder %s20, 0
      %p124 = por %p122, %p123
      %s126 = sadd.s32 %s125, 1
      %p129 = scmp.eq.s32.totalorder %s14, 7
      %p130 = scmp.ne.s32.totalorder %s125, %s127
      %p131 = scmp.eq.s32.totalorder %s14, 0
      %p132 = por %p130, %p131
      %p133 = scmp.ne.s32.totalorder %s125, %s127
      %p134 = scmp.eq.s32.totalorder %s19, 7
      %p135 = por %p133, %p134
      %p136 = scmp.ne.s32.totalorder %s127, %s128
      %p137 = scmp.eq.s32.totalorder %s19, 0
      %p138 = por %p136, %p137
      %p139 = scmp.ne.s32.totalorder %s127, %s128
      %p140 = scmp.eq.s32.totalorder %s20, 7
      %p141 = por %p139, %p140
      %p143 = scmp.ne.s32.totalorder %s128, %s142
      %p144 = scmp.eq.s32.totalorder %s20, 0
      %p145 = por %p143, %p144
      %s147 = sadd.s32 %s146, 1
      %p150 = scmp.eq.s32.totalorder %s14, 7
      %p151 = scmp.ne.s32.totalorder %s146, %s148
      %p152 = scmp.eq.s32.totalorder %s14, 0
      %p153 = por %p151, %p152
      %p154 = scmp.ne.s32.totalorder %s146, %s148
      %p155 = scmp.eq.s32.totalorder %s19, 7
      %p156 = por %p154, %p155
      %p157 = scmp.ne.s32.totalorder %s148, %s149
      %p158 = scmp.eq.s32.totalorder %s19, 0
      %p159 = por %p157, %p158
      %p160 = scmp.ne.s32.totalorder %s148, %s149
      %p161 = scmp.eq.s32.totalorder %s20, 7
      %p162 = por %p160, %p161
      %p164 = scmp.ne.s32.totalorder %s149, %s163
      %p165 = scmp.eq.s32.totalorder %s20, 0
      %p166 = por %p164, %p165
      %s167 = ssub.s32 %s21, %s40
      %s168 = ssub.s32 %s22, %s36
      %s169 = sor.u32 %s167, %s168
      %p170 = scmp.eq.s32.totalorder %s169, 0
      %s172 = sadd.s32 %s171, 1
      %s173 = scalar_select %p170, %s171, %s172
      %p176 = pneg %p170
      %p177 = scmp.eq.s32.totalorder %s14, 7
      %p178 = por %p176, %p177
      %p179 = scmp.ne.s32.totalorder %s171, %s174
      %p180 = scmp.eq.s32.totalorder %s14, 0
      %p181 = por %p179, %p180
      %p182 = scmp.ne.s32.totalorder %s171, %s174
      %p183 = scmp.eq.s32.totalorder %s19, 7
      %p184 = por %p182, %p183
      %p185 = scmp.ne.s32.totalorder %s174, %s175
      %p186 = scmp.eq.s32.totalorder %s19, 0
      %p187 = por %p185, %p186
      %p188 = scmp.ne.s32.totalorder %s174, %s175
      %p189 = scmp.eq.s32.totalorder %s20, 7
      %p190 = por %p188, %p189
      %p192 = scmp.ne.s32.totalorder %s175, %s191
      %p193 = scmp.eq.s32.totalorder %s20, 0
      %p194 = por %p192, %p193
      %p195 = scmp.le.s32.totalorder 1, %s14
      %p196 = scmp.lt.s32.totalorder %s14, 9
      %p197 = pnand %p195, %p196
      %p198 = pneg %p197
      // Predicated region
      $region9: #{attention_pallas.3} parent=5 // pred_check
        _
      $region10: #{attention_pallas.3} parent=5 // pred_check_branch
        %200 = sbr.rel (%p197) target = $region12
      $region11: #{attention_pallas.3} parent=5 // pred_region
        %s201 = ssub.s32 %s14, 1
        // Predicated region
        $region13: #{attention_pallas.3} parent=11 // pred_check
          %p202 = pneg %p138
        $region14: #{attention_pallas.3} parent=11 // pred_check_branch
          %204 = sbr.rel (%p202) target = $region16
        $region15: #{attention_pallas.3} parent=11 // pred_region
          _
        $region16: #{attention_pallas.3} parent=11 // pred_fallthru
          _
        // Predicated region
        $region17: #{attention_pallas.3} parent=11 // pred_check
          %p205 = pneg %p159
        $region18: #{attention_pallas.3} parent=11 // pred_check_branch
          %207 = sbr.rel (%p205) target = $region20
        $region19: #{attention_pallas.3} parent=11 // pred_region
          _
        $region20: #{attention_pallas.3} parent=11 // pred_fallthru
          _
      $region12: #{attention_pallas.3} parent=5 // pred_fallthru
        _
      %p208 = scmp.lt.s32.totalorder %s14, 8
      // Predicated region
      $region21: #{attention_pallas.3} parent=5 // pred_check
        %p209 = pneg %p208
      $region22: #{attention_pallas.3} parent=5 // pred_check_branch
        %211 = sbr.rel (%p209) target = $region24
      $region23: #{attention_pallas.3} parent=5 // pred_region
        // Predicated region
        $region25: #{attention_pallas.3} parent=23 // pred_check
          %p212 = pneg %p55
        $region26: #{attention_pallas.3} parent=23 // pred_check_branch
          %214 = sbr.rel (%p212) target = $region28
        $region27: #{attention_pallas.3} parent=23 // pred_region
          %s215 = sand.u32 %s45, 1
          %s216 = sand.u32 %s45, 1
          %s217 = smul.addr %s216, 256
          %s218 = scalar_lea.vmem [#allocation5], %s217
          %s219 = smul.u32 16, %s22
          %s220 = smul.addr %s21, 128
          %s221 = sadd.s32 %s219, %s220
          %s222 = smul.addr %s221, 4
          %s223 = scalar_lea.vmem %s0, %s222
          // Predicated region
          $region29: #{attention_pallas.3} parent=27 // pred_check
            _
          $region30: #{attention_pallas.3} parent=27 // pred_check_branch
            %225 = sbr.rel (0) target = $region32
          $region31: #{attention_pallas.3} parent=27 // pred_region
            // Predicated region
            $region33: #{attention_pallas.3} parent=31 // pred_check
              _
            $region34: #{attention_pallas.3} parent=31 // pred_check_branch
              %227 = sbr.rel target = $region36
            $region35: #{attention_pallas.3} parent=31 // pred_region
              // Predicated region
              $region48: #{attention_pallas.3} parent=35 // pred_check
                _
              $region49: #{attention_pallas.3} parent=35 // pred_check_branch
                %368 = sbr.rel (0) target = $region51
              $region50: #{attention_pallas.3} parent=35 // pred_region
                loop: start=0, step=1, limit=1
                $region52: #{attention_pallas.3} parent=50 // loop_pre_header
                  _
                $region53: #{attention_pallas.3} parent=50 // loop_header
                  %s370 = sphi 0, %s374
                  %p371 = scmp.ge.s32.totalorder %s370, 1
                  %s375 = sphi %s223, %s223
                  %s376 = sphi %s218, %s218
                $region54: #{attention_pallas.3} parent=50 // loop_header_branch
                  %373 = sbr.rel (%p371) target = $region58
                $region55: #{attention_pallas.3} parent=50 // loop_body
                  _
                $region56: #{attention_pallas.3} parent=50 // loop_footer
                  %s374 = sadd.s32 1, %s370
                $region57: #{attention_pallas.3} parent=50 // loop_footer_branch
                  %369 = sbr.rel target = $region53
                $region58: #{attention_pallas.3} parent=50 // loop_exit
                  _
                loop: start=0, step=1, limit=1
                $region59: #{attention_pallas.3} parent=50 // loop_pre_header
                  _
                $region60: #{attention_pallas.3} parent=50 // loop_header
                  %s379 = sphi 0, %s383
                  %p380 = scmp.ge.s32.totalorder %s379, 1
                  %s384 = sphi %s223, %s223
                  %s385 = sphi %s218, %s218
                $region61: #{attention_pallas.3} parent=50 // loop_header_branch
                  %382 = sbr.rel (%p380) target = $region65
                $region62: #{attention_pallas.3} parent=50 // loop_body
                  %v386 = vld [vmem:[%s384] sm:$0xf]
                  %387 = vst [vmem:[%s385] sm:$0xf] %v386
                  %v388 = vld [vmem:[%s384 + $0x4] sm:$0xf]
                  %389 = vst [vmem:[%s385 + $0x4] sm:$0xf] %v388
                  %v390 = vld [vmem:[%s384 + $0x8] sm:$0xf]
                  %391 = vst [vmem:[%s385 + $0x8] sm:$0xf] %v390
                  %v392 = vld [vmem:[%s384 + $0xc] sm:$0xf]
                  %393 = vst [vmem:[%s385 + $0xc] sm:$0xf] %v392
                  %v394 = vld [vmem:[%s384 + $0x10] sm:$0xf]
                  %395 = vst [vmem:[%s385 + $0x10] sm:$0xf] %v394
                  %v396 = vld [vmem:[%s384 + $0x14] sm:$0xf]
                  %397 = vst [vmem:[%s385 + $0x14] sm:$0xf] %v396
                  %v398 = vld [vmem:[%s384 + $0x18] sm:$0xf]
                  %399 = vst [vmem:[%s385 + $0x18] sm:$0xf] %v398
                  %v400 = vld [vmem:[%s384 + $0x1c] sm:$0xf]
                  %401 = vst [vmem:[%s385 + $0x1c] sm:$0xf] %v400
                  %v402 = vld [vmem:[%s384 + $0x20] sm:$0xf]
                  %403 = vst [vmem:[%s385 + $0x20] sm:$0xf] %v402
                  %v404 = vld [vmem:[%s384 + $0x24] sm:$0xf]
                  %405 = vst [vmem:[%s385 + $0x24] sm:$0xf] %v404
                  %v406 = vld [vmem:[%s384 + $0x28] sm:$0xf]
                  %407 = vst [vmem:[%s385 + $0x28] sm:$0xf] %v406
                  %v408 = vld [vmem:[%s384 + $0x2c] sm:$0xf]
                  %409 = vst [vmem:[%s385 + $0x2c] sm:$0xf] %v408
                  %v410 = vld [vmem:[%s384 + $0x30] sm:$0xf]
                  %411 = vst [vmem:[%s385 + $0x30] sm:$0xf] %v410
                  %v412 = vld [vmem:[%s384 + $0x34] sm:$0xf]
                  %413 = vst [vmem:[%s385 + $0x34] sm:$0xf] %v412
                  %v414 = vld [vmem:[%s384 + $0x38] sm:$0xf]
                  %415 = vst [vmem:[%s385 + $0x38] sm:$0xf] %v414
                  %v416 = vld [vmem:[%s384 + $0x3c] sm:$0xf]
                  %417 = vst [vmem:[%s385 + $0x3c] sm:$0xf] %v416
                  %v418 = vld [vmem:[%s384 + $0x80] sm:$0xf]
                  %419 = vst [vmem:[%s385 + $0x40] sm:$0xf] %v418
                  %v420 = vld [vmem:[%s384 + $0x84] sm:$0xf]
                  %421 = vst [vmem:[%s385 + $0x44] sm:$0xf] %v420
                  %v422 = vld [vmem:[%s384 + $0x88] sm:$0xf]
                  %423 = vst [vmem:[%s385 + $0x48] sm:$0xf] %v422
                  %v424 = vld [vmem:[%s384 + $0x8c] sm:$0xf]
                  %425 = vst [vmem:[%s385 + $0x4c] sm:$0xf] %v424
                  %v426 = vld [vmem:[%s384 + $0x90] sm:$0xf]
                  %427 = vst [vmem:[%s385 + $0x50] sm:$0xf] %v426
                  %v428 = vld [vmem:[%s384 + $0x94] sm:$0xf]
                  %429 = vst [vmem:[%s385 + $0x54] sm:$0xf] %v428
                  %v430 = vld [vmem:[%s384 + $0x98] sm:$0xf]
                  %431 = vst [vmem:[%s385 + $0x58] sm:$0xf] %v430
                  %v432 = vld [vmem:[%s384 + $0x9c] sm:$0xf]
                  %433 = vst [vmem:[%s385 + $0x5c] sm:$0xf] %v432
                  %v434 = vld [vmem:[%s384 + $0xa0] sm:$0xf]
                  %435 = vst [vmem:[%s385 + $0x60] sm:$0xf] %v434
                  %v436 = vld [vmem:[%s384 + $0xa4] sm:$0xf]
                  %437 = vst [vmem:[%s385 + $0x64] sm:$0xf] %v436
                  %v438 = vld [vmem:[%s384 + $0xa8] sm:$0xf]
                  %439 = vst [vmem:[%s385 + $0x68] sm:$0xf] %v438
                  %v440 = vld [vmem:[%s384 + $0xac] sm:$0xf]
                  %441 = vst [vmem:[%s385 + $0x6c] sm:$0xf] %v440
                  %v442 = vld [vmem:[%s384 + $0xb0] sm:$0xf]
                  %443 = vst [vmem:[%s385 + $0x70] sm:$0xf] %v442
                  %v444 = vld [vmem:[%s384 + $0xb4] sm:$0xf]
                  %445 = vst [vmem:[%s385 + $0x74] sm:$0xf] %v444
                  %v446 = vld [vmem:[%s384 + $0xb8] sm:$0xf]
                  %447 = vst [vmem:[%s385 + $0x78] sm:$0xf] %v446
                  %v448 = vld [vmem:[%s384 + $0xbc] sm:$0xf]
                  %449 = vst [vmem:[%s385 + $0x7c] sm:$0xf] %v448
                  %v450 = vld [vmem:[%s384 + $0x100] sm:$0xf]
                  %451 = vst [vmem:[%s385 + $0x80] sm:$0xf] %v450
                  %v452 = vld [vmem:[%s384 + $0x104] sm:$0xf]
                  %453 = vst [vmem:[%s385 + $0x84] sm:$0xf] %v452
                  %v454 = vld [vmem:[%s384 + $0x108] sm:$0xf]
                  %455 = vst [vmem:[%s385 + $0x88] sm:$0xf] %v454
                  %v456 = vld [vmem:[%s384 + $0x10c] sm:$0xf]
                  %457 = vst [vmem:[%s385 + $0x8c] sm:$0xf] %v456
                  %v458 = vld [vmem:[%s384 + $0x110] sm:$0xf]
                  %459 = vst [vmem:[%s385 + $0x90] sm:$0xf] %v458
                  %v460 = vld [vmem:[%s384 + $0x114] sm:$0xf]
                  %461 = vst [vmem:[%s385 + $0x94] sm:$0xf] %v460
                  %v462 = vld [vmem:[%s384 + $0x118] sm:$0xf]
                  %463 = vst [vmem:[%s385 + $0x98] sm:$0xf] %v462
                  %v464 = vld [vmem:[%s384 + $0x11c] sm:$0xf]
                  %465 = vst [vmem:[%s385 + $0x9c] sm:$0xf] %v464
                  %v466 = vld [vmem:[%s384 + $0x120] sm:$0xf]
                  %467 = vst [vmem:[%s385 + $0xa0] sm:$0xf] %v466
                  %v468 = vld [vmem:[%s384 + $0x124] sm:$0xf]
                  %469 = vst [vmem:[%s385 + $0xa4] sm:$0xf] %v468
                  %v470 = vld [vmem:[%s384 + $0x128] sm:$0xf]
                  %471 = vst [vmem:[%s385 + $0xa8] sm:$0xf] %v470
                  %v472 = vld [vmem:[%s384 + $0x12c] sm:$0xf]
                  %473 = vst [vmem:[%s385 + $0xac] sm:$0xf] %v472
                  %v474 = vld [vmem:[%s384 + $0x130] sm:$0xf]
                  %475 = vst [vmem:[%s385 + $0xb0] sm:$0xf] %v474
                  %v476 = vld [vmem:[%s384 + $0x134] sm:$0xf]
                  %477 = vst [vmem:[%s385 + $0xb4] sm:$0xf] %v476
                  %v478 = vld [vmem:[%s384 + $0x138] sm:$0xf]
                  %479 = vst [vmem:[%s385 + $0xb8] sm:$0xf] %v478
                  %v480 = vld [vmem:[%s384 + $0x13c] sm:$0xf]
                  %481 = vst [vmem:[%s385 + $0xbc] sm:$0xf] %v480
                  %v482 = vld [vmem:[%s384 + $0x180] sm:$0xf]
                  %483 = vst [vmem:[%s385 + $0xc0] sm:$0xf] %v482
                  %v484 = vld [vmem:[%s384 + $0x184] sm:$0xf]
                  %485 = vst [vmem:[%s385 + $0xc4] sm:$0xf] %v484
                  %v486 = vld [vmem:[%s384 + $0x188] sm:$0xf]
                  %487 = vst [vmem:[%s385 + $0xc8] sm:$0xf] %v486
                  %v488 = vld [vmem:[%s384 + $0x18c] sm:$0xf]
                  %489 = vst [vmem:[%s385 + $0xcc] sm:$0xf] %v488
                  %v490 = vld [vmem:[%s384 + $0x190] sm:$0xf]
                  %491 = vst [vmem:[%s385 + $0xd0] sm:$0xf] %v490
                  %v492 = vld [vmem:[%s384 + $0x194] sm:$0xf]
                  %493 = vst [vmem:[%s385 + $0xd4] sm:$0xf] %v492
                  %v494 = vld [vmem:[%s384 + $0x198] sm:$0xf]
                  %495 = vst [vmem:[%s385 + $0xd8] sm:$0xf] %v494
                  %v496 = vld [vmem:[%s384 + $0x19c] sm:$0xf]
                  %497 = vst [vmem:[%s385 + $0xdc] sm:$0xf] %v496
                  %v498 = vld [vmem:[%s384 + $0x1a0] sm:$0xf]
                  %499 = vst [vmem:[%s385 + $0xe0] sm:$0xf] %v498
                  %v500 = vld [vmem:[%s384 + $0x1a4] sm:$0xf]
                  %501 = vst [vmem:[%s385 + $0xe4] sm:$0xf] %v500
                  %v502 = vld [vmem:[%s384 + $0x1a8] sm:$0xf]
                  %503 = vst [vmem:[%s385 + $0xe8] sm:$0xf] %v502
                  %v504 = vld [vmem:[%s384 + $0x1ac] sm:$0xf]
                  %505 = vst [vmem:[%s385 + $0xec] sm:$0xf] %v504
                  %v506 = vld [vmem:[%s384 + $0x1b0] sm:$0xf]
                  %507 = vst [vmem:[%s385 + $0xf0] sm:$0xf] %v506
                  %v508 = vld [vmem:[%s384 + $0x1b4] sm:$0xf]
                  %509 = vst [vmem:[%s385 + $0xf4] sm:$0xf] %v508
                  %v510 = vld [vmem:[%s384 + $0x1b8] sm:$0xf]
                  %511 = vst [vmem:[%s385 + $0xf8] sm:$0xf] %v510
                  %v512 = vld [vmem:[%s384 + $0x1bc] sm:$0xf]
                  %513 = vst [vmem:[%s385 + $0xfc] sm:$0xf] %v512
                $region63: #{attention_pallas.3} parent=50 // loop_footer
                  %s383 = sadd.s32 1, %s379
                $region64: #{attention_pallas.3} parent=50 // loop_footer_branch
                  %378 = sbr.rel target = $region60
                $region65: #{attention_pallas.3} parent=50 // loop_exit
                  _
              $region51: #{attention_pallas.3} parent=35 // pred_fallthru
                _
            $region36: #{attention_pallas.3} parent=31 // pred_fallthru
              _
            // Predicated region
            $region37: #{attention_pallas.3} parent=31 // pred_check
              _
            $region38: #{attention_pallas.3} parent=31 // pred_check_branch
              %229 = sbr.rel (0) target = $region40
            $region39: #{attention_pallas.3} parent=31 // pred_region
              loop: start=0, step=1, limit=1
              $region41: #{attention_pallas.3} parent=39 // loop_pre_header
                _
              $region42: #{attention_pallas.3} parent=39 // loop_header
                %s232 = sphi 0, %s236
                %p233 = scmp.ge.s32.totalorder %s232, 1
                %s237 = sphi %s223, %s223
                %s238 = sphi %s218, %s218
              $region43: #{attention_pallas.3} parent=39 // loop_header_branch
                %235 = sbr.rel (%p233) target = $region47
              $region44: #{attention_pallas.3} parent=39 // loop_body
                %v239 = vld [vmem:[%s237] sm:$0xf]
                %240 = vst [vmem:[%s238] sm:$0xf] %v239
                %v241 = vld [vmem:[%s237 + $0x4] sm:$0xf]
                %242 = vst [vmem:[%s238 + $0x4] sm:$0xf] %v241
                %v243 = vld [vmem:[%s237 + $0x8] sm:$0xf]
                %244 = vst [vmem:[%s238 + $0x8] sm:$0xf] %v243
                %v245 = vld [vmem:[%s237 + $0xc] sm:$0xf]
                %246 = vst [vmem:[%s238 + $0xc] sm:$0xf] %v245
                %v247 = vld [vmem:[%s237 + $0x10] sm:$0xf]
                %248 = vst [vmem:[%s238 + $0x10] sm:$0xf] %v247
                %v249 = vld [vmem:[%s237 + $0x14] sm:$0xf]
                %250 = vst [vmem:[%s238 + $0x14] sm:$0xf] %v249
                %v251 = vld [vmem:[%s237 + $0x18] sm:$0xf]
                %252 = vst [vmem:[%s238 + $0x18] sm:$0xf] %v251
                %v253 = vld [vmem:[%s237 + $0x1c] sm:$0xf]
                %254 = vst [vmem:[%s238 + $0x1c] sm:$0xf] %v253
                %v255 = vld [vmem:[%s237 + $0x20] sm:$0xf]
                %256 = vst [vmem:[%s238 + $0x20] sm:$0xf] %v255
                %v257 = vld [vmem:[%s237 + $0x24] sm:$0xf]
                %258 = vst [vmem:[%s238 + $0x24] sm:$0xf] %v257
                %v259 = vld [vmem:[%s237 + $0x28] sm:$0xf]
                %260 = vst [vmem:[%s238 + $0x28] sm:$0xf] %v259
                %v261 = vld [vmem:[%s237 + $0x2c] sm:$0xf]
                %262 = vst [vmem:[%s238 + $0x2c] sm:$0xf] %v261
                %v263 = vld [vmem:[%s237 + $0x30] sm:$0xf]
                %264 = vst [vmem:[%s238 + $0x30] sm:$0xf] %v263
                %v265 = vld [vmem:[%s237 + $0x34] sm:$0xf]
                %266 = vst [vmem:[%s238 + $0x34] sm:$0xf] %v265
                %v267 = vld [vmem:[%s237 + $0x38] sm:$0xf]
                %268 = vst [vmem:[%s238 + $0x38] sm:$0xf] %v267
                %v269 = vld [vmem:[%s237 + $0x3c] sm:$0xf]
                %270 = vst [vmem:[%s238 + $0x3c] sm:$0xf] %v269
                %v271 = vld [vmem:[%s237 + $0x80] sm:$0xf]
                %272 = vst [vmem:[%s238 + $0x40] sm:$0xf] %v271
                %v273 = vld [vmem:[%s237 + $0x84] sm:$0xf]
                %274 = vst [vmem:[%s238 + $0x44] sm:$0xf] %v273
                %v275 = vld [vmem:[%s237 + $0x88] sm:$0xf]
                %276 = vst [vmem:[%s238 + $0x48] sm:$0xf] %v275
                %v277 = vld [vmem:[%s237 + $0x8c] sm:$0xf]
                %278 = vst [vmem:[%s238 + $0x4c] sm:$0xf] %v277
                %v279 = vld [vmem:[%s237 + $0x90] sm:$0xf]
                %280 = vst [vmem:[%s238 + $0x50] sm:$0xf] %v279
                %v281 = vld [vmem:[%s237 + $0x94] sm:$0xf]
                %282 = vst [vmem:[%s238 + $0x54] sm:$0xf] %v281
                %v283 = vld [vmem:[%s237 + $0x98] sm:$0xf]
                %284 = vst [vmem:[%s238 + $0x58] sm:$0xf] %v283
                %v285 = vld [vmem:[%s237 + $0x9c] sm:$0xf]
                %286 = vst [vmem:[%s238 + $0x5c] sm:$0xf] %v285
                %v287 = vld [vmem:[%s237 + $0xa0] sm:$0xf]
                %288 = vst [vmem:[%s238 + $0x60] sm:$0xf] %v287
                %v289 = vld [vmem:[%s237 + $0xa4] sm:$0xf]
                %290 = vst [vmem:[%s238 + $0x64] sm:$0xf] %v289
                %v291 = vld [vmem:[%s237 + $0xa8] sm:$0xf]
                %292 = vst [vmem:[%s238 + $0x68] sm:$0xf] %v291
                %v293 = vld [vmem:[%s237 + $0xac] sm:$0xf]
                %294 = vst [vmem:[%s238 + $0x6c] sm:$0xf] %v293
                %v295 = vld [vmem:[%s237 + $0xb0] sm:$0xf]
                %296 = vst [vmem:[%s238 + $0x70] sm:$0xf] %v295
                %v297 = vld [vmem:[%s237 + $0xb4] sm:$0xf]
                %298 = vst [vmem:[%s238 + $0x74] sm:$0xf] %v297
                %v299 = vld [vmem:[%s237 + $0xb8] sm:$0xf]
                %300 = vst [vmem:[%s238 + $0x78] sm:$0xf] %v299
                %v301 = vld [vmem:[%s237 + $0xbc] sm:$0xf]
                %302 = vst [vmem:[%s238 + $0x7c] sm:$0xf] %v301
                %v303 = vld [vmem:[%s237 + $0x100] sm:$0xf]
                %304 = vst [vmem:[%s238 + $0x80] sm:$0xf] %v303
                %v305 = vld [vmem:[%s237 + $0x104] sm:$0xf]
                %306 = vst [vmem:[%s238 + $0x84] sm:$0xf] %v305
                %v307 = vld [vmem:[%s237 + $0x108] sm:$0xf]
                %308 = vst [vmem:[%s238 + $0x88] sm:$0xf] %v307
                %v309 = vld [vmem:[%s237 + $0x10c] sm:$0xf]
                %310 = vst [vmem:[%s238 + $0x8c] sm:$0xf] %v309
                %v311 = vld [vmem:[%s237 + $0x110] sm:$0xf]
                %312 = vst [vmem:[%s238 + $0x90] sm:$0xf] %v311
                %v313 = vld [vmem:[%s237 + $0x114] sm:$0xf]
                %314 = vst [vmem:[%s238 + $0x94] sm:$0xf] %v313
                %v315 = vld [vmem:[%s237 + $0x118] sm:$0xf]
                %316 = vst [vmem:[%s238 + $0x98] sm:$0xf] %v315
                %v317 = vld [vmem:[%s237 + $0x11c] sm:$0xf]
                %318 = vst [vmem:[%s238 + $0x9c] sm:$0xf] %v317
                %v319 = vld [vmem:[%s237 + $0x120] sm:$0xf]
                %320 = vst [vmem:[%s238 + $0xa0] sm:$0xf] %v319
                %v321 = vld [vmem:[%s237 + $0x124] sm:$0xf]
                %322 = vst [vmem:[%s238 + $0xa4] sm:$0xf] %v321
                %v323 = vld [vmem:[%s237 + $0x128] sm:$0xf]
                %324 = vst [vmem:[%s238 + $0xa8] sm:$0xf] %v323
                %v325 = vld [vmem:[%s237 + $0x12c] sm:$0xf]
                %326 = vst [vmem:[%s238 + $0xac] sm:$0xf] %v325
                %v327 = vld [vmem:[%s237 + $0x130] sm:$0xf]
                %328 = vst [vmem:[%s238 + $0xb0] sm:$0xf] %v327
                %v329 = vld [vmem:[%s237 + $0x134] sm:$0xf]
                %330 = vst [vmem:[%s238 + $0xb4] sm:$0xf] %v329
                %v331 = vld [vmem:[%s237 + $0x138] sm:$0xf]
                %332 = vst [vmem:[%s238 + $0xb8] sm:$0xf] %v331
                %v333 = vld [vmem:[%s237 + $0x13c] sm:$0xf]
                %334 = vst [vmem:[%s238 + $0xbc] sm:$0xf] %v333
                %v335 = vld [vmem:[%s237 + $0x180] sm:$0xf]
                %336 = vst [vmem:[%s238 + $0xc0] sm:$0xf] %v335
                %v337 = vld [vmem:[%s237 + $0x184] sm:$0xf]
                %338 = vst [vmem:[%s238 + $0xc4] sm:$0xf] %v337
                %v339 = vld [vmem:[%s237 + $0x188] sm:$0xf]
                %340 = vst [vmem:[%s238 + $0xc8] sm:$0xf] %v339
                %v341 = vld [vmem:[%s237 + $0x18c] sm:$0xf]
                %342 = vst [vmem:[%s238 + $0xcc] sm:$0xf] %v341
                %v343 = vld [vmem:[%s237 + $0x190] sm:$0xf]
                %344 = vst [vmem:[%s238 + $0xd0] sm:$0xf] %v343
                %v345 = vld [vmem:[%s237 + $0x194] sm:$0xf]
                %346 = vst [vmem:[%s238 + $0xd4] sm:$0xf] %v345
                %v347 = vld [vmem:[%s237 + $0x198] sm:$0xf]
                %348 = vst [vmem:[%s238 + $0xd8] sm:$0xf] %v347
                %v349 = vld [vmem:[%s237 + $0x19c] sm:$0xf]
                %350 = vst [vmem:[%s238 + $0xdc] sm:$0xf] %v349
                %v351 = vld [vmem:[%s237 + $0x1a0] sm:$0xf]
                %352 = vst [vmem:[%s238 + $0xe0] sm:$0xf] %v351
                %v353 = vld [vmem:[%s237 + $0x1a4] sm:$0xf]
                %354 = vst [vmem:[%s238 + $0xe4] sm:$0xf] %v353
                %v355 = vld [vmem:[%s237 + $0x1a8] sm:$0xf]
                %356 = vst [vmem:[%s238 + $0xe8] sm:$0xf] %v355
                %v357 = vld [vmem:[%s237 + $0x1ac] sm:$0xf]
                %358 = vst [vmem:[%s238 + $0xec] sm:$0xf] %v357
                %v359 = vld [vmem:[%s237 + $0x1b0] sm:$0xf]
                %360 = vst [vmem:[%s238 + $0xf0] sm:$0xf] %v359
                %v361 = vld [vmem:[%s237 + $0x1b4] sm:$0xf]
                %362 = vst [vmem:[%s238 + $0xf4] sm:$0xf] %v361
                %v363 = vld [vmem:[%s237 + $0x1b8] sm:$0xf]
                %364 = vst [vmem:[%s238 + $0xf8] sm:$0xf] %v363
                %v365 = vld [vmem:[%s237 + $0x1bc] sm:$0xf]
                %366 = vst [vmem:[%s238 + $0xfc] sm:$0xf] %v365
              $region45: #{attention_pallas.3} parent=39 // loop_footer
                %s236 = sadd.s32 1, %s232
              $region46: #{attention_pallas.3} parent=39 // loop_footer_branch
                %231 = sbr.rel target = $region42
              $region47: #{attention_pallas.3} parent=39 // loop_exit
                _
            $region40: #{attention_pallas.3} parent=31 // pred_fallthru
              _
          $region32: #{attention_pallas.3} parent=27 // pred_fallthru
            _
          %514 = vnop
        $region28: #{attention_pallas.3} parent=23 // pred_fallthru
          _
        // Predicated region
        $region66: #{attention_pallas.3} parent=23 // pred_check
          %p515 = pneg %p83
        $region67: #{attention_pallas.3} parent=23 // pred_check_branch
          %517 = sbr.rel (%p515) target = $region69
        $region68: #{attention_pallas.3} parent=23 // pred_region
          %s518 = sand.u32 %s73, 1
          %s519 = sand.u32 %s73, 1
          %s520 = smul.addr %s519, 256
          %s521 = scalar_lea.vmem [#allocation6], %s520
          %s522 = smul.u32 16, %s23
          %s523 = smul.addr %s21, 128
          %s524 = sadd.s32 %s522, %s523
          %s525 = smul.addr %s524, 4
          %s526 = scalar_lea.vmem %s1, %s525
          // Predicated region
          $region70: #{attention_pallas.3} parent=68 // pred_check
            _
          $region71: #{attention_pallas.3} parent=68 // pred_check_branch
            %528 = sbr.rel (0) target = $region73
          $region72: #{attention_pallas.3} parent=68 // pred_region
            // Predicated region
            $region74: #{attention_pallas.3} parent=72 // pred_check
              _
            $region75: #{attention_pallas.3} parent=72 // pred_check_branch
              %530 = sbr.rel target = $region77
            $region76: #{attention_pallas.3} parent=72 // pred_region
              // Predicated region
              $region89: #{attention_pallas.3} parent=76 // pred_check
                _
              $region90: #{attention_pallas.3} parent=76 // pred_check_branch
                %671 = sbr.rel (0) target = $region92
              $region91: #{attention_pallas.3} parent=76 // pred_region
                loop: start=0, step=1, limit=1
                $region93: #{attention_pallas.3} parent=91 // loop_pre_header
                  _
                $region94: #{attention_pallas.3} parent=91 // loop_header
                  %s673 = sphi 0, %s677
                  %p674 = scmp.ge.s32.totalorder %s673, 1
                  %s678 = sphi %s526, %s526
                  %s679 = sphi %s521, %s521
                $region95: #{attention_pallas.3} parent=91 // loop_header_branch
                  %676 = sbr.rel (%p674) target = $region99
                $region96: #{attention_pallas.3} parent=91 // loop_body
                  _
                $region97: #{attention_pallas.3} parent=91 // loop_footer
                  %s677 = sadd.s32 1, %s673
                $region98: #{attention_pallas.3} parent=91 // loop_footer_branch
                  %672 = sbr.rel target = $region94
                $region99: #{attention_pallas.3} parent=91 // loop_exit
                  _
                loop: start=0, step=1, limit=1
                $region100: #{attention_pallas.3} parent=91 // loop_pre_header
                  _
                $region101: #{attention_pallas.3} parent=91 // loop_header
                  %s682 = sphi 0, %s686
                  %p683 = scmp.ge.s32.totalorder %s682, 1
                  %s687 = sphi %s526, %s526
                  %s688 = sphi %s521, %s521
                $region102: #{attention_pallas.3} parent=91 // loop_header_branch
                  %685 = sbr.rel (%p683) target = $region106
                $region103: #{attention_pallas.3} parent=91 // loop_body
                  %v689 = vld [vmem:[%s687] sm:$0xf]
                  %690 = vst [vmem:[%s688] sm:$0xf] %v689
                  %v691 = vld [vmem:[%s687 + $0x4] sm:$0xf]
                  %692 = vst [vmem:[%s688 + $0x4] sm:$0xf] %v691
                  %v693 = vld [vmem:[%s687 + $0x8] sm:$0xf]
                  %694 = vst [vmem:[%s688 + $0x8] sm:$0xf] %v693
                  %v695 = vld [vmem:[%s687 + $0xc] sm:$0xf]
                  %696 = vst [vmem:[%s688 + $0xc] sm:$0xf] %v695
                  %v697 = vld [vmem:[%s687 + $0x10] sm:$0xf]
                  %698 = vst [vmem:[%s688 + $0x10] sm:$0xf] %v697
                  %v699 = vld [vmem:[%s687 + $0x14] sm:$0xf]
                  %700 = vst [vmem:[%s688 + $0x14] sm:$0xf] %v699
                  %v701 = vld [vmem:[%s687 + $0x18] sm:$0xf]
                  %702 = vst [vmem:[%s688 + $0x18] sm:$0xf] %v701
                  %v703 = vld [vmem:[%s687 + $0x1c] sm:$0xf]
                  %704 = vst [vmem:[%s688 + $0x1c] sm:$0xf] %v703
                  %v705 = vld [vmem:[%s687 + $0x20] sm:$0xf]
                  %706 = vst [vmem:[%s688 + $0x20] sm:$0xf] %v705
                  %v707 = vld [vmem:[%s687 + $0x24] sm:$0xf]
                  %708 = vst [vmem:[%s688 + $0x24] sm:$0xf] %v707
                  %v709 = vld [vmem:[%s687 + $0x28] sm:$0xf]
                  %710 = vst [vmem:[%s688 + $0x28] sm:$0xf] %v709
                  %v711 = vld [vmem:[%s687 + $0x2c] sm:$0xf]
                  %712 = vst [vmem:[%s688 + $0x2c] sm:$0xf] %v711
                  %v713 = vld [vmem:[%s687 + $0x30] sm:$0xf]
                  %714 = vst [vmem:[%s688 + $0x30] sm:$0xf] %v713
                  %v715 = vld [vmem:[%s687 + $0x34] sm:$0xf]
                  %716 = vst [vmem:[%s688 + $0x34] sm:$0xf] %v715
                  %v717 = vld [vmem:[%s687 + $0x38] sm:$0xf]
                  %718 = vst [vmem:[%s688 + $0x38] sm:$0xf] %v717
                  %v719 = vld [vmem:[%s687 + $0x3c] sm:$0xf]
                  %720 = vst [vmem:[%s688 + $0x3c] sm:$0xf] %v719
                  %v721 = vld [vmem:[%s687 + $0x80] sm:$0xf]
                  %722 = vst [vmem:[%s688 + $0x40] sm:$0xf] %v721
                  %v723 = vld [vmem:[%s687 + $0x84] sm:$0xf]
                  %724 = vst [vmem:[%s688 + $0x44] sm:$0xf] %v723
                  %v725 = vld [vmem:[%s687 + $0x88] sm:$0xf]
                  %726 = vst [vmem:[%s688 + $0x48] sm:$0xf] %v725
                  %v727 = vld [vmem:[%s687 + $0x8c] sm:$0xf]
                  %728 = vst [vmem:[%s688 + $0x4c] sm:$0xf] %v727
                  %v729 = vld [vmem:[%s687 + $0x90] sm:$0xf]
                  %730 = vst [vmem:[%s688 + $0x50] sm:$0xf] %v729
                  %v731 = vld [vmem:[%s687 + $0x94] sm:$0xf]
                  %732 = vst [vmem:[%s688 + $0x54] sm:$0xf] %v731
                  %v733 = vld [vmem:[%s687 + $0x98] sm:$0xf]
                  %734 = vst [vmem:[%s688 + $0x58] sm:$0xf] %v733
                  %v735 = vld [vmem:[%s687 + $0x9c] sm:$0xf]
                  %736 = vst [vmem:[%s688 + $0x5c] sm:$0xf] %v735
                  %v737 = vld [vmem:[%s687 + $0xa0] sm:$0xf]
                  %738 = vst [vmem:[%s688 + $0x60] sm:$0xf] %v737
                  %v739 = vld [vmem:[%s687 + $0xa4] sm:$0xf]
                  %740 = vst [vmem:[%s688 + $0x64] sm:$0xf] %v739
                  %v741 = vld [vmem:[%s687 + $0xa8] sm:$0xf]
                  %742 = vst [vmem:[%s688 + $0x68] sm:$0xf] %v741
                  %v743 = vld [vmem:[%s687 + $0xac] sm:$0xf]
                  %744 = vst [vmem:[%s688 + $0x6c] sm:$0xf] %v743
                  %v745 = vld [vmem:[%s687 + $0xb0] sm:$0xf]
                  %746 = vst [vmem:[%s688 + $0x70] sm:$0xf] %v745
                  %v747 = vld [vmem:[%s687 + $0xb4] sm:$0xf]
                  %748 = vst [vmem:[%s688 + $0x74] sm:$0xf] %v747
                  %v749 = vld [vmem:[%s687 + $0xb8] sm:$0xf]
                  %750 = vst [vmem:[%s688 + $0x78] sm:$0xf] %v749
                  %v751 = vld [vmem:[%s687 + $0xbc] sm:$0xf]
                  %752 = vst [vmem:[%s688 + $0x7c] sm:$0xf] %v751
                  %v753 = vld [vmem:[%s687 + $0x100] sm:$0xf]
                  %754 = vst [vmem:[%s688 + $0x80] sm:$0xf] %v753
                  %v755 = vld [vmem:[%s687 + $0x104] sm:$0xf]
                  %756 = vst [vmem:[%s688 + $0x84] sm:$0xf] %v755
                  %v757 = vld [vmem:[%s687 + $0x108] sm:$0xf]
                  %758 = vst [vmem:[%s688 + $0x88] sm:$0xf] %v757
                  %v759 = vld [vmem:[%s687 + $0x10c] sm:$0xf]
                  %760 = vst [vmem:[%s688 + $0x8c] sm:$0xf] %v759
                  %v761 = vld [vmem:[%s687 + $0x110] sm:$0xf]
                  %762 = vst [vmem:[%s688 + $0x90] sm:$0xf] %v761
                  %v763 = vld [vmem:[%s687 + $0x114] sm:$0xf]
                  %764 = vst [vmem:[%s688 + $0x94] sm:$0xf] %v763
                  %v765 = vld [vmem:[%s687 + $0x118] sm:$0xf]
                  %766 = vst [vmem:[%s688 + $0x98] sm:$0xf] %v765
                  %v767 = vld [vmem:[%s687 + $0x11c] sm:$0xf]
                  %768 = vst [vmem:[%s688 + $0x9c] sm:$0xf] %v767
                  %v769 = vld [vmem:[%s687 + $0x120] sm:$0xf]
                  %770 = vst [vmem:[%s688 + $0xa0] sm:$0xf] %v769
                  %v771 = vld [vmem:[%s687 + $0x124] sm:$0xf]
                  %772 = vst [vmem:[%s688 + $0xa4] sm:$0xf] %v771
                  %v773 = vld [vmem:[%s687 + $0x128] sm:$0xf]
                  %774 = vst [vmem:[%s688 + $0xa8] sm:$0xf] %v773
                  %v775 = vld [vmem:[%s687 + $0x12c] sm:$0xf]
                  %776 = vst [vmem:[%s688 + $0xac] sm:$0xf] %v775
                  %v777 = vld [vmem:[%s687 + $0x130] sm:$0xf]
                  %778 = vst [vmem:[%s688 + $0xb0] sm:$0xf] %v777
                  %v779 = vld [vmem:[%s687 + $0x134] sm:$0xf]
                  %780 = vst [vmem:[%s688 + $0xb4] sm:$0xf] %v779
                  %v781 = vld [vmem:[%s687 + $0x138] sm:$0xf]
                  %782 = vst [vmem:[%s688 + $0xb8] sm:$0xf] %v781
                  %v783 = vld [vmem:[%s687 + $0x13c] sm:$0xf]
                  %784 = vst [vmem:[%s688 + $0xbc] sm:$0xf] %v783
                  %v785 = vld [vmem:[%s687 + $0x180] sm:$0xf]
                  %786 = vst [vmem:[%s688 + $0xc0] sm:$0xf] %v785
                  %v787 = vld [vmem:[%s687 + $0x184] sm:$0xf]
                  %788 = vst [vmem:[%s688 + $0xc4] sm:$0xf] %v787
                  %v789 = vld [vmem:[%s687 + $0x188] sm:$0xf]
                  %790 = vst [vmem:[%s688 + $0xc8] sm:$0xf] %v789
                  %v791 = vld [vmem:[%s687 + $0x18c] sm:$0xf]
                  %792 = vst [vmem:[%s688 + $0xcc] sm:$0xf] %v791
                  %v793 = vld [vmem:[%s687 + $0x190] sm:$0xf]
                  %794 = vst [vmem:[%s688 + $0xd0] sm:$0xf] %v793
                  %v795 = vld [vmem:[%s687 + $0x194] sm:$0xf]
                  %796 = vst [vmem:[%s688 + $0xd4] sm:$0xf] %v795
                  %v797 = vld [vmem:[%s687 + $0x198] sm:$0xf]
                  %798 = vst [vmem:[%s688 + $0xd8] sm:$0xf] %v797
                  %v799 = vld [vmem:[%s687 + $0x19c] sm:$0xf]
                  %800 = vst [vmem:[%s688 + $0xdc] sm:$0xf] %v799
                  %v801 = vld [vmem:[%s687 + $0x1a0] sm:$0xf]
                  %802 = vst [vmem:[%s688 + $0xe0] sm:$0xf] %v801
                  %v803 = vld [vmem:[%s687 + $0x1a4] sm:$0xf]
                  %804 = vst [vmem:[%s688 + $0xe4] sm:$0xf] %v803
                  %v805 = vld [vmem:[%s687 + $0x1a8] sm:$0xf]
                  %806 = vst [vmem:[%s688 + $0xe8] sm:$0xf] %v805
                  %v807 = vld [vmem:[%s687 + $0x1ac] sm:$0xf]
                  %808 = vst [vmem:[%s688 + $0xec] sm:$0xf] %v807
                  %v809 = vld [vmem:[%s687 + $0x1b0] sm:$0xf]
                  %810 = vst [vmem:[%s688 + $0xf0] sm:$0xf] %v809
                  %v811 = vld [vmem:[%s687 + $0x1b4] sm:$0xf]
                  %812 = vst [vmem:[%s688 + $0xf4] sm:$0xf] %v811
                  %v813 = vld [vmem:[%s687 + $0x1b8] sm:$0xf]
                  %814 = vst [vmem:[%s688 + $0xf8] sm:$0xf] %v813
                  %v815 = vld [vmem:[%s687 + $0x1bc] sm:$0xf]
                  %816 = vst [vmem:[%s688 + $0xfc] sm:$0xf] %v815
                $region104: #{attention_pallas.3} parent=91 // loop_footer
                  %s686 = sadd.s32 1, %s682
                $region105: #{attention_pallas.3} parent=91 // loop_footer_branch
                  %681 = sbr.rel target = $region101
                $region106: #{attention_pallas.3} parent=91 // loop_exit
                  _
              $region92: #{attention_pallas.3} parent=76 // pred_fallthru
                _
            $region77: #{attention_pallas.3} parent=72 // pred_fallthru
              _
            // Predicated region
            $region78: #{attention_pallas.3} parent=72 // pred_check
              _
            $region79: #{attention_pallas.3} parent=72 // pred_check_branch
              %532 = sbr.rel (0) target = $region81
            $region80: #{attention_pallas.3} parent=72 // pred_region
              loop: start=0, step=1, limit=1
              $region82: #{attention_pallas.3} parent=80 // loop_pre_header
                _
              $region83: #{attention_pallas.3} parent=80 // loop_header
                %s535 = sphi 0, %s539
                %p536 = scmp.ge.s32.totalorder %s535, 1
                %s540 = sphi %s526, %s526
                %s541 = sphi %s521, %s521
              $region84: #{attention_pallas.3} parent=80 // loop_header_branch
                %538 = sbr.rel (%p536) target = $region88
              $region85: #{attention_pallas.3} parent=80 // loop_body
                %v542 = vld [vmem:[%s540] sm:$0xf]
                %543 = vst [vmem:[%s541] sm:$0xf] %v542
                %v544 = vld [vmem:[%s540 + $0x4] sm:$0xf]
                %545 = vst [vmem:[%s541 + $0x4] sm:$0xf] %v544
                %v546 = vld [vmem:[%s540 + $0x8] sm:$0xf]
                %547 = vst [vmem:[%s541 + $0x8] sm:$0xf] %v546
                %v548 = vld [vmem:[%s540 + $0xc] sm:$0xf]
                %549 = vst [vmem:[%s541 + $0xc] sm:$0xf] %v548
                %v550 = vld [vmem:[%s540 + $0x10] sm:$0xf]
                %551 = vst [vmem:[%s541 + $0x10] sm:$0xf] %v550
                %v552 = vld [vmem:[%s540 + $0x14] sm:$0xf]
                %553 = vst [vmem:[%s541 + $0x14] sm:$0xf] %v552
                %v554 = vld [vmem:[%s540 + $0x18] sm:$0xf]
                %555 = vst [vmem:[%s541 + $0x18] sm:$0xf] %v554
                %v556 = vld [vmem:[%s540 + $0x1c] sm:$0xf]
                %557 = vst [vmem:[%s541 + $0x1c] sm:$0xf] %v556
                %v558 = vld [vmem:[%s540 + $0x20] sm:$0xf]
                %559 = vst [vmem:[%s541 + $0x20] sm:$0xf] %v558
                %v560 = vld [vmem:[%s540 + $0x24] sm:$0xf]
                %561 = vst [vmem:[%s541 + $0x24] sm:$0xf] %v560
                %v562 = vld [vmem:[%s540 + $0x28] sm:$0xf]
                %563 = vst [vmem:[%s541 + $0x28] sm:$0xf] %v562
                %v564 = vld [vmem:[%s540 + $0x2c] sm:$0xf]
                %565 = vst [vmem:[%s541 + $0x2c] sm:$0xf] %v564
                %v566 = vld [vmem:[%s540 + $0x30] sm:$0xf]
                %567 = vst [vmem:[%s541 + $0x30] sm:$0xf] %v566
                %v568 = vld [vmem:[%s540 + $0x34] sm:$0xf]
                %569 = vst [vmem:[%s541 + $0x34] sm:$0xf] %v568
                %v570 = vld [vmem:[%s540 + $0x38] sm:$0xf]
                %571 = vst [vmem:[%s541 + $0x38] sm:$0xf] %v570
                %v572 = vld [vmem:[%s540 + $0x3c] sm:$0xf]
                %573 = vst [vmem:[%s541 + $0x3c] sm:$0xf] %v572
                %v574 = vld [vmem:[%s540 + $0x80] sm:$0xf]
                %575 = vst [vmem:[%s541 + $0x40] sm:$0xf] %v574
                %v576 = vld [vmem:[%s540 + $0x84] sm:$0xf]
                %577 = vst [vmem:[%s541 + $0x44] sm:$0xf] %v576
                %v578 = vld [vmem:[%s540 + $0x88] sm:$0xf]
                %579 = vst [vmem:[%s541 + $0x48] sm:$0xf] %v578
                %v580 = vld [vmem:[%s540 + $0x8c] sm:$0xf]
                %581 = vst [vmem:[%s541 + $0x4c] sm:$0xf] %v580
                %v582 = vld [vmem:[%s540 + $0x90] sm:$0xf]
                %583 = vst [vmem:[%s541 + $0x50] sm:$0xf] %v582
                %v584 = vld [vmem:[%s540 + $0x94] sm:$0xf]
                %585 = vst [vmem:[%s541 + $0x54] sm:$0xf] %v584
                %v586 = vld [vmem:[%s540 + $0x98] sm:$0xf]
                %587 = vst [vmem:[%s541 + $0x58] sm:$0xf] %v586
                %v588 = vld [vmem:[%s540 + $0x9c] sm:$0xf]
                %589 = vst [vmem:[%s541 + $0x5c] sm:$0xf] %v588
                %v590 = vld [vmem:[%s540 + $0xa0] sm:$0xf]
                %591 = vst [vmem:[%s541 + $0x60] sm:$0xf] %v590
                %v592 = vld [vmem:[%s540 + $0xa4] sm:$0xf]
                %593 = vst [vmem:[%s541 + $0x64] sm:$0xf] %v592
                %v594 = vld [vmem:[%s540 + $0xa8] sm:$0xf]
                %595 = vst [vmem:[%s541 + $0x68] sm:$0xf] %v594
                %v596 = vld [vmem:[%s540 + $0xac] sm:$0xf]
                %597 = vst [vmem:[%s541 + $0x6c] sm:$0xf] %v596
                %v598 = vld [vmem:[%s540 + $0xb0] sm:$0xf]
                %599 = vst [vmem:[%s541 + $0x70] sm:$0xf] %v598
                %v600 = vld [vmem:[%s540 + $0xb4] sm:$0xf]
                %601 = vst [vmem:[%s541 + $0x74] sm:$0xf] %v600
                %v602 = vld [vmem:[%s540 + $0xb8] sm:$0xf]
                %603 = vst [vmem:[%s541 + $0x78] sm:$0xf] %v602
                %v604 = vld [vmem:[%s540 + $0xbc] sm:$0xf]
                %605 = vst [vmem:[%s541 + $0x7c] sm:$0xf] %v604
                %v606 = vld [vmem:[%s540 + $0x100] sm:$0xf]
                %607 = vst [vmem:[%s541 + $0x80] sm:$0xf] %v606
                %v608 = vld [vmem:[%s540 + $0x104] sm:$0xf]
                %609 = vst [vmem:[%s541 + $0x84] sm:$0xf] %v608
                %v610 = vld [vmem:[%s540 + $0x108] sm:$0xf]
                %611 = vst [vmem:[%s541 + $0x88] sm:$0xf] %v610
                %v612 = vld [vmem:[%s540 + $0x10c] sm:$0xf]
                %613 = vst [vmem:[%s541 + $0x8c] sm:$0xf] %v612
                %v614 = vld [vmem:[%s540 + $0x110] sm:$0xf]
                %615 = vst [vmem:[%s541 + $0x90] sm:$0xf] %v614
                %v616 = vld [vmem:[%s540 + $0x114] sm:$0xf]
                %617 = vst [vmem:[%s541 + $0x94] sm:$0xf] %v616
                %v618 = vld [vmem:[%s540 + $0x118] sm:$0xf]
                %619 = vst [vmem:[%s541 + $0x98] sm:$0xf] %v618
                %v620 = vld [vmem:[%s540 + $0x11c] sm:$0xf]
                %621 = vst [vmem:[%s541 + $0x9c] sm:$0xf] %v620
                %v622 = vld [vmem:[%s540 + $0x120] sm:$0xf]
                %623 = vst [vmem:[%s541 + $0xa0] sm:$0xf] %v622
                %v624 = vld [vmem:[%s540 + $0x124] sm:$0xf]
                %625 = vst [vmem:[%s541 + $0xa4] sm:$0xf] %v624
                %v626 = vld [vmem:[%s540 + $0x128] sm:$0xf]
                %627 = vst [vmem:[%s541 + $0xa8] sm:$0xf] %v626
                %v628 = vld [vmem:[%s540 + $0x12c] sm:$0xf]
                %629 = vst [vmem:[%s541 + $0xac] sm:$0xf] %v628
                %v630 = vld [vmem:[%s540 + $0x130] sm:$0xf]
                %631 = vst [vmem:[%s541 + $0xb0] sm:$0xf] %v630
                %v632 = vld [vmem:[%s540 + $0x134] sm:$0xf]
                %633 = vst [vmem:[%s541 + $0xb4] sm:$0xf] %v632
                %v634 = vld [vmem:[%s540 + $0x138] sm:$0xf]
                %635 = vst [vmem:[%s541 + $0xb8] sm:$0xf] %v634
                %v636 = vld [vmem:[%s540 + $0x13c] sm:$0xf]
                %637 = vst [vmem:[%s541 + $0xbc] sm:$0xf] %v636
                %v638 = vld [vmem:[%s540 + $0x180] sm:$0xf]
                %639 = vst [vmem:[%s541 + $0xc0] sm:$0xf] %v638
                %v640 = vld [vmem:[%s540 + $0x184] sm:$0xf]
                %641 = vst [vmem:[%s541 + $0xc4] sm:$0xf] %v640
                %v642 = vld [vmem:[%s540 + $0x188] sm:$0xf]
                %643 = vst [vmem:[%s541 + $0xc8] sm:$0xf] %v642
                %v644 = vld [vmem:[%s540 + $0x18c] sm:$0xf]
                %645 = vst [vmem:[%s541 + $0xcc] sm:$0xf] %v644
                %v646 = vld [vmem:[%s540 + $0x190] sm:$0xf]
                %647 = vst [vmem:[%s541 + $0xd0] sm:$0xf] %v646
                %v648 = vld [vmem:[%s540 + $0x194] sm:$0xf]
                %649 = vst [vmem:[%s541 + $0xd4] sm:$0xf] %v648
                %v650 = vld [vmem:[%s540 + $0x198] sm:$0xf]
                %651 = vst [vmem:[%s541 + $0xd8] sm:$0xf] %v650
                %v652 = vld [vmem:[%s540 + $0x19c] sm:$0xf]
                %653 = vst [vmem:[%s541 + $0xdc] sm:$0xf] %v652
                %v654 = vld [vmem:[%s540 + $0x1a0] sm:$0xf]
                %655 = vst [vmem:[%s541 + $0xe0] sm:$0xf] %v654
                %v656 = vld [vmem:[%s540 + $0x1a4] sm:$0xf]
                %657 = vst [vmem:[%s541 + $0xe4] sm:$0xf] %v656
                %v658 = vld [vmem:[%s540 + $0x1a8] sm:$0xf]
                %659 = vst [vmem:[%s541 + $0xe8] sm:$0xf] %v658
                %v660 = vld [vmem:[%s540 + $0x1ac] sm:$0xf]
                %661 = vst [vmem:[%s541 + $0xec] sm:$0xf] %v660
                %v662 = vld [vmem:[%s540 + $0x1b0] sm:$0xf]
                %663 = vst [vmem:[%s541 + $0xf0] sm:$0xf] %v662
                %v664 = vld [vmem:[%s540 + $0x1b4] sm:$0xf]
                %665 = vst [vmem:[%s541 + $0xf4] sm:$0xf] %v664
                %v666 = vld [vmem:[%s540 + $0x1b8] sm:$0xf]
                %667 = vst [vmem:[%s541 + $0xf8] sm:$0xf] %v666
                %v668 = vld [vmem:[%s540 + $0x1bc] sm:$0xf]
                %669 = vst [vmem:[%s541 + $0xfc] sm:$0xf] %v668
              $region86: #{attention_pallas.3} parent=80 // loop_footer
                %s539 = sadd.s32 1, %s535
              $region87: #{attention_pallas.3} parent=80 // loop_footer_branch
                %534 = sbr.rel target = $region83
              $region88: #{attention_pallas.3} parent=80 // loop_exit
                _
            $region81: #{attention_pallas.3} parent=72 // pred_fallthru
              _
          $region73: #{attention_pallas.3} parent=68 // pred_fallthru
            _
          %817 = vnop
        $region69: #{attention_pallas.3} parent=23 // pred_fallthru
          _
        // Predicated region
        $region107: #{attention_pallas.3} parent=23 // pred_check
          %p818 = pneg %p111
        $region108: #{attention_pallas.3} parent=23 // pred_check_branch
          %820 = sbr.rel (%p818) target = $region110
        $region109: #{attention_pallas.3} parent=23 // pred_region
          %s821 = sand.u32 %s101, 1
          %s822 = sand.u32 %s101, 1
          %s823 = smul.addr %s822, 256
          %s824 = scalar_lea.vmem [#allocation7], %s823
          %s825 = smul.u32 16, %s23
          %s826 = smul.addr %s21, 128
          %s827 = sadd.s32 %s825, %s826
          %s828 = smul.addr %s827, 4
          %s829 = scalar_lea.vmem %s2, %s828
          // Predicated region
          $region111: #{attention_pallas.3} parent=109 // pred_check
            _
          $region112: #{attention_pallas.3} parent=109 // pred_check_branch
            %831 = sbr.rel (0) target = $region114
          $region113: #{attention_pallas.3} parent=109 // pred_region
            // Predicated region
            $region115: #{attention_pallas.3} parent=113 // pred_check
              _
            $region116: #{attention_pallas.3} parent=113 // pred_check_branch
              %833 = sbr.rel target = $region118
            $region117: #{attention_pallas.3} parent=113 // pred_region
              // Predicated region
              $region130: #{attention_pallas.3} parent=117 // pred_check
                _
              $region131: #{attention_pallas.3} parent=117 // pred_check_branch
                %974 = sbr.rel (0) target = $region133
              $region132: #{attention_pallas.3} parent=117 // pred_region
                loop: start=0, step=1, limit=1
                $region134: #{attention_pallas.3} parent=132 // loop_pre_header
                  _
                $region135: #{attention_pallas.3} parent=132 // loop_header
                  %s976 = sphi 0, %s980
                  %p977 = scmp.ge.s32.totalorder %s976, 1
                  %s981 = sphi %s829, %s829
                  %s982 = sphi %s824, %s824
                $region136: #{attention_pallas.3} parent=132 // loop_header_branch
                  %979 = sbr.rel (%p977) target = $region140
                $region137: #{attention_pallas.3} parent=132 // loop_body
                  _
                $region138: #{attention_pallas.3} parent=132 // loop_footer
                  %s980 = sadd.s32 1, %s976
                $region139: #{attention_pallas.3} parent=132 // loop_footer_branch
                  %975 = sbr.rel target = $region135
                $region140: #{attention_pallas.3} parent=132 // loop_exit
                  _
                loop: start=0, step=1, limit=1
                $region141: #{attention_pallas.3} parent=132 // loop_pre_header
                  _
                $region142: #{attention_pallas.3} parent=132 // loop_header
                  %s985 = sphi 0, %s989
                  %p986 = scmp.ge.s32.totalorder %s985, 1
                  %s990 = sphi %s829, %s829
                  %s991 = sphi %s824, %s824
                $region143: #{attention_pallas.3} parent=132 // loop_header_branch
                  %988 = sbr.rel (%p986) target = $region147
                $region144: #{attention_pallas.3} parent=132 // loop_body
                  %v992 = vld [vmem:[%s990] sm:$0xf]
                  %993 = vst [vmem:[%s991] sm:$0xf] %v992
                  %v994 = vld [vmem:[%s990 + $0x4] sm:$0xf]
                  %995 = vst [vmem:[%s991 + $0x4] sm:$0xf] %v994
                  %v996 = vld [vmem:[%s990 + $0x8] sm:$0xf]
                  %997 = vst [vmem:[%s991 + $0x8] sm:$0xf] %v996
                  %v998 = vld [vmem:[%s990 + $0xc] sm:$0xf]
                  %999 = vst [vmem:[%s991 + $0xc] sm:$0xf] %v998
                  %v1000 = vld [vmem:[%s990 + $0x10] sm:$0xf]
                  %1001 = vst [vmem:[%s991 + $0x10] sm:$0xf] %v1000
                  %v1002 = vld [vmem:[%s990 + $0x14] sm:$0xf]
                  %1003 = vst [vmem:[%s991 + $0x14] sm:$0xf] %v1002
                  %v1004 = vld [vmem:[%s990 + $0x18] sm:$0xf]
                  %1005 = vst [vmem:[%s991 + $0x18] sm:$0xf] %v1004
                  %v1006 = vld [vmem:[%s990 + $0x1c] sm:$0xf]
                  %1007 = vst [vmem:[%s991 + $0x1c] sm:$0xf] %v1006
                  %v1008 = vld [vmem:[%s990 + $0x20] sm:$0xf]
                  %1009 = vst [vmem:[%s991 + $0x20] sm:$0xf] %v1008
                  %v1010 = vld [vmem:[%s990 + $0x24] sm:$0xf]
                  %1011 = vst [vmem:[%s991 + $0x24] sm:$0xf] %v1010
                  %v1012 = vld [vmem:[%s990 + $0x28] sm:$0xf]
                  %1013 = vst [vmem:[%s991 + $0x28] sm:$0xf] %v1012
                  %v1014 = vld [vmem:[%s990 + $0x2c] sm:$0xf]
                  %1015 = vst [vmem:[%s991 + $0x2c] sm:$0xf] %v1014
                  %v1016 = vld [vmem:[%s990 + $0x30] sm:$0xf]
                  %1017 = vst [vmem:[%s991 + $0x30] sm:$0xf] %v1016
                  %v1018 = vld [vmem:[%s990 + $0x34] sm:$0xf]
                  %1019 = vst [vmem:[%s991 + $0x34] sm:$0xf] %v1018
                  %v1020 = vld [vmem:[%s990 + $0x38] sm:$0xf]
                  %1021 = vst [vmem:[%s991 + $0x38] sm:$0xf] %v1020
                  %v1022 = vld [vmem:[%s990 + $0x3c] sm:$0xf]
                  %1023 = vst [vmem:[%s991 + $0x3c] sm:$0xf] %v1022
                  %v1024 = vld [vmem:[%s990 + $0x80] sm:$0xf]
                  %1025 = vst [vmem:[%s991 + $0x40] sm:$0xf] %v1024
                  %v1026 = vld [vmem:[%s990 + $0x84] sm:$0xf]
                  %1027 = vst [vmem:[%s991 + $0x44] sm:$0xf] %v1026
                  %v1028 = vld [vmem:[%s990 + $0x88] sm:$0xf]
                  %1029 = vst [vmem:[%s991 + $0x48] sm:$0xf] %v1028
                  %v1030 = vld [vmem:[%s990 + $0x8c] sm:$0xf]
                  %1031 = vst [vmem:[%s991 + $0x4c] sm:$0xf] %v1030
                  %v1032 = vld [vmem:[%s990 + $0x90] sm:$0xf]
                  %1033 = vst [vmem:[%s991 + $0x50] sm:$0xf] %v1032
                  %v1034 = vld [vmem:[%s990 + $0x94] sm:$0xf]
                  %1035 = vst [vmem:[%s991 + $0x54] sm:$0xf] %v1034
                  %v1036 = vld [vmem:[%s990 + $0x98] sm:$0xf]
                  %1037 = vst [vmem:[%s991 + $0x58] sm:$0xf] %v1036
                  %v1038 = vld [vmem:[%s990 + $0x9c] sm:$0xf]
                  %1039 = vst [vmem:[%s991 + $0x5c] sm:$0xf] %v1038
                  %v1040 = vld [vmem:[%s990 + $0xa0] sm:$0xf]
                  %1041 = vst [vmem:[%s991 + $0x60] sm:$0xf] %v1040
                  %v1042 = vld [vmem:[%s990 + $0xa4] sm:$0xf]
                  %1043 = vst [vmem:[%s991 + $0x64] sm:$0xf] %v1042
                  %v1044 = vld [vmem:[%s990 + $0xa8] sm:$0xf]
                  %1045 = vst [vmem:[%s991 + $0x68] sm:$0xf] %v1044
                  %v1046 = vld [vmem:[%s990 + $0xac] sm:$0xf]
                  %1047 = vst [vmem:[%s991 + $0x6c] sm:$0xf] %v1046
                  %v1048 = vld [vmem:[%s990 + $0xb0] sm:$0xf]
                  %1049 = vst [vmem:[%s991 + $0x70] sm:$0xf] %v1048
                  %v1050 = vld [vmem:[%s990 + $0xb4] sm:$0xf]
                  %1051 = vst [vmem:[%s991 + $0x74] sm:$0xf] %v1050
                  %v1052 = vld [vmem:[%s990 + $0xb8] sm:$0xf]
                  %1053 = vst [vmem:[%s991 + $0x78] sm:$0xf] %v1052
                  %v1054 = vld [vmem:[%s990 + $0xbc] sm:$0xf]
                  %1055 = vst [vmem:[%s991 + $0x7c] sm:$0xf] %v1054
                  %v1056 = vld [vmem:[%s990 + $0x100] sm:$0xf]
                  %1057 = vst [vmem:[%s991 + $0x80] sm:$0xf] %v1056
                  %v1058 = vld [vmem:[%s990 + $0x104] sm:$0xf]
                  %1059 = vst [vmem:[%s991 + $0x84] sm:$0xf] %v1058
                  %v1060 = vld [vmem:[%s990 + $0x108] sm:$0xf]
                  %1061 = vst [vmem:[%s991 + $0x88] sm:$0xf] %v1060
                  %v1062 = vld [vmem:[%s990 + $0x10c] sm:$0xf]
                  %1063 = vst [vmem:[%s991 + $0x8c] sm:$0xf] %v1062
                  %v1064 = vld [vmem:[%s990 + $0x110] sm:$0xf]
                  %1065 = vst [vmem:[%s991 + $0x90] sm:$0xf] %v1064
                  %v1066 = vld [vmem:[%s990 + $0x114] sm:$0xf]
                  %1067 = vst [vmem:[%s991 + $0x94] sm:$0xf] %v1066
                  %v1068 = vld [vmem:[%s990 + $0x118] sm:$0xf]
                  %1069 = vst [vmem:[%s991 + $0x98] sm:$0xf] %v1068
                  %v1070 = vld [vmem:[%s990 + $0x11c] sm:$0xf]
                  %1071 = vst [vmem:[%s991 + $0x9c] sm:$0xf] %v1070
                  %v1072 = vld [vmem:[%s990 + $0x120] sm:$0xf]
                  %1073 = vst [vmem:[%s991 + $0xa0] sm:$0xf] %v1072
                  %v1074 = vld [vmem:[%s990 + $0x124] sm:$0xf]
                  %1075 = vst [vmem:[%s991 + $0xa4] sm:$0xf] %v1074
                  %v1076 = vld [vmem:[%s990 + $0x128] sm:$0xf]
                  %1077 = vst [vmem:[%s991 + $0xa8] sm:$0xf] %v1076
                  %v1078 = vld [vmem:[%s990 + $0x12c] sm:$0xf]
                  %1079 = vst [vmem:[%s991 + $0xac] sm:$0xf] %v1078
                  %v1080 = vld [vmem:[%s990 + $0x130] sm:$0xf]
                  %1081 = vst [vmem:[%s991 + $0xb0] sm:$0xf] %v1080
                  %v1082 = vld [vmem:[%s990 + $0x134] sm:$0xf]
                  %1083 = vst [vmem:[%s991 + $0xb4] sm:$0xf] %v1082
                  %v1084 = vld [vmem:[%s990 + $0x138] sm:$0xf]
                  %1085 = vst [vmem:[%s991 + $0xb8] sm:$0xf] %v1084
                  %v1086 = vld [vmem:[%s990 + $0x13c] sm:$0xf]
                  %1087 = vst [vmem:[%s991 + $0xbc] sm:$0xf] %v1086
                  %v1088 = vld [vmem:[%s990 + $0x180] sm:$0xf]
                  %1089 = vst [vmem:[%s991 + $0xc0] sm:$0xf] %v1088
                  %v1090 = vld [vmem:[%s990 + $0x184] sm:$0xf]
                  %1091 = vst [vmem:[%s991 + $0xc4] sm:$0xf] %v1090
                  %v1092 = vld [vmem:[%s990 + $0x188] sm:$0xf]
                  %1093 = vst [vmem:[%s991 + $0xc8] sm:$0xf] %v1092
                  %v1094 = vld [vmem:[%s990 + $0x18c] sm:$0xf]
                  %1095 = vst [vmem:[%s991 + $0xcc] sm:$0xf] %v1094
                  %v1096 = vld [vmem:[%s990 + $0x190] sm:$0xf]
                  %1097 = vst [vmem:[%s991 + $0xd0] sm:$0xf] %v1096
                  %v1098 = vld [vmem:[%s990 + $0x194] sm:$0xf]
                  %1099 = vst [vmem:[%s991 + $0xd4] sm:$0xf] %v1098
                  %v1100 = vld [vmem:[%s990 + $0x198] sm:$0xf]
                  %1101 = vst [vmem:[%s991 + $0xd8] sm:$0xf] %v1100
                  %v1102 = vld [vmem:[%s990 + $0x19c] sm:$0xf]
                  %1103 = vst [vmem:[%s991 + $0xdc] sm:$0xf] %v1102
                  %v1104 = vld [vmem:[%s990 + $0x1a0] sm:$0xf]
                  %1105 = vst [vmem:[%s991 + $0xe0] sm:$0xf] %v1104
                  %v1106 = vld [vmem:[%s990 + $0x1a4] sm:$0xf]
                  %1107 = vst [vmem:[%s991 + $0xe4] sm:$0xf] %v1106
                  %v1108 = vld [vmem:[%s990 + $0x1a8] sm:$0xf]
                  %1109 = vst [vmem:[%s991 + $0xe8] sm:$0xf] %v1108
                  %v1110 = vld [vmem:[%s990 + $0x1ac] sm:$0xf]
                  %1111 = vst [vmem:[%s991 + $0xec] sm:$0xf] %v1110
                  %v1112 = vld [vmem:[%s990 + $0x1b0] sm:$0xf]
                  %1113 = vst [vmem:[%s991 + $0xf0] sm:$0xf] %v1112
                  %v1114 = vld [vmem:[%s990 + $0x1b4] sm:$0xf]
                  %1115 = vst [vmem:[%s991 + $0xf4] sm:$0xf] %v1114
                  %v1116 = vld [vmem:[%s990 + $0x1b8] sm:$0xf]
                  %1117 = vst [vmem:[%s991 + $0xf8] sm:$0xf] %v1116
                  %v1118 = vld [vmem:[%s990 + $0x1bc] sm:$0xf]
                  %1119 = vst [vmem:[%s991 + $0xfc] sm:$0xf] %v1118
                $region145: #{attention_pallas.3} parent=132 // loop_footer
                  %s989 = sadd.s32 1, %s985
                $region146: #{attention_pallas.3} parent=132 // loop_footer_branch
                  %984 = sbr.rel target = $region142
                $region147: #{attention_pallas.3} parent=132 // loop_exit
                  _
              $region133: #{attention_pallas.3} parent=117 // pred_fallthru
                _
            $region118: #{attention_pallas.3} parent=113 // pred_fallthru
              _
            // Predicated region
            $region119: #{attention_pallas.3} parent=113 // pred_check
              _
            $region120: #{attention_pallas.3} parent=113 // pred_check_branch
              %835 = sbr.rel (0) target = $region122
            $region121: #{attention_pallas.3} parent=113 // pred_region
              loop: start=0, step=1, limit=1
              $region123: #{attention_pallas.3} parent=121 // loop_pre_header
                _
              $region124: #{attention_pallas.3} parent=121 // loop_header
                %s838 = sphi 0, %s842
                %p839 = scmp.ge.s32.totalorder %s838, 1
                %s843 = sphi %s829, %s829
                %s844 = sphi %s824, %s824
              $region125: #{attention_pallas.3} parent=121 // loop_header_branch
                %841 = sbr.rel (%p839) target = $region129
              $region126: #{attention_pallas.3} parent=121 // loop_body
                %v845 = vld [vmem:[%s843] sm:$0xf]
                %846 = vst [vmem:[%s844] sm:$0xf] %v845
                %v847 = vld [vmem:[%s843 + $0x4] sm:$0xf]
                %848 = vst [vmem:[%s844 + $0x4] sm:$0xf] %v847
                %v849 = vld [vmem:[%s843 + $0x8] sm:$0xf]
                %850 = vst [vmem:[%s844 + $0x8] sm:$0xf] %v849
                %v851 = vld [vmem:[%s843 + $0xc] sm:$0xf]
                %852 = vst [vmem:[%s844 + $0xc] sm:$0xf] %v851
                %v853 = vld [vmem:[%s843 + $0x10] sm:$0xf]
                %854 = vst [vmem:[%s844 + $0x10] sm:$0xf] %v853
                %v855 = vld [vmem:[%s843 + $0x14] sm:$0xf]
                %856 = vst [vmem:[%s844 + $0x14] sm:$0xf] %v855
                %v857 = vld [vmem:[%s843 + $0x18] sm:$0xf]
                %858 = vst [vmem:[%s844 + $0x18] sm:$0xf] %v857
                %v859 = vld [vmem:[%s843 + $0x1c] sm:$0xf]
                %860 = vst [vmem:[%s844 + $0x1c] sm:$0xf] %v859
                %v861 = vld [vmem:[%s843 + $0x20] sm:$0xf]
                %862 = vst [vmem:[%s844 + $0x20] sm:$0xf] %v861
                %v863 = vld [vmem:[%s843 + $0x24] sm:$0xf]
                %864 = vst [vmem:[%s844 + $0x24] sm:$0xf] %v863
                %v865 = vld [vmem:[%s843 + $0x28] sm:$0xf]
                %866 = vst [vmem:[%s844 + $0x28] sm:$0xf] %v865
                %v867 = vld [vmem:[%s843 + $0x2c] sm:$0xf]
                %868 = vst [vmem:[%s844 + $0x2c] sm:$0xf] %v867
                %v869 = vld [vmem:[%s843 + $0x30] sm:$0xf]
                %870 = vst [vmem:[%s844 + $0x30] sm:$0xf] %v869
                %v871 = vld [vmem:[%s843 + $0x34] sm:$0xf]
                %872 = vst [vmem:[%s844 + $0x34] sm:$0xf] %v871
                %v873 = vld [vmem:[%s843 + $0x38] sm:$0xf]
                %874 = vst [vmem:[%s844 + $0x38] sm:$0xf] %v873
                %v875 = vld [vmem:[%s843 + $0x3c] sm:$0xf]
                %876 = vst [vmem:[%s844 + $0x3c] sm:$0xf] %v875
                %v877 = vld [vmem:[%s843 + $0x80] sm:$0xf]
                %878 = vst [vmem:[%s844 + $0x40] sm:$0xf] %v877
                %v879 = vld [vmem:[%s843 + $0x84] sm:$0xf]
                %880 = vst [vmem:[%s844 + $0x44] sm:$0xf] %v879
                %v881 = vld [vmem:[%s843 + $0x88] sm:$0xf]
                %882 = vst [vmem:[%s844 + $0x48] sm:$0xf] %v881
                %v883 = vld [vmem:[%s843 + $0x8c] sm:$0xf]
                %884 = vst [vmem:[%s844 + $0x4c] sm:$0xf] %v883
                %v885 = vld [vmem:[%s843 + $0x90] sm:$0xf]
                %886 = vst [vmem:[%s844 + $0x50] sm:$0xf] %v885
                %v887 = vld [vmem:[%s843 + $0x94] sm:$0xf]
                %888 = vst [vmem:[%s844 + $0x54] sm:$0xf] %v887
                %v889 = vld [vmem:[%s843 + $0x98] sm:$0xf]
                %890 = vst [vmem:[%s844 + $0x58] sm:$0xf] %v889
                %v891 = vld [vmem:[%s843 + $0x9c] sm:$0xf]
                %892 = vst [vmem:[%s844 + $0x5c] sm:$0xf] %v891
                %v893 = vld [vmem:[%s843 + $0xa0] sm:$0xf]
                %894 = vst [vmem:[%s844 + $0x60] sm:$0xf] %v893
                %v895 = vld [vmem:[%s843 + $0xa4] sm:$0xf]
                %896 = vst [vmem:[%s844 + $0x64] sm:$0xf] %v895
                %v897 = vld [vmem:[%s843 + $0xa8] sm:$0xf]
                %898 = vst [vmem:[%s844 + $0x68] sm:$0xf] %v897
                %v899 = vld [vmem:[%s843 + $0xac] sm:$0xf]
                %900 = vst [vmem:[%s844 + $0x6c] sm:$0xf] %v899
                %v901 = vld [vmem:[%s843 + $0xb0] sm:$0xf]
                %902 = vst [vmem:[%s844 + $0x70] sm:$0xf] %v901
                %v903 = vld [vmem:[%s843 + $0xb4] sm:$0xf]
                %904 = vst [vmem:[%s844 + $0x74] sm:$0xf] %v903
                %v905 = vld [vmem:[%s843 + $0xb8] sm:$0xf]
                %906 = vst [vmem:[%s844 + $0x78] sm:$0xf] %v905
                %v907 = vld [vmem:[%s843 + $0xbc] sm:$0xf]
                %908 = vst [vmem:[%s844 + $0x7c] sm:$0xf] %v907
                %v909 = vld [vmem:[%s843 + $0x100] sm:$0xf]
                %910 = vst [vmem:[%s844 + $0x80] sm:$0xf] %v909
                %v911 = vld [vmem:[%s843 + $0x104] sm:$0xf]
                %912 = vst [vmem:[%s844 + $0x84] sm:$0xf] %v911
                %v913 = vld [vmem:[%s843 + $0x108] sm:$0xf]
                %914 = vst [vmem:[%s844 + $0x88] sm:$0xf] %v913
                %v915 = vld [vmem:[%s843 + $0x10c] sm:$0xf]
                %916 = vst [vmem:[%s844 + $0x8c] sm:$0xf] %v915
                %v917 = vld [vmem:[%s843 + $0x110] sm:$0xf]
                %918 = vst [vmem:[%s844 + $0x90] sm:$0xf] %v917
                %v919 = vld [vmem:[%s843 + $0x114] sm:$0xf]
                %920 = vst [vmem:[%s844 + $0x94] sm:$0xf] %v919
                %v921 = vld [vmem:[%s843 + $0x118] sm:$0xf]
                %922 = vst [vmem:[%s844 + $0x98] sm:$0xf] %v921
                %v923 = vld [vmem:[%s843 + $0x11c] sm:$0xf]
                %924 = vst [vmem:[%s844 + $0x9c] sm:$0xf] %v923
                %v925 = vld [vmem:[%s843 + $0x120] sm:$0xf]
                %926 = vst [vmem:[%s844 + $0xa0] sm:$0xf] %v925
                %v927 = vld [vmem:[%s843 + $0x124] sm:$0xf]
                %928 = vst [vmem:[%s844 + $0xa4] sm:$0xf] %v927
                %v929 = vld [vmem:[%s843 + $0x128] sm:$0xf]
                %930 = vst [vmem:[%s844 + $0xa8] sm:$0xf] %v929
                %v931 = vld [vmem:[%s843 + $0x12c] sm:$0xf]
                %932 = vst [vmem:[%s844 + $0xac] sm:$0xf] %v931
                %v933 = vld [vmem:[%s843 + $0x130] sm:$0xf]
                %934 = vst [vmem:[%s844 + $0xb0] sm:$0xf] %v933
                %v935 = vld [vmem:[%s843 + $0x134] sm:$0xf]
                %936 = vst [vmem:[%s844 + $0xb4] sm:$0xf] %v935
                %v937 = vld [vmem:[%s843 + $0x138] sm:$0xf]
                %938 = vst [vmem:[%s844 + $0xb8] sm:$0xf] %v937
                %v939 = vld [vmem:[%s843 + $0x13c] sm:$0xf]
                %940 = vst [vmem:[%s844 + $0xbc] sm:$0xf] %v939
                %v941 = vld [vmem:[%s843 + $0x180] sm:$0xf]
                %942 = vst [vmem:[%s844 + $0xc0] sm:$0xf] %v941
                %v943 = vld [vmem:[%s843 + $0x184] sm:$0xf]
                %944 = vst [vmem:[%s844 + $0xc4] sm:$0xf] %v943
                %v945 = vld [vmem:[%s843 + $0x188] sm:$0xf]
                %946 = vst [vmem:[%s844 + $0xc8] sm:$0xf] %v945
                %v947 = vld [vmem:[%s843 + $0x18c] sm:$0xf]
                %948 = vst [vmem:[%s844 + $0xcc] sm:$0xf] %v947
                %v949 = vld [vmem:[%s843 + $0x190] sm:$0xf]
                %950 = vst [vmem:[%s844 + $0xd0] sm:$0xf] %v949
                %v951 = vld [vmem:[%s843 + $0x194] sm:$0xf]
                %952 = vst [vmem:[%s844 + $0xd4] sm:$0xf] %v951
                %v953 = vld [vmem:[%s843 + $0x198] sm:$0xf]
                %954 = vst [vmem:[%s844 + $0xd8] sm:$0xf] %v953
                %v955 = vld [vmem:[%s843 + $0x19c] sm:$0xf]
                %956 = vst [vmem:[%s844 + $0xdc] sm:$0xf] %v955
                %v957 = vld [vmem:[%s843 + $0x1a0] sm:$0xf]
                %958 = vst [vmem:[%s844 + $0xe0] sm:$0xf] %v957
                %v959 = vld [vmem:[%s843 + $0x1a4] sm:$0xf]
                %960 = vst [vmem:[%s844 + $0xe4] sm:$0xf] %v959
                %v961 = vld [vmem:[%s843 + $0x1a8] sm:$0xf]
                %962 = vst [vmem:[%s844 + $0xe8] sm:$0xf] %v961
                %v963 = vld [vmem:[%s843 + $0x1ac] sm:$0xf]
                %964 = vst [vmem:[%s844 + $0xec] sm:$0xf] %v963
                %v965 = vld [vmem:[%s843 + $0x1b0] sm:$0xf]
                %966 = vst [vmem:[%s844 + $0xf0] sm:$0xf] %v965
                %v967 = vld [vmem:[%s843 + $0x1b4] sm:$0xf]
                %968 = vst [vmem:[%s844 + $0xf4] sm:$0xf] %v967
                %v969 = vld [vmem:[%s843 + $0x1b8] sm:$0xf]
                %970 = vst [vmem:[%s844 + $0xf8] sm:$0xf] %v969
                %v971 = vld [vmem:[%s843 + $0x1bc] sm:$0xf]
                %972 = vst [vmem:[%s844 + $0xfc] sm:$0xf] %v971
              $region127: #{attention_pallas.3} parent=121 // loop_footer
                %s842 = sadd.s32 1, %s838
              $region128: #{attention_pallas.3} parent=121 // loop_footer_branch
                %837 = sbr.rel target = $region124
              $region129: #{attention_pallas.3} parent=121 // loop_exit
                _
            $region122: #{attention_pallas.3} parent=113 // pred_fallthru
              _
          $region114: #{attention_pallas.3} parent=109 // pred_fallthru
            _
          %1120 = vnop
        $region110: #{attention_pallas.3} parent=23 // pred_fallthru
          _
      $region24: #{attention_pallas.3} parent=5 // pred_fallthru
        _
      %p1121 = scmp.le.s32.totalorder 1, %s14
      %p1122 = scmp.lt.s32.totalorder %s14, 9
      %p1123 = pnand %p1121, %p1122
      %p1124 = pneg %p1123
      // Predicated region
      $region148: #{attention_pallas.3} parent=5 // pred_check
        _
      $region149: #{attention_pallas.3} parent=5 // pred_check_branch
        %1126 = sbr.rel (%p1123) target = $region151
      $region150: #{attention_pallas.3} parent=5 // pred_region
        %s1127 = ssub.s32 %s14, 1
        %s1128 = sand.u32 %s48, 1
        %s1129 = sand.u32 %s48, 1
        %s1130 = smul.addr %s1129, 256
        %s1131 = scalar_lea.vmem [#allocation5], %s1130
        // Predicated region
        $region152: #{attention_pallas.3} parent=150 // pred_check
          %p1132 = pneg %p61
        $region153: #{attention_pallas.3} parent=150 // pred_check_branch
          %1134 = sbr.rel (%p1132) target = $region155
        $region154: #{attention_pallas.3} parent=150 // pred_region
          _
        $region155: #{attention_pallas.3} parent=150 // pred_fallthru
          _
        %s1135 = sand.u32 %s76, 1
        %s1136 = sand.u32 %s76, 1
        %s1137 = smul.addr %s1136, 256
        %s1138 = scalar_lea.vmem [#allocation6], %s1137
        // Predicated region
        $region156: #{attention_pallas.3} parent=150 // pred_check
          %p1139 = pneg %p89
        $region157: #{attention_pallas.3} parent=150 // pred_check_branch
          %1141 = sbr.rel (%p1139) target = $region159
        $region158: #{attention_pallas.3} parent=150 // pred_region
          _
        $region159: #{attention_pallas.3} parent=150 // pred_fallthru
          _
        %s1142 = sand.u32 %s104, 1
        %s1143 = sand.u32 %s104, 1
        %s1144 = smul.addr %s1143, 256
        %s1145 = scalar_lea.vmem [#allocation7], %s1144
        // Predicated region
        $region160: #{attention_pallas.3} parent=150 // pred_check
          %p1146 = pneg %p117
        $region161: #{attention_pallas.3} parent=150 // pred_check_branch
          %1148 = sbr.rel (%p1146) target = $region163
        $region162: #{attention_pallas.3} parent=150 // pred_region
          _
        $region163: #{attention_pallas.3} parent=150 // pred_fallthru
          _
        %s1149 = sand.u32 %s48, 1
        %s1150 = sand.u32 %s48, 1
        %s1151 = smul.addr %s1150, 256
        %s1152 = scalar_lea.vmem [#allocation5], %s1151
        %p1153 = pneg %p61
        %p1154 = pneg %p58
        %s1155 = sand.u32 %s76, 1
        %s1156 = sand.u32 %s76, 1
        %s1157 = smul.addr %s1156, 256
        %s1158 = scalar_lea.vmem [#allocation6], %s1157
        %p1159 = pneg %p89
        %p1160 = pneg %p86
        %s1161 = sand.u32 %s104, 1
        %s1162 = sand.u32 %s104, 1
        %s1163 = smul.addr %s1162, 256
        %s1164 = scalar_lea.vmem [#allocation7], %s1163
        %p1165 = pneg %p117
        %p1166 = pneg %p114
        %p1167 = pneg %p138
        %p1168 = pneg %p135
        %p1169 = pneg %p159
        %p1170 = pneg %p156
        %p1171 = pneg %p187
        %p1172 = pneg %p184
        %s1173 = sand.u32 %s174, 1
        %s1174 = scalar_lea.sflag [#allocation9], %s1173
        %s1175 = sand.u32 %s174, 1
        %s1176 = smul.addr %s1175, 256
        %s1177 = scalar_lea.vmem [#allocation8], %s1176
        %s1178 = smul.u32 16, %s25
        %s1179 = smul.u32 16, %s26
        %s1180 = smul.u32 16, %s26
        %s1181 = smul.u32 16, %s25
        %p1183 = scmp.eq.s32.totalorder %s26, 0
        // Predicated region
        $region164: #{attention_pallas.3} parent=150 // pred_check
          %p1184 = pneg %p1183
        $region165: #{attention_pallas.3} parent=150 // pred_check_branch
          %1186 = sbr.rel (%p1184) target = $region167
        $region166: #{attention_pallas.3} parent=150 // pred_region
          %vm1187 = vcmask 7168
          %1188 = vst.msk [vmem:[#allocation2] sm:$0xff] %vm1187, -1e+30
          %1189 = vst.msk [vmem:[#allocation2 + $0x8] sm:$0xff] %vm1187, -1e+30
          %1190 = vst.msk [vmem:[#allocation2 + $0x10] sm:$0xff] %vm1187, -1e+30
          %1191 = vst.msk [vmem:[#allocation2 + $0x18] sm:$0xff] %vm1187, -1e+30
          %1192 = vst.msk [vmem:[#allocation2 + $0x20] sm:$0xff] %vm1187, -1e+30
          %1193 = vst.msk [vmem:[#allocation2 + $0x28] sm:$0xff] %vm1187, -1e+30
          %1194 = vst.msk [vmem:[#allocation2 + $0x30] sm:$0xff] %vm1187, -1e+30
          %1195 = vst.msk [vmem:[#allocation2 + $0x38] sm:$0xff] %vm1187, -1e+30
          %1196 = vst.msk [vmem:[#allocation2 + $0x40] sm:$0xff] %vm1187, -1e+30
          %1197 = vst.msk [vmem:[#allocation2 + $0x48] sm:$0xff] %vm1187, -1e+30
          %1198 = vst.msk [vmem:[#allocation2 + $0x50] sm:$0xff] %vm1187, -1e+30
          %1199 = vst.msk [vmem:[#allocation2 + $0x58] sm:$0xff] %vm1187, -1e+30
          %1200 = vst.msk [vmem:[#allocation2 + $0x60] sm:$0xff] %vm1187, -1e+30
          %1201 = vst.msk [vmem:[#allocation2 + $0x68] sm:$0xff] %vm1187, -1e+30
          %1202 = vst.msk [vmem:[#allocation2 + $0x70] sm:$0xff] %vm1187, -1e+30
          %1203 = vst.msk [vmem:[#allocation2 + $0x78] sm:$0xff] %vm1187, -1e+30
          %1204 = vst.msk [vmem:[#allocation2 + $0x80] sm:$0xff] %vm1187, -1e+30
          %1205 = vst.msk [vmem:[#allocation2 + $0x88] sm:$0xff] %vm1187, -1e+30
          %1206 = vst.msk [vmem:[#allocation2 + $0x90] sm:$0xff] %vm1187, -1e+30
          %1207 = vst.msk [vmem:[#allocation2 + $0x98] sm:$0xff] %vm1187, -1e+30
          %1208 = vst.msk [vmem:[#allocation2 + $0xa0] sm:$0xff] %vm1187, -1e+30
          %1209 = vst.msk [vmem:[#allocation2 + $0xa8] sm:$0xff] %vm1187, -1e+30
          %1210 = vst.msk [vmem:[#allocation2 + $0xb0] sm:$0xff] %vm1187, -1e+30
          %1211 = vst.msk [vmem:[#allocation2 + $0xb8] sm:$0xff] %vm1187, -1e+30
          %1212 = vst.msk [vmem:[#allocation2 + $0xc0] sm:$0xff] %vm1187, -1e+30
          %1213 = vst.msk [vmem:[#allocation2 + $0xc8] sm:$0xff] %vm1187, -1e+30
          %1214 = vst.msk [vmem:[#allocation2 + $0xd0] sm:$0xff] %vm1187, -1e+30
          %1215 = vst.msk [vmem:[#allocation2 + $0xd8] sm:$0xff] %vm1187, -1e+30
          %1216 = vst.msk [vmem:[#allocation2 + $0xe0] sm:$0xff] %vm1187, -1e+30
          %1217 = vst.msk [vmem:[#allocation2 + $0xe8] sm:$0xff] %vm1187, -1e+30
          %1218 = vst.msk [vmem:[#allocation2 + $0xf0] sm:$0xff] %vm1187, -1e+30
          %1219 = vst.msk [vmem:[#allocation2 + $0xf8] sm:$0xff] %vm1187, -1e+30
          %1220 = vst.msk [vmem:[#allocation2 + $0x100] sm:$0xff] %vm1187, -1e+30
          %1221 = vst.msk [vmem:[#allocation2 + $0x108] sm:$0xff] %vm1187, -1e+30
          %1222 = vst.msk [vmem:[#allocation2 + $0x110] sm:$0xff] %vm1187, -1e+30
          %1223 = vst.msk [vmem:[#allocation2 + $0x118] sm:$0xff] %vm1187, -1e+30
          %1224 = vst.msk [vmem:[#allocation2 + $0x120] sm:$0xff] %vm1187, -1e+30
          %1225 = vst.msk [vmem:[#allocation2 + $0x128] sm:$0xff] %vm1187, -1e+30
          %1226 = vst.msk [vmem:[#allocation2 + $0x130] sm:$0xff] %vm1187, -1e+30
          %1227 = vst.msk [vmem:[#allocation2 + $0x138] sm:$0xff] %vm1187, -1e+30
          %1228 = vst.msk [vmem:[#allocation2 + $0x140] sm:$0xff] %vm1187, -1e+30
          %1229 = vst.msk [vmem:[#allocation2 + $0x148] sm:$0xff] %vm1187, -1e+30
          %1230 = vst.msk [vmem:[#allocation2 + $0x150] sm:$0xff] %vm1187, -1e+30
          %1231 = vst.msk [vmem:[#allocation2 + $0x158] sm:$0xff] %vm1187, -1e+30
          %1232 = vst.msk [vmem:[#allocation2 + $0x160] sm:$0xff] %vm1187, -1e+30
          %1233 = vst.msk [vmem:[#allocation2 + $0x168] sm:$0xff] %vm1187, -1e+30
          %1234 = vst.msk [vmem:[#allocation2 + $0x170] sm:$0xff] %vm1187, -1e+30
          %1235 = vst.msk [vmem:[#allocation2 + $0x178] sm:$0xff] %vm1187, -1e+30
          %1236 = vst.msk [vmem:[#allocation2 + $0x180] sm:$0xff] %vm1187, -1e+30
          %1237 = vst.msk [vmem:[#allocation2 + $0x188] sm:$0xff] %vm1187, -1e+30
          %1238 = vst.msk [vmem:[#allocation2 + $0x190] sm:$0xff] %vm1187, -1e+30
          %1239 = vst.msk [vmem:[#allocation2 + $0x198] sm:$0xff] %vm1187, -1e+30
          %1240 = vst.msk [vmem:[#allocation2 + $0x1a0] sm:$0xff] %vm1187, -1e+30
          %1241 = vst.msk [vmem:[#allocation2 + $0x1a8] sm:$0xff] %vm1187, -1e+30
          %1242 = vst.msk [vmem:[#allocation2 + $0x1b0] sm:$0xff] %vm1187, -1e+30
          %1243 = vst.msk [vmem:[#allocation2 + $0x1b8] sm:$0xff] %vm1187, -1e+30
          %1244 = vst.msk [vmem:[#allocation2 + $0x1c0] sm:$0xff] %vm1187, -1e+30
          %1245 = vst.msk [vmem:[#allocation2 + $0x1c8] sm:$0xff] %vm1187, -1e+30
          %1246 = vst.msk [vmem:[#allocation2 + $0x1d0] sm:$0xff] %vm1187, -1e+30
          %1247 = vst.msk [vmem:[#allocation2 + $0x1d8] sm:$0xff] %vm1187, -1e+30
          %1248 = vst.msk [vmem:[#allocation2 + $0x1e0] sm:$0xff] %vm1187, -1e+30
          %1249 = vst.msk [vmem:[#allocation2 + $0x1e8] sm:$0xff] %vm1187, -1e+30
          %1250 = vst.msk [vmem:[#allocation2 + $0x1f0] sm:$0xff] %vm1187, -1e+30
          %1251 = vst.msk [vmem:[#allocation2 + $0x1f8] sm:$0xff] %vm1187, -1e+30
          %1252 = vst.msk [vmem:[#allocation3] sm:$0xff] %vm1187, 0.0
          %1253 = vst.msk [vmem:[#allocation3 + $0x8] sm:$0xff] %vm1187, 0.0
          %1254 = vst.msk [vmem:[#allocation3 + $0x10] sm:$0xff] %vm1187, 0.0
          %1255 = vst.msk [vmem:[#allocation3 + $0x18] sm:$0xff] %vm1187, 0.0
          %1256 = vst.msk [vmem:[#allocation3 + $0x20] sm:$0xff] %vm1187, 0.0
          %1257 = vst.msk [vmem:[#allocation3 + $0x28] sm:$0xff] %vm1187, 0.0
          %1258 = vst.msk [vmem:[#allocation3 + $0x30] sm:$0xff] %vm1187, 0.0
          %1259 = vst.msk [vmem:[#allocation3 + $0x38] sm:$0xff] %vm1187, 0.0
          %1260 = vst.msk [vmem:[#allocation3 + $0x40] sm:$0xff] %vm1187, 0.0
          %1261 = vst.msk [vmem:[#allocation3 + $0x48] sm:$0xff] %vm1187, 0.0
          %1262 = vst.msk [vmem:[#allocation3 + $0x50] sm:$0xff] %vm1187, 0.0
          %1263 = vst.msk [vmem:[#allocation3 + $0x58] sm:$0xff] %vm1187, 0.0
          %1264 = vst.msk [vmem:[#allocation3 + $0x60] sm:$0xff] %vm1187, 0.0
          %1265 = vst.msk [vmem:[#allocation3 + $0x68] sm:$0xff] %vm1187, 0.0
          %1266 = vst.msk [vmem:[#allocation3 + $0x70] sm:$0xff] %vm1187, 0.0
          %1267 = vst.msk [vmem:[#allocation3 + $0x78] sm:$0xff] %vm1187, 0.0
          %1268 = vst.msk [vmem:[#allocation3 + $0x80] sm:$0xff] %vm1187, 0.0
          %1269 = vst.msk [vmem:[#allocation3 + $0x88] sm:$0xff] %vm1187, 0.0
          %1270 = vst.msk [vmem:[#allocation3 + $0x90] sm:$0xff] %vm1187, 0.0
          %1271 = vst.msk [vmem:[#allocation3 + $0x98] sm:$0xff] %vm1187, 0.0
          %1272 = vst.msk [vmem:[#allocation3 + $0xa0] sm:$0xff] %vm1187, 0.0
          %1273 = vst.msk [vmem:[#allocation3 + $0xa8] sm:$0xff] %vm1187, 0.0
          %1274 = vst.msk [vmem:[#allocation3 + $0xb0] sm:$0xff] %vm1187, 0.0
          %1275 = vst.msk [vmem:[#allocation3 + $0xb8] sm:$0xff] %vm1187, 0.0
          %1276 = vst.msk [vmem:[#allocation3 + $0xc0] sm:$0xff] %vm1187, 0.0
          %1277 = vst.msk [vmem:[#allocation3 + $0xc8] sm:$0xff] %vm1187, 0.0
          %1278 = vst.msk [vmem:[#allocation3 + $0xd0] sm:$0xff] %vm1187, 0.0
          %1279 = vst.msk [vmem:[#allocation3 + $0xd8] sm:$0xff] %vm1187, 0.0
          %1280 = vst.msk [vmem:[#allocation3 + $0xe0] sm:$0xff] %vm1187, 0.0
          %1281 = vst.msk [vmem:[#allocation3 + $0xe8] sm:$0xff] %vm1187, 0.0
          %1282 = vst.msk [vmem:[#allocation3 + $0xf0] sm:$0xff] %vm1187, 0.0
          %1283 = vst.msk [vmem:[#allocation3 + $0xf8] sm:$0xff] %vm1187, 0.0
          %1284 = vst.msk [vmem:[#allocation3 + $0x100] sm:$0xff] %vm1187, 0.0
          %1285 = vst.msk [vmem:[#allocation3 + $0x108] sm:$0xff] %vm1187, 0.0
          %1286 = vst.msk [vmem:[#allocation3 + $0x110] sm:$0xff] %vm1187, 0.0
          %1287 = vst.msk [vmem:[#allocation3 + $0x118] sm:$0xff] %vm1187, 0.0
          %1288 = vst.msk [vmem:[#allocation3 + $0x120] sm:$0xff] %vm1187, 0.0
          %1289 = vst.msk [vmem:[#allocation3 + $0x128] sm:$0xff] %vm1187, 0.0
          %1290 = vst.msk [vmem:[#allocation3 + $0x130] sm:$0xff] %vm1187, 0.0
          %1291 = vst.msk [vmem:[#allocation3 + $0x138] sm:$0xff] %vm1187, 0.0
          %1292 = vst.msk [vmem:[#allocation3 + $0x140] sm:$0xff] %vm1187, 0.0
          %1293 = vst.msk [vmem:[#allocation3 + $0x148] sm:$0xff] %vm1187, 0.0
          %1294 = vst.msk [vmem:[#allocation3 + $0x150] sm:$0xff] %vm1187, 0.0
          %1295 = vst.msk [vmem:[#allocation3 + $0x158] sm:$0xff] %vm1187, 0.0
          %1296 = vst.msk [vmem:[#allocation3 + $0x160] sm:$0xff] %vm1187, 0.0
          %1297 = vst.msk [vmem:[#allocation3 + $0x168] sm:$0xff] %vm1187, 0.0
          %1298 = vst.msk [vmem:[#allocation3 + $0x170] sm:$0xff] %vm1187, 0.0
          %1299 = vst.msk [vmem:[#allocation3 + $0x178] sm:$0xff] %vm1187, 0.0
          %1300 = vst.msk [vmem:[#allocation3 + $0x180] sm:$0xff] %vm1187, 0.0
          %1301 = vst.msk [vmem:[#allocation3 + $0x188] sm:$0xff] %vm1187, 0.0
          %1302 = vst.msk [vmem:[#allocation3 + $0x190] sm:$0xff] %vm1187, 0.0
          %1303 = vst.msk [vmem:[#allocation3 + $0x198] sm:$0xff] %vm1187, 0.0
          %1304 = vst.msk [vmem:[#allocation3 + $0x1a0] sm:$0xff] %vm1187, 0.0
          %1305 = vst.msk [vmem:[#allocation3 + $0x1a8] sm:$0xff] %vm1187, 0.0
          %1306 = vst.msk [vmem:[#allocation3 + $0x1b0] sm:$0xff] %vm1187, 0.0
          %1307 = vst.msk [vmem:[#allocation3 + $0x1b8] sm:$0xff] %vm1187, 0.0
          %1308 = vst.msk [vmem:[#allocation3 + $0x1c0] sm:$0xff] %vm1187, 0.0
          %1309 = vst.msk [vmem:[#allocation3 + $0x1c8] sm:$0xff] %vm1187, 0.0
          %1310 = vst.msk [vmem:[#allocation3 + $0x1d0] sm:$0xff] %vm1187, 0.0
          %1311 = vst.msk [vmem:[#allocation3 + $0x1d8] sm:$0xff] %vm1187, 0.0
          %1312 = vst.msk [vmem:[#allocation3 + $0x1e0] sm:$0xff] %vm1187, 0.0
          %1313 = vst.msk [vmem:[#allocation3 + $0x1e8] sm:$0xff] %vm1187, 0.0
          %1314 = vst.msk [vmem:[#allocation3 + $0x1f0] sm:$0xff] %vm1187, 0.0
          %1315 = vst.msk [vmem:[#allocation3 + $0x1f8] sm:$0xff] %vm1187, 0.0
          %vm1316 = vcmask 523264
          %1317 = vst.msk [vmem:[#allocation4] sm:$0xff] %vm1316, 0.0
          %1318 = vst.msk [vmem:[#allocation4 + $0x8] sm:$0xff] %vm1316, 0.0
          %1319 = vst.msk [vmem:[#allocation4 + $0x10] sm:$0xff] %vm1316, 0.0
          %1320 = vst.msk [vmem:[#allocation4 + $0x18] sm:$0xff] %vm1316, 0.0
          %1321 = vst.msk [vmem:[#allocation4 + $0x20] sm:$0xff] %vm1316, 0.0
          %1322 = vst.msk [vmem:[#allocation4 + $0x28] sm:$0xff] %vm1316, 0.0
          %1323 = vst.msk [vmem:[#allocation4 + $0x30] sm:$0xff] %vm1316, 0.0
          %1324 = vst.msk [vmem:[#allocation4 + $0x38] sm:$0xff] %vm1316, 0.0
          %1325 = vst.msk [vmem:[#allocation4 + $0x40] sm:$0xff] %vm1316, 0.0
          %1326 = vst.msk [vmem:[#allocation4 + $0x48] sm:$0xff] %vm1316, 0.0
          %1327 = vst.msk [vmem:[#allocation4 + $0x50] sm:$0xff] %vm1316, 0.0
          %1328 = vst.msk [vmem:[#allocation4 + $0x58] sm:$0xff] %vm1316, 0.0
          %1329 = vst.msk [vmem:[#allocation4 + $0x60] sm:$0xff] %vm1316, 0.0
          %1330 = vst.msk [vmem:[#allocation4 + $0x68] sm:$0xff] %vm1316, 0.0
          %1331 = vst.msk [vmem:[#allocation4 + $0x70] sm:$0xff] %vm1316, 0.0
          %1332 = vst.msk [vmem:[#allocation4 + $0x78] sm:$0xff] %vm1316, 0.0
          %1333 = vst.msk [vmem:[#allocation4 + $0x80] sm:$0xff] %vm1316, 0.0
          %1334 = vst.msk [vmem:[#allocation4 + $0x88] sm:$0xff] %vm1316, 0.0
          %1335 = vst.msk [vmem:[#allocation4 + $0x90] sm:$0xff] %vm1316, 0.0
          %1336 = vst.msk [vmem:[#allocation4 + $0x98] sm:$0xff] %vm1316, 0.0
          %1337 = vst.msk [vmem:[#allocation4 + $0xa0] sm:$0xff] %vm1316, 0.0
          %1338 = vst.msk [vmem:[#allocation4 + $0xa8] sm:$0xff] %vm1316, 0.0
          %1339 = vst.msk [vmem:[#allocation4 + $0xb0] sm:$0xff] %vm1316, 0.0
          %1340 = vst.msk [vmem:[#allocation4 + $0xb8] sm:$0xff] %vm1316, 0.0
          %1341 = vst.msk [vmem:[#allocation4 + $0xc0] sm:$0xff] %vm1316, 0.0
          %1342 = vst.msk [vmem:[#allocation4 + $0xc8] sm:$0xff] %vm1316, 0.0
          %1343 = vst.msk [vmem:[#allocation4 + $0xd0] sm:$0xff] %vm1316, 0.0
          %1344 = vst.msk [vmem:[#allocation4 + $0xd8] sm:$0xff] %vm1316, 0.0
          %1345 = vst.msk [vmem:[#allocation4 + $0xe0] sm:$0xff] %vm1316, 0.0
          %1346 = vst.msk [vmem:[#allocation4 + $0xe8] sm:$0xff] %vm1316, 0.0
          %1347 = vst.msk [vmem:[#allocation4 + $0xf0] sm:$0xff] %vm1316, 0.0
          %1348 = vst.msk [vmem:[#allocation4 + $0xf8] sm:$0xff] %vm1316, 0.0
          %1349 = vst.msk [vmem:[#allocation4 + $0x100] sm:$0xff] %vm1316, 0.0
          %1350 = vst.msk [vmem:[#allocation4 + $0x108] sm:$0xff] %vm1316, 0.0
          %1351 = vst.msk [vmem:[#allocation4 + $0x110] sm:$0xff] %vm1316, 0.0
          %1352 = vst.msk [vmem:[#allocation4 + $0x118] sm:$0xff] %vm1316, 0.0
          %1353 = vst.msk [vmem:[#allocation4 + $0x120] sm:$0xff] %vm1316, 0.0
          %1354 = vst.msk [vmem:[#allocation4 + $0x128] sm:$0xff] %vm1316, 0.0
          %1355 = vst.msk [vmem:[#allocation4 + $0x130] sm:$0xff] %vm1316, 0.0
          %1356 = vst.msk [vmem:[#allocation4 + $0x138] sm:$0xff] %vm1316, 0.0
          %1357 = vst.msk [vmem:[#allocation4 + $0x140] sm:$0xff] %vm1316, 0.0
          %1358 = vst.msk [vmem:[#allocation4 + $0x148] sm:$0xff] %vm1316, 0.0
          %1359 = vst.msk [vmem:[#allocation4 + $0x150] sm:$0xff] %vm1316, 0.0
          %1360 = vst.msk [vmem:[#allocation4 + $0x158] sm:$0xff] %vm1316, 0.0
          %1361 = vst.msk [vmem:[#allocation4 + $0x160] sm:$0xff] %vm1316, 0.0
          %1362 = vst.msk [vmem:[#allocation4 + $0x168] sm:$0xff] %vm1316, 0.0
          %1363 = vst.msk [vmem:[#allocation4 + $0x170] sm:$0xff] %vm1316, 0.0
          %1364 = vst.msk [vmem:[#allocation4 + $0x178] sm:$0xff] %vm1316, 0.0
          %1365 = vst.msk [vmem:[#allocation4 + $0x180] sm:$0xff] %vm1316, 0.0
          %1366 = vst.msk [vmem:[#allocation4 + $0x188] sm:$0xff] %vm1316, 0.0
          %1367 = vst.msk [vmem:[#allocation4 + $0x190] sm:$0xff] %vm1316, 0.0
          %1368 = vst.msk [vmem:[#allocation4 + $0x198] sm:$0xff] %vm1316, 0.0
          %1369 = vst.msk [vmem:[#allocation4 + $0x1a0] sm:$0xff] %vm1316, 0.0
          %1370 = vst.msk [vmem:[#allocation4 + $0x1a8] sm:$0xff] %vm1316, 0.0
          %1371 = vst.msk [vmem:[#allocation4 + $0x1b0] sm:$0xff] %vm1316, 0.0
          %1372 = vst.msk [vmem:[#allocation4 + $0x1b8] sm:$0xff] %vm1316, 0.0
          %1373 = vst.msk [vmem:[#allocation4 + $0x1c0] sm:$0xff] %vm1316, 0.0
          %1374 = vst.msk [vmem:[#allocation4 + $0x1c8] sm:$0xff] %vm1316, 0.0
          %1375 = vst.msk [vmem:[#allocation4 + $0x1d0] sm:$0xff] %vm1316, 0.0
          %1376 = vst.msk [vmem:[#allocation4 + $0x1d8] sm:$0xff] %vm1316, 0.0
          %1377 = vst.msk [vmem:[#allocation4 + $0x1e0] sm:$0xff] %vm1316, 0.0
          %1378 = vst.msk [vmem:[#allocation4 + $0x1e8] sm:$0xff] %vm1316, 0.0
          %1379 = vst.msk [vmem:[#allocation4 + $0x1f0] sm:$0xff] %vm1316, 0.0
          %1380 = vst.msk [vmem:[#allocation4 + $0x1f8] sm:$0xff] %vm1316, 0.0
        $region167: #{attention_pallas.3} parent=150 // pred_fallthru
          _
        %v1381 = vld [vmem:[%s1131] sm:$0xf]
        %v1382 = vld [vmem:[%s1131 + $0x4] sm:$0xf]
        %v1383 = vld [vmem:[%s1131 + $0x8] sm:$0xf]
        %v1384 = vld [vmem:[%s1131 + $0xc] sm:$0xf]
        %v1385 = vld [vmem:[%s1131 + $0x10] sm:$0xf]
        %v1386 = vld [vmem:[%s1131 + $0x14] sm:$0xf]
        %v1387 = vld [vmem:[%s1131 + $0x18] sm:$0xf]
        %v1388 = vld [vmem:[%s1131 + $0x1c] sm:$0xf]
        %v1389 = vld [vmem:[%s1131 + $0x20] sm:$0xf]
        %v1390 = vld [vmem:[%s1131 + $0x24] sm:$0xf]
        %v1391 = vld [vmem:[%s1131 + $0x28] sm:$0xf]
        %v1392 = vld [vmem:[%s1131 + $0x2c] sm:$0xf]
        %v1393 = vld [vmem:[%s1131 + $0x30] sm:$0xf]
        %v1394 = vld [vmem:[%s1131 + $0x34] sm:$0xf]
        %v1395 = vld [vmem:[%s1131 + $0x38] sm:$0xf]
        %v1396 = vld [vmem:[%s1131 + $0x3c] sm:$0xf]
        %v1397 = vld [vmem:[%s1131 + $0x40] sm:$0xf]
        %v1398 = vld [vmem:[%s1131 + $0x44] sm:$0xf]
        %v1399 = vld [vmem:[%s1131 + $0x48] sm:$0xf]
        %v1400 = vld [vmem:[%s1131 + $0x4c] sm:$0xf]
        %v1401 = vld [vmem:[%s1131 + $0x50] sm:$0xf]
        %v1402 = vld [vmem:[%s1131 + $0x54] sm:$0xf]
        %v1403 = vld [vmem:[%s1131 + $0x58] sm:$0xf]
        %v1404 = vld [vmem:[%s1131 + $0x5c] sm:$0xf]
        %v1405 = vld [vmem:[%s1131 + $0x60] sm:$0xf]
        %v1406 = vld [vmem:[%s1131 + $0x64] sm:$0xf]
        %v1407 = vld [vmem:[%s1131 + $0x68] sm:$0xf]
        %v1408 = vld [vmem:[%s1131 + $0x6c] sm:$0xf]
        %v1409 = vld [vmem:[%s1131 + $0x70] sm:$0xf]
        %v1410 = vld [vmem:[%s1131 + $0x74] sm:$0xf]
        %v1411 = vld [vmem:[%s1131 + $0x78] sm:$0xf]
        %v1412 = vld [vmem:[%s1131 + $0x7c] sm:$0xf]
        %v1413 = vld [vmem:[%s1131 + $0x80] sm:$0xf]
        %v1414 = vld [vmem:[%s1131 + $0x84] sm:$0xf]
        %v1415 = vld [vmem:[%s1131 + $0x88] sm:$0xf]
        %v1416 = vld [vmem:[%s1131 + $0x8c] sm:$0xf]
        %v1417 = vld [vmem:[%s1131 + $0x90] sm:$0xf]
        %v1418 = vld [vmem:[%s1131 + $0x94] sm:$0xf]
        %v1419 = vld [vmem:[%s1131 + $0x98] sm:$0xf]
        %v1420 = vld [vmem:[%s1131 + $0x9c] sm:$0xf]
        %v1421 = vld [vmem:[%s1131 + $0xa0] sm:$0xf]
        %v1422 = vld [vmem:[%s1131 + $0xa4] sm:$0xf]
        %v1423 = vld [vmem:[%s1131 + $0xa8] sm:$0xf]
        %v1424 = vld [vmem:[%s1131 + $0xac] sm:$0xf]
        %v1425 = vld [vmem:[%s1131 + $0xb0] sm:$0xf]
        %v1426 = vld [vmem:[%s1131 + $0xb4] sm:$0xf]
        %v1427 = vld [vmem:[%s1131 + $0xb8] sm:$0xf]
        %v1428 = vld [vmem:[%s1131 + $0xbc] sm:$0xf]
        %v1429 = vld [vmem:[%s1131 + $0xc0] sm:$0xf]
        %v1430 = vld [vmem:[%s1131 + $0xc4] sm:$0xf]
        %v1431 = vld [vmem:[%s1131 + $0xc8] sm:$0xf]
        %v1432 = vld [vmem:[%s1131 + $0xcc] sm:$0xf]
        %v1433 = vld [vmem:[%s1131 + $0xd0] sm:$0xf]
        %v1434 = vld [vmem:[%s1131 + $0xd4] sm:$0xf]
        %v1435 = vld [vmem:[%s1131 + $0xd8] sm:$0xf]
        %v1436 = vld [vmem:[%s1131 + $0xdc] sm:$0xf]
        %v1437 = vld [vmem:[%s1131 + $0xe0] sm:$0xf]
        %v1438 = vld [vmem:[%s1131 + $0xe4] sm:$0xf]
        %v1439 = vld [vmem:[%s1131 + $0xe8] sm:$0xf]
        %v1440 = vld [vmem:[%s1131 + $0xec] sm:$0xf]
        %v1441 = vld [vmem:[%s1131 + $0xf0] sm:$0xf]
        %v1442 = vld [vmem:[%s1131 + $0xf4] sm:$0xf]
        %v1443 = vld [vmem:[%s1131 + $0xf8] sm:$0xf]
        %v1444 = vld [vmem:[%s1131 + $0xfc] sm:$0xf]
        %v1445 = vld [vmem:[%s1138] sm:$0xf]
        %v1446 = vld [vmem:[%s1138 + $0x4] sm:$0xf]
        %v1447 = vld [vmem:[%s1138 + $0x8] sm:$0xf]
        %v1448 = vld [vmem:[%s1138 + $0xc] sm:$0xf]
        %v1449 = vld [vmem:[%s1138 + $0x10] sm:$0xf]
        %v1450 = vld [vmem:[%s1138 + $0x14] sm:$0xf]
        %v1451 = vld [vmem:[%s1138 + $0x18] sm:$0xf]
        %v1452 = vld [vmem:[%s1138 + $0x1c] sm:$0xf]
        %v1453 = vld [vmem:[%s1138 + $0x20] sm:$0xf]
        %v1454 = vld [vmem:[%s1138 + $0x24] sm:$0xf]
        %v1455 = vld [vmem:[%s1138 + $0x28] sm:$0xf]
        %v1456 = vld [vmem:[%s1138 + $0x2c] sm:$0xf]
        %v1457 = vld [vmem:[%s1138 + $0x30] sm:$0xf]
        %v1458 = vld [vmem:[%s1138 + $0x34] sm:$0xf]
        %v1459 = vld [vmem:[%s1138 + $0x38] sm:$0xf]
        %v1460 = vld [vmem:[%s1138 + $0x3c] sm:$0xf]
        %v1461 = vld [vmem:[%s1138 + $0x40] sm:$0xf]
        %v1462 = vld [vmem:[%s1138 + $0x44] sm:$0xf]
        %v1463 = vld [vmem:[%s1138 + $0x48] sm:$0xf]
        %v1464 = vld [vmem:[%s1138 + $0x4c] sm:$0xf]
        %v1465 = vld [vmem:[%s1138 + $0x50] sm:$0xf]
        %v1466 = vld [vmem:[%s1138 + $0x54] sm:$0xf]
        %v1467 = vld [vmem:[%s1138 + $0x58] sm:$0xf]
        %v1468 = vld [vmem:[%s1138 + $0x5c] sm:$0xf]
        %v1469 = vld [vmem:[%s1138 + $0x60] sm:$0xf]
        %v1470 = vld [vmem:[%s1138 + $0x64] sm:$0xf]
        %v1471 = vld [vmem:[%s1138 + $0x68] sm:$0xf]
        %v1472 = vld [vmem:[%s1138 + $0x6c] sm:$0xf]
        %v1473 = vld [vmem:[%s1138 + $0x70] sm:$0xf]
        %v1474 = vld [vmem:[%s1138 + $0x74] sm:$0xf]
        %v1475 = vld [vmem:[%s1138 + $0x78] sm:$0xf]
        %v1476 = vld [vmem:[%s1138 + $0x7c] sm:$0xf]
        %v1477 = vld [vmem:[%s1138 + $0x80] sm:$0xf]
        %v1478 = vld [vmem:[%s1138 + $0x84] sm:$0xf]
        %v1479 = vld [vmem:[%s1138 + $0x88] sm:$0xf]
        %v1480 = vld [vmem:[%s1138 + $0x8c] sm:$0xf]
        %v1481 = vld [vmem:[%s1138 + $0x90] sm:$0xf]
        %v1482 = vld [vmem:[%s1138 + $0x94] sm:$0xf]
        %v1483 = vld [vmem:[%s1138 + $0x98] sm:$0xf]
        %v1484 = vld [vmem:[%s1138 + $0x9c] sm:$0xf]
        %v1485 = vld [vmem:[%s1138 + $0xa0] sm:$0xf]
        %v1486 = vld [vmem:[%s1138 + $0xa4] sm:$0xf]
        %v1487 = vld [vmem:[%s1138 + $0xa8] sm:$0xf]
        %v1488 = vld [vmem:[%s1138 + $0xac] sm:$0xf]
        %v1489 = vld [vmem:[%s1138 + $0xb0] sm:$0xf]
        %v1490 = vld [vmem:[%s1138 + $0xb4] sm:$0xf]
        %v1491 = vld [vmem:[%s1138 + $0xb8] sm:$0xf]
        %v1492 = vld [vmem:[%s1138 + $0xbc] sm:$0xf]
        %v1493 = vld [vmem:[%s1138 + $0xc0] sm:$0xf]
        %v1494 = vld [vmem:[%s1138 + $0xc4] sm:$0xf]
        %v1495 = vld [vmem:[%s1138 + $0xc8] sm:$0xf]
        %v1496 = vld [vmem:[%s1138 + $0xcc] sm:$0xf]
        %v1497 = vld [vmem:[%s1138 + $0xd0] sm:$0xf]
        %v1498 = vld [vmem:[%s1138 + $0xd4] sm:$0xf]
        %v1499 = vld [vmem:[%s1138 + $0xd8] sm:$0xf]
        %v1500 = vld [vmem:[%s1138 + $0xdc] sm:$0xf]
        %v1501 = vld [vmem:[%s1138 + $0xe0] sm:$0xf]
        %v1502 = vld [vmem:[%s1138 + $0xe4] sm:$0xf]
        %v1503 = vld [vmem:[%s1138 + $0xe8] sm:$0xf]
        %v1504 = vld [vmem:[%s1138 + $0xec] sm:$0xf]
        %v1505 = vld [vmem:[%s1138 + $0xf0] sm:$0xf]
        %v1506 = vld [vmem:[%s1138 + $0xf4] sm:$0xf]
        %v1507 = vld [vmem:[%s1138 + $0xf8] sm:$0xf]
        %v1508 = vld [vmem:[%s1138 + $0xfc] sm:$0xf]
        %v1509 = vld [vmem:[%s1145] sm:$0xf]
        %v1510 = vld [vmem:[%s1145 + $0x4] sm:$0xf]
        %v1511 = vld [vmem:[%s1145 + $0x8] sm:$0xf]
        %v1512 = vld [vmem:[%s1145 + $0xc] sm:$0xf]
        %v1513 = vld [vmem:[%s1145 + $0x10] sm:$0xf]
        %v1514 = vld [vmem:[%s1145 + $0x14] sm:$0xf]
        %v1515 = vld [vmem:[%s1145 + $0x18] sm:$0xf]
        %v1516 = vld [vmem:[%s1145 + $0x1c] sm:$0xf]
        %v1517 = vld [vmem:[%s1145 + $0x20] sm:$0xf]
        %v1518 = vld [vmem:[%s1145 + $0x24] sm:$0xf]
        %v1519 = vld [vmem:[%s1145 + $0x28] sm:$0xf]
        %v1520 = vld [vmem:[%s1145 + $0x2c] sm:$0xf]
        %v1521 = vld [vmem:[%s1145 + $0x30] sm:$0xf]
        %v1522 = vld [vmem:[%s1145 + $0x34] sm:$0xf]
        %v1523 = vld [vmem:[%s1145 + $0x38] sm:$0xf]
        %v1524 = vld [vmem:[%s1145 + $0x3c] sm:$0xf]
        %v1525 = vld [vmem:[%s1145 + $0x40] sm:$0xf]
        %v1526 = vld [vmem:[%s1145 + $0x44] sm:$0xf]
        %v1527 = vld [vmem:[%s1145 + $0x48] sm:$0xf]
        %v1528 = vld [vmem:[%s1145 + $0x4c] sm:$0xf]
        %v1529 = vld [vmem:[%s1145 + $0x50] sm:$0xf]
        %v1530 = vld [vmem:[%s1145 + $0x54] sm:$0xf]
        %v1531 = vld [vmem:[%s1145 + $0x58] sm:$0xf]
        %v1532 = vld [vmem:[%s1145 + $0x5c] sm:$0xf]
        %v1533 = vld [vmem:[%s1145 + $0x60] sm:$0xf]
        %v1534 = vld [vmem:[%s1145 + $0x64] sm:$0xf]
        %v1535 = vld [vmem:[%s1145 + $0x68] sm:$0xf]
        %v1536 = vld [vmem:[%s1145 + $0x6c] sm:$0xf]
        %v1537 = vld [vmem:[%s1145 + $0x70] sm:$0xf]
        %v1538 = vld [vmem:[%s1145 + $0x74] sm:$0xf]
        %v1539 = vld [vmem:[%s1145 + $0x78] sm:$0xf]
        %v1540 = vld [vmem:[%s1145 + $0x7c] sm:$0xf]
        %v1541 = vld [vmem:[%s1145 + $0x80] sm:$0xf]
        %v1542 = vld [vmem:[%s1145 + $0x84] sm:$0xf]
        %v1543 = vld [vmem:[%s1145 + $0x88] sm:$0xf]
        %v1544 = vld [vmem:[%s1145 + $0x8c] sm:$0xf]
        %v1545 = vld [vmem:[%s1145 + $0x90] sm:$0xf]
        %v1546 = vld [vmem:[%s1145 + $0x94] sm:$0xf]
        %v1547 = vld [vmem:[%s1145 + $0x98] sm:$0xf]
        %v1548 = vld [vmem:[%s1145 + $0x9c] sm:$0xf]
        %v1549 = vld [vmem:[%s1145 + $0xa0] sm:$0xf]
        %v1550 = vld [vmem:[%s1145 + $0xa4] sm:$0xf]
        %v1551 = vld [vmem:[%s1145 + $0xa8] sm:$0xf]
        %v1552 = vld [vmem:[%s1145 + $0xac] sm:$0xf]
        %v1553 = vld [vmem:[%s1145 + $0xb0] sm:$0xf]
        %v1554 = vld [vmem:[%s1145 + $0xb4] sm:$0xf]
        %v1555 = vld [vmem:[%s1145 + $0xb8] sm:$0xf]
        %v1556 = vld [vmem:[%s1145 + $0xbc] sm:$0xf]
        %v1557 = vld [vmem:[%s1145 + $0xc0] sm:$0xf]
        %v1558 = vld [vmem:[%s1145 + $0xc4] sm:$0xf]
        %v1559 = vld [vmem:[%s1145 + $0xc8] sm:$0xf]
        %v1560 = vld [vmem:[%s1145 + $0xcc] sm:$0xf]
        %v1561 = vld [vmem:[%s1145 + $0xd0] sm:$0xf]
        %v1562 = vld [vmem:[%s1145 + $0xd4] sm:$0xf]
        %v1563 = vld [vmem:[%s1145 + $0xd8] sm:$0xf]
        %v1564 = vld [vmem:[%s1145 + $0xdc] sm:$0xf]
        %v1565 = vld [vmem:[%s1145 + $0xe0] sm:$0xf]
        %v1566 = vld [vmem:[%s1145 + $0xe4] sm:$0xf]
        %v1567 = vld [vmem:[%s1145 + $0xe8] sm:$0xf]
        %v1568 = vld [vmem:[%s1145 + $0xec] sm:$0xf]
        %v1569 = vld [vmem:[%s1145 + $0xf0] sm:$0xf]
        %v1570 = vld [vmem:[%s1145 + $0xf4] sm:$0xf]
        %v1571 = vld [vmem:[%s1145 + $0xf8] sm:$0xf]
        %v1572 = vld [vmem:[%s1145 + $0xfc] sm:$0xf]
        %v1589 = vunpack.c.l.b16 %v1381
        %v1590 = vunpack.c.l.b16 %v1382
        %v1591 = vunpack.c.l.b16 %v1383
        %v1592 = vunpack.c.l.b16 %v1384
        %v1593 = vunpack.c.l.b16 %v1385
        %v1594 = vunpack.c.l.b16 %v1386
        %v1595 = vunpack.c.l.b16 %v1387
        %v1596 = vunpack.c.l.b16 %v1388
        %v1597 = vunpack.c.l.b16 %v1389
        %v1598 = vunpack.c.l.b16 %v1390
        %v1599 = vunpack.c.l.b16 %v1391
        %v1600 = vunpack.c.l.b16 %v1392
        %v1601 = vunpack.c.l.b16 %v1393
        %v1602 = vunpack.c.l.b16 %v1394
        %v1603 = vunpack.c.l.b16 %v1395
        %v1604 = vunpack.c.l.b16 %v1396
        %v1605 = vpack.c.b16 %v1590, %v1589
        %v1606 = vpack.c.b16 %v1592, %v1591
        %v1607 = vpack.c.b16 %v1594, %v1593
        %v1608 = vpack.c.b16 %v1596, %v1595
        %v1609 = vpack.c.b16 %v1598, %v1597
        %v1610 = vpack.c.b16 %v1600, %v1599
        %v1611 = vpack.c.b16 %v1602, %v1601
        %v1612 = vpack.c.b16 %v1604, %v1603
        %v1629 = vunpack.c.l.b16 %v1445
        %v1630 = vunpack.c.l.b16 %v1446
        %v1631 = vunpack.c.l.b16 %v1447
        %v1632 = vunpack.c.l.b16 %v1448
        %v1633 = vunpack.c.l.b16 %v1449
        %v1634 = vunpack.c.l.b16 %v1450
        %v1635 = vunpack.c.l.b16 %v1451
        %v1636 = vunpack.c.l.b16 %v1452
        %v1637 = vunpack.c.l.b16 %v1453
        %v1638 = vunpack.c.l.b16 %v1454
        %v1639 = vunpack.c.l.b16 %v1455
        %v1640 = vunpack.c.l.b16 %v1456
        %v1641 = vunpack.c.l.b16 %v1457
        %v1642 = vunpack.c.l.b16 %v1458
        %v1643 = vunpack.c.l.b16 %v1459
        %v1644 = vunpack.c.l.b16 %v1460
        %v1645 = vpack.c.b16 %v1630, %v1629
        %v1646 = vpack.c.b16 %v1632, %v1631
        %v1647 = vpack.c.b16 %v1634, %v1633
        %v1648 = vpack.c.b16 %v1636, %v1635
        %v1649 = vpack.c.b16 %v1638, %v1637
        %v1650 = vpack.c.b16 %v1640, %v1639
        %v1651 = vpack.c.b16 %v1642, %v1641
        %v1652 = vpack.c.b16 %v1644, %v1643
        %vm1653 = vcmask 523264
        %v1655 = vsel %vm1653, %v1605, 0
        %v1658 = vsel %vm1653, %v1606, 0
        %v1661 = vsel %vm1653, %v1607, 0
        %v1664 = vsel %vm1653, %v1608, 0
        %v1667 = vsel %vm1653, %v1609, 0
        %v1670 = vsel %vm1653, %v1610, 0
        %v1673 = vsel %vm1653, %v1611, 0
        %v1676 = vsel %vm1653, %v1612, 0
        %v1679 = vsel %vm1653, %v1645, 0
        %v1682 = vsel %vm1653, %v1646, 0
        %v1685 = vsel %vm1653, %v1647, 0
        %v1688 = vsel %vm1653, %v1648, 0
        %v1691 = vsel %vm1653, %v1649, 0
        %v1694 = vsel %vm1653, %v1650, 0
        %v1697 = vsel %vm1653, %v1651, 0
        %v1700 = vsel %vm1653, %v1652, 0
        %1702 = vmatprep.subr.bf16.mxu0 0
        %1703 = vmatpush1.bf16.xpose.msra.mxu0 %v1679
        %1704 = vmatprep.subr.bf16.mxu0 0
        %1705 = vmatpush1.bf16.xpose.msra.mxu0 %v1682
        %1706 = vmatprep.subr.bf16.mxu0 0
        %1707 = vmatpush1.bf16.xpose.msra.mxu0 %v1685
        %1708 = vmatprep.subr.bf16.mxu0 0
        %1709 = vmatpush1.bf16.xpose.msra.mxu0 %v1688
        %1710 = vmatprep.subr.bf16.mxu0 0
        %1711 = vmatpush1.bf16.xpose.msra.mxu0 %v1691
        %1712 = vmatprep.subr.bf16.mxu0 0
        %1713 = vmatpush1.bf16.xpose.msra.mxu0 %v1694
        %1714 = vmatprep.subr.bf16.mxu0 0
        %1715 = vmatpush1.bf16.xpose.msra.mxu0 %v1697
        %1716 = vmatprep.subr.bf16.mxu0 0
        %1717 = vmatpush1.bf16.xpose.msra.mxu0 %v1700
        %1718 = vmatprep.subr.bf16.mxu0 0
        %1719 = vmatpush1.bf16.xpose.msra.mxu0 0
        %1720 = vmatprep.subr.bf16.mxu0 0
        %1721 = vmatpush1.bf16.xpose.msra.mxu0 0
        %1722 = vmatprep.subr.bf16.mxu0 0
        %1723 = vmatpush1.bf16.xpose.msra.mxu0 0
        %1724 = vmatprep.subr.bf16.mxu0 0
        %1725 = vmatpush1.bf16.xpose.msra.mxu0 0
        %1726 = vmatprep.subr.bf16.mxu0 0
        %1727 = vmatpush1.bf16.xpose.msra.mxu0 0
        %1728 = vmatprep.subr.bf16.mxu0 0
        %1729 = vmatpush1.bf16.xpose.msra.mxu0 0
        %1730 = vmatprep.subr.bf16.mxu0 0
        %1731 = vmatpush1.bf16.xpose.msra.mxu0 0
        %1732 = vmatprep.subr.bf16.mxu0 0
        %1733 = vmatpush1.bf16.xpose.msra.mxu0 0
        %1734 = vmatprep.mubr.bf16.mxu0 0
        %1735 = vmatmul.mubr.bf16.gmra.mrb[0].mxu0 %v1655
        %v1736 = vpop.f32.mrb[0].mxu0
        %v1737 = vadd.f32 0.0, %v1736
        %v1738 = vpop.f32.mrb[0].mxu0
        %v1739 = vpop.f32.mrb[0].mxu0
        %v1740 = vadd.f32 0.0, %v1739
        %v1741 = vpop.f32.mrb[0].mxu0
        %1742 = vmatprep.mubr.bf16.mxu0 0
        %1743 = vmatmul.mubr.bf16.gmra.mrb[0].mxu0 %v1658
        %v1744 = vpop.f32.mrb[0].mxu0
        %v1745 = vadd.f32 0.0, %v1744
        %v1746 = vpop.f32.mrb[0].mxu0
        %v1747 = vpop.f32.mrb[0].mxu0
        %v1748 = vadd.f32 0.0, %v1747
        %v1749 = vpop.f32.mrb[0].mxu0
        %1750 = vmatprep.mubr.bf16.mxu0 0
        %1751 = vmatmul.mubr.bf16.gmra.mrb[0].mxu0 %v1661
        %v1752 = vpop.f32.mrb[0].mxu0
        %v1753 = vadd.f32 0.0, %v1752
        %v1754 = vpop.f32.mrb[0].mxu0
        %v1755 = vpop.f32.mrb[0].mxu0
        %v1756 = vadd.f32 0.0, %v1755
        %v1757 = vpop.f32.mrb[0].mxu0
        %1758 = vmatprep.mubr.bf16.mxu0 0
        %1759 = vmatmul.mubr.bf16.gmra.mrb[0].mxu0 %v1664
        %v1760 = vpop.f32.mrb[0].mxu0
        %v1761 = vadd.f32 0.0, %v1760
        %v1762 = vpop.f32.mrb[0].mxu0
        %v1763 = vpop.f32.mrb[0].mxu0
        %v1764 = vadd.f32 0.0, %v1763
        %v1765 = vpop.f32.mrb[0].mxu0
        %1766 = vmatprep.mubr.bf16.mxu0 0
        %1767 = vmatmul.mubr.bf16.gmra.mrb[0].mxu0 %v1667
        %v1768 = vpop.f32.mrb[0].mxu0
        %v1769 = vadd.f32 0.0, %v1768
        %v1770 = vpop.f32.mrb[0].mxu0
        %v1771 = vpop.f32.mrb[0].mxu0
        %v1772 = vadd.f32 0.0, %v1771
        %v1773 = vpop.f32.mrb[0].mxu0
        %1774 = vmatprep.mubr.bf16.mxu0 0
        %1775 = vmatmul.mubr.bf16.gmra.mrb[0].mxu0 %v1670
        %v1776 = vpop.f32.mrb[0].mxu0
        %v1777 = vadd.f32 0.0, %v1776
        %v1778 = vpop.f32.mrb[0].mxu0
        %v1779 = vpop.f32.mrb[0].mxu0
        %v1780 = vadd.f32 0.0, %v1779
        %v1781 = vpop.f32.mrb[0].mxu0
        %1782 = vmatprep.mubr.bf16.mxu0 0
        %1783 = vmatmul.mubr.bf16.gmra.mrb[0].mxu0 %v1673
        %v1784 = vpop.f32.mrb[0].mxu0
        %v1785 = vadd.f32 0.0, %v1784
        %v1786 = vpop.f32.mrb[0].mxu0
        %v1787 = vpop.f32.mrb[0].mxu0
        %v1788 = vadd.f32 0.0, %v1787
        %v1789 = vpop.f32.mrb[0].mxu0
        %1790 = vmatprep.mubr.bf16.mxu0 0
        %1791 = vmatmul.mubr.bf16.gmra.mrb[0].mxu0 %v1676
        %v1792 = vpop.f32.mrb[0].mxu0
        %v1793 = vadd.f32 0.0, %v1792
        %v1794 = vpop.f32.mrb[0].mxu0
        %v1795 = vpop.f32.mrb[0].mxu0
        %v1796 = vadd.f32 0.0, %v1795
        %v1797 = vpop.f32.mrb[0].mxu0
        %1798 = vdwg.mxu0
        %v1815 = vunpack.c.l.b16 %v1397
        %v1816 = vunpack.c.l.b16 %v1398
        %v1817 = vunpack.c.l.b16 %v1399
        %v1818 = vunpack.c.l.b16 %v1400
        %v1819 = vunpack.c.l.b16 %v1401
        %v1820 = vunpack.c.l.b16 %v1402
        %v1821 = vunpack.c.l.b16 %v1403
        %v1822 = vunpack.c.l.b16 %v1404
        %v1823 = vunpack.c.l.b16 %v1405
        %v1824 = vunpack.c.l.b16 %v1406
        %v1825 = vunpack.c.l.b16 %v1407
        %v1826 = vunpack.c.l.b16 %v1408
        %v1827 = vunpack.c.l.b16 %v1409
        %v1828 = vunpack.c.l.b16 %v1410
        %v1829 = vunpack.c.l.b16 %v1411
        %v1830 = vunpack.c.l.b16 %v1412
        %v1831 = vpack.c.b16 %v1816, %v1815
        %v1832 = vpack.c.b16 %v1818, %v1817
        %v1833 = vpack.c.b16 %v1820, %v1819
        %v1834 = vpack.c.b16 %v1822, %v1821
        %v1835 = vpack.c.b16 %v1824, %v1823
        %v1836 = vpack.c.b16 %v1826, %v1825
        %v1837 = vpack.c.b16 %v1828, %v1827
        %v1838 = vpack.c.b16 %v1830, %v1829
        %v1855 = vunpack.c.l.b16 %v1461
        %v1856 = vunpack.c.l.b16 %v1462
        %v1857 = vunpack.c.l.b16 %v1463
        %v1858 = vunpack.c.l.b16 %v1464
        %v1859 = vunpack.c.l.b16 %v1465
        %v1860 = vunpack.c.l.b16 %v1466
        %v1861 = vunpack.c.l.b16 %v1467
        %v1862 = vunpack.c.l.b16 %v1468
        %v1863 = vunpack.c.l.b16 %v1469
        %v1864 = vunpack.c.l.b16 %v1470
        %v1865 = vunpack.c.l.b16 %v1471
        %v1866 = vunpack.c.l.b16 %v1472
        %v1867 = vunpack.c.l.b16 %v1473
        %v1868 = vunpack.c.l.b16 %v1474
        %v1869 = vunpack.c.l.b16 %v1475
        %v1870 = vunpack.c.l.b16 %v1476
        %v1871 = vpack.c.b16 %v1856, %v1855
        %v1872 = vpack.c.b16 %v1858, %v1857
        %v1873 = vpack.c.b16 %v1860, %v1859
        %v1874 = vpack.c.b16 %v1862, %v1861
        %v1875 = vpack.c.b16 %v1864, %v1863
        %v1876 = vpack.c.b16 %v1866, %v1865
        %v1877 = vpack.c.b16 %v1868, %v1867
        %v1878 = vpack.c.b16 %v1870, %v1869
        %v1880 = vsel %vm1653, %v1831, 0
        %v1883 = vsel %vm1653, %v1832, 0
        %v1886 = vsel %vm1653, %v1833, 0
        %v1889 = vsel %vm1653, %v1834, 0
        %v1892 = vsel %vm1653, %v1835, 0
        %v1895 = vsel %vm1653, %v1836, 0
        %v1898 = vsel %vm1653, %v1837, 0
        %v1901 = vsel %vm1653, %v1838, 0
        %v1904 = vsel %vm1653, %v1871, 0
        %v1907 = vsel %vm1653, %v1872, 0
        %v1910 = vsel %vm1653, %v1873, 0
        %v1913 = vsel %vm1653, %v1874, 0
        %v1916 = vsel %vm1653, %v1875, 0
        %v1919 = vsel %vm1653, %v1876, 0
        %v1922 = vsel %vm1653, %v1877, 0
        %v1925 = vsel %vm1653, %v1878, 0
        %1927 = vmatprep.subr.bf16.mxu0 0
        %1928 = vmatpush1.bf16.xpose.msra.mxu0 %v1904
        %1929 = vmatprep.subr.bf16.mxu0 0
        %1930 = vmatpush1.bf16.xpose.msra.mxu0 %v1907
        %1931 = vmatprep.subr.bf16.mxu0 0
        %1932 = vmatpush1.bf16.xpose.msra.mxu0 %v1910
        %1933 = vmatprep.subr.bf16.mxu0 0
        %1934 = vmatpush1.bf16.xpose.msra.mxu0 %v1913
        %1935 = vmatprep.subr.bf16.mxu0 0
        %1936 = vmatpush1.bf16.xpose.msra.mxu0 %v1916
        %1937 = vmatprep.subr.bf16.mxu0 0
        %1938 = vmatpush1.bf16.xpose.msra.mxu0 %v1919
        %1939 = vmatprep.subr.bf16.mxu0 0
        %1940 = vmatpush1.bf16.xpose.msra.mxu0 %v1922
        %1941 = vmatprep.subr.bf16.mxu0 0
        %1942 = vmatpush1.bf16.xpose.msra.mxu0 %v1925
        %1943 = vmatprep.subr.bf16.mxu0 0
        %1944 = vmatpush1.bf16.xpose.msra.mxu0 0
        %1945 = vmatprep.subr.bf16.mxu0 0
        %1946 = vmatpush1.bf16.xpose.msra.mxu0 0
        %1947 = vmatprep.subr.bf16.mxu0 0
        %1948 = vmatpush1.bf16.xpose.msra.mxu0 0
        %1949 = vmatprep.subr.bf16.mxu0 0
        %1950 = vmatpush1.bf16.xpose.msra.mxu0 0
        %1951 = vmatprep.subr.bf16.mxu0 0
        %1952 = vmatpush1.bf16.xpose.msra.mxu0 0
        %1953 = vmatprep.subr.bf16.mxu0 0
        %1954 = vmatpush1.bf16.xpose.msra.mxu0 0
        %1955 = vmatprep.subr.bf16.mxu0 0
        %1956 = vmatpush1.bf16.xpose.msra.mxu0 0
        %1957 = vmatprep.subr.bf16.mxu0 0
        %1958 = vmatpush1.bf16.xpose.msra.mxu0 0
        %1959 = vmatprep.mubr.bf16.mxu0 0
        %1960 = vmatmul.mubr.bf16.gmra.mrb[0].mxu0 %v1880
        %v1961 = vpop.f32.mrb[0].mxu0
        %v1962 = vadd.f32 0.0, %v1961
        %v1963 = vpop.f32.mrb[0].mxu0
        %v1964 = vpop.f32.mrb[0].mxu0
        %v1965 = vadd.f32 0.0, %v1964
        %v1966 = vpop.f32.mrb[0].mxu0
        %1967 = vmatprep.mubr.bf16.mxu0 0
        %1968 = vmatmul.mubr.bf16.gmra.mrb[0].mxu0 %v1883
        %v1969 = vpop.f32.mrb[0].mxu0
        %v1970 = vadd.f32 0.0, %v1969
        %v1971 = vpop.f32.mrb[0].mxu0
        %v1972 = vpop.f32.mrb[0].mxu0
        %v1973 = vadd.f32 0.0, %v1972
        %v1974 = vpop.f32.mrb[0].mxu0
        %1975 = vmatprep.mubr.bf16.mxu0 0
        %1976 = vmatmul.mubr.bf16.gmra.mrb[0].mxu0 %v1886
        %v1977 = vpop.f32.mrb[0].mxu0
        %v1978 = vadd.f32 0.0, %v1977
        %v1979 = vpop.f32.mrb[0].mxu0
        %v1980 = vpop.f32.mrb[0].mxu0
        %v1981 = vadd.f32 0.0, %v1980
        %v1982 = vpop.f32.mrb[0].mxu0
        %1983 = vmatprep.mubr.bf16.mxu0 0
        %1984 = vmatmul.mubr.bf16.gmra.mrb[0].mxu0 %v1889
        %v1985 = vpop.f32.mrb[0].mxu0
        %v1986 = vadd.f32 0.0, %v1985
        %v1987 = vpop.f32.mrb[0].mxu0
        %v1988 = vpop.f32.mrb[0].mxu0
        %v1989 = vadd.f32 0.0, %v1988
        %v1990 = vpop.f32.mrb[0].mxu0
        %1991 = vmatprep.mubr.bf16.mxu0 0
        %1992 = vmatmul.mubr.bf16.gmra.mrb[0].mxu0 %v1892
        %v1993 = vpop.f32.mrb[0].mxu0
        %v1994 = vadd.f32 0.0, %v1993
        %v1995 = vpop.f32.mrb[0].mxu0
        %v1996 = vpop.f32.mrb[0].mxu0
        %v1997 = vadd.f32 0.0, %v1996
        %v1998 = vpop.f32.mrb[0].mxu0
        %1999 = vmatprep.mubr.bf16.mxu0 0
        %2000 = vmatmul.mubr.bf16.gmra.mrb[0].mxu0 %v1895
        %v2001 = vpop.f32.mrb[0].mxu0
        %v2002 = vadd.f32 0.0, %v2001
        %v2003 = vpop.f32.mrb[0].mxu0
        %v2004 = vpop.f32.mrb[0].mxu0
        %v2005 = vadd.f32 0.0, %v2004
        %v2006 = vpop.f32.mrb[0].mxu0
        %2007 = vmatprep.mubr.bf16.mxu0 0
        %2008 = vmatmul.mubr.bf16.gmra.mrb[0].mxu0 %v1898
        %v2009 = vpop.f32.mrb[0].mxu0
        %v2010 = vadd.f32 0.0, %v2009
        %v2011 = vpop.f32.mrb[0].mxu0
        %v2012 = vpop.f32.mrb[0].mxu0
        %v2013 = vadd.f32 0.0, %v2012
        %v2014 = vpop.f32.mrb[0].mxu0
        %2015 = vmatprep.mubr.bf16.mxu0 0
        %2016 = vmatmul.mubr.bf16.gmra.mrb[0].mxu0 %v1901
        %v2017 = vpop.f32.mrb[0].mxu0
        %v2018 = vadd.f32 0.0, %v2017
        %v2019 = vpop.f32.mrb[0].mxu0
        %v2020 = vpop.f32.mrb[0].mxu0
        %v2021 = vadd.f32 0.0, %v2020
        %v2022 = vpop.f32.mrb[0].mxu0
        %2023 = vdwg.mxu0
        %v2040 = vunpack.c.l.b16 %v1413
        %v2041 = vunpack.c.l.b16 %v1414
        %v2042 = vunpack.c.l.b16 %v1415
        %v2043 = vunpack.c.l.b16 %v1416
        %v2044 = vunpack.c.l.b16 %v1417
        %v2045 = vunpack.c.l.b16 %v1418
        %v2046 = vunpack.c.l.b16 %v1419
        %v2047 = vunpack.c.l.b16 %v1420
        %v2048 = vunpack.c.l.b16 %v1421
        %v2049 = vunpack.c.l.b16 %v1422
        %v2050 = vunpack.c.l.b16 %v1423
        %v2051 = vunpack.c.l.b16 %v1424
        %v2052 = vunpack.c.l.b16 %v1425
        %v2053 = vunpack.c.l.b16 %v1426
        %v2054 = vunpack.c.l.b16 %v1427
        %v2055 = vunpack.c.l.b16 %v1428
        %v2056 = vpack.c.b16 %v2041, %v2040
        %v2057 = vpack.c.b16 %v2043, %v2042
        %v2058 = vpack.c.b16 %v2045, %v2044
        %v2059 = vpack.c.b16 %v2047, %v2046
        %v2060 = vpack.c.b16 %v2049, %v2048
        %v2061 = vpack.c.b16 %v2051, %v2050
        %v2062 = vpack.c.b16 %v2053, %v2052
        %v2063 = vpack.c.b16 %v2055, %v2054
        %v2080 = vunpack.c.l.b16 %v1477
        %v2081 = vunpack.c.l.b16 %v1478
        %v2082 = vunpack.c.l.b16 %v1479
        %v2083 = vunpack.c.l.b16 %v1480
        %v2084 = vunpack.c.l.b16 %v1481
        %v2085 = vunpack.c.l.b16 %v1482
        %v2086 = vunpack.c.l.b16 %v1483
        %v2087 = vunpack.c.l.b16 %v1484
        %v2088 = vunpack.c.l.b16 %v1485
        %v2089 = vunpack.c.l.b16 %v1486
        %v2090 = vunpack.c.l.b16 %v1487
        %v2091 = vunpack.c.l.b16 %v1488
        %v2092 = vunpack.c.l.b16 %v1489
        %v2093 = vunpack.c.l.b16 %v1490
        %v2094 = vunpack.c.l.b16 %v1491
        %v2095 = vunpack.c.l.b16 %v1492
        %v2096 = vpack.c.b16 %v2081, %v2080
        %v2097 = vpack.c.b16 %v2083, %v2082
        %v2098 = vpack.c.b16 %v2085, %v2084
        %v2099 = vpack.c.b16 %v2087, %v2086
        %v2100 = vpack.c.b16 %v2089, %v2088
        %v2101 = vpack.c.b16 %v2091, %v2090
        %v2102 = vpack.c.b16 %v2093, %v2092
        %v2103 = vpack.c.b16 %v2095, %v2094
        %v2105 = vsel %vm1653, %v2056, 0
        %v2108 = vsel %vm1653, %v2057, 0
        %v2111 = vsel %vm1653, %v2058, 0
        %v2114 = vsel %vm1653, %v2059, 0
        %v2117 = vsel %vm1653, %v2060, 0
        %v2120 = vsel %vm1653, %v2061, 0
        %v2123 = vsel %vm1653, %v2062, 0
        %v2126 = vsel %vm1653, %v2063, 0
        %v2129 = vsel %vm1653, %v2096, 0
        %v2132 = vsel %vm1653, %v2097, 0
        %v2135 = vsel %vm1653, %v2098, 0
        %v2138 = vsel %vm1653, %v2099, 0
        %v2141 = vsel %vm1653, %v2100, 0
        %v2144 = vsel %vm1653, %v2101, 0
        %v2147 = vsel %vm1653, %v2102, 0
        %v2150 = vsel %vm1653, %v2103, 0
        %2152 = vmatprep.subr.bf16.mxu0 0
        %2153 = vmatpush1.bf16.xpose.msra.mxu0 %v2129
        %2154 = vmatprep.subr.bf16.mxu0 0
        %2155 = vmatpush1.bf16.xpose.msra.mxu0 %v2132
        %2156 = vmatprep.subr.bf16.mxu0 0
        %2157 = vmatpush1.bf16.xpose.msra.mxu0 %v2135
        %2158 = vmatprep.subr.bf16.mxu0 0
        %2159 = vmatpush1.bf16.xpose.msra.mxu0 %v2138
        %2160 = vmatprep.subr.bf16.mxu0 0
        %2161 = vmatpush1.bf16.xpose.msra.mxu0 %v2141
        %2162 = vmatprep.subr.bf16.mxu0 0
        %2163 = vmatpush1.bf16.xpose.msra.mxu0 %v2144
        %2164 = vmatprep.subr.bf16.mxu0 0
        %2165 = vmatpush1.bf16.xpose.msra.mxu0 %v2147
        %2166 = vmatprep.subr.bf16.mxu0 0
        %2167 = vmatpush1.bf16.xpose.msra.mxu0 %v2150
        %2168 = vmatprep.subr.bf16.mxu0 0
        %2169 = vmatpush1.bf16.xpose.msra.mxu0 0
        %2170 = vmatprep.subr.bf16.mxu0 0
        %2171 = vmatpush1.bf16.xpose.msra.mxu0 0
        %2172 = vmatprep.subr.bf16.mxu0 0
        %2173 = vmatpush1.bf16.xpose.msra.mxu0 0
        %2174 = vmatprep.subr.bf16.mxu0 0
        %2175 = vmatpush1.bf16.xpose.msra.mxu0 0
        %2176 = vmatprep.subr.bf16.mxu0 0
        %2177 = vmatpush1.bf16.xpose.msra.mxu0 0
        %2178 = vmatprep.subr.bf16.mxu0 0
        %2179 = vmatpush1.bf16.xpose.msra.mxu0 0
        %2180 = vmatprep.subr.bf16.mxu0 0
        %2181 = vmatpush1.bf16.xpose.msra.mxu0 0
        %2182 = vmatprep.subr.bf16.mxu0 0
        %2183 = vmatpush1.bf16.xpose.msra.mxu0 0
        %2184 = vmatprep.mubr.bf16.mxu0 0
        %2185 = vmatmul.mubr.bf16.gmra.mrb[0].mxu0 %v2105
        %v2186 = vpop.f32.mrb[0].mxu0
        %v2187 = vadd.f32 0.0, %v2186
        %v2188 = vpop.f32.mrb[0].mxu0
        %v2189 = vpop.f32.mrb[0].mxu0
        %v2190 = vadd.f32 0.0, %v2189
        %v2191 = vpop.f32.mrb[0].mxu0
        %2192 = vmatprep.mubr.bf16.mxu0 0
        %2193 = vmatmul.mubr.bf16.gmra.mrb[0].mxu0 %v2108
        %v2194 = vpop.f32.mrb[0].mxu0
        %v2195 = vadd.f32 0.0, %v2194
        %v2196 = vpop.f32.mrb[0].mxu0
        %v2197 = vpop.f32.mrb[0].mxu0
        %v2198 = vadd.f32 0.0, %v2197
        %v2199 = vpop.f32.mrb[0].mxu0
        %2200 = vmatprep.mubr.bf16.mxu0 0
        %2201 = vmatmul.mubr.bf16.gmra.mrb[0].mxu0 %v2111
        %v2202 = vpop.f32.mrb[0].mxu0
        %v2203 = vadd.f32 0.0, %v2202
        %v2204 = vpop.f32.mrb[0].mxu0
        %v2205 = vpop.f32.mrb[0].mxu0
        %v2206 = vadd.f32 0.0, %v2205
        %v2207 = vpop.f32.mrb[0].mxu0
        %2208 = vmatprep.mubr.bf16.mxu0 0
        %2209 = vmatmul.mubr.bf16.gmra.mrb[0].mxu0 %v2114
        %v2210 = vpop.f32.mrb[0].mxu0
        %v2211 = vadd.f32 0.0, %v2210
        %v2212 = vpop.f32.mrb[0].mxu0
        %v2213 = vpop.f32.mrb[0].mxu0
        %v2214 = vadd.f32 0.0, %v2213
        %v2215 = vpop.f32.mrb[0].mxu0
        %2216 = vmatprep.mubr.bf16.mxu0 0
        %2217 = vmatmul.mubr.bf16.gmra.mrb[0].mxu0 %v2117
        %v2218 = vpop.f32.mrb[0].mxu0
        %v2219 = vadd.f32 0.0, %v2218
        %v2220 = vpop.f32.mrb[0].mxu0
        %v2221 = vpop.f32.mrb[0].mxu0
        %v2222 = vadd.f32 0.0, %v2221
        %v2223 = vpop.f32.mrb[0].mxu0
        %2224 = vmatprep.mubr.bf16.mxu0 0
        %2225 = vmatmul.mubr.bf16.gmra.mrb[0].mxu0 %v2120
        %v2226 = vpop.f32.mrb[0].mxu0
        %v2227 = vadd.f32 0.0, %v2226
        %v2228 = vpop.f32.mrb[0].mxu0
        %v2229 = vpop.f32.mrb[0].mxu0
        %v2230 = vadd.f32 0.0, %v2229
        %v2231 = vpop.f32.mrb[0].mxu0
        %2232 = vmatprep.mubr.bf16.mxu0 0
        %2233 = vmatmul.mubr.bf16.gmra.mrb[0].mxu0 %v2123
        %v2234 = vpop.f32.mrb[0].mxu0
        %v2235 = vadd.f32 0.0, %v2234
        %v2236 = vpop.f32.mrb[0].mxu0
        %v2237 = vpop.f32.mrb[0].mxu0
        %v2238 = vadd.f32 0.0, %v2237
        %v2239 = vpop.f32.mrb[0].mxu0
        %2240 = vmatprep.mubr.bf16.mxu0 0
        %2241 = vmatmul.mubr.bf16.gmra.mrb[0].mxu0 %v2126
        %v2242 = vpop.f32.mrb[0].mxu0
        %v2243 = vadd.f32 0.0, %v2242
        %v2244 = vpop.f32.mrb[0].mxu0
        %v2245 = vpop.f32.mrb[0].mxu0
        %v2246 = vadd.f32 0.0, %v2245
        %v2247 = vpop.f32.mrb[0].mxu0
        %2248 = vdwg.mxu0
        %v2265 = vunpack.c.l.b16 %v1429
        %v2266 = vunpack.c.l.b16 %v1430
        %v2267 = vunpack.c.l.b16 %v1431
        %v2268 = vunpack.c.l.b16 %v1432
        %v2269 = vunpack.c.l.b16 %v1433
        %v2270 = vunpack.c.l.b16 %v1434
        %v2271 = vunpack.c.l.b16 %v1435
        %v2272 = vunpack.c.l.b16 %v1436
        %v2273 = vunpack.c.l.b16 %v1437
        %v2274 = vunpack.c.l.b16 %v1438
        %v2275 = vunpack.c.l.b16 %v1439
        %v2276 = vunpack.c.l.b16 %v1440
        %v2277 = vunpack.c.l.b16 %v1441
        %v2278 = vunpack.c.l.b16 %v1442
        %v2279 = vunpack.c.l.b16 %v1443
        %v2280 = vunpack.c.l.b16 %v1444
        %v2281 = vpack.c.b16 %v2266, %v2265
        %v2282 = vpack.c.b16 %v2268, %v2267
        %v2283 = vpack.c.b16 %v2270, %v2269
        %v2284 = vpack.c.b16 %v2272, %v2271
        %v2285 = vpack.c.b16 %v2274, %v2273
        %v2286 = vpack.c.b16 %v2276, %v2275
        %v2287 = vpack.c.b16 %v2278, %v2277
        %v2288 = vpack.c.b16 %v2280, %v2279
        %v2305 = vunpack.c.l.b16 %v1493
        %v2306 = vunpack.c.l.b16 %v1494
        %v2307 = vunpack.c.l.b16 %v1495
        %v2308 = vunpack.c.l.b16 %v1496
        %v2309 = vunpack.c.l.b16 %v1497
        %v2310 = vunpack.c.l.b16 %v1498
        %v2311 = vunpack.c.l.b16 %v1499
        %v2312 = vunpack.c.l.b16 %v1500
        %v2313 = vunpack.c.l.b16 %v1501
        %v2314 = vunpack.c.l.b16 %v1502
        %v2315 = vunpack.c.l.b16 %v1503
        %v2316 = vunpack.c.l.b16 %v1504
        %v2317 = vunpack.c.l.b16 %v1505
        %v2318 = vunpack.c.l.b16 %v1506
        %v2319 = vunpack.c.l.b16 %v1507
        %v2320 = vunpack.c.l.b16 %v1508
        %v2321 = vpack.c.b16 %v2306, %v2305
        %v2322 = vpack.c.b16 %v2308, %v2307
        %v2323 = vpack.c.b16 %v2310, %v2309
        %v2324 = vpack.c.b16 %v2312, %v2311
        %v2325 = vpack.c.b16 %v2314, %v2313
        %v2326 = vpack.c.b16 %v2316, %v2315
        %v2327 = vpack.c.b16 %v2318, %v2317
        %v2328 = vpack.c.b16 %v2320, %v2319
        %v2330 = vsel %vm1653, %v2281, 0
        %v2333 = vsel %vm1653, %v2282, 0
        %v2336 = vsel %vm1653, %v2283, 0
        %v2339 = vsel %vm1653, %v2284, 0
        %v2342 = vsel %vm1653, %v2285, 0
        %v2345 = vsel %vm1653, %v2286, 0
        %v2348 = vsel %vm1653, %v2287, 0
        %v2351 = vsel %vm1653, %v2288, 0
        %v2354 = vsel %vm1653, %v2321, 0
        %v2357 = vsel %vm1653, %v2322, 0
        %v2360 = vsel %vm1653, %v2323, 0
        %v2363 = vsel %vm1653, %v2324, 0
        %v2366 = vsel %vm1653, %v2325, 0
        %v2369 = vsel %vm1653, %v2326, 0
        %v2372 = vsel %vm1653, %v2327, 0
        %v2375 = vsel %vm1653, %v2328, 0
        %2377 = vmatprep.subr.bf16.mxu0 0
        %2378 = vmatpush1.bf16.xpose.msra.mxu0 %v2354
        %2379 = vmatprep.subr.bf16.mxu0 0
        %2380 = vmatpush1.bf16.xpose.msra.mxu0 %v2357
        %2381 = vmatprep.subr.bf16.mxu0 0
        %2382 = vmatpush1.bf16.xpose.msra.mxu0 %v2360
        %2383 = vmatprep.subr.bf16.mxu0 0
        %2384 = vmatpush1.bf16.xpose.msra.mxu0 %v2363
        %2385 = vmatprep.subr.bf16.mxu0 0
        %2386 = vmatpush1.bf16.xpose.msra.mxu0 %v2366
        %2387 = vmatprep.subr.bf16.mxu0 0
        %2388 = vmatpush1.bf16.xpose.msra.mxu0 %v2369
        %2389 = vmatprep.subr.bf16.mxu0 0
        %2390 = vmatpush1.bf16.xpose.msra.mxu0 %v2372
        %2391 = vmatprep.subr.bf16.mxu0 0
        %2392 = vmatpush1.bf16.xpose.msra.mxu0 %v2375
        %2393 = vmatprep.subr.bf16.mxu0 0
        %2394 = vmatpush1.bf16.xpose.msra.mxu0 0
        %2395 = vmatprep.subr.bf16.mxu0 0
        %2396 = vmatpush1.bf16.xpose.msra.mxu0 0
        %2397 = vmatprep.subr.bf16.mxu0 0
        %2398 = vmatpush1.bf16.xpose.msra.mxu0 0
        %2399 = vmatprep.subr.bf16.mxu0 0
        %2400 = vmatpush1.bf16.xpose.msra.mxu0 0
        %2401 = vmatprep.subr.bf16.mxu0 0
        %2402 = vmatpush1.bf16.xpose.msra.mxu0 0
        %2403 = vmatprep.subr.bf16.mxu0 0
        %2404 = vmatpush1.bf16.xpose.msra.mxu0 0
        %2405 = vmatprep.subr.bf16.mxu0 0
        %2406 = vmatpush1.bf16.xpose.msra.mxu0 0
        %2407 = vmatprep.subr.bf16.mxu0 0
        %2408 = vmatpush1.bf16.xpose.msra.mxu0 0
        %2409 = vmatprep.mubr.bf16.mxu0 0
        %2410 = vmatmul.mubr.bf16.gmra.mrb[0].mxu0 %v2330
        %v2411 = vpop.f32.mrb[0].mxu0
        %v2412 = vadd.f32 0.0, %v2411
        %v2413 = vpop.f32.mrb[0].mxu0
        %v2414 = vpop.f32.mrb[0].mxu0
        %v2415 = vadd.f32 0.0, %v2414
        %v2416 = vpop.f32.mrb[0].mxu0
        %2417 = vmatprep.mubr.bf16.mxu0 0
        %2418 = vmatmul.mubr.bf16.gmra.mrb[0].mxu0 %v2333
        %v2419 = vpop.f32.mrb[0].mxu0
        %v2420 = vadd.f32 0.0, %v2419
        %v2421 = vpop.f32.mrb[0].mxu0
        %v2422 = vpop.f32.mrb[0].mxu0
        %v2423 = vadd.f32 0.0, %v2422
        %v2424 = vpop.f32.mrb[0].mxu0
        %2425 = vmatprep.mubr.bf16.mxu0 0
        %2426 = vmatmul.mubr.bf16.gmra.mrb[0].mxu0 %v2336
        %v2427 = vpop.f32.mrb[0].mxu0
        %v2428 = vadd.f32 0.0, %v2427
        %v2429 = vpop.f32.mrb[0].mxu0
        %v2430 = vpop.f32.mrb[0].mxu0
        %v2431 = vadd.f32 0.0, %v2430
        %v2432 = vpop.f32.mrb[0].mxu0
        %2433 = vmatprep.mubr.bf16.mxu0 0
        %2434 = vmatmul.mubr.bf16.gmra.mrb[0].mxu0 %v2339
        %v2435 = vpop.f32.mrb[0].mxu0
        %v2436 = vadd.f32 0.0, %v2435
        %v2437 = vpop.f32.mrb[0].mxu0
        %v2438 = vpop.f32.mrb[0].mxu0
        %v2439 = vadd.f32 0.0, %v2438
        %v2440 = vpop.f32.mrb[0].mxu0
        %2441 = vmatprep.mubr.bf16.mxu0 0
        %2442 = vmatmul.mubr.bf16.gmra.mrb[0].mxu0 %v2342
        %v2443 = vpop.f32.mrb[0].mxu0
        %v2444 = vadd.f32 0.0, %v2443
        %v2445 = vpop.f32.mrb[0].mxu0
        %v2446 = vpop.f32.mrb[0].mxu0
        %v2447 = vadd.f32 0.0, %v2446
        %v2448 = vpop.f32.mrb[0].mxu0
        %2449 = vmatprep.mubr.bf16.mxu0 0
        %2450 = vmatmul.mubr.bf16.gmra.mrb[0].mxu0 %v2345
        %v2451 = vpop.f32.mrb[0].mxu0
        %v2452 = vadd.f32 0.0, %v2451
        %v2453 = vpop.f32.mrb[0].mxu0
        %v2454 = vpop.f32.mrb[0].mxu0
        %v2455 = vadd.f32 0.0, %v2454
        %v2456 = vpop.f32.mrb[0].mxu0
        %2457 = vmatprep.mubr.bf16.mxu0 0
        %2458 = vmatmul.mubr.bf16.gmra.mrb[0].mxu0 %v2348
        %v2459 = vpop.f32.mrb[0].mxu0
        %v2460 = vadd.f32 0.0, %v2459
        %v2461 = vpop.f32.mrb[0].mxu0
        %v2462 = vpop.f32.mrb[0].mxu0
        %v2463 = vadd.f32 0.0, %v2462
        %v2464 = vpop.f32.mrb[0].mxu0
        %2465 = vmatprep.mubr.bf16.mxu0 0
        %2466 = vmatmul.mubr.bf16.gmra.mrb[0].mxu0 %v2351
        %v2467 = vpop.f32.mrb[0].mxu0
        %v2468 = vadd.f32 0.0, %v2467
        %v2469 = vpop.f32.mrb[0].mxu0
        %v2470 = vpop.f32.mrb[0].mxu0
        %v2471 = vadd.f32 0.0, %v2470
        %v2472 = vpop.f32.mrb[0].mxu0
        %2473 = vdwg.mxu0
        %v2474 = vld [vmem:[#allocation2] sm:$0xff]
        %v2475 = vld [vmem:[#allocation2 + $0x8] sm:$0xff]
        %v2476 = vld [vmem:[#allocation2 + $0x10] sm:$0xff]
        %v2477 = vld [vmem:[#allocation2 + $0x18] sm:$0xff]
        %v2478 = vld [vmem:[#allocation2 + $0x20] sm:$0xff]
        %v2479 = vld [vmem:[#allocation2 + $0x28] sm:$0xff]
        %v2480 = vld [vmem:[#allocation2 + $0x30] sm:$0xff]
        %v2481 = vld [vmem:[#allocation2 + $0x38] sm:$0xff]
        %v2482 = vld [vmem:[#allocation2 + $0x40] sm:$0xff]
        %v2483 = vld [vmem:[#allocation2 + $0x48] sm:$0xff]
        %v2484 = vld [vmem:[#allocation2 + $0x50] sm:$0xff]
        %v2485 = vld [vmem:[#allocation2 + $0x58] sm:$0xff]
        %v2486 = vld [vmem:[#allocation2 + $0x60] sm:$0xff]
        %v2487 = vld [vmem:[#allocation2 + $0x68] sm:$0xff]
        %v2488 = vld [vmem:[#allocation2 + $0x70] sm:$0xff]
        %v2489 = vld [vmem:[#allocation2 + $0x78] sm:$0xff]
        %v2490 = vld [vmem:[#allocation2 + $0x80] sm:$0xff]
        %v2491 = vld [vmem:[#allocation2 + $0x88] sm:$0xff]
        %v2492 = vld [vmem:[#allocation2 + $0x90] sm:$0xff]
        %v2493 = vld [vmem:[#allocation2 + $0x98] sm:$0xff]
        %v2494 = vld [vmem:[#allocation2 + $0xa0] sm:$0xff]
        %v2495 = vld [vmem:[#allocation2 + $0xa8] sm:$0xff]
        %v2496 = vld [vmem:[#allocation2 + $0xb0] sm:$0xff]
        %v2497 = vld [vmem:[#allocation2 + $0xb8] sm:$0xff]
        %v2498 = vld [vmem:[#allocation2 + $0xc0] sm:$0xff]
        %v2499 = vld [vmem:[#allocation2 + $0xc8] sm:$0xff]
        %v2500 = vld [vmem:[#allocation2 + $0xd0] sm:$0xff]
        %v2501 = vld [vmem:[#allocation2 + $0xd8] sm:$0xff]
        %v2502 = vld [vmem:[#allocation2 + $0xe0] sm:$0xff]
        %v2503 = vld [vmem:[#allocation2 + $0xe8] sm:$0xff]
        %v2504 = vld [vmem:[#allocation2 + $0xf0] sm:$0xff]
        %v2505 = vld [vmem:[#allocation2 + $0xf8] sm:$0xff]
        %v2506 = vld [vmem:[#allocation2 + $0x100] sm:$0xff]
        %v2507 = vld [vmem:[#allocation2 + $0x108] sm:$0xff]
        %v2508 = vld [vmem:[#allocation2 + $0x110] sm:$0xff]
        %v2509 = vld [vmem:[#allocation2 + $0x118] sm:$0xff]
        %v2510 = vld [vmem:[#allocation2 + $0x120] sm:$0xff]
        %v2511 = vld [vmem:[#allocation2 + $0x128] sm:$0xff]
        %v2512 = vld [vmem:[#allocation2 + $0x130] sm:$0xff]
        %v2513 = vld [vmem:[#allocation2 + $0x138] sm:$0xff]
        %v2514 = vld [vmem:[#allocation2 + $0x140] sm:$0xff]
        %v2515 = vld [vmem:[#allocation2 + $0x148] sm:$0xff]
        %v2516 = vld [vmem:[#allocation2 + $0x150] sm:$0xff]
        %v2517 = vld [vmem:[#allocation2 + $0x158] sm:$0xff]
        %v2518 = vld [vmem:[#allocation2 + $0x160] sm:$0xff]
        %v2519 = vld [vmem:[#allocation2 + $0x168] sm:$0xff]
        %v2520 = vld [vmem:[#allocation2 + $0x170] sm:$0xff]
        %v2521 = vld [vmem:[#allocation2 + $0x178] sm:$0xff]
        %v2522 = vld [vmem:[#allocation2 + $0x180] sm:$0xff]
        %v2523 = vld [vmem:[#allocation2 + $0x188] sm:$0xff]
        %v2524 = vld [vmem:[#allocation2 + $0x190] sm:$0xff]
        %v2525 = vld [vmem:[#allocation2 + $0x198] sm:$0xff]
        %v2526 = vld [vmem:[#allocation2 + $0x1a0] sm:$0xff]
        %v2527 = vld [vmem:[#allocation2 + $0x1a8] sm:$0xff]
        %v2528 = vld [vmem:[#allocation2 + $0x1b0] sm:$0xff]
        %v2529 = vld [vmem:[#allocation2 + $0x1b8] sm:$0xff]
        %v2530 = vld [vmem:[#allocation2 + $0x1c0] sm:$0xff]
        %v2531 = vld [vmem:[#allocation2 + $0x1c8] sm:$0xff]
        %v2532 = vld [vmem:[#allocation2 + $0x1d0] sm:$0xff]
        %v2533 = vld [vmem:[#allocation2 + $0x1d8] sm:$0xff]
        %v2534 = vld [vmem:[#allocation2 + $0x1e0] sm:$0xff]
        %v2535 = vld [vmem:[#allocation2 + $0x1e8] sm:$0xff]
        %v2536 = vld [vmem:[#allocation2 + $0x1f0] sm:$0xff]
        %v2537 = vld [vmem:[#allocation2 + $0x1f8] sm:$0xff]
        %2538 = vmax.xlane.f32.xlu0 %v1737
        %v2539 = vpop.xlane.xlu0 %2538
        %2540 = vmax.xlane.f32.xlu0 %v1740
        %v2541 = vpop.xlane.xlu0 %2540
        %2542 = vmax.xlane.f32.xlu0 %v1745
        %v2543 = vpop.xlane.xlu0 %2542
        %2544 = vmax.xlane.f32.xlu0 %v1748
        %v2545 = vpop.xlane.xlu0 %2544
        %2546 = vmax.xlane.f32.xlu0 %v1753
        %v2547 = vpop.xlane.xlu0 %2546
        %2548 = vmax.xlane.f32.xlu0 %v1756
        %v2549 = vpop.xlane.xlu0 %2548
        %2550 = vmax.xlane.f32.xlu0 %v1761
        %v2551 = vpop.xlane.xlu0 %2550
        %2552 = vmax.xlane.f32.xlu0 %v1764
        %v2553 = vpop.xlane.xlu0 %2552
        %2554 = vmax.xlane.f32.xlu0 %v1769
        %v2555 = vpop.xlane.xlu0 %2554
        %2556 = vmax.xlane.f32.xlu0 %v1772
        %v2557 = vpop.xlane.xlu0 %2556
        %2558 = vmax.xlane.f32.xlu0 %v1777
        %v2559 = vpop.xlane.xlu0 %2558
        %2560 = vmax.xlane.f32.xlu0 %v1780
        %v2561 = vpop.xlane.xlu0 %2560
        %2562 = vmax.xlane.f32.xlu0 %v1785
        %v2563 = vpop.xlane.xlu0 %2562
        %2564 = vmax.xlane.f32.xlu0 %v1788
        %v2565 = vpop.xlane.xlu0 %2564
        %2566 = vmax.xlane.f32.xlu0 %v1793
        %v2567 = vpop.xlane.xlu0 %2566
        %2568 = vmax.xlane.f32.xlu0 %v1796
        %v2569 = vpop.xlane.xlu0 %2568
        %2570 = vmax.xlane.f32.xlu0 %v1962
        %v2571 = vpop.xlane.xlu0 %2570
        %2572 = vmax.xlane.f32.xlu0 %v1965
        %v2573 = vpop.xlane.xlu0 %2572
        %2574 = vmax.xlane.f32.xlu0 %v1970
        %v2575 = vpop.xlane.xlu0 %2574
        %2576 = vmax.xlane.f32.xlu0 %v1973
        %v2577 = vpop.xlane.xlu0 %2576
        %2578 = vmax.xlane.f32.xlu0 %v1978
        %v2579 = vpop.xlane.xlu0 %2578
        %2580 = vmax.xlane.f32.xlu0 %v1981
        %v2581 = vpop.xlane.xlu0 %2580
        %2582 = vmax.xlane.f32.xlu0 %v1986
        %v2583 = vpop.xlane.xlu0 %2582
        %2584 = vmax.xlane.f32.xlu0 %v1989
        %v2585 = vpop.xlane.xlu0 %2584
        %2586 = vmax.xlane.f32.xlu0 %v1994
        %v2587 = vpop.xlane.xlu0 %2586
        %2588 = vmax.xlane.f32.xlu0 %v1997
        %v2589 = vpop.xlane.xlu0 %2588
        %2590 = vmax.xlane.f32.xlu0 %v2002
        %v2591 = vpop.xlane.xlu0 %2590
        %2592 = vmax.xlane.f32.xlu0 %v2005
        %v2593 = vpop.xlane.xlu0 %2592
        %2594 = vmax.xlane.f32.xlu0 %v2010
        %v2595 = vpop.xlane.xlu0 %2594
        %2596 = vmax.xlane.f32.xlu0 %v2013
        %v2597 = vpop.xlane.xlu0 %2596
        %2598 = vmax.xlane.f32.xlu0 %v2018
        %v2599 = vpop.xlane.xlu0 %2598
        %2600 = vmax.xlane.f32.xlu0 %v2021
        %v2601 = vpop.xlane.xlu0 %2600
        %2602 = vmax.xlane.f32.xlu0 %v2187
        %v2603 = vpop.xlane.xlu0 %2602
        %2604 = vmax.xlane.f32.xlu0 %v2190
        %v2605 = vpop.xlane.xlu0 %2604
        %2606 = vmax.xlane.f32.xlu0 %v2195
        %v2607 = vpop.xlane.xlu0 %2606
        %2608 = vmax.xlane.f32.xlu0 %v2198
        %v2609 = vpop.xlane.xlu0 %2608
        %2610 = vmax.xlane.f32.xlu0 %v2203
        %v2611 = vpop.xlane.xlu0 %2610
        %2612 = vmax.xlane.f32.xlu0 %v2206
        %v2613 = vpop.xlane.xlu0 %2612
        %2614 = vmax.xlane.f32.xlu0 %v2211
        %v2615 = vpop.xlane.xlu0 %2614
        %2616 = vmax.xlane.f32.xlu0 %v2214
        %v2617 = vpop.xlane.xlu0 %2616
        %2618 = vmax.xlane.f32.xlu0 %v2219
        %v2619 = vpop.xlane.xlu0 %2618
        %2620 = vmax.xlane.f32.xlu0 %v2222
        %v2621 = vpop.xlane.xlu0 %2620
        %2622 = vmax.xlane.f32.xlu0 %v2227
        %v2623 = vpop.xlane.xlu0 %2622
        %2624 = vmax.xlane.f32.xlu0 %v2230
        %v2625 = vpop.xlane.xlu0 %2624
        %2626 = vmax.xlane.f32.xlu0 %v2235
        %v2627 = vpop.xlane.xlu0 %2626
        %2628 = vmax.xlane.f32.xlu0 %v2238
        %v2629 = vpop.xlane.xlu0 %2628
        %2630 = vmax.xlane.f32.xlu0 %v2243
        %v2631 = vpop.xlane.xlu0 %2630
        %2632 = vmax.xlane.f32.xlu0 %v2246
        %v2633 = vpop.xlane.xlu0 %2632
        %2634 = vmax.xlane.f32.xlu0 %v2412
        %v2635 = vpop.xlane.xlu0 %2634
        %2636 = vmax.xlane.f32.xlu0 %v2415
        %v2637 = vpop.xlane.xlu0 %2636
        %2638 = vmax.xlane.f32.xlu0 %v2420
        %v2639 = vpop.xlane.xlu0 %2638
        %2640 = vmax.xlane.f32.xlu0 %v2423
        %v2641 = vpop.xlane.xlu0 %2640
        %2642 = vmax.xlane.f32.xlu0 %v2428
        %v2643 = vpop.xlane.xlu0 %2642
        %2644 = vmax.xlane.f32.xlu0 %v2431
        %v2645 = vpop.xlane.xlu0 %2644
        %2646 = vmax.xlane.f32.xlu0 %v2436
        %v2647 = vpop.xlane.xlu0 %2646
        %2648 = vmax.xlane.f32.xlu0 %v2439
        %v2649 = vpop.xlane.xlu0 %2648
        %2650 = vmax.xlane.f32.xlu0 %v2444
        %v2651 = vpop.xlane.xlu0 %2650
        %2652 = vmax.xlane.f32.xlu0 %v2447
        %v2653 = vpop.xlane.xlu0 %2652
        %2654 = vmax.xlane.f32.xlu0 %v2452
        %v2655 = vpop.xlane.xlu0 %2654
        %2656 = vmax.xlane.f32.xlu0 %v2455
        %v2657 = vpop.xlane.xlu0 %2656
        %2658 = vmax.xlane.f32.xlu0 %v2460
        %v2659 = vpop.xlane.xlu0 %2658
        %2660 = vmax.xlane.f32.xlu0 %v2463
        %v2661 = vpop.xlane.xlu0 %2660
        %2662 = vmax.xlane.f32.xlu0 %v2468
        %v2663 = vpop.xlane.xlu0 %2662
        %2664 = vmax.xlane.f32.xlu0 %v2471
        %v2665 = vpop.xlane.xlu0 %2664
        %v2666 = vmax.f32 %v2474, %v2539
        %v2667 = vmax.f32 %v2475, %v2541
        %v2668 = vmax.f32 %v2476, %v2543
        %v2669 = vmax.f32 %v2477, %v2545
        %v2670 = vmax.f32 %v2478, %v2547
        %v2671 = vmax.f32 %v2479, %v2549
        %v2672 = vmax.f32 %v2480, %v2551
        %v2673 = vmax.f32 %v2481, %v2553
        %v2674 = vmax.f32 %v2482, %v2555
        %v2675 = vmax.f32 %v2483, %v2557
        %v2676 = vmax.f32 %v2484, %v2559
        %v2677 = vmax.f32 %v2485, %v2561
        %v2678 = vmax.f32 %v2486, %v2563
        %v2679 = vmax.f32 %v2487, %v2565
        %v2680 = vmax.f32 %v2488, %v2567
        %v2681 = vmax.f32 %v2489, %v2569
        %v2682 = vmax.f32 %v2490, %v2571
        %v2683 = vmax.f32 %v2491, %v2573
        %v2684 = vmax.f32 %v2492, %v2575
        %v2685 = vmax.f32 %v2493, %v2577
        %v2686 = vmax.f32 %v2494, %v2579
        %v2687 = vmax.f32 %v2495, %v2581
        %v2688 = vmax.f32 %v2496, %v2583
        %v2689 = vmax.f32 %v2497, %v2585
        %v2690 = vmax.f32 %v2498, %v2587
        %v2691 = vmax.f32 %v2499, %v2589
        %v2692 = vmax.f32 %v2500, %v2591
        %v2693 = vmax.f32 %v2501, %v2593
        %v2694 = vmax.f32 %v2502, %v2595
        %v2695 = vmax.f32 %v2503, %v2597
        %v2696 = vmax.f32 %v2504, %v2599
        %v2697 = vmax.f32 %v2505, %v2601
        %v2698 = vmax.f32 %v2506, %v2603
        %v2699 = vmax.f32 %v2507, %v2605
        %v2700 = vmax.f32 %v2508, %v2607
        %v2701 = vmax.f32 %v2509, %v2609
        %v2702 = vmax.f32 %v2510, %v2611
        %v2703 = vmax.f32 %v2511, %v2613
        %v2704 = vmax.f32 %v2512, %v2615
        %v2705 = vmax.f32 %v2513, %v2617
        %v2706 = vmax.f32 %v2514, %v2619
        %v2707 = vmax.f32 %v2515, %v2621
        %v2708 = vmax.f32 %v2516, %v2623
        %v2709 = vmax.f32 %v2517, %v2625
        %v2710 = vmax.f32 %v2518, %v2627
        %v2711 = vmax.f32 %v2519, %v2629
        %v2712 = vmax.f32 %v2520, %v2631
        %v2713 = vmax.f32 %v2521, %v2633
        %v2714 = vmax.f32 %v2522, %v2635
        %v2715 = vmax.f32 %v2523, %v2637
        %v2716 = vmax.f32 %v2524, %v2639
        %v2717 = vmax.f32 %v2525, %v2641
        %v2718 = vmax.f32 %v2526, %v2643
        %v2719 = vmax.f32 %v2527, %v2645
        %v2720 = vmax.f32 %v2528, %v2647
        %v2721 = vmax.f32 %v2529, %v2649
        %v2722 = vmax.f32 %v2530, %v2651
        %v2723 = vmax.f32 %v2531, %v2653
        %v2724 = vmax.f32 %v2532, %v2655
        %v2725 = vmax.f32 %v2533, %v2657
        %v2726 = vmax.f32 %v2534, %v2659
        %v2727 = vmax.f32 %v2535, %v2661
        %v2728 = vmax.f32 %v2536, %v2663
        %v2729 = vmax.f32 %v2537, %v2665
        %v2730 = vsub.f32 %v2474, %v2666
        %v2731 = vsub.f32 %v2475, %v2667
        %v2732 = vsub.f32 %v2476, %v2668
        %v2733 = vsub.f32 %v2477, %v2669
        %v2734 = vsub.f32 %v2478, %v2670
        %v2735 = vsub.f32 %v2479, %v2671
        %v2736 = vsub.f32 %v2480, %v2672
        %v2737 = vsub.f32 %v2481, %v2673
        %v2738 = vsub.f32 %v2482, %v2674
        %v2739 = vsub.f32 %v2483, %v2675
        %v2740 = vsub.f32 %v2484, %v2676
        %v2741 = vsub.f32 %v2485, %v2677
        %v2742 = vsub.f32 %v2486, %v2678
        %v2743 = vsub.f32 %v2487, %v2679
        %v2744 = vsub.f32 %v2488, %v2680
        %v2745 = vsub.f32 %v2489, %v2681
        %v2746 = vsub.f32 %v2490, %v2682
        %v2747 = vsub.f32 %v2491, %v2683
        %v2748 = vsub.f32 %v2492, %v2684
        %v2749 = vsub.f32 %v2493, %v2685
        %v2750 = vsub.f32 %v2494, %v2686
        %v2751 = vsub.f32 %v2495, %v2687
        %v2752 = vsub.f32 %v2496, %v2688
        %v2753 = vsub.f32 %v2497, %v2689
        %v2754 = vsub.f32 %v2498, %v2690
        %v2755 = vsub.f32 %v2499, %v2691
        %v2756 = vsub.f32 %v2500, %v2692
        %v2757 = vsub.f32 %v2501, %v2693
        %v2758 = vsub.f32 %v2502, %v2694
        %v2759 = vsub.f32 %v2503, %v2695
        %v2760 = vsub.f32 %v2504, %v2696
        %v2761 = vsub.f32 %v2505, %v2697
        %v2762 = vsub.f32 %v2506, %v2698
        %v2763 = vsub.f32 %v2507, %v2699
        %v2764 = vsub.f32 %v2508, %v2700
        %v2765 = vsub.f32 %v2509, %v2701
        %v2766 = vsub.f32 %v2510, %v2702
        %v2767 = vsub.f32 %v2511, %v2703
        %v2768 = vsub.f32 %v2512, %v2704
        %v2769 = vsub.f32 %v2513, %v2705
        %v2770 = vsub.f32 %v2514, %v2706
        %v2771 = vsub.f32 %v2515, %v2707
        %v2772 = vsub.f32 %v2516, %v2708
        %v2773 = vsub.f32 %v2517, %v2709
        %v2774 = vsub.f32 %v2518, %v2710
        %v2775 = vsub.f32 %v2519, %v2711
        %v2776 = vsub.f32 %v2520, %v2712
        %v2777 = vsub.f32 %v2521, %v2713
        %v2778 = vsub.f32 %v2522, %v2714
        %v2779 = vsub.f32 %v2523, %v2715
        %v2780 = vsub.f32 %v2524, %v2716
        %v2781 = vsub.f32 %v2525, %v2717
        %v2782 = vsub.f32 %v2526, %v2718
        %v2783 = vsub.f32 %v2527, %v2719
        %v2784 = vsub.f32 %v2528, %v2720
        %v2785 = vsub.f32 %v2529, %v2721
        %v2786 = vsub.f32 %v2530, %v2722
        %v2787 = vsub.f32 %v2531, %v2723
        %v2788 = vsub.f32 %v2532, %v2724
        %v2789 = vsub.f32 %v2533, %v2725
        %v2790 = vsub.f32 %v2534, %v2726
        %v2791 = vsub.f32 %v2535, %v2727
        %v2792 = vsub.f32 %v2536, %v2728
        %v2793 = vsub.f32 %v2537, %v2729
        %v2794 = vmul.f32 %v2730, 1.442695
        %v2795 = vpow.pop %v2794
        %v2796 = vmul.f32 %v2731, 1.442695
        %v2797 = vpow.pop %v2796
        %v2798 = vmul.f32 %v2732, 1.442695
        %v2799 = vpow.pop %v2798
        %v2800 = vmul.f32 %v2733, 1.442695
        %v2801 = vpow.pop %v2800
        %v2802 = vmul.f32 %v2734, 1.442695
        %v2803 = vpow.pop %v2802
        %v2804 = vmul.f32 %v2735, 1.442695
        %v2805 = vpow.pop %v2804
        %v2806 = vmul.f32 %v2736, 1.442695
        %v2807 = vpow.pop %v2806
        %v2808 = vmul.f32 %v2737, 1.442695
        %v2809 = vpow.pop %v2808
        %v2810 = vmul.f32 %v2738, 1.442695
        %v2811 = vpow.pop %v2810
        %v2812 = vmul.f32 %v2739, 1.442695
        %v2813 = vpow.pop %v2812
        %v2814 = vmul.f32 %v2740, 1.442695
        %v2815 = vpow.pop %v2814
        %v2816 = vmul.f32 %v2741, 1.442695
        %v2817 = vpow.pop %v2816
        %v2818 = vmul.f32 %v2742, 1.442695
        %v2819 = vpow.pop %v2818
        %v2820 = vmul.f32 %v2743, 1.442695
        %v2821 = vpow.pop %v2820
        %v2822 = vmul.f32 %v2744, 1.442695
        %v2823 = vpow.pop %v2822
        %v2824 = vmul.f32 %v2745, 1.442695
        %v2825 = vpow.pop %v2824
        %v2826 = vmul.f32 %v2746, 1.442695
        %v2827 = vpow.pop %v2826
        %v2828 = vmul.f32 %v2747, 1.442695
        %v2829 = vpow.pop %v2828
        %v2830 = vmul.f32 %v2748, 1.442695
        %v2831 = vpow.pop %v2830
        %v2832 = vmul.f32 %v2749, 1.442695
        %v2833 = vpow.pop %v2832
        %v2834 = vmul.f32 %v2750, 1.442695
        %v2835 = vpow.pop %v2834
        %v2836 = vmul.f32 %v2751, 1.442695
        %v2837 = vpow.pop %v2836
        %v2838 = vmul.f32 %v2752, 1.442695
        %v2839 = vpow.pop %v2838
        %v2840 = vmul.f32 %v2753, 1.442695
        %v2841 = vpow.pop %v2840
        %v2842 = vmul.f32 %v2754, 1.442695
        %v2843 = vpow.pop %v2842
        %v2844 = vmul.f32 %v2755, 1.442695
        %v2845 = vpow.pop %v2844
        %v2846 = vmul.f32 %v2756, 1.442695
        %v2847 = vpow.pop %v2846
        %v2848 = vmul.f32 %v2757, 1.442695
        %v2849 = vpow.pop %v2848
        %v2850 = vmul.f32 %v2758, 1.442695
        %v2851 = vpow.pop %v2850
        %v2852 = vmul.f32 %v2759, 1.442695
        %v2853 = vpow.pop %v2852
        %v2854 = vmul.f32 %v2760, 1.442695
        %v2855 = vpow.pop %v2854
        %v2856 = vmul.f32 %v2761, 1.442695
        %v2857 = vpow.pop %v2856
        %v2858 = vmul.f32 %v2762, 1.442695
        %v2859 = vpow.pop %v2858
        %v2860 = vmul.f32 %v2763, 1.442695
        %v2861 = vpow.pop %v2860
        %v2862 = vmul.f32 %v2764, 1.442695
        %v2863 = vpow.pop %v2862
        %v2864 = vmul.f32 %v2765, 1.442695
        %v2865 = vpow.pop %v2864
        %v2866 = vmul.f32 %v2766, 1.442695
        %v2867 = vpow.pop %v2866
        %v2868 = vmul.f32 %v2767, 1.442695
        %v2869 = vpow.pop %v2868
        %v2870 = vmul.f32 %v2768, 1.442695
        %v2871 = vpow.pop %v2870
        %v2872 = vmul.f32 %v2769, 1.442695
        %v2873 = vpow.pop %v2872
        %v2874 = vmul.f32 %v2770, 1.442695
        %v2875 = vpow.pop %v2874
        %v2876 = vmul.f32 %v2771, 1.442695
        %v2877 = vpow.pop %v2876
        %v2878 = vmul.f32 %v2772, 1.442695
        %v2879 = vpow.pop %v2878
        %v2880 = vmul.f32 %v2773, 1.442695
        %v2881 = vpow.pop %v2880
        %v2882 = vmul.f32 %v2774, 1.442695
        %v2883 = vpow.pop %v2882
        %v2884 = vmul.f32 %v2775, 1.442695
        %v2885 = vpow.pop %v2884
        %v2886 = vmul.f32 %v2776, 1.442695
        %v2887 = vpow.pop %v2886
        %v2888 = vmul.f32 %v2777, 1.442695
        %v2889 = vpow.pop %v2888
        %v2890 = vmul.f32 %v2778, 1.442695
        %v2891 = vpow.pop %v2890
        %v2892 = vmul.f32 %v2779, 1.442695
        %v2893 = vpow.pop %v2892
        %v2894 = vmul.f32 %v2780, 1.442695
        %v2895 = vpow.pop %v2894
        %v2896 = vmul.f32 %v2781, 1.442695
        %v2897 = vpow.pop %v2896
        %v2898 = vmul.f32 %v2782, 1.442695
        %v2899 = vpow.pop %v2898
        %v2900 = vmul.f32 %v2783, 1.442695
        %v2901 = vpow.pop %v2900
        %v2902 = vmul.f32 %v2784, 1.442695
        %v2903 = vpow.pop %v2902
        %v2904 = vmul.f32 %v2785, 1.442695
        %v2905 = vpow.pop %v2904
        %v2906 = vmul.f32 %v2786, 1.442695
        %v2907 = vpow.pop %v2906
        %v2908 = vmul.f32 %v2787, 1.442695
        %v2909 = vpow.pop %v2908
        %v2910 = vmul.f32 %v2788, 1.442695
        %v2911 = vpow.pop %v2910
        %v2912 = vmul.f32 %v2789, 1.442695
        %v2913 = vpow.pop %v2912
        %v2914 = vmul.f32 %v2790, 1.442695
        %v2915 = vpow.pop %v2914
        %v2916 = vmul.f32 %v2791, 1.442695
        %v2917 = vpow.pop %v2916
        %v2918 = vmul.f32 %v2792, 1.442695
        %v2919 = vpow.pop %v2918
        %v2920 = vmul.f32 %v2793, 1.442695
        %v2921 = vpow.pop %v2920
        %2923 = vset.pattern.permute.xlu0 0
        %2924 = vperm.xlu0 %2923, %v2666
        %v2925 = vpop.permute.xlu0 %2924
        %2928 = vset.pattern.permute.xlu0 0
        %2929 = vperm.xlu0 %2928, %v2667
        %v2930 = vpop.permute.xlu0 %2929
        %2933 = vset.pattern.permute.xlu0 0
        %2934 = vperm.xlu0 %2933, %v2668
        %v2935 = vpop.permute.xlu0 %2934
        %2938 = vset.pattern.permute.xlu0 0
        %2939 = vperm.xlu0 %2938, %v2669
        %v2940 = vpop.permute.xlu0 %2939
        %2943 = vset.pattern.permute.xlu0 0
        %2944 = vperm.xlu0 %2943, %v2670
        %v2945 = vpop.permute.xlu0 %2944
        %2948 = vset.pattern.permute.xlu0 0
        %2949 = vperm.xlu0 %2948, %v2671
        %v2950 = vpop.permute.xlu0 %2949
        %2953 = vset.pattern.permute.xlu0 0
        %2954 = vperm.xlu0 %2953, %v2672
        %v2955 = vpop.permute.xlu0 %2954
        %2958 = vset.pattern.permute.xlu0 0
        %2959 = vperm.xlu0 %2958, %v2673
        %v2960 = vpop.permute.xlu0 %2959
        %2963 = vset.pattern.permute.xlu0 0
        %2964 = vperm.xlu0 %2963, %v2674
        %v2965 = vpop.permute.xlu0 %2964
        %2968 = vset.pattern.permute.xlu0 0
        %2969 = vperm.xlu0 %2968, %v2675
        %v2970 = vpop.permute.xlu0 %2969
        %2973 = vset.pattern.permute.xlu0 0
        %2974 = vperm.xlu0 %2973, %v2676
        %v2975 = vpop.permute.xlu0 %2974
        %2978 = vset.pattern.permute.xlu0 0
        %2979 = vperm.xlu0 %2978, %v2677
        %v2980 = vpop.permute.xlu0 %2979
        %2983 = vset.pattern.permute.xlu0 0
        %2984 = vperm.xlu0 %2983, %v2678
        %v2985 = vpop.permute.xlu0 %2984
        %2988 = vset.pattern.permute.xlu0 0
        %2989 = vperm.xlu0 %2988, %v2679
        %v2990 = vpop.permute.xlu0 %2989
        %2993 = vset.pattern.permute.xlu0 0
        %2994 = vperm.xlu0 %2993, %v2680
        %v2995 = vpop.permute.xlu0 %2994
        %2998 = vset.pattern.permute.xlu0 0
        %2999 = vperm.xlu0 %2998, %v2681
        %v3000 = vpop.permute.xlu0 %2999
        %3003 = vset.pattern.permute.xlu0 0
        %3004 = vperm.xlu0 %3003, %v2682
        %v3005 = vpop.permute.xlu0 %3004
        %3008 = vset.pattern.permute.xlu0 0
        %3009 = vperm.xlu0 %3008, %v2683
        %v3010 = vpop.permute.xlu0 %3009
        %3013 = vset.pattern.permute.xlu0 0
        %3014 = vperm.xlu0 %3013, %v2684
        %v3015 = vpop.permute.xlu0 %3014
        %3018 = vset.pattern.permute.xlu0 0
        %3019 = vperm.xlu0 %3018, %v2685
        %v3020 = vpop.permute.xlu0 %3019
        %3023 = vset.pattern.permute.xlu0 0
        %3024 = vperm.xlu0 %3023, %v2686
        %v3025 = vpop.permute.xlu0 %3024
        %3028 = vset.pattern.permute.xlu0 0
        %3029 = vperm.xlu0 %3028, %v2687
        %v3030 = vpop.permute.xlu0 %3029
        %3033 = vset.pattern.permute.xlu0 0
        %3034 = vperm.xlu0 %3033, %v2688
        %v3035 = vpop.permute.xlu0 %3034
        %3038 = vset.pattern.permute.xlu0 0
        %3039 = vperm.xlu0 %3038, %v2689
        %v3040 = vpop.permute.xlu0 %3039
        %3043 = vset.pattern.permute.xlu0 0
        %3044 = vperm.xlu0 %3043, %v2690
        %v3045 = vpop.permute.xlu0 %3044
        %3048 = vset.pattern.permute.xlu0 0
        %3049 = vperm.xlu0 %3048, %v2691
        %v3050 = vpop.permute.xlu0 %3049
        %3053 = vset.pattern.permute.xlu0 0
        %3054 = vperm.xlu0 %3053, %v2692
        %v3055 = vpop.permute.xlu0 %3054
        %3058 = vset.pattern.permute.xlu0 0
        %3059 = vperm.xlu0 %3058, %v2693
        %v3060 = vpop.permute.xlu0 %3059
        %3063 = vset.pattern.permute.xlu0 0
        %3064 = vperm.xlu0 %3063, %v2694
        %v3065 = vpop.permute.xlu0 %3064
        %3068 = vset.pattern.permute.xlu0 0
        %3069 = vperm.xlu0 %3068, %v2695
        %v3070 = vpop.permute.xlu0 %3069
        %3073 = vset.pattern.permute.xlu0 0
        %3074 = vperm.xlu0 %3073, %v2696
        %v3075 = vpop.permute.xlu0 %3074
        %3078 = vset.pattern.permute.xlu0 0
        %3079 = vperm.xlu0 %3078, %v2697
        %v3080 = vpop.permute.xlu0 %3079
        %3083 = vset.pattern.permute.xlu0 0
        %3084 = vperm.xlu0 %3083, %v2698
        %v3085 = vpop.permute.xlu0 %3084
        %3088 = vset.pattern.permute.xlu0 0
        %3089 = vperm.xlu0 %3088, %v2699
        %v3090 = vpop.permute.xlu0 %3089
        %3093 = vset.pattern.permute.xlu0 0
        %3094 = vperm.xlu0 %3093, %v2700
        %v3095 = vpop.permute.xlu0 %3094
        %3098 = vset.pattern.permute.xlu0 0
        %3099 = vperm.xlu0 %3098, %v2701
        %v3100 = vpop.permute.xlu0 %3099
        %3103 = vset.pattern.permute.xlu0 0
        %3104 = vperm.xlu0 %3103, %v2702
        %v3105 = vpop.permute.xlu0 %3104
        %3108 = vset.pattern.permute.xlu0 0
        %3109 = vperm.xlu0 %3108, %v2703
        %v3110 = vpop.permute.xlu0 %3109
        %3113 = vset.pattern.permute.xlu0 0
        %3114 = vperm.xlu0 %3113, %v2704
        %v3115 = vpop.permute.xlu0 %3114
        %3118 = vset.pattern.permute.xlu0 0
        %3119 = vperm.xlu0 %3118, %v2705
        %v3120 = vpop.permute.xlu0 %3119
        %3123 = vset.pattern.permute.xlu0 0
        %3124 = vperm.xlu0 %3123, %v2706
        %v3125 = vpop.permute.xlu0 %3124
        %3128 = vset.pattern.permute.xlu0 0
        %3129 = vperm.xlu0 %3128, %v2707
        %v3130 = vpop.permute.xlu0 %3129
        %3133 = vset.pattern.permute.xlu0 0
        %3134 = vperm.xlu0 %3133, %v2708
        %v3135 = vpop.permute.xlu0 %3134
        %3138 = vset.pattern.permute.xlu0 0
        %3139 = vperm.xlu0 %3138, %v2709
        %v3140 = vpop.permute.xlu0 %3139
        %3143 = vset.pattern.permute.xlu0 0
        %3144 = vperm.xlu0 %3143, %v2710
        %v3145 = vpop.permute.xlu0 %3144
        %3148 = vset.pattern.permute.xlu0 0
        %3149 = vperm.xlu0 %3148, %v2711
        %v3150 = vpop.permute.xlu0 %3149
        %3153 = vset.pattern.permute.xlu0 0
        %3154 = vperm.xlu0 %3153, %v2712
        %v3155 = vpop.permute.xlu0 %3154
        %3158 = vset.pattern.permute.xlu0 0
        %3159 = vperm.xlu0 %3158, %v2713
        %v3160 = vpop.permute.xlu0 %3159
        %3163 = vset.pattern.permute.xlu0 0
        %3164 = vperm.xlu0 %3163, %v2714
        %v3165 = vpop.permute.xlu0 %3164
        %3168 = vset.pattern.permute.xlu0 0
        %3169 = vperm.xlu0 %3168, %v2715
        %v3170 = vpop.permute.xlu0 %3169
        %3173 = vset.pattern.permute.xlu0 0
        %3174 = vperm.xlu0 %3173, %v2716
        %v3175 = vpop.permute.xlu0 %3174
        %3178 = vset.pattern.permute.xlu0 0
        %3179 = vperm.xlu0 %3178, %v2717
        %v3180 = vpop.permute.xlu0 %3179
        %3183 = vset.pattern.permute.xlu0 0
        %3184 = vperm.xlu0 %3183, %v2718
        %v3185 = vpop.permute.xlu0 %3184
        %3188 = vset.pattern.permute.xlu0 0
        %3189 = vperm.xlu0 %3188, %v2719
        %v3190 = vpop.permute.xlu0 %3189
        %3193 = vset.pattern.permute.xlu0 0
        %3194 = vperm.xlu0 %3193, %v2720
        %v3195 = vpop.permute.xlu0 %3194
        %3198 = vset.pattern.permute.xlu0 0
        %3199 = vperm.xlu0 %3198, %v2721
        %v3200 = vpop.permute.xlu0 %3199
        %3203 = vset.pattern.permute.xlu0 0
        %3204 = vperm.xlu0 %3203, %v2722
        %v3205 = vpop.permute.xlu0 %3204
        %3208 = vset.pattern.permute.xlu0 0
        %3209 = vperm.xlu0 %3208, %v2723
        %v3210 = vpop.permute.xlu0 %3209
        %3213 = vset.pattern.permute.xlu0 0
        %3214 = vperm.xlu0 %3213, %v2724
        %v3215 = vpop.permute.xlu0 %3214
        %3218 = vset.pattern.permute.xlu0 0
        %3219 = vperm.xlu0 %3218, %v2725
        %v3220 = vpop.permute.xlu0 %3219
        %3223 = vset.pattern.permute.xlu0 0
        %3224 = vperm.xlu0 %3223, %v2726
        %v3225 = vpop.permute.xlu0 %3224
        %3228 = vset.pattern.permute.xlu0 0
        %3229 = vperm.xlu0 %3228, %v2727
        %v3230 = vpop.permute.xlu0 %3229
        %3233 = vset.pattern.permute.xlu0 0
        %3234 = vperm.xlu0 %3233, %v2728
        %v3235 = vpop.permute.xlu0 %3234
        %3238 = vset.pattern.permute.xlu0 0
        %3239 = vperm.xlu0 %3238, %v2729
        %v3240 = vpop.permute.xlu0 %3239
        %v3242 = vsub.f32 %v1737, %v2925
        %v3243 = vsub.f32 %v1740, %v2930
        %v3244 = vsub.f32 %v1745, %v2935
        %v3245 = vsub.f32 %v1748, %v2940
        %v3246 = vsub.f32 %v1753, %v2945
        %v3247 = vsub.f32 %v1756, %v2950
        %v3248 = vsub.f32 %v1761, %v2955
        %v3249 = vsub.f32 %v1764, %v2960
        %v3250 = vsub.f32 %v1769, %v2965
        %v3251 = vsub.f32 %v1772, %v2970
        %v3252 = vsub.f32 %v1777, %v2975
        %v3253 = vsub.f32 %v1780, %v2980
        %v3254 = vsub.f32 %v1785, %v2985
        %v3255 = vsub.f32 %v1788, %v2990
        %v3256 = vsub.f32 %v1793, %v2995
        %v3257 = vsub.f32 %v1796, %v3000
        %v3258 = vsub.f32 %v1962, %v3005
        %v3259 = vsub.f32 %v1965, %v3010
        %v3260 = vsub.f32 %v1970, %v3015
        %v3261 = vsub.f32 %v1973, %v3020
        %v3262 = vsub.f32 %v1978, %v3025
        %v3263 = vsub.f32 %v1981, %v3030
        %v3264 = vsub.f32 %v1986, %v3035
        %v3265 = vsub.f32 %v1989, %v3040
        %v3266 = vsub.f32 %v1994, %v3045
        %v3267 = vsub.f32 %v1997, %v3050
        %v3268 = vsub.f32 %v2002, %v3055
        %v3269 = vsub.f32 %v2005, %v3060
        %v3270 = vsub.f32 %v2010, %v3065
        %v3271 = vsub.f32 %v2013, %v3070
        %v3272 = vsub.f32 %v2018, %v3075
        %v3273 = vsub.f32 %v2021, %v3080
        %v3274 = vsub.f32 %v2187, %v3085
        %v3275 = vsub.f32 %v2190, %v3090
        %v3276 = vsub.f32 %v2195, %v3095
        %v3277 = vsub.f32 %v2198, %v3100
        %v3278 = vsub.f32 %v2203, %v3105
        %v3279 = vsub.f32 %v2206, %v3110
        %v3280 = vsub.f32 %v2211, %v3115
        %v3281 = vsub.f32 %v2214, %v3120
        %v3282 = vsub.f32 %v2219, %v3125
        %v3283 = vsub.f32 %v2222, %v3130
        %v3284 = vsub.f32 %v2227, %v3135
        %v3285 = vsub.f32 %v2230, %v3140
        %v3286 = vsub.f32 %v2235, %v3145
        %v3287 = vsub.f32 %v2238, %v3150
        %v3288 = vsub.f32 %v2243, %v3155
        %v3289 = vsub.f32 %v2246, %v3160
        %v3290 = vsub.f32 %v2412, %v3165
        %v3291 = vsub.f32 %v2415, %v3170
        %v3292 = vsub.f32 %v2420, %v3175
        %v3293 = vsub.f32 %v2423, %v3180
        %v3294 = vsub.f32 %v2428, %v3185
        %v3295 = vsub.f32 %v2431, %v3190
        %v3296 = vsub.f32 %v2436, %v3195
        %v3297 = vsub.f32 %v2439, %v3200
        %v3298 = vsub.f32 %v2444, %v3205
        %v3299 = vsub.f32 %v2447, %v3210
        %v3300 = vsub.f32 %v2452, %v3215
        %v3301 = vsub.f32 %v2455, %v3220
        %v3302 = vsub.f32 %v2460, %v3225
        %v3303 = vsub.f32 %v2463, %v3230
        %v3304 = vsub.f32 %v2468, %v3235
        %v3305 = vsub.f32 %v2471, %v3240
        %v3306 = vmul.f32 %v3242, 1.442695
        %v3307 = vpow.pop %v3306
        %v3308 = vmul.f32 %v3243, 1.442695
        %v3309 = vpow.pop %v3308
        %v3310 = vmul.f32 %v3244, 1.442695
        %v3311 = vpow.pop %v3310
        %v3312 = vmul.f32 %v3245, 1.442695
        %v3313 = vpow.pop %v3312
        %v3314 = vmul.f32 %v3246, 1.442695
        %v3315 = vpow.pop %v3314
        %v3316 = vmul.f32 %v3247, 1.442695
        %v3317 = vpow.pop %v3316
        %v3318 = vmul.f32 %v3248, 1.442695
        %v3319 = vpow.pop %v3318
        %v3320 = vmul.f32 %v3249, 1.442695
        %v3321 = vpow.pop %v3320
        %v3322 = vmul.f32 %v3250, 1.442695
        %v3323 = vpow.pop %v3322
        %v3324 = vmul.f32 %v3251, 1.442695
        %v3325 = vpow.pop %v3324
        %v3326 = vmul.f32 %v3252, 1.442695
        %v3327 = vpow.pop %v3326
        %v3328 = vmul.f32 %v3253, 1.442695
        %v3329 = vpow.pop %v3328
        %v3330 = vmul.f32 %v3254, 1.442695
        %v3331 = vpow.pop %v3330
        %v3332 = vmul.f32 %v3255, 1.442695
        %v3333 = vpow.pop %v3332
        %v3334 = vmul.f32 %v3256, 1.442695
        %v3335 = vpow.pop %v3334
        %v3336 = vmul.f32 %v3257, 1.442695
        %v3337 = vpow.pop %v3336
        %v3338 = vmul.f32 %v3258, 1.442695
        %v3339 = vpow.pop %v3338
        %v3340 = vmul.f32 %v3259, 1.442695
        %v3341 = vpow.pop %v3340
        %v3342 = vmul.f32 %v3260, 1.442695
        %v3343 = vpow.pop %v3342
        %v3344 = vmul.f32 %v3261, 1.442695
        %v3345 = vpow.pop %v3344
        %v3346 = vmul.f32 %v3262, 1.442695
        %v3347 = vpow.pop %v3346
        %v3348 = vmul.f32 %v3263, 1.442695
        %v3349 = vpow.pop %v3348
        %v3350 = vmul.f32 %v3264, 1.442695
        %v3351 = vpow.pop %v3350
        %v3352 = vmul.f32 %v3265, 1.442695
        %v3353 = vpow.pop %v3352
        %v3354 = vmul.f32 %v3266, 1.442695
        %v3355 = vpow.pop %v3354
        %v3356 = vmul.f32 %v3267, 1.442695
        %v3357 = vpow.pop %v3356
        %v3358 = vmul.f32 %v3268, 1.442695
        %v3359 = vpow.pop %v3358
        %v3360 = vmul.f32 %v3269, 1.442695
        %v3361 = vpow.pop %v3360
        %v3362 = vmul.f32 %v3270, 1.442695
        %v3363 = vpow.pop %v3362
        %v3364 = vmul.f32 %v3271, 1.442695
        %v3365 = vpow.pop %v3364
        %v3366 = vmul.f32 %v3272, 1.442695
        %v3367 = vpow.pop %v3366
        %v3368 = vmul.f32 %v3273, 1.442695
        %v3369 = vpow.pop %v3368
        %v3370 = vmul.f32 %v3274, 1.442695
        %v3371 = vpow.pop %v3370
        %v3372 = vmul.f32 %v3275, 1.442695
        %v3373 = vpow.pop %v3372
        %v3374 = vmul.f32 %v3276, 1.442695
        %v3375 = vpow.pop %v3374
        %v3376 = vmul.f32 %v3277, 1.442695
        %v3377 = vpow.pop %v3376
        %v3378 = vmul.f32 %v3278, 1.442695
        %v3379 = vpow.pop %v3378
        %v3380 = vmul.f32 %v3279, 1.442695
        %v3381 = vpow.pop %v3380
        %v3382 = vmul.f32 %v3280, 1.442695
        %v3383 = vpow.pop %v3382
        %v3384 = vmul.f32 %v3281, 1.442695
        %v3385 = vpow.pop %v3384
        %v3386 = vmul.f32 %v3282, 1.442695
        %v3387 = vpow.pop %v3386
        %v3388 = vmul.f32 %v3283, 1.442695
        %v3389 = vpow.pop %v3388
        %v3390 = vmul.f32 %v3284, 1.442695
        %v3391 = vpow.pop %v3390
        %v3392 = vmul.f32 %v3285, 1.442695
        %v3393 = vpow.pop %v3392
        %v3394 = vmul.f32 %v3286, 1.442695
        %v3395 = vpow.pop %v3394
        %v3396 = vmul.f32 %v3287, 1.442695
        %v3397 = vpow.pop %v3396
        %v3398 = vmul.f32 %v3288, 1.442695
        %v3399 = vpow.pop %v3398
        %v3400 = vmul.f32 %v3289, 1.442695
        %v3401 = vpow.pop %v3400
        %v3402 = vmul.f32 %v3290, 1.442695
        %v3403 = vpow.pop %v3402
        %v3404 = vmul.f32 %v3291, 1.442695
        %v3405 = vpow.pop %v3404
        %v3406 = vmul.f32 %v3292, 1.442695
        %v3407 = vpow.pop %v3406
        %v3408 = vmul.f32 %v3293, 1.442695
        %v3409 = vpow.pop %v3408
        %v3410 = vmul.f32 %v3294, 1.442695
        %v3411 = vpow.pop %v3410
        %v3412 = vmul.f32 %v3295, 1.442695
        %v3413 = vpow.pop %v3412
        %v3414 = vmul.f32 %v3296, 1.442695
        %v3415 = vpow.pop %v3414
        %v3416 = vmul.f32 %v3297, 1.442695
        %v3417 = vpow.pop %v3416
        %v3418 = vmul.f32 %v3298, 1.442695
        %v3419 = vpow.pop %v3418
        %v3420 = vmul.f32 %v3299, 1.442695
        %v3421 = vpow.pop %v3420
        %v3422 = vmul.f32 %v3300, 1.442695
        %v3423 = vpow.pop %v3422
        %v3424 = vmul.f32 %v3301, 1.442695
        %v3425 = vpow.pop %v3424
        %v3426 = vmul.f32 %v3302, 1.442695
        %v3427 = vpow.pop %v3426
        %v3428 = vmul.f32 %v3303, 1.442695
        %v3429 = vpow.pop %v3428
        %v3430 = vmul.f32 %v3304, 1.442695
        %v3431 = vpow.pop %v3430
        %v3432 = vmul.f32 %v3305, 1.442695
        %v3433 = vpow.pop %v3432
        %v3434 = vld [vmem:[#allocation3] sm:$0xff]
        %v3435 = vld [vmem:[#allocation3 + $0x8] sm:$0xff]
        %v3436 = vld [vmem:[#allocation3 + $0x10] sm:$0xff]
        %v3437 = vld [vmem:[#allocation3 + $0x18] sm:$0xff]
        %v3438 = vld [vmem:[#allocation3 + $0x20] sm:$0xff]
        %v3439 = vld [vmem:[#allocation3 + $0x28] sm:$0xff]
        %v3440 = vld [vmem:[#allocation3 + $0x30] sm:$0xff]
        %v3441 = vld [vmem:[#allocation3 + $0x38] sm:$0xff]
        %v3442 = vld [vmem:[#allocation3 + $0x40] sm:$0xff]
        %v3443 = vld [vmem:[#allocation3 + $0x48] sm:$0xff]
        %v3444 = vld [vmem:[#allocation3 + $0x50] sm:$0xff]
        %v3445 = vld [vmem:[#allocation3 + $0x58] sm:$0xff]
        %v3446 = vld [vmem:[#allocation3 + $0x60] sm:$0xff]
        %v3447 = vld [vmem:[#allocation3 + $0x68] sm:$0xff]
        %v3448 = vld [vmem:[#allocation3 + $0x70] sm:$0xff]
        %v3449 = vld [vmem:[#allocation3 + $0x78] sm:$0xff]
        %v3450 = vld [vmem:[#allocation3 + $0x80] sm:$0xff]
        %v3451 = vld [vmem:[#allocation3 + $0x88] sm:$0xff]
        %v3452 = vld [vmem:[#allocation3 + $0x90] sm:$0xff]
        %v3453 = vld [vmem:[#allocation3 + $0x98] sm:$0xff]
        %v3454 = vld [vmem:[#allocation3 + $0xa0] sm:$0xff]
        %v3455 = vld [vmem:[#allocation3 + $0xa8] sm:$0xff]
        %v3456 = vld [vmem:[#allocation3 + $0xb0] sm:$0xff]
        %v3457 = vld [vmem:[#allocation3 + $0xb8] sm:$0xff]
        %v3458 = vld [vmem:[#allocation3 + $0xc0] sm:$0xff]
        %v3459 = vld [vmem:[#allocation3 + $0xc8] sm:$0xff]
        %v3460 = vld [vmem:[#allocation3 + $0xd0] sm:$0xff]
        %v3461 = vld [vmem:[#allocation3 + $0xd8] sm:$0xff]
        %v3462 = vld [vmem:[#allocation3 + $0xe0] sm:$0xff]
        %v3463 = vld [vmem:[#allocation3 + $0xe8] sm:$0xff]
        %v3464 = vld [vmem:[#allocation3 + $0xf0] sm:$0xff]
        %v3465 = vld [vmem:[#allocation3 + $0xf8] sm:$0xff]
        %v3466 = vld [vmem:[#allocation3 + $0x100] sm:$0xff]
        %v3467 = vld [vmem:[#allocation3 + $0x108] sm:$0xff]
        %v3468 = vld [vmem:[#allocation3 + $0x110] sm:$0xff]
        %v3469 = vld [vmem:[#allocation3 + $0x118] sm:$0xff]
        %v3470 = vld [vmem:[#allocation3 + $0x120] sm:$0xff]
        %v3471 = vld [vmem:[#allocation3 + $0x128] sm:$0xff]
        %v3472 = vld [vmem:[#allocation3 + $0x130] sm:$0xff]
        %v3473 = vld [vmem:[#allocation3 + $0x138] sm:$0xff]
        %v3474 = vld [vmem:[#allocation3 + $0x140] sm:$0xff]
        %v3475 = vld [vmem:[#allocation3 + $0x148] sm:$0xff]
        %v3476 = vld [vmem:[#allocation3 + $0x150] sm:$0xff]
        %v3477 = vld [vmem:[#allocation3 + $0x158] sm:$0xff]
        %v3478 = vld [vmem:[#allocation3 + $0x160] sm:$0xff]
        %v3479 = vld [vmem:[#allocation3 + $0x168] sm:$0xff]
        %v3480 = vld [vmem:[#allocation3 + $0x170] sm:$0xff]
        %v3481 = vld [vmem:[#allocation3 + $0x178] sm:$0xff]
        %v3482 = vld [vmem:[#allocation3 + $0x180] sm:$0xff]
        %v3483 = vld [vmem:[#allocation3 + $0x188] sm:$0xff]
        %v3484 = vld [vmem:[#allocation3 + $0x190] sm:$0xff]
        %v3485 = vld [vmem:[#allocation3 + $0x198] sm:$0xff]
        %v3486 = vld [vmem:[#allocation3 + $0x1a0] sm:$0xff]
        %v3487 = vld [vmem:[#allocation3 + $0x1a8] sm:$0xff]
        %v3488 = vld [vmem:[#allocation3 + $0x1b0] sm:$0xff]
        %v3489 = vld [vmem:[#allocation3 + $0x1b8] sm:$0xff]
        %v3490 = vld [vmem:[#allocation3 + $0x1c0] sm:$0xff]
        %v3491 = vld [vmem:[#allocation3 + $0x1c8] sm:$0xff]
        %v3492 = vld [vmem:[#allocation3 + $0x1d0] sm:$0xff]
        %v3493 = vld [vmem:[#allocation3 + $0x1d8] sm:$0xff]
        %v3494 = vld [vmem:[#allocation3 + $0x1e0] sm:$0xff]
        %v3495 = vld [vmem:[#allocation3 + $0x1e8] sm:$0xff]
        %v3496 = vld [vmem:[#allocation3 + $0x1f0] sm:$0xff]
        %v3497 = vld [vmem:[#allocation3 + $0x1f8] sm:$0xff]
        %v3498 = vmul.f32 %v2795, %v3434
        %v3499 = vmul.f32 %v2797, %v3435
        %v3500 = vmul.f32 %v2799, %v3436
        %v3501 = vmul.f32 %v2801, %v3437
        %v3502 = vmul.f32 %v2803, %v3438
        %v3503 = vmul.f32 %v2805, %v3439
        %v3504 = vmul.f32 %v2807, %v3440
        %v3505 = vmul.f32 %v2809, %v3441
        %v3506 = vmul.f32 %v2811, %v3442
        %v3507 = vmul.f32 %v2813, %v3443
        %v3508 = vmul.f32 %v2815, %v3444
        %v3509 = vmul.f32 %v2817, %v3445
        %v3510 = vmul.f32 %v2819, %v3446
        %v3511 = vmul.f32 %v2821, %v3447
        %v3512 = vmul.f32 %v2823, %v3448
        %v3513 = vmul.f32 %v2825, %v3449
        %v3514 = vmul.f32 %v2827, %v3450
        %v3515 = vmul.f32 %v2829, %v3451
        %v3516 = vmul.f32 %v2831, %v3452
        %v3517 = vmul.f32 %v2833, %v3453
        %v3518 = vmul.f32 %v2835, %v3454
        %v3519 = vmul.f32 %v2837, %v3455
        %v3520 = vmul.f32 %v2839, %v3456
        %v3521 = vmul.f32 %v2841, %v3457
        %v3522 = vmul.f32 %v2843, %v3458
        %v3523 = vmul.f32 %v2845, %v3459
        %v3524 = vmul.f32 %v2847, %v3460
        %v3525 = vmul.f32 %v2849, %v3461
        %v3526 = vmul.f32 %v2851, %v3462
        %v3527 = vmul.f32 %v2853, %v3463
        %v3528 = vmul.f32 %v2855, %v3464
        %v3529 = vmul.f32 %v2857, %v3465
        %v3530 = vmul.f32 %v2859, %v3466
        %v3531 = vmul.f32 %v2861, %v3467
        %v3532 = vmul.f32 %v2863, %v3468
        %v3533 = vmul.f32 %v2865, %v3469
        %v3534 = vmul.f32 %v2867, %v3470
        %v3535 = vmul.f32 %v2869, %v3471
        %v3536 = vmul.f32 %v2871, %v3472
        %v3537 = vmul.f32 %v2873, %v3473
        %v3538 = vmul.f32 %v2875, %v3474
        %v3539 = vmul.f32 %v2877, %v3475
        %v3540 = vmul.f32 %v2879, %v3476
        %v3541 = vmul.f32 %v2881, %v3477
        %v3542 = vmul.f32 %v2883, %v3478
        %v3543 = vmul.f32 %v2885, %v3479
        %v3544 = vmul.f32 %v2887, %v3480
        %v3545 = vmul.f32 %v2889, %v3481
        %v3546 = vmul.f32 %v2891, %v3482
        %v3547 = vmul.f32 %v2893, %v3483
        %v3548 = vmul.f32 %v2895, %v3484
        %v3549 = vmul.f32 %v2897, %v3485
        %v3550 = vmul.f32 %v2899, %v3486
        %v3551 = vmul.f32 %v2901, %v3487
        %v3552 = vmul.f32 %v2903, %v3488
        %v3553 = vmul.f32 %v2905, %v3489
        %v3554 = vmul.f32 %v2907, %v3490
        %v3555 = vmul.f32 %v2909, %v3491
        %v3556 = vmul.f32 %v2911, %v3492
        %v3557 = vmul.f32 %v2913, %v3493
        %v3558 = vmul.f32 %v2915, %v3494
        %v3559 = vmul.f32 %v2917, %v3495
        %v3560 = vmul.f32 %v2919, %v3496
        %v3561 = vmul.f32 %v2921, %v3497
        %3562 = vadd.xlane.f32.xlu0 %v3307
        %v3563 = vpop.xlane.xlu0 %3562
        %3564 = vadd.xlane.f32.xlu0 %v3309
        %v3565 = vpop.xlane.xlu0 %3564
        %3566 = vadd.xlane.f32.xlu0 %v3311
        %v3567 = vpop.xlane.xlu0 %3566
        %3568 = vadd.xlane.f32.xlu0 %v3313
        %v3569 = vpop.xlane.xlu0 %3568
        %3570 = vadd.xlane.f32.xlu0 %v3315
        %v3571 = vpop.xlane.xlu0 %3570
        %3572 = vadd.xlane.f32.xlu0 %v3317
        %v3573 = vpop.xlane.xlu0 %3572
        %3574 = vadd.xlane.f32.xlu0 %v3319
        %v3575 = vpop.xlane.xlu0 %3574
        %3576 = vadd.xlane.f32.xlu0 %v3321
        %v3577 = vpop.xlane.xlu0 %3576
        %3578 = vadd.xlane.f32.xlu0 %v3323
        %v3579 = vpop.xlane.xlu0 %3578
        %3580 = vadd.xlane.f32.xlu0 %v3325
        %v3581 = vpop.xlane.xlu0 %3580
        %3582 = vadd.xlane.f32.xlu0 %v3327
        %v3583 = vpop.xlane.xlu0 %3582
        %3584 = vadd.xlane.f32.xlu0 %v3329
        %v3585 = vpop.xlane.xlu0 %3584
        %3586 = vadd.xlane.f32.xlu0 %v3331
        %v3587 = vpop.xlane.xlu0 %3586
        %3588 = vadd.xlane.f32.xlu0 %v3333
        %v3589 = vpop.xlane.xlu0 %3588
        %3590 = vadd.xlane.f32.xlu0 %v3335
        %v3591 = vpop.xlane.xlu0 %3590
        %3592 = vadd.xlane.f32.xlu0 %v3337
        %v3593 = vpop.xlane.xlu0 %3592
        %3594 = vadd.xlane.f32.xlu0 %v3339
        %v3595 = vpop.xlane.xlu0 %3594
        %3596 = vadd.xlane.f32.xlu0 %v3341
        %v3597 = vpop.xlane.xlu0 %3596
        %3598 = vadd.xlane.f32.xlu0 %v3343
        %v3599 = vpop.xlane.xlu0 %3598
        %3600 = vadd.xlane.f32.xlu0 %v3345
        %v3601 = vpop.xlane.xlu0 %3600
        %3602 = vadd.xlane.f32.xlu0 %v3347
        %v3603 = vpop.xlane.xlu0 %3602
        %3604 = vadd.xlane.f32.xlu0 %v3349
        %v3605 = vpop.xlane.xlu0 %3604
        %3606 = vadd.xlane.f32.xlu0 %v3351
        %v3607 = vpop.xlane.xlu0 %3606
        %3608 = vadd.xlane.f32.xlu0 %v3353
        %v3609 = vpop.xlane.xlu0 %3608
        %3610 = vadd.xlane.f32.xlu0 %v3355
        %v3611 = vpop.xlane.xlu0 %3610
        %3612 = vadd.xlane.f32.xlu0 %v3357
        %v3613 = vpop.xlane.xlu0 %3612
        %3614 = vadd.xlane.f32.xlu0 %v3359
        %v3615 = vpop.xlane.xlu0 %3614
        %3616 = vadd.xlane.f32.xlu0 %v3361
        %v3617 = vpop.xlane.xlu0 %3616
        %3618 = vadd.xlane.f32.xlu0 %v3363
        %v3619 = vpop.xlane.xlu0 %3618
        %3620 = vadd.xlane.f32.xlu0 %v3365
        %v3621 = vpop.xlane.xlu0 %3620
        %3622 = vadd.xlane.f32.xlu0 %v3367
        %v3623 = vpop.xlane.xlu0 %3622
        %3624 = vadd.xlane.f32.xlu0 %v3369
        %v3625 = vpop.xlane.xlu0 %3624
        %3626 = vadd.xlane.f32.xlu0 %v3371
        %v3627 = vpop.xlane.xlu0 %3626
        %3628 = vadd.xlane.f32.xlu0 %v3373
        %v3629 = vpop.xlane.xlu0 %3628
        %3630 = vadd.xlane.f32.xlu0 %v3375
        %v3631 = vpop.xlane.xlu0 %3630
        %3632 = vadd.xlane.f32.xlu0 %v3377
        %v3633 = vpop.xlane.xlu0 %3632
        %3634 = vadd.xlane.f32.xlu0 %v3379
        %v3635 = vpop.xlane.xlu0 %3634
        %3636 = vadd.xlane.f32.xlu0 %v3381
        %v3637 = vpop.xlane.xlu0 %3636
        %3638 = vadd.xlane.f32.xlu0 %v3383
        %v3639 = vpop.xlane.xlu0 %3638
        %3640 = vadd.xlane.f32.xlu0 %v3385
        %v3641 = vpop.xlane.xlu0 %3640
        %3642 = vadd.xlane.f32.xlu0 %v3387
        %v3643 = vpop.xlane.xlu0 %3642
        %3644 = vadd.xlane.f32.xlu0 %v3389
        %v3645 = vpop.xlane.xlu0 %3644
        %3646 = vadd.xlane.f32.xlu0 %v3391
        %v3647 = vpop.xlane.xlu0 %3646
        %3648 = vadd.xlane.f32.xlu0 %v3393
        %v3649 = vpop.xlane.xlu0 %3648
        %3650 = vadd.xlane.f32.xlu0 %v3395
        %v3651 = vpop.xlane.xlu0 %3650
        %3652 = vadd.xlane.f32.xlu0 %v3397
        %v3653 = vpop.xlane.xlu0 %3652
        %3654 = vadd.xlane.f32.xlu0 %v3399
        %v3655 = vpop.xlane.xlu0 %3654
        %3656 = vadd.xlane.f32.xlu0 %v3401
        %v3657 = vpop.xlane.xlu0 %3656
        %3658 = vadd.xlane.f32.xlu0 %v3403
        %v3659 = vpop.xlane.xlu0 %3658
        %3660 = vadd.xlane.f32.xlu0 %v3405
        %v3661 = vpop.xlane.xlu0 %3660
        %3662 = vadd.xlane.f32.xlu0 %v3407
        %v3663 = vpop.xlane.xlu0 %3662
        %3664 = vadd.xlane.f32.xlu0 %v3409
        %v3665 = vpop.xlane.xlu0 %3664
        %3666 = vadd.xlane.f32.xlu0 %v3411
        %v3667 = vpop.xlane.xlu0 %3666
        %3668 = vadd.xlane.f32.xlu0 %v3413
        %v3669 = vpop.xlane.xlu0 %3668
        %3670 = vadd.xlane.f32.xlu0 %v3415
        %v3671 = vpop.xlane.xlu0 %3670
        %3672 = vadd.xlane.f32.xlu0 %v3417
        %v3673 = vpop.xlane.xlu0 %3672
        %3674 = vadd.xlane.f32.xlu0 %v3419
        %v3675 = vpop.xlane.xlu0 %3674
        %3676 = vadd.xlane.f32.xlu0 %v3421
        %v3677 = vpop.xlane.xlu0 %3676
        %3678 = vadd.xlane.f32.xlu0 %v3423
        %v3679 = vpop.xlane.xlu0 %3678
        %3680 = vadd.xlane.f32.xlu0 %v3425
        %v3681 = vpop.xlane.xlu0 %3680
        %3682 = vadd.xlane.f32.xlu0 %v3427
        %v3683 = vpop.xlane.xlu0 %3682
        %3684 = vadd.xlane.f32.xlu0 %v3429
        %v3685 = vpop.xlane.xlu0 %3684
        %3686 = vadd.xlane.f32.xlu0 %v3431
        %v3687 = vpop.xlane.xlu0 %3686
        %3688 = vadd.xlane.f32.xlu0 %v3433
        %v3689 = vpop.xlane.xlu0 %3688
        %v3690 = vadd.f32 %v3498, %v3563
        %v3691 = vadd.f32 %v3499, %v3565
        %v3692 = vadd.f32 %v3500, %v3567
        %v3693 = vadd.f32 %v3501, %v3569
        %v3694 = vadd.f32 %v3502, %v3571
        %v3695 = vadd.f32 %v3503, %v3573
        %v3696 = vadd.f32 %v3504, %v3575
        %v3697 = vadd.f32 %v3505, %v3577
        %v3698 = vadd.f32 %v3506, %v3579
        %v3699 = vadd.f32 %v3507, %v3581
        %v3700 = vadd.f32 %v3508, %v3583
        %v3701 = vadd.f32 %v3509, %v3585
        %v3702 = vadd.f32 %v3510, %v3587
        %v3703 = vadd.f32 %v3511, %v3589
        %v3704 = vadd.f32 %v3512, %v3591
        %v3705 = vadd.f32 %v3513, %v3593
        %v3706 = vadd.f32 %v3514, %v3595
        %v3707 = vadd.f32 %v3515, %v3597
        %v3708 = vadd.f32 %v3516, %v3599
        %v3709 = vadd.f32 %v3517, %v3601
        %v3710 = vadd.f32 %v3518, %v3603
        %v3711 = vadd.f32 %v3519, %v3605
        %v3712 = vadd.f32 %v3520, %v3607
        %v3713 = vadd.f32 %v3521, %v3609
        %v3714 = vadd.f32 %v3522, %v3611
        %v3715 = vadd.f32 %v3523, %v3613
        %v3716 = vadd.f32 %v3524, %v3615
        %v3717 = vadd.f32 %v3525, %v3617
        %v3718 = vadd.f32 %v3526, %v3619
        %v3719 = vadd.f32 %v3527, %v3621
        %v3720 = vadd.f32 %v3528, %v3623
        %v3721 = vadd.f32 %v3529, %v3625
        %v3722 = vadd.f32 %v3530, %v3627
        %v3723 = vadd.f32 %v3531, %v3629
        %v3724 = vadd.f32 %v3532, %v3631
        %v3725 = vadd.f32 %v3533, %v3633
        %v3726 = vadd.f32 %v3534, %v3635
        %v3727 = vadd.f32 %v3535, %v3637
        %v3728 = vadd.f32 %v3536, %v3639
        %v3729 = vadd.f32 %v3537, %v3641
        %v3730 = vadd.f32 %v3538, %v3643
        %v3731 = vadd.f32 %v3539, %v3645
        %v3732 = vadd.f32 %v3540, %v3647
        %v3733 = vadd.f32 %v3541, %v3649
        %v3734 = vadd.f32 %v3542, %v3651
        %v3735 = vadd.f32 %v3543, %v3653
        %v3736 = vadd.f32 %v3544, %v3655
        %v3737 = vadd.f32 %v3545, %v3657
        %v3738 = vadd.f32 %v3546, %v3659
        %v3739 = vadd.f32 %v3547, %v3661
        %v3740 = vadd.f32 %v3548, %v3663
        %v3741 = vadd.f32 %v3549, %v3665
        %v3742 = vadd.f32 %v3550, %v3667
        %v3743 = vadd.f32 %v3551, %v3669
        %v3744 = vadd.f32 %v3552, %v3671
        %v3745 = vadd.f32 %v3553, %v3673
        %v3746 = vadd.f32 %v3554, %v3675
        %v3747 = vadd.f32 %v3555, %v3677
        %v3748 = vadd.f32 %v3556, %v3679
        %v3749 = vadd.f32 %v3557, %v3681
        %v3750 = vadd.f32 %v3558, %v3683
        %v3751 = vadd.f32 %v3559, %v3685
        %v3752 = vadd.f32 %v3560, %v3687
        %v3753 = vadd.f32 %v3561, %v3689
        %vm3754 = vcmask 7168
        %3755 = vst.msk [vmem:[#allocation3] sm:$0xff] %vm3754, %v3690
        %3756 = vst.msk [vmem:[#allocation3 + $0x8] sm:$0xff] %vm3754, %v3691
        %3757 = vst.msk [vmem:[#allocation3 + $0x10] sm:$0xff] %vm3754, %v3692
        %3758 = vst.msk [vmem:[#allocation3 + $0x18] sm:$0xff] %vm3754, %v3693
        %3759 = vst.msk [vmem:[#allocation3 + $0x20] sm:$0xff] %vm3754, %v3694
        %3760 = vst.msk [vmem:[#allocation3 + $0x28] sm:$0xff] %vm3754, %v3695
        %3761 = vst.msk [vmem:[#allocation3 + $0x30] sm:$0xff] %vm3754, %v3696
        %3762 = vst.msk [vmem:[#allocation3 + $0x38] sm:$0xff] %vm3754, %v3697
        %3763 = vst.msk [vmem:[#allocation3 + $0x40] sm:$0xff] %vm3754, %v3698
        %3764 = vst.msk [vmem:[#allocation3 + $0x48] sm:$0xff] %vm3754, %v3699
        %3765 = vst.msk [vmem:[#allocation3 + $0x50] sm:$0xff] %vm3754, %v3700
        %3766 = vst.msk [vmem:[#allocation3 + $0x58] sm:$0xff] %vm3754, %v3701
        %3767 = vst.msk [vmem:[#allocation3 + $0x60] sm:$0xff] %vm3754, %v3702
        %3768 = vst.msk [vmem:[#allocation3 + $0x68] sm:$0xff] %vm3754, %v3703
        %3769 = vst.msk [vmem:[#allocation3 + $0x70] sm:$0xff] %vm3754, %v3704
        %3770 = vst.msk [vmem:[#allocation3 + $0x78] sm:$0xff] %vm3754, %v3705
        %3771 = vst.msk [vmem:[#allocation3 + $0x80] sm:$0xff] %vm3754, %v3706
        %3772 = vst.msk [vmem:[#allocation3 + $0x88] sm:$0xff] %vm3754, %v3707
        %3773 = vst.msk [vmem:[#allocation3 + $0x90] sm:$0xff] %vm3754, %v3708
        %3774 = vst.msk [vmem:[#allocation3 + $0x98] sm:$0xff] %vm3754, %v3709
        %3775 = vst.msk [vmem:[#allocation3 + $0xa0] sm:$0xff] %vm3754, %v3710
        %3776 = vst.msk [vmem:[#allocation3 + $0xa8] sm:$0xff] %vm3754, %v3711
        %3777 = vst.msk [vmem:[#allocation3 + $0xb0] sm:$0xff] %vm3754, %v3712
        %3778 = vst.msk [vmem:[#allocation3 + $0xb8] sm:$0xff] %vm3754, %v3713
        %3779 = vst.msk [vmem:[#allocation3 + $0xc0] sm:$0xff] %vm3754, %v3714
        %3780 = vst.msk [vmem:[#allocation3 + $0xc8] sm:$0xff] %vm3754, %v3715
        %3781 = vst.msk [vmem:[#allocation3 + $0xd0] sm:$0xff] %vm3754, %v3716
        %3782 = vst.msk [vmem:[#allocation3 + $0xd8] sm:$0xff] %vm3754, %v3717
        %3783 = vst.msk [vmem:[#allocation3 + $0xe0] sm:$0xff] %vm3754, %v3718
        %3784 = vst.msk [vmem:[#allocation3 + $0xe8] sm:$0xff] %vm3754, %v3719
        %3785 = vst.msk [vmem:[#allocation3 + $0xf0] sm:$0xff] %vm3754, %v3720
        %3786 = vst.msk [vmem:[#allocation3 + $0xf8] sm:$0xff] %vm3754, %v3721
        %3787 = vst.msk [vmem:[#allocation3 + $0x100] sm:$0xff] %vm3754, %v3722
        %3788 = vst.msk [vmem:[#allocation3 + $0x108] sm:$0xff] %vm3754, %v3723
        %3789 = vst.msk [vmem:[#allocation3 + $0x110] sm:$0xff] %vm3754, %v3724
        %3790 = vst.msk [vmem:[#allocation3 + $0x118] sm:$0xff] %vm3754, %v3725
        %3791 = vst.msk [vmem:[#allocation3 + $0x120] sm:$0xff] %vm3754, %v3726
        %3792 = vst.msk [vmem:[#allocation3 + $0x128] sm:$0xff] %vm3754, %v3727
        %3793 = vst.msk [vmem:[#allocation3 + $0x130] sm:$0xff] %vm3754, %v3728
        %3794 = vst.msk [vmem:[#allocation3 + $0x138] sm:$0xff] %vm3754, %v3729
        %3795 = vst.msk [vmem:[#allocation3 + $0x140] sm:$0xff] %vm3754, %v3730
        %3796 = vst.msk [vmem:[#allocation3 + $0x148] sm:$0xff] %vm3754, %v3731
        %3797 = vst.msk [vmem:[#allocation3 + $0x150] sm:$0xff] %vm3754, %v3732
        %3798 = vst.msk [vmem:[#allocation3 + $0x158] sm:$0xff] %vm3754, %v3733
        %3799 = vst.msk [vmem:[#allocation3 + $0x160] sm:$0xff] %vm3754, %v3734
        %3800 = vst.msk [vmem:[#allocation3 + $0x168] sm:$0xff] %vm3754, %v3735
        %3801 = vst.msk [vmem:[#allocation3 + $0x170] sm:$0xff] %vm3754, %v3736
        %3802 = vst.msk [vmem:[#allocation3 + $0x178] sm:$0xff] %vm3754, %v3737
        %3803 = vst.msk [vmem:[#allocation3 + $0x180] sm:$0xff] %vm3754, %v3738
        %3804 = vst.msk [vmem:[#allocation3 + $0x188] sm:$0xff] %vm3754, %v3739
        %3805 = vst.msk [vmem:[#allocation3 + $0x190] sm:$0xff] %vm3754, %v3740
        %3806 = vst.msk [vmem:[#allocation3 + $0x198] sm:$0xff] %vm3754, %v3741
        %3807 = vst.msk [vmem:[#allocation3 + $0x1a0] sm:$0xff] %vm3754, %v3742
        %3808 = vst.msk [vmem:[#allocation3 + $0x1a8] sm:$0xff] %vm3754, %v3743
        %3809 = vst.msk [vmem:[#allocation3 + $0x1b0] sm:$0xff] %vm3754, %v3744
        %3810 = vst.msk [vmem:[#allocation3 + $0x1b8] sm:$0xff] %vm3754, %v3745
        %3811 = vst.msk [vmem:[#allocation3 + $0x1c0] sm:$0xff] %vm3754, %v3746
        %3812 = vst.msk [vmem:[#allocation3 + $0x1c8] sm:$0xff] %vm3754, %v3747
        %3813 = vst.msk [vmem:[#allocation3 + $0x1d0] sm:$0xff] %vm3754, %v3748
        %3814 = vst.msk [vmem:[#allocation3 + $0x1d8] sm:$0xff] %vm3754, %v3749
        %3815 = vst.msk [vmem:[#allocation3 + $0x1e0] sm:$0xff] %vm3754, %v3750
        %3816 = vst.msk [vmem:[#allocation3 + $0x1e8] sm:$0xff] %vm3754, %v3751
        %3817 = vst.msk [vmem:[#allocation3 + $0x1f0] sm:$0xff] %vm3754, %v3752
        %3818 = vst.msk [vmem:[#allocation3 + $0x1f8] sm:$0xff] %vm3754, %v3753
        %v3819 = vpack.c.bf16 %v3309, %v3307
        %v3820 = vpack.c.bf16 %v3313, %v3311
        %v3821 = vpack.c.bf16 %v3317, %v3315
        %v3822 = vpack.c.bf16 %v3321, %v3319
        %v3823 = vpack.c.bf16 %v3325, %v3323
        %v3824 = vpack.c.bf16 %v3329, %v3327
        %v3825 = vpack.c.bf16 %v3333, %v3331
        %v3826 = vpack.c.bf16 %v3337, %v3335
        %v3827 = vpack.c.bf16 %v3341, %v3339
        %v3828 = vpack.c.bf16 %v3345, %v3343
        %v3829 = vpack.c.bf16 %v3349, %v3347
        %v3830 = vpack.c.bf16 %v3353, %v3351
        %v3831 = vpack.c.bf16 %v3357, %v3355
        %v3832 = vpack.c.bf16 %v3361, %v3359
        %v3833 = vpack.c.bf16 %v3365, %v3363
        %v3834 = vpack.c.bf16 %v3369, %v3367
        %v3835 = vpack.c.bf16 %v3373, %v3371
        %v3836 = vpack.c.bf16 %v3377, %v3375
        %v3837 = vpack.c.bf16 %v3381, %v3379
        %v3838 = vpack.c.bf16 %v3385, %v3383
        %v3839 = vpack.c.bf16 %v3389, %v3387
        %v3840 = vpack.c.bf16 %v3393, %v3391
        %v3841 = vpack.c.bf16 %v3397, %v3395
        %v3842 = vpack.c.bf16 %v3401, %v3399
        %v3843 = vpack.c.bf16 %v3405, %v3403
        %v3844 = vpack.c.bf16 %v3409, %v3407
        %v3845 = vpack.c.bf16 %v3413, %v3411
        %v3846 = vpack.c.bf16 %v3417, %v3415
        %v3847 = vpack.c.bf16 %v3421, %v3419
        %v3848 = vpack.c.bf16 %v3425, %v3423
        %v3849 = vpack.c.bf16 %v3429, %v3427
        %v3850 = vpack.c.bf16 %v3433, %v3431
        %v3867 = vunpack.c.l.b16 %v1509
        %v3868 = vunpack.c.l.b16 %v1510
        %v3869 = vunpack.c.l.b16 %v1511
        %v3870 = vunpack.c.l.b16 %v1512
        %v3871 = vunpack.c.l.b16 %v1513
        %v3872 = vunpack.c.l.b16 %v1514
        %v3873 = vunpack.c.l.b16 %v1515
        %v3874 = vunpack.c.l.b16 %v1516
        %v3875 = vunpack.c.l.b16 %v1517
        %v3876 = vunpack.c.l.b16 %v1518
        %v3877 = vunpack.c.l.b16 %v1519
        %v3878 = vunpack.c.l.b16 %v1520
        %v3879 = vunpack.c.l.b16 %v1521
        %v3880 = vunpack.c.l.b16 %v1522
        %v3881 = vunpack.c.l.b16 %v1523
        %v3882 = vunpack.c.l.b16 %v1524
        %v3883 = vpack.c.b16 %v3868, %v3867
        %v3884 = vpack.c.b16 %v3870, %v3869
        %v3885 = vpack.c.b16 %v3872, %v3871
        %v3886 = vpack.c.b16 %v3874, %v3873
        %v3887 = vpack.c.b16 %v3876, %v3875
        %v3888 = vpack.c.b16 %v3878, %v3877
        %v3889 = vpack.c.b16 %v3880, %v3879
        %v3890 = vpack.c.b16 %v3882, %v3881
        %3899 = vmatprep.subr.bf16.mxu0 0
        %3900 = vmatpush1.bf16.msra.mxu0 %v3883
        %3901 = vmatprep.subr.bf16.mxu0 0
        %3902 = vmatpush1.bf16.msra.mxu0 %v3884
        %3903 = vmatprep.subr.bf16.mxu0 0
        %3904 = vmatpush1.bf16.msra.mxu0 %v3885
        %3905 = vmatprep.subr.bf16.mxu0 0
        %3906 = vmatpush1.bf16.msra.mxu0 %v3886
        %3907 = vmatprep.subr.bf16.mxu0 0
        %3908 = vmatpush1.bf16.msra.mxu0 %v3887
        %3909 = vmatprep.subr.bf16.mxu0 0
        %3910 = vmatpush1.bf16.msra.mxu0 %v3888
        %3911 = vmatprep.subr.bf16.mxu0 0
        %3912 = vmatpush1.bf16.msra.mxu0 %v3889
        %3913 = vmatprep.subr.bf16.mxu0 0
        %3914 = vmatpush1.bf16.msra.mxu0 %v3890
        %3915 = vmatprep.subr.bf16.mxu0 0
        %3916 = vmatpush1.bf16.msra.mxu0 0
        %3917 = vmatprep.subr.bf16.mxu0 0
        %3918 = vmatpush1.bf16.msra.mxu0 0
        %3919 = vmatprep.subr.bf16.mxu0 0
        %3920 = vmatpush1.bf16.msra.mxu0 0
        %3921 = vmatprep.subr.bf16.mxu0 0
        %3922 = vmatpush1.bf16.msra.mxu0 0
        %3923 = vmatprep.subr.bf16.mxu0 0
        %3924 = vmatpush1.bf16.msra.mxu0 0
        %3925 = vmatprep.subr.bf16.mxu0 0
        %3926 = vmatpush1.bf16.msra.mxu0 0
        %3927 = vmatprep.subr.bf16.mxu0 0
        %3928 = vmatpush1.bf16.msra.mxu0 0
        %3929 = vmatprep.subr.bf16.mxu0 0
        %3930 = vmatpush1.bf16.msra.mxu0 0
        %3931 = vmatprep.mubr.bf16.mxu0 0
        %3932 = vmatmul.mubr.bf16.gmra.mrb[0].mxu0 %v3819
        %v3933 = vpop.f32.mrb[0].mxu0
        %v3934 = vadd.f32 0.0, %v3933
        %v3935 = vpop.f32.mrb[0].mxu0
        %v3936 = vpop.f32.mrb[0].mxu0
        %v3937 = vadd.f32 0.0, %v3936
        %v3938 = vpop.f32.mrb[0].mxu0
        %3939 = vmatprep.mubr.bf16.mxu0 0
        %3940 = vmatmul.mubr.bf16.gmra.mrb[0].mxu0 %v3820
        %v3941 = vpop.f32.mrb[0].mxu0
        %v3942 = vadd.f32 0.0, %v3941
        %v3943 = vpop.f32.mrb[0].mxu0
        %v3944 = vpop.f32.mrb[0].mxu0
        %v3945 = vadd.f32 0.0, %v3944
        %v3946 = vpop.f32.mrb[0].mxu0
        %3947 = vmatprep.mubr.bf16.mxu0 0
        %3948 = vmatmul.mubr.bf16.gmra.mrb[0].mxu0 %v3821
        %v3949 = vpop.f32.mrb[0].mxu0
        %v3950 = vadd.f32 0.0, %v3949
        %v3951 = vpop.f32.mrb[0].mxu0
        %v3952 = vpop.f32.mrb[0].mxu0
        %v3953 = vadd.f32 0.0, %v3952
        %v3954 = vpop.f32.mrb[0].mxu0
        %3955 = vmatprep.mubr.bf16.mxu0 0
        %3956 = vmatmul.mubr.bf16.gmra.mrb[0].mxu0 %v3822
        %v3957 = vpop.f32.mrb[0].mxu0
        %v3958 = vadd.f32 0.0, %v3957
        %v3959 = vpop.f32.mrb[0].mxu0
        %v3960 = vpop.f32.mrb[0].mxu0
        %v3961 = vadd.f32 0.0, %v3960
        %v3962 = vpop.f32.mrb[0].mxu0
        %3963 = vmatprep.mubr.bf16.mxu0 0
        %3964 = vmatmul.mubr.bf16.gmra.mrb[0].mxu0 %v3823
        %v3965 = vpop.f32.mrb[0].mxu0
        %v3966 = vadd.f32 0.0, %v3965
        %v3967 = vpop.f32.mrb[0].mxu0
        %v3968 = vpop.f32.mrb[0].mxu0
        %v3969 = vadd.f32 0.0, %v3968
        %v3970 = vpop.f32.mrb[0].mxu0
        %3971 = vmatprep.mubr.bf16.mxu0 0
        %3972 = vmatmul.mubr.bf16.gmra.mrb[0].mxu0 %v3824
        %v3973 = vpop.f32.mrb[0].mxu0
        %v3974 = vadd.f32 0.0, %v3973
        %v3975 = vpop.f32.mrb[0].mxu0
        %v3976 = vpop.f32.mrb[0].mxu0
        %v3977 = vadd.f32 0.0, %v3976
        %v3978 = vpop.f32.mrb[0].mxu0
        %3979 = vmatprep.mubr.bf16.mxu0 0
        %3980 = vmatmul.mubr.bf16.gmra.mrb[0].mxu0 %v3825
        %v3981 = vpop.f32.mrb[0].mxu0
        %v3982 = vadd.f32 0.0, %v3981
        %v3983 = vpop.f32.mrb[0].mxu0
        %v3984 = vpop.f32.mrb[0].mxu0
        %v3985 = vadd.f32 0.0, %v3984
        %v3986 = vpop.f32.mrb[0].mxu0
        %3987 = vmatprep.mubr.bf16.mxu0 0
        %3988 = vmatmul.mubr.bf16.gmra.mrb[0].mxu0 %v3826
        %v3989 = vpop.f32.mrb[0].mxu0
        %v3990 = vadd.f32 0.0, %v3989
        %v3991 = vpop.f32.mrb[0].mxu0
        %v3992 = vpop.f32.mrb[0].mxu0
        %v3993 = vadd.f32 0.0, %v3992
        %v3994 = vpop.f32.mrb[0].mxu0
        %3995 = vdwg.mxu0
        %v4012 = vunpack.c.l.b16 %v1525
        %v4013 = vunpack.c.l.b16 %v1526
        %v4014 = vunpack.c.l.b16 %v1527
        %v4015 = vunpack.c.l.b16 %v1528
        %v4016 = vunpack.c.l.b16 %v1529
        %v4017 = vunpack.c.l.b16 %v1530
        %v4018 = vunpack.c.l.b16 %v1531
        %v4019 = vunpack.c.l.b16 %v1532
        %v4020 = vunpack.c.l.b16 %v1533
        %v4021 = vunpack.c.l.b16 %v1534
        %v4022 = vunpack.c.l.b16 %v1535
        %v4023 = vunpack.c.l.b16 %v1536
        %v4024 = vunpack.c.l.b16 %v1537
        %v4025 = vunpack.c.l.b16 %v1538
        %v4026 = vunpack.c.l.b16 %v1539
        %v4027 = vunpack.c.l.b16 %v1540
        %v4028 = vpack.c.b16 %v4013, %v4012
        %v4029 = vpack.c.b16 %v4015, %v4014
        %v4030 = vpack.c.b16 %v4017, %v4016
        %v4031 = vpack.c.b16 %v4019, %v4018
        %v4032 = vpack.c.b16 %v4021, %v4020
        %v4033 = vpack.c.b16 %v4023, %v4022
        %v4034 = vpack.c.b16 %v4025, %v4024
        %v4035 = vpack.c.b16 %v4027, %v4026
        %4044 = vmatprep.subr.bf16.mxu0 0
        %4045 = vmatpush1.bf16.msra.mxu0 %v4028
        %4046 = vmatprep.subr.bf16.mxu0 0
        %4047 = vmatpush1.bf16.msra.mxu0 %v4029
        %4048 = vmatprep.subr.bf16.mxu0 0
        %4049 = vmatpush1.bf16.msra.mxu0 %v4030
        %4050 = vmatprep.subr.bf16.mxu0 0
        %4051 = vmatpush1.bf16.msra.mxu0 %v4031
        %4052 = vmatprep.subr.bf16.mxu0 0
        %4053 = vmatpush1.bf16.msra.mxu0 %v4032
        %4054 = vmatprep.subr.bf16.mxu0 0
        %4055 = vmatpush1.bf16.msra.mxu0 %v4033
        %4056 = vmatprep.subr.bf16.mxu0 0
        %4057 = vmatpush1.bf16.msra.mxu0 %v4034
        %4058 = vmatprep.subr.bf16.mxu0 0
        %4059 = vmatpush1.bf16.msra.mxu0 %v4035
        %4060 = vmatprep.subr.bf16.mxu0 0
        %4061 = vmatpush1.bf16.msra.mxu0 0
        %4062 = vmatprep.subr.bf16.mxu0 0
        %4063 = vmatpush1.bf16.msra.mxu0 0
        %4064 = vmatprep.subr.bf16.mxu0 0
        %4065 = vmatpush1.bf16.msra.mxu0 0
        %4066 = vmatprep.subr.bf16.mxu0 0
        %4067 = vmatpush1.bf16.msra.mxu0 0
        %4068 = vmatprep.subr.bf16.mxu0 0
        %4069 = vmatpush1.bf16.msra.mxu0 0
        %4070 = vmatprep.subr.bf16.mxu0 0
        %4071 = vmatpush1.bf16.msra.mxu0 0
        %4072 = vmatprep.subr.bf16.mxu0 0
        %4073 = vmatpush1.bf16.msra.mxu0 0
        %4074 = vmatprep.subr.bf16.mxu0 0
        %4075 = vmatpush1.bf16.msra.mxu0 0
        %4076 = vmatprep.mubr.bf16.mxu0 0
        %4077 = vmatmul.mubr.bf16.gmra.mrb[0].mxu0 %v3827
        %v4078 = vpop.f32.mrb[0].mxu0
        %v4079 = vadd.f32 0.0, %v4078
        %v4080 = vpop.f32.mrb[0].mxu0
        %v4081 = vpop.f32.mrb[0].mxu0
        %v4082 = vadd.f32 0.0, %v4081
        %v4083 = vpop.f32.mrb[0].mxu0
        %4084 = vmatprep.mubr.bf16.mxu0 0
        %4085 = vmatmul.mubr.bf16.gmra.mrb[0].mxu0 %v3828
        %v4086 = vpop.f32.mrb[0].mxu0
        %v4087 = vadd.f32 0.0, %v4086
        %v4088 = vpop.f32.mrb[0].mxu0
        %v4089 = vpop.f32.mrb[0].mxu0
        %v4090 = vadd.f32 0.0, %v4089
        %v4091 = vpop.f32.mrb[0].mxu0
        %4092 = vmatprep.mubr.bf16.mxu0 0
        %4093 = vmatmul.mubr.bf16.gmra.mrb[0].mxu0 %v3829
        %v4094 = vpop.f32.mrb[0].mxu0
        %v4095 = vadd.f32 0.0, %v4094
        %v4096 = vpop.f32.mrb[0].mxu0
        %v4097 = vpop.f32.mrb[0].mxu0
        %v4098 = vadd.f32 0.0, %v4097
        %v4099 = vpop.f32.mrb[0].mxu0
        %4100 = vmatprep.mubr.bf16.mxu0 0
        %4101 = vmatmul.mubr.bf16.gmra.mrb[0].mxu0 %v3830
        %v4102 = vpop.f32.mrb[0].mxu0
        %v4103 = vadd.f32 0.0, %v4102
        %v4104 = vpop.f32.mrb[0].mxu0
        %v4105 = vpop.f32.mrb[0].mxu0
        %v4106 = vadd.f32 0.0, %v4105
        %v4107 = vpop.f32.mrb[0].mxu0
        %4108 = vmatprep.mubr.bf16.mxu0 0
        %4109 = vmatmul.mubr.bf16.gmra.mrb[0].mxu0 %v3831
        %v4110 = vpop.f32.mrb[0].mxu0
        %v4111 = vadd.f32 0.0, %v4110
        %v4112 = vpop.f32.mrb[0].mxu0
        %v4113 = vpop.f32.mrb[0].mxu0
        %v4114 = vadd.f32 0.0, %v4113
        %v4115 = vpop.f32.mrb[0].mxu0
        %4116 = vmatprep.mubr.bf16.mxu0 0
        %4117 = vmatmul.mubr.bf16.gmra.mrb[0].mxu0 %v3832
        %v4118 = vpop.f32.mrb[0].mxu0
        %v4119 = vadd.f32 0.0, %v4118
        %v4120 = vpop.f32.mrb[0].mxu0
        %v4121 = vpop.f32.mrb[0].mxu0
        %v4122 = vadd.f32 0.0, %v4121
        %v4123 = vpop.f32.mrb[0].mxu0
        %4124 = vmatprep.mubr.bf16.mxu0 0
        %4125 = vmatmul.mubr.bf16.gmra.mrb[0].mxu0 %v3833
        %v4126 = vpop.f32.mrb[0].mxu0
        %v4127 = vadd.f32 0.0, %v4126
        %v4128 = vpop.f32.mrb[0].mxu0
        %v4129 = vpop.f32.mrb[0].mxu0
        %v4130 = vadd.f32 0.0, %v4129
        %v4131 = vpop.f32.mrb[0].mxu0
        %4132 = vmatprep.mubr.bf16.mxu0 0
        %4133 = vmatmul.mubr.bf16.gmra.mrb[0].mxu0 %v3834
        %v4134 = vpop.f32.mrb[0].mxu0
        %v4135 = vadd.f32 0.0, %v4134
        %v4136 = vpop.f32.mrb[0].mxu0
        %v4137 = vpop.f32.mrb[0].mxu0
        %v4138 = vadd.f32 0.0, %v4137
        %v4139 = vpop.f32.mrb[0].mxu0
        %4140 = vdwg.mxu0
        %v4157 = vunpack.c.l.b16 %v1541
        %v4158 = vunpack.c.l.b16 %v1542
        %v4159 = vunpack.c.l.b16 %v1543
        %v4160 = vunpack.c.l.b16 %v1544
        %v4161 = vunpack.c.l.b16 %v1545
        %v4162 = vunpack.c.l.b16 %v1546
        %v4163 = vunpack.c.l.b16 %v1547
        %v4164 = vunpack.c.l.b16 %v1548
        %v4165 = vunpack.c.l.b16 %v1549
        %v4166 = vunpack.c.l.b16 %v1550
        %v4167 = vunpack.c.l.b16 %v1551
        %v4168 = vunpack.c.l.b16 %v1552
        %v4169 = vunpack.c.l.b16 %v1553
        %v4170 = vunpack.c.l.b16 %v1554
        %v4171 = vunpack.c.l.b16 %v1555
        %v4172 = vunpack.c.l.b16 %v1556
        %v4173 = vpack.c.b16 %v4158, %v4157
        %v4174 = vpack.c.b16 %v4160, %v4159
        %v4175 = vpack.c.b16 %v4162, %v4161
        %v4176 = vpack.c.b16 %v4164, %v4163
        %v4177 = vpack.c.b16 %v4166, %v4165
        %v4178 = vpack.c.b16 %v4168, %v4167
        %v4179 = vpack.c.b16 %v4170, %v4169
        %v4180 = vpack.c.b16 %v4172, %v4171
        %4189 = vmatprep.subr.bf16.mxu0 0
        %4190 = vmatpush1.bf16.msra.mxu0 %v4173
        %4191 = vmatprep.subr.bf16.mxu0 0
        %4192 = vmatpush1.bf16.msra.mxu0 %v4174
        %4193 = vmatprep.subr.bf16.mxu0 0
        %4194 = vmatpush1.bf16.msra.mxu0 %v4175
        %4195 = vmatprep.subr.bf16.mxu0 0
        %4196 = vmatpush1.bf16.msra.mxu0 %v4176
        %4197 = vmatprep.subr.bf16.mxu0 0
        %4198 = vmatpush1.bf16.msra.mxu0 %v4177
        %4199 = vmatprep.subr.bf16.mxu0 0
        %4200 = vmatpush1.bf16.msra.mxu0 %v4178
        %4201 = vmatprep.subr.bf16.mxu0 0
        %4202 = vmatpush1.bf16.msra.mxu0 %v4179
        %4203 = vmatprep.subr.bf16.mxu0 0
        %4204 = vmatpush1.bf16.msra.mxu0 %v4180
        %4205 = vmatprep.subr.bf16.mxu0 0
        %4206 = vmatpush1.bf16.msra.mxu0 0
        %4207 = vmatprep.subr.bf16.mxu0 0
        %4208 = vmatpush1.bf16.msra.mxu0 0
        %4209 = vmatprep.subr.bf16.mxu0 0
        %4210 = vmatpush1.bf16.msra.mxu0 0
        %4211 = vmatprep.subr.bf16.mxu0 0
        %4212 = vmatpush1.bf16.msra.mxu0 0
        %4213 = vmatprep.subr.bf16.mxu0 0
        %4214 = vmatpush1.bf16.msra.mxu0 0
        %4215 = vmatprep.subr.bf16.mxu0 0
        %4216 = vmatpush1.bf16.msra.mxu0 0
        %4217 = vmatprep.subr.bf16.mxu0 0
        %4218 = vmatpush1.bf16.msra.mxu0 0
        %4219 = vmatprep.subr.bf16.mxu0 0
        %4220 = vmatpush1.bf16.msra.mxu0 0
        %4221 = vmatprep.mubr.bf16.mxu0 0
        %4222 = vmatmul.mubr.bf16.gmra.mrb[0].mxu0 %v3835
        %v4223 = vpop.f32.mrb[0].mxu0
        %v4224 = vadd.f32 0.0, %v4223
        %v4225 = vpop.f32.mrb[0].mxu0
        %v4226 = vpop.f32.mrb[0].mxu0
        %v4227 = vadd.f32 0.0, %v4226
        %v4228 = vpop.f32.mrb[0].mxu0
        %4229 = vmatprep.mubr.bf16.mxu0 0
        %4230 = vmatmul.mubr.bf16.gmra.mrb[0].mxu0 %v3836
        %v4231 = vpop.f32.mrb[0].mxu0
        %v4232 = vadd.f32 0.0, %v4231
        %v4233 = vpop.f32.mrb[0].mxu0
        %v4234 = vpop.f32.mrb[0].mxu0
        %v4235 = vadd.f32 0.0, %v4234
        %v4236 = vpop.f32.mrb[0].mxu0
        %4237 = vmatprep.mubr.bf16.mxu0 0
        %4238 = vmatmul.mubr.bf16.gmra.mrb[0].mxu0 %v3837
        %v4239 = vpop.f32.mrb[0].mxu0
        %v4240 = vadd.f32 0.0, %v4239
        %v4241 = vpop.f32.mrb[0].mxu0
        %v4242 = vpop.f32.mrb[0].mxu0
        %v4243 = vadd.f32 0.0, %v4242
        %v4244 = vpop.f32.mrb[0].mxu0
        %4245 = vmatprep.mubr.bf16.mxu0 0
        %4246 = vmatmul.mubr.bf16.gmra.mrb[0].mxu0 %v3838
        %v4247 = vpop.f32.mrb[0].mxu0
        %v4248 = vadd.f32 0.0, %v4247
        %v4249 = vpop.f32.mrb[0].mxu0
        %v4250 = vpop.f32.mrb[0].mxu0
        %v4251 = vadd.f32 0.0, %v4250
        %v4252 = vpop.f32.mrb[0].mxu0
        %4253 = vmatprep.mubr.bf16.mxu0 0
        %4254 = vmatmul.mubr.bf16.gmra.mrb[0].mxu0 %v3839
        %v4255 = vpop.f32.mrb[0].mxu0
        %v4256 = vadd.f32 0.0, %v4255
        %v4257 = vpop.f32.mrb[0].mxu0
        %v4258 = vpop.f32.mrb[0].mxu0
        %v4259 = vadd.f32 0.0, %v4258
        %v4260 = vpop.f32.mrb[0].mxu0
        %4261 = vmatprep.mubr.bf16.mxu0 0
        %4262 = vmatmul.mubr.bf16.gmra.mrb[0].mxu0 %v3840
        %v4263 = vpop.f32.mrb[0].mxu0
        %v4264 = vadd.f32 0.0, %v4263
        %v4265 = vpop.f32.mrb[0].mxu0
        %v4266 = vpop.f32.mrb[0].mxu0
        %v4267 = vadd.f32 0.0, %v4266
        %v4268 = vpop.f32.mrb[0].mxu0
        %4269 = vmatprep.mubr.bf16.mxu0 0
        %4270 = vmatmul.mubr.bf16.gmra.mrb[0].mxu0 %v3841
        %v4271 = vpop.f32.mrb[0].mxu0
        %v4272 = vadd.f32 0.0, %v4271
        %v4273 = vpop.f32.mrb[0].mxu0
        %v4274 = vpop.f32.mrb[0].mxu0
        %v4275 = vadd.f32 0.0, %v4274
        %v4276 = vpop.f32.mrb[0].mxu0
        %4277 = vmatprep.mubr.bf16.mxu0 0
        %4278 = vmatmul.mubr.bf16.gmra.mrb[0].mxu0 %v3842
        %v4279 = vpop.f32.mrb[0].mxu0
        %v4280 = vadd.f32 0.0, %v4279
        %v4281 = vpop.f32.mrb[0].mxu0
        %v4282 = vpop.f32.mrb[0].mxu0
        %v4283 = vadd.f32 0.0, %v4282
        %v4284 = vpop.f32.mrb[0].mxu0
        %4285 = vdwg.mxu0
        %v4302 = vunpack.c.l.b16 %v1557
        %v4303 = vunpack.c.l.b16 %v1558
        %v4304 = vunpack.c.l.b16 %v1559
        %v4305 = vunpack.c.l.b16 %v1560
        %v4306 = vunpack.c.l.b16 %v1561
        %v4307 = vunpack.c.l.b16 %v1562
        %v4308 = vunpack.c.l.b16 %v1563
        %v4309 = vunpack.c.l.b16 %v1564
        %v4310 = vunpack.c.l.b16 %v1565
        %v4311 = vunpack.c.l.b16 %v1566
        %v4312 = vunpack.c.l.b16 %v1567
        %v4313 = vunpack.c.l.b16 %v1568
        %v4314 = vunpack.c.l.b16 %v1569
        %v4315 = vunpack.c.l.b16 %v1570
        %v4316 = vunpack.c.l.b16 %v1571
        %v4317 = vunpack.c.l.b16 %v1572
        %v4318 = vpack.c.b16 %v4303, %v4302
        %v4319 = vpack.c.b16 %v4305, %v4304
        %v4320 = vpack.c.b16 %v4307, %v4306
        %v4321 = vpack.c.b16 %v4309, %v4308
        %v4322 = vpack.c.b16 %v4311, %v4310
        %v4323 = vpack.c.b16 %v4313, %v4312
        %v4324 = vpack.c.b16 %v4315, %v4314
        %v4325 = vpack.c.b16 %v4317, %v4316
        %4334 = vmatprep.subr.bf16.mxu0 0
        %4335 = vmatpush1.bf16.msra.mxu0 %v4318
        %4336 = vmatprep.subr.bf16.mxu0 0
        %4337 = vmatpush1.bf16.msra.mxu0 %v4319
        %4338 = vmatprep.subr.bf16.mxu0 0
        %4339 = vmatpush1.bf16.msra.mxu0 %v4320
        %4340 = vmatprep.subr.bf16.mxu0 0
        %4341 = vmatpush1.bf16.msra.mxu0 %v4321
        %4342 = vmatprep.subr.bf16.mxu0 0
        %4343 = vmatpush1.bf16.msra.mxu0 %v4322
        %4344 = vmatprep.subr.bf16.mxu0 0
        %4345 = vmatpush1.bf16.msra.mxu0 %v4323
        %4346 = vmatprep.subr.bf16.mxu0 0
        %4347 = vmatpush1.bf16.msra.mxu0 %v4324
        %4348 = vmatprep.subr.bf16.mxu0 0
        %4349 = vmatpush1.bf16.msra.mxu0 %v4325
        %4350 = vmatprep.subr.bf16.mxu0 0
        %4351 = vmatpush1.bf16.msra.mxu0 0
        %4352 = vmatprep.subr.bf16.mxu0 0
        %4353 = vmatpush1.bf16.msra.mxu0 0
        %4354 = vmatprep.subr.bf16.mxu0 0
        %4355 = vmatpush1.bf16.msra.mxu0 0
        %4356 = vmatprep.subr.bf16.mxu0 0
        %4357 = vmatpush1.bf16.msra.mxu0 0
        %4358 = vmatprep.subr.bf16.mxu0 0
        %4359 = vmatpush1.bf16.msra.mxu0 0
        %4360 = vmatprep.subr.bf16.mxu0 0
        %4361 = vmatpush1.bf16.msra.mxu0 0
        %4362 = vmatprep.subr.bf16.mxu0 0
        %4363 = vmatpush1.bf16.msra.mxu0 0
        %4364 = vmatprep.subr.bf16.mxu0 0
        %4365 = vmatpush1.bf16.msra.mxu0 0
        %4366 = vmatprep.mubr.bf16.mxu0 0
        %4367 = vmatmul.mubr.bf16.gmra.mrb[0].mxu0 %v3843
        %v4368 = vpop.f32.mrb[0].mxu0
        %v4369 = vadd.f32 0.0, %v4368
        %v4370 = vpop.f32.mrb[0].mxu0
        %v4371 = vpop.f32.mrb[0].mxu0
        %v4372 = vadd.f32 0.0, %v4371
        %v4373 = vpop.f32.mrb[0].mxu0
        %4374 = vmatprep.mubr.bf16.mxu0 0
        %4375 = vmatmul.mubr.bf16.gmra.mrb[0].mxu0 %v3844
        %v4376 = vpop.f32.mrb[0].mxu0
        %v4377 = vadd.f32 0.0, %v4376
        %v4378 = vpop.f32.mrb[0].mxu0
        %v4379 = vpop.f32.mrb[0].mxu0
        %v4380 = vadd.f32 0.0, %v4379
        %v4381 = vpop.f32.mrb[0].mxu0
        %4382 = vmatprep.mubr.bf16.mxu0 0
        %4383 = vmatmul.mubr.bf16.gmra.mrb[0].mxu0 %v3845
        %v4384 = vpop.f32.mrb[0].mxu0
        %v4385 = vadd.f32 0.0, %v4384
        %v4386 = vpop.f32.mrb[0].mxu0
        %v4387 = vpop.f32.mrb[0].mxu0
        %v4388 = vadd.f32 0.0, %v4387
        %v4389 = vpop.f32.mrb[0].mxu0
        %4390 = vmatprep.mubr.bf16.mxu0 0
        %4391 = vmatmul.mubr.bf16.gmra.mrb[0].mxu0 %v3846
        %v4392 = vpop.f32.mrb[0].mxu0
        %v4393 = vadd.f32 0.0, %v4392
        %v4394 = vpop.f32.mrb[0].mxu0
        %v4395 = vpop.f32.mrb[0].mxu0
        %v4396 = vadd.f32 0.0, %v4395
        %v4397 = vpop.f32.mrb[0].mxu0
        %4398 = vmatprep.mubr.bf16.mxu0 0
        %4399 = vmatmul.mubr.bf16.gmra.mrb[0].mxu0 %v3847
        %v4400 = vpop.f32.mrb[0].mxu0
        %v4401 = vadd.f32 0.0, %v4400
        %v4402 = vpop.f32.mrb[0].mxu0
        %v4403 = vpop.f32.mrb[0].mxu0
        %v4404 = vadd.f32 0.0, %v4403
        %v4405 = vpop.f32.mrb[0].mxu0
        %4406 = vmatprep.mubr.bf16.mxu0 0
        %4407 = vmatmul.mubr.bf16.gmra.mrb[0].mxu0 %v3848
        %v4408 = vpop.f32.mrb[0].mxu0
        %v4409 = vadd.f32 0.0, %v4408
        %v4410 = vpop.f32.mrb[0].mxu0
        %v4411 = vpop.f32.mrb[0].mxu0
        %v4412 = vadd.f32 0.0, %v4411
        %v4413 = vpop.f32.mrb[0].mxu0
        %4414 = vmatprep.mubr.bf16.mxu0 0
        %4415 = vmatmul.mubr.bf16.gmra.mrb[0].mxu0 %v3849
        %v4416 = vpop.f32.mrb[0].mxu0
        %v4417 = vadd.f32 0.0, %v4416
        %v4418 = vpop.f32.mrb[0].mxu0
        %v4419 = vpop.f32.mrb[0].mxu0
        %v4420 = vadd.f32 0.0, %v4419
        %v4421 = vpop.f32.mrb[0].mxu0
        %4422 = vmatprep.mubr.bf16.mxu0 0
        %4423 = vmatmul.mubr.bf16.gmra.mrb[0].mxu0 %v3850
        %v4424 = vpop.f32.mrb[0].mxu0
        %v4425 = vadd.f32 0.0, %v4424
        %v4426 = vpop.f32.mrb[0].mxu0
        %v4427 = vpop.f32.mrb[0].mxu0
        %v4428 = vadd.f32 0.0, %v4427
        %v4429 = vpop.f32.mrb[0].mxu0
        %4430 = vdwg.mxu0
        %v4431 = vld [vmem:[#allocation4] sm:$0xff]
        %v4432 = vld [vmem:[#allocation4 + $0x8] sm:$0xff]
        %v4433 = vld [vmem:[#allocation4 + $0x10] sm:$0xff]
        %v4434 = vld [vmem:[#allocation4 + $0x18] sm:$0xff]
        %v4435 = vld [vmem:[#allocation4 + $0x20] sm:$0xff]
        %v4436 = vld [vmem:[#allocation4 + $0x28] sm:$0xff]
        %v4437 = vld [vmem:[#allocation4 + $0x30] sm:$0xff]
        %v4438 = vld [vmem:[#allocation4 + $0x38] sm:$0xff]
        %v4439 = vld [vmem:[#allocation4 + $0x40] sm:$0xff]
        %v4440 = vld [vmem:[#allocation4 + $0x48] sm:$0xff]
        %v4441 = vld [vmem:[#allocation4 + $0x50] sm:$0xff]
        %v4442 = vld [vmem:[#allocation4 + $0x58] sm:$0xff]
        %v4443 = vld [vmem:[#allocation4 + $0x60] sm:$0xff]
        %v4444 = vld [vmem:[#allocation4 + $0x68] sm:$0xff]
        %v4445 = vld [vmem:[#allocation4 + $0x70] sm:$0xff]
        %v4446 = vld [vmem:[#allocation4 + $0x78] sm:$0xff]
        %v4447 = vld [vmem:[#allocation4 + $0x80] sm:$0xff]
        %v4448 = vld [vmem:[#allocation4 + $0x88] sm:$0xff]
        %v4449 = vld [vmem:[#allocation4 + $0x90] sm:$0xff]
        %v4450 = vld [vmem:[#allocation4 + $0x98] sm:$0xff]
        %v4451 = vld [vmem:[#allocation4 + $0xa0] sm:$0xff]
        %v4452 = vld [vmem:[#allocation4 + $0xa8] sm:$0xff]
        %v4453 = vld [vmem:[#allocation4 + $0xb0] sm:$0xff]
        %v4454 = vld [vmem:[#allocation4 + $0xb8] sm:$0xff]
        %v4455 = vld [vmem:[#allocation4 + $0xc0] sm:$0xff]
        %v4456 = vld [vmem:[#allocation4 + $0xc8] sm:$0xff]
        %v4457 = vld [vmem:[#allocation4 + $0xd0] sm:$0xff]
        %v4458 = vld [vmem:[#allocation4 + $0xd8] sm:$0xff]
        %v4459 = vld [vmem:[#allocation4 + $0xe0] sm:$0xff]
        %v4460 = vld [vmem:[#allocation4 + $0xe8] sm:$0xff]
        %v4461 = vld [vmem:[#allocation4 + $0xf0] sm:$0xff]
        %v4462 = vld [vmem:[#allocation4 + $0xf8] sm:$0xff]
        %v4463 = vld [vmem:[#allocation4 + $0x100] sm:$0xff]
        %v4464 = vld [vmem:[#allocation4 + $0x108] sm:$0xff]
        %v4465 = vld [vmem:[#allocation4 + $0x110] sm:$0xff]
        %v4466 = vld [vmem:[#allocation4 + $0x118] sm:$0xff]
        %v4467 = vld [vmem:[#allocation4 + $0x120] sm:$0xff]
        %v4468 = vld [vmem:[#allocation4 + $0x128] sm:$0xff]
        %v4469 = vld [vmem:[#allocation4 + $0x130] sm:$0xff]
        %v4470 = vld [vmem:[#allocation4 + $0x138] sm:$0xff]
        %v4471 = vld [vmem:[#allocation4 + $0x140] sm:$0xff]
        %v4472 = vld [vmem:[#allocation4 + $0x148] sm:$0xff]
        %v4473 = vld [vmem:[#allocation4 + $0x150] sm:$0xff]
        %v4474 = vld [vmem:[#allocation4 + $0x158] sm:$0xff]
        %v4475 = vld [vmem:[#allocation4 + $0x160] sm:$0xff]
        %v4476 = vld [vmem:[#allocation4 + $0x168] sm:$0xff]
        %v4477 = vld [vmem:[#allocation4 + $0x170] sm:$0xff]
        %v4478 = vld [vmem:[#allocation4 + $0x178] sm:$0xff]
        %v4479 = vld [vmem:[#allocation4 + $0x180] sm:$0xff]
        %v4480 = vld [vmem:[#allocation4 + $0x188] sm:$0xff]
        %v4481 = vld [vmem:[#allocation4 + $0x190] sm:$0xff]
        %v4482 = vld [vmem:[#allocation4 + $0x198] sm:$0xff]
        %v4483 = vld [vmem:[#allocation4 + $0x1a0] sm:$0xff]
        %v4484 = vld [vmem:[#allocation4 + $0x1a8] sm:$0xff]
        %v4485 = vld [vmem:[#allocation4 + $0x1b0] sm:$0xff]
        %v4486 = vld [vmem:[#allocation4 + $0x1b8] sm:$0xff]
        %v4487 = vld [vmem:[#allocation4 + $0x1c0] sm:$0xff]
        %v4488 = vld [vmem:[#allocation4 + $0x1c8] sm:$0xff]
        %v4489 = vld [vmem:[#allocation4 + $0x1d0] sm:$0xff]
        %v4490 = vld [vmem:[#allocation4 + $0x1d8] sm:$0xff]
        %v4491 = vld [vmem:[#allocation4 + $0x1e0] sm:$0xff]
        %v4492 = vld [vmem:[#allocation4 + $0x1e8] sm:$0xff]
        %v4493 = vld [vmem:[#allocation4 + $0x1f0] sm:$0xff]
        %v4494 = vld [vmem:[#allocation4 + $0x1f8] sm:$0xff]
        %4496 = vset.pattern.permute.xlu0 0
        %4497 = vperm.xlu0 %4496, %v2795
        %v4498 = vpop.permute.xlu0 %4497
        %4501 = vset.pattern.permute.xlu0 0
        %4502 = vperm.xlu0 %4501, %v2797
        %v4503 = vpop.permute.xlu0 %4502
        %4506 = vset.pattern.permute.xlu0 0
        %4507 = vperm.xlu0 %4506, %v2799
        %v4508 = vpop.permute.xlu0 %4507
        %4511 = vset.pattern.permute.xlu0 0
        %4512 = vperm.xlu0 %4511, %v2801
        %v4513 = vpop.permute.xlu0 %4512
        %4516 = vset.pattern.permute.xlu0 0
        %4517 = vperm.xlu0 %4516, %v2803
        %v4518 = vpop.permute.xlu0 %4517
        %4521 = vset.pattern.permute.xlu0 0
        %4522 = vperm.xlu0 %4521, %v2805
        %v4523 = vpop.permute.xlu0 %4522
        %4526 = vset.pattern.permute.xlu0 0
        %4527 = vperm.xlu0 %4526, %v2807
        %v4528 = vpop.permute.xlu0 %4527
        %4531 = vset.pattern.permute.xlu0 0
        %4532 = vperm.xlu0 %4531, %v2809
        %v4533 = vpop.permute.xlu0 %4532
        %4536 = vset.pattern.permute.xlu0 0
        %4537 = vperm.xlu0 %4536, %v2811
        %v4538 = vpop.permute.xlu0 %4537
        %4541 = vset.pattern.permute.xlu0 0
        %4542 = vperm.xlu0 %4541, %v2813
        %v4543 = vpop.permute.xlu0 %4542
        %4546 = vset.pattern.permute.xlu0 0
        %4547 = vperm.xlu0 %4546, %v2815
        %v4548 = vpop.permute.xlu0 %4547
        %4551 = vset.pattern.permute.xlu0 0
        %4552 = vperm.xlu0 %4551, %v2817
        %v4553 = vpop.permute.xlu0 %4552
        %4556 = vset.pattern.permute.xlu0 0
        %4557 = vperm.xlu0 %4556, %v2819
        %v4558 = vpop.permute.xlu0 %4557
        %4561 = vset.pattern.permute.xlu0 0
        %4562 = vperm.xlu0 %4561, %v2821
        %v4563 = vpop.permute.xlu0 %4562
        %4566 = vset.pattern.permute.xlu0 0
        %4567 = vperm.xlu0 %4566, %v2823
        %v4568 = vpop.permute.xlu0 %4567
        %4571 = vset.pattern.permute.xlu0 0
        %4572 = vperm.xlu0 %4571, %v2825
        %v4573 = vpop.permute.xlu0 %4572
        %4576 = vset.pattern.permute.xlu0 0
        %4577 = vperm.xlu0 %4576, %v2827
        %v4578 = vpop.permute.xlu0 %4577
        %4581 = vset.pattern.permute.xlu0 0
        %4582 = vperm.xlu0 %4581, %v2829
        %v4583 = vpop.permute.xlu0 %4582
        %4586 = vset.pattern.permute.xlu0 0
        %4587 = vperm.xlu0 %4586, %v2831
        %v4588 = vpop.permute.xlu0 %4587
        %4591 = vset.pattern.permute.xlu0 0
        %4592 = vperm.xlu0 %4591, %v2833
        %v4593 = vpop.permute.xlu0 %4592
        %4596 = vset.pattern.permute.xlu0 0
        %4597 = vperm.xlu0 %4596, %v2835
        %v4598 = vpop.permute.xlu0 %4597
        %4601 = vset.pattern.permute.xlu0 0
        %4602 = vperm.xlu0 %4601, %v2837
        %v4603 = vpop.permute.xlu0 %4602
        %4606 = vset.pattern.permute.xlu0 0
        %4607 = vperm.xlu0 %4606, %v2839
        %v4608 = vpop.permute.xlu0 %4607
        %4611 = vset.pattern.permute.xlu0 0
        %4612 = vperm.xlu0 %4611, %v2841
        %v4613 = vpop.permute.xlu0 %4612
        %4616 = vset.pattern.permute.xlu0 0
        %4617 = vperm.xlu0 %4616, %v2843
        %v4618 = vpop.permute.xlu0 %4617
        %4621 = vset.pattern.permute.xlu0 0
        %4622 = vperm.xlu0 %4621, %v2845
        %v4623 = vpop.permute.xlu0 %4622
        %4626 = vset.pattern.permute.xlu0 0
        %4627 = vperm.xlu0 %4626, %v2847
        %v4628 = vpop.permute.xlu0 %4627
        %4631 = vset.pattern.permute.xlu0 0
        %4632 = vperm.xlu0 %4631, %v2849
        %v4633 = vpop.permute.xlu0 %4632
        %4636 = vset.pattern.permute.xlu0 0
        %4637 = vperm.xlu0 %4636, %v2851
        %v4638 = vpop.permute.xlu0 %4637
        %4641 = vset.pattern.permute.xlu0 0
        %4642 = vperm.xlu0 %4641, %v2853
        %v4643 = vpop.permute.xlu0 %4642
        %4646 = vset.pattern.permute.xlu0 0
        %4647 = vperm.xlu0 %4646, %v2855
        %v4648 = vpop.permute.xlu0 %4647
        %4651 = vset.pattern.permute.xlu0 0
        %4652 = vperm.xlu0 %4651, %v2857
        %v4653 = vpop.permute.xlu0 %4652
        %4656 = vset.pattern.permute.xlu0 0
        %4657 = vperm.xlu0 %4656, %v2859
        %v4658 = vpop.permute.xlu0 %4657
        %4661 = vset.pattern.permute.xlu0 0
        %4662 = vperm.xlu0 %4661, %v2861
        %v4663 = vpop.permute.xlu0 %4662
        %4666 = vset.pattern.permute.xlu0 0
        %4667 = vperm.xlu0 %4666, %v2863
        %v4668 = vpop.permute.xlu0 %4667
        %4671 = vset.pattern.permute.xlu0 0
        %4672 = vperm.xlu0 %4671, %v2865
        %v4673 = vpop.permute.xlu0 %4672
        %4676 = vset.pattern.permute.xlu0 0
        %4677 = vperm.xlu0 %4676, %v2867
        %v4678 = vpop.permute.xlu0 %4677
        %4681 = vset.pattern.permute.xlu0 0
        %4682 = vperm.xlu0 %4681, %v2869
        %v4683 = vpop.permute.xlu0 %4682
        %4686 = vset.pattern.permute.xlu0 0
        %4687 = vperm.xlu0 %4686, %v2871
        %v4688 = vpop.permute.xlu0 %4687
        %4691 = vset.pattern.permute.xlu0 0
        %4692 = vperm.xlu0 %4691, %v2873
        %v4693 = vpop.permute.xlu0 %4692
        %4696 = vset.pattern.permute.xlu0 0
        %4697 = vperm.xlu0 %4696, %v2875
        %v4698 = vpop.permute.xlu0 %4697
        %4701 = vset.pattern.permute.xlu0 0
        %4702 = vperm.xlu0 %4701, %v2877
        %v4703 = vpop.permute.xlu0 %4702
        %4706 = vset.pattern.permute.xlu0 0
        %4707 = vperm.xlu0 %4706, %v2879
        %v4708 = vpop.permute.xlu0 %4707
        %4711 = vset.pattern.permute.xlu0 0
        %4712 = vperm.xlu0 %4711, %v2881
        %v4713 = vpop.permute.xlu0 %4712
        %4716 = vset.pattern.permute.xlu0 0
        %4717 = vperm.xlu0 %4716, %v2883
        %v4718 = vpop.permute.xlu0 %4717
        %4721 = vset.pattern.permute.xlu0 0
        %4722 = vperm.xlu0 %4721, %v2885
        %v4723 = vpop.permute.xlu0 %4722
        %4726 = vset.pattern.permute.xlu0 0
        %4727 = vperm.xlu0 %4726, %v2887
        %v4728 = vpop.permute.xlu0 %4727
        %4731 = vset.pattern.permute.xlu0 0
        %4732 = vperm.xlu0 %4731, %v2889
        %v4733 = vpop.permute.xlu0 %4732
        %4736 = vset.pattern.permute.xlu0 0
        %4737 = vperm.xlu0 %4736, %v2891
        %v4738 = vpop.permute.xlu0 %4737
        %4741 = vset.pattern.permute.xlu0 0
        %4742 = vperm.xlu0 %4741, %v2893
        %v4743 = vpop.permute.xlu0 %4742
        %4746 = vset.pattern.permute.xlu0 0
        %4747 = vperm.xlu0 %4746, %v2895
        %v4748 = vpop.permute.xlu0 %4747
        %4751 = vset.pattern.permute.xlu0 0
        %4752 = vperm.xlu0 %4751, %v2897
        %v4753 = vpop.permute.xlu0 %4752
        %4756 = vset.pattern.permute.xlu0 0
        %4757 = vperm.xlu0 %4756, %v2899
        %v4758 = vpop.permute.xlu0 %4757
        %4761 = vset.pattern.permute.xlu0 0
        %4762 = vperm.xlu0 %4761, %v2901
        %v4763 = vpop.permute.xlu0 %4762
        %4766 = vset.pattern.permute.xlu0 0
        %4767 = vperm.xlu0 %4766, %v2903
        %v4768 = vpop.permute.xlu0 %4767
        %4771 = vset.pattern.permute.xlu0 0
        %4772 = vperm.xlu0 %4771, %v2905
        %v4773 = vpop.permute.xlu0 %4772
        %4776 = vset.pattern.permute.xlu0 0
        %4777 = vperm.xlu0 %4776, %v2907
        %v4778 = vpop.permute.xlu0 %4777
        %4781 = vset.pattern.permute.xlu0 0
        %4782 = vperm.xlu0 %4781, %v2909
        %v4783 = vpop.permute.xlu0 %4782
        %4786 = vset.pattern.permute.xlu0 0
        %4787 = vperm.xlu0 %4786, %v2911
        %v4788 = vpop.permute.xlu0 %4787
        %4791 = vset.pattern.permute.xlu0 0
        %4792 = vperm.xlu0 %4791, %v2913
        %v4793 = vpop.permute.xlu0 %4792
        %4796 = vset.pattern.permute.xlu0 0
        %4797 = vperm.xlu0 %4796, %v2915
        %v4798 = vpop.permute.xlu0 %4797
        %4801 = vset.pattern.permute.xlu0 0
        %4802 = vperm.xlu0 %4801, %v2917
        %v4803 = vpop.permute.xlu0 %4802
        %4806 = vset.pattern.permute.xlu0 0
        %4807 = vperm.xlu0 %4806, %v2919
        %v4808 = vpop.permute.xlu0 %4807
        %4811 = vset.pattern.permute.xlu0 0
        %4812 = vperm.xlu0 %4811, %v2921
        %v4813 = vpop.permute.xlu0 %4812
        %v4815 = vmul.f32 %v4498, %v4431
        %v4816 = vmul.f32 %v4503, %v4432
        %v4817 = vmul.f32 %v4508, %v4433
        %v4818 = vmul.f32 %v4513, %v4434
        %v4819 = vmul.f32 %v4518, %v4435
        %v4820 = vmul.f32 %v4523, %v4436
        %v4821 = vmul.f32 %v4528, %v4437
        %v4822 = vmul.f32 %v4533, %v4438
        %v4823 = vmul.f32 %v4538, %v4439
        %v4824 = vmul.f32 %v4543, %v4440
        %v4825 = vmul.f32 %v4548, %v4441
        %v4826 = vmul.f32 %v4553, %v4442
        %v4827 = vmul.f32 %v4558, %v4443
        %v4828 = vmul.f32 %v4563, %v4444
        %v4829 = vmul.f32 %v4568, %v4445
        %v4830 = vmul.f32 %v4573, %v4446
        %v4831 = vmul.f32 %v4578, %v4447
        %v4832 = vmul.f32 %v4583, %v4448
        %v4833 = vmul.f32 %v4588, %v4449
        %v4834 = vmul.f32 %v4593, %v4450
        %v4835 = vmul.f32 %v4598, %v4451
        %v4836 = vmul.f32 %v4603, %v4452
        %v4837 = vmul.f32 %v4608, %v4453
        %v4838 = vmul.f32 %v4613, %v4454
        %v4839 = vmul.f32 %v4618, %v4455
        %v4840 = vmul.f32 %v4623, %v4456
        %v4841 = vmul.f32 %v4628, %v4457
        %v4842 = vmul.f32 %v4633, %v4458
        %v4843 = vmul.f32 %v4638, %v4459
        %v4844 = vmul.f32 %v4643, %v4460
        %v4845 = vmul.f32 %v4648, %v4461
        %v4846 = vmul.f32 %v4653, %v4462
        %v4847 = vmul.f32 %v4658, %v4463
        %v4848 = vmul.f32 %v4663, %v4464
        %v4849 = vmul.f32 %v4668, %v4465
        %v4850 = vmul.f32 %v4673, %v4466
        %v4851 = vmul.f32 %v4678, %v4467
        %v4852 = vmul.f32 %v4683, %v4468
        %v4853 = vmul.f32 %v4688, %v4469
        %v4854 = vmul.f32 %v4693, %v4470
        %v4855 = vmul.f32 %v4698, %v4471
        %v4856 = vmul.f32 %v4703, %v4472
        %v4857 = vmul.f32 %v4708, %v4473
        %v4858 = vmul.f32 %v4713, %v4474
        %v4859 = vmul.f32 %v4718, %v4475
        %v4860 = vmul.f32 %v4723, %v4476
        %v4861 = vmul.f32 %v4728, %v4477
        %v4862 = vmul.f32 %v4733, %v4478
        %v4863 = vmul.f32 %v4738, %v4479
        %v4864 = vmul.f32 %v4743, %v4480
        %v4865 = vmul.f32 %v4748, %v4481
        %v4866 = vmul.f32 %v4753, %v4482
        %v4867 = vmul.f32 %v4758, %v4483
        %v4868 = vmul.f32 %v4763, %v4484
        %v4869 = vmul.f32 %v4768, %v4485
        %v4870 = vmul.f32 %v4773, %v4486
        %v4871 = vmul.f32 %v4778, %v4487
        %v4872 = vmul.f32 %v4783, %v4488
        %v4873 = vmul.f32 %v4788, %v4489
        %v4874 = vmul.f32 %v4793, %v4490
        %v4875 = vmul.f32 %v4798, %v4491
        %v4876 = vmul.f32 %v4803, %v4492
        %v4877 = vmul.f32 %v4808, %v4493
        %v4878 = vmul.f32 %v4813, %v4494
        %v4879 = vadd.f32 %v4815, %v3934
        %v4880 = vadd.f32 %v4816, %v3937
        %v4881 = vadd.f32 %v4817, %v3942
        %v4882 = vadd.f32 %v4818, %v3945
        %v4883 = vadd.f32 %v4819, %v3950
        %v4884 = vadd.f32 %v4820, %v3953
        %v4885 = vadd.f32 %v4821, %v3958
        %v4886 = vadd.f32 %v4822, %v3961
        %v4887 = vadd.f32 %v4823, %v3966
        %v4888 = vadd.f32 %v4824, %v3969
        %v4889 = vadd.f32 %v4825, %v3974
        %v4890 = vadd.f32 %v4826, %v3977
        %v4891 = vadd.f32 %v4827, %v3982
        %v4892 = vadd.f32 %v4828, %v3985
        %v4893 = vadd.f32 %v4829, %v3990
        %v4894 = vadd.f32 %v4830, %v3993
        %v4895 = vadd.f32 %v4831, %v4079
        %v4896 = vadd.f32 %v4832, %v4082
        %v4897 = vadd.f32 %v4833, %v4087
        %v4898 = vadd.f32 %v4834, %v4090
        %v4899 = vadd.f32 %v4835, %v4095
        %v4900 = vadd.f32 %v4836, %v4098
        %v4901 = vadd.f32 %v4837, %v4103
        %v4902 = vadd.f32 %v4838, %v4106
        %v4903 = vadd.f32 %v4839, %v4111
        %v4904 = vadd.f32 %v4840, %v4114
        %v4905 = vadd.f32 %v4841, %v4119
        %v4906 = vadd.f32 %v4842, %v4122
        %v4907 = vadd.f32 %v4843, %v4127
        %v4908 = vadd.f32 %v4844, %v4130
        %v4909 = vadd.f32 %v4845, %v4135
        %v4910 = vadd.f32 %v4846, %v4138
        %v4911 = vadd.f32 %v4847, %v4224
        %v4912 = vadd.f32 %v4848, %v4227
        %v4913 = vadd.f32 %v4849, %v4232
        %v4914 = vadd.f32 %v4850, %v4235
        %v4915 = vadd.f32 %v4851, %v4240
        %v4916 = vadd.f32 %v4852, %v4243
        %v4917 = vadd.f32 %v4853, %v4248
        %v4918 = vadd.f32 %v4854, %v4251
        %v4919 = vadd.f32 %v4855, %v4256
        %v4920 = vadd.f32 %v4856, %v4259
        %v4921 = vadd.f32 %v4857, %v4264
        %v4922 = vadd.f32 %v4858, %v4267
        %v4923 = vadd.f32 %v4859, %v4272
        %v4924 = vadd.f32 %v4860, %v4275
        %v4925 = vadd.f32 %v4861, %v4280
        %v4926 = vadd.f32 %v4862, %v4283
        %v4927 = vadd.f32 %v4863, %v4369
        %v4928 = vadd.f32 %v4864, %v4372
        %v4929 = vadd.f32 %v4865, %v4377
        %v4930 = vadd.f32 %v4866, %v4380
        %v4931 = vadd.f32 %v4867, %v4385
        %v4932 = vadd.f32 %v4868, %v4388
        %v4933 = vadd.f32 %v4869, %v4393
        %v4934 = vadd.f32 %v4870, %v4396
        %v4935 = vadd.f32 %v4871, %v4401
        %v4936 = vadd.f32 %v4872, %v4404
        %v4937 = vadd.f32 %v4873, %v4409
        %v4938 = vadd.f32 %v4874, %v4412
        %v4939 = vadd.f32 %v4875, %v4417
        %v4940 = vadd.f32 %v4876, %v4420
        %v4941 = vadd.f32 %v4877, %v4425
        %v4942 = vadd.f32 %v4878, %v4428
        %4943 = vst.msk [vmem:[#allocation4] sm:$0xff] %vm1653, %v4879
        %4944 = vst.msk [vmem:[#allocation4 + $0x8] sm:$0xff] %vm1653, %v4880
        %4945 = vst.msk [vmem:[#allocation4 + $0x10] sm:$0xff] %vm1653, %v4881
        %4946 = vst.msk [vmem:[#allocation4 + $0x18] sm:$0xff] %vm1653, %v4882
        %4947 = vst.msk [vmem:[#allocation4 + $0x20] sm:$0xff] %vm1653, %v4883
        %4948 = vst.msk [vmem:[#allocation4 + $0x28] sm:$0xff] %vm1653, %v4884
        %4949 = vst.msk [vmem:[#allocation4 + $0x30] sm:$0xff] %vm1653, %v4885
        %4950 = vst.msk [vmem:[#allocation4 + $0x38] sm:$0xff] %vm1653, %v4886
        %4951 = vst.msk [vmem:[#allocation4 + $0x40] sm:$0xff] %vm1653, %v4887
        %4952 = vst.msk [vmem:[#allocation4 + $0x48] sm:$0xff] %vm1653, %v4888
        %4953 = vst.msk [vmem:[#allocation4 + $0x50] sm:$0xff] %vm1653, %v4889
        %4954 = vst.msk [vmem:[#allocation4 + $0x58] sm:$0xff] %vm1653, %v4890
        %4955 = vst.msk [vmem:[#allocation4 + $0x60] sm:$0xff] %vm1653, %v4891
        %4956 = vst.msk [vmem:[#allocation4 + $0x68] sm:$0xff] %vm1653, %v4892
        %4957 = vst.msk [vmem:[#allocation4 + $0x70] sm:$0xff] %vm1653, %v4893
        %4958 = vst.msk [vmem:[#allocation4 + $0x78] sm:$0xff] %vm1653, %v4894
        %4959 = vst.msk [vmem:[#allocation4 + $0x80] sm:$0xff] %vm1653, %v4895
        %4960 = vst.msk [vmem:[#allocation4 + $0x88] sm:$0xff] %vm1653, %v4896
        %4961 = vst.msk [vmem:[#allocation4 + $0x90] sm:$0xff] %vm1653, %v4897
        %4962 = vst.msk [vmem:[#allocation4 + $0x98] sm:$0xff] %vm1653, %v4898
        %4963 = vst.msk [vmem:[#allocation4 + $0xa0] sm:$0xff] %vm1653, %v4899
        %4964 = vst.msk [vmem:[#allocation4 + $0xa8] sm:$0xff] %vm1653, %v4900
        %4965 = vst.msk [vmem:[#allocation4 + $0xb0] sm:$0xff] %vm1653, %v4901
        %4966 = vst.msk [vmem:[#allocation4 + $0xb8] sm:$0xff] %vm1653, %v4902
        %4967 = vst.msk [vmem:[#allocation4 + $0xc0] sm:$0xff] %vm1653, %v4903
        %4968 = vst.msk [vmem:[#allocation4 + $0xc8] sm:$0xff] %vm1653, %v4904
        %4969 = vst.msk [vmem:[#allocation4 + $0xd0] sm:$0xff] %vm1653, %v4905
        %4970 = vst.msk [vmem:[#allocation4 + $0xd8] sm:$0xff] %vm1653, %v4906
        %4971 = vst.msk [vmem:[#allocation4 + $0xe0] sm:$0xff] %vm1653, %v4907
        %4972 = vst.msk [vmem:[#allocation4 + $0xe8] sm:$0xff] %vm1653, %v4908
        %4973 = vst.msk [vmem:[#allocation4 + $0xf0] sm:$0xff] %vm1653, %v4909
        %4974 = vst.msk [vmem:[#allocation4 + $0xf8] sm:$0xff] %vm1653, %v4910
        %4975 = vst.msk [vmem:[#allocation4 + $0x100] sm:$0xff] %vm1653, %v4911
        %4976 = vst.msk [vmem:[#allocation4 + $0x108] sm:$0xff] %vm1653, %v4912
        %4977 = vst.msk [vmem:[#allocation4 + $0x110] sm:$0xff] %vm1653, %v4913
        %4978 = vst.msk [vmem:[#allocation4 + $0x118] sm:$0xff] %vm1653, %v4914
        %4979 = vst.msk [vmem:[#allocation4 + $0x120] sm:$0xff] %vm1653, %v4915
        %4980 = vst.msk [vmem:[#allocation4 + $0x128] sm:$0xff] %vm1653, %v4916
        %4981 = vst.msk [vmem:[#allocation4 + $0x130] sm:$0xff] %vm1653, %v4917
        %4982 = vst.msk [vmem:[#allocation4 + $0x138] sm:$0xff] %vm1653, %v4918
        %4983 = vst.msk [vmem:[#allocation4 + $0x140] sm:$0xff] %vm1653, %v4919
        %4984 = vst.msk [vmem:[#allocation4 + $0x148] sm:$0xff] %vm1653, %v4920
        %4985 = vst.msk [vmem:[#allocation4 + $0x150] sm:$0xff] %vm1653, %v4921
        %4986 = vst.msk [vmem:[#allocation4 + $0x158] sm:$0xff] %vm1653, %v4922
        %4987 = vst.msk [vmem:[#allocation4 + $0x160] sm:$0xff] %vm1653, %v4923
        %4988 = vst.msk [vmem:[#allocation4 + $0x168] sm:$0xff] %vm1653, %v4924
        %4989 = vst.msk [vmem:[#allocation4 + $0x170] sm:$0xff] %vm1653, %v4925
        %4990 = vst.msk [vmem:[#allocation4 + $0x178] sm:$0xff] %vm1653, %v4926
        %4991 = vst.msk [vmem:[#allocation4 + $0x180] sm:$0xff] %vm1653, %v4927
        %4992 = vst.msk [vmem:[#allocation4 + $0x188] sm:$0xff] %vm1653, %v4928
        %4993 = vst.msk [vmem:[#allocation4 + $0x190] sm:$0xff] %vm1653, %v4929
        %4994 = vst.msk [vmem:[#allocation4 + $0x198] sm:$0xff] %vm1653, %v4930
        %4995 = vst.msk [vmem:[#allocation4 + $0x1a0] sm:$0xff] %vm1653, %v4931
        %4996 = vst.msk [vmem:[#allocation4 + $0x1a8] sm:$0xff] %vm1653, %v4932
        %4997 = vst.msk [vmem:[#allocation4 + $0x1b0] sm:$0xff] %vm1653, %v4933
        %4998 = vst.msk [vmem:[#allocation4 + $0x1b8] sm:$0xff] %vm1653, %v4934
        %4999 = vst.msk [vmem:[#allocation4 + $0x1c0] sm:$0xff] %vm1653, %v4935
        %5000 = vst.msk [vmem:[#allocation4 + $0x1c8] sm:$0xff] %vm1653, %v4936
        %5001 = vst.msk [vmem:[#allocation4 + $0x1d0] sm:$0xff] %vm1653, %v4937
        %5002 = vst.msk [vmem:[#allocation4 + $0x1d8] sm:$0xff] %vm1653, %v4938
        %5003 = vst.msk [vmem:[#allocation4 + $0x1e0] sm:$0xff] %vm1653, %v4939
        %5004 = vst.msk [vmem:[#allocation4 + $0x1e8] sm:$0xff] %vm1653, %v4940
        %5005 = vst.msk [vmem:[#allocation4 + $0x1f0] sm:$0xff] %vm1653, %v4941
        %5006 = vst.msk [vmem:[#allocation4 + $0x1f8] sm:$0xff] %vm1653, %v4942
        %5007 = vst.msk [vmem:[#allocation2] sm:$0xff] %vm3754, %v2666
        %5008 = vst.msk [vmem:[#allocation2 + $0x8] sm:$0xff] %vm3754, %v2667
        %5009 = vst.msk [vmem:[#allocation2 + $0x10] sm:$0xff] %vm3754, %v2668
        %5010 = vst.msk [vmem:[#allocation2 + $0x18] sm:$0xff] %vm3754, %v2669
        %5011 = vst.msk [vmem:[#allocation2 + $0x20] sm:$0xff] %vm3754, %v2670
        %5012 = vst.msk [vmem:[#allocation2 + $0x28] sm:$0xff] %vm3754, %v2671
        %5013 = vst.msk [vmem:[#allocation2 + $0x30] sm:$0xff] %vm3754, %v2672
        %5014 = vst.msk [vmem:[#allocation2 + $0x38] sm:$0xff] %vm3754, %v2673
        %5015 = vst.msk [vmem:[#allocation2 + $0x40] sm:$0xff] %vm3754, %v2674
        %5016 = vst.msk [vmem:[#allocation2 + $0x48] sm:$0xff] %vm3754, %v2675
        %5017 = vst.msk [vmem:[#allocation2 + $0x50] sm:$0xff] %vm3754, %v2676
        %5018 = vst.msk [vmem:[#allocation2 + $0x58] sm:$0xff] %vm3754, %v2677
        %5019 = vst.msk [vmem:[#allocation2 + $0x60] sm:$0xff] %vm3754, %v2678
        %5020 = vst.msk [vmem:[#allocation2 + $0x68] sm:$0xff] %vm3754, %v2679
        %5021 = vst.msk [vmem:[#allocation2 + $0x70] sm:$0xff] %vm3754, %v2680
        %5022 = vst.msk [vmem:[#allocation2 + $0x78] sm:$0xff] %vm3754, %v2681
        %5023 = vst.msk [vmem:[#allocation2 + $0x80] sm:$0xff] %vm3754, %v2682
        %5024 = vst.msk [vmem:[#allocation2 + $0x88] sm:$0xff] %vm3754, %v2683
        %5025 = vst.msk [vmem:[#allocation2 + $0x90] sm:$0xff] %vm3754, %v2684
        %5026 = vst.msk [vmem:[#allocation2 + $0x98] sm:$0xff] %vm3754, %v2685
        %5027 = vst.msk [vmem:[#allocation2 + $0xa0] sm:$0xff] %vm3754, %v2686
        %5028 = vst.msk [vmem:[#allocation2 + $0xa8] sm:$0xff] %vm3754, %v2687
        %5029 = vst.msk [vmem:[#allocation2 + $0xb0] sm:$0xff] %vm3754, %v2688
        %5030 = vst.msk [vmem:[#allocation2 + $0xb8] sm:$0xff] %vm3754, %v2689
        %5031 = vst.msk [vmem:[#allocation2 + $0xc0] sm:$0xff] %vm3754, %v2690
        %5032 = vst.msk [vmem:[#allocation2 + $0xc8] sm:$0xff] %vm3754, %v2691
        %5033 = vst.msk [vmem:[#allocation2 + $0xd0] sm:$0xff] %vm3754, %v2692
        %5034 = vst.msk [vmem:[#allocation2 + $0xd8] sm:$0xff] %vm3754, %v2693
        %5035 = vst.msk [vmem:[#allocation2 + $0xe0] sm:$0xff] %vm3754, %v2694
        %5036 = vst.msk [vmem:[#allocation2 + $0xe8] sm:$0xff] %vm3754, %v2695
        %5037 = vst.msk [vmem:[#allocation2 + $0xf0] sm:$0xff] %vm3754, %v2696
        %5038 = vst.msk [vmem:[#allocation2 + $0xf8] sm:$0xff] %vm3754, %v2697
        %5039 = vst.msk [vmem:[#allocation2 + $0x100] sm:$0xff] %vm3754, %v2698
        %5040 = vst.msk [vmem:[#allocation2 + $0x108] sm:$0xff] %vm3754, %v2699
        %5041 = vst.msk [vmem:[#allocation2 + $0x110] sm:$0xff] %vm3754, %v2700
        %5042 = vst.msk [vmem:[#allocation2 + $0x118] sm:$0xff] %vm3754, %v2701
        %5043 = vst.msk [vmem:[#allocation2 + $0x120] sm:$0xff] %vm3754, %v2702
        %5044 = vst.msk [vmem:[#allocation2 + $0x128] sm:$0xff] %vm3754, %v2703
        %5045 = vst.msk [vmem:[#allocation2 + $0x130] sm:$0xff] %vm3754, %v2704
        %5046 = vst.msk [vmem:[#allocation2 + $0x138] sm:$0xff] %vm3754, %v2705
        %5047 = vst.msk [vmem:[#allocation2 + $0x140] sm:$0xff] %vm3754, %v2706
        %5048 = vst.msk [vmem:[#allocation2 + $0x148] sm:$0xff] %vm3754, %v2707
        %5049 = vst.msk [vmem:[#allocation2 + $0x150] sm:$0xff] %vm3754, %v2708
        %5050 = vst.msk [vmem:[#allocation2 + $0x158] sm:$0xff] %vm3754, %v2709
        %5051 = vst.msk [vmem:[#allocation2 + $0x160] sm:$0xff] %vm3754, %v2710
        %5052 = vst.msk [vmem:[#allocation2 + $0x168] sm:$0xff] %vm3754, %v2711
        %5053 = vst.msk [vmem:[#allocation2 + $0x170] sm:$0xff] %vm3754, %v2712
        %5054 = vst.msk [vmem:[#allocation2 + $0x178] sm:$0xff] %vm3754, %v2713
        %5055 = vst.msk [vmem:[#allocation2 + $0x180] sm:$0xff] %vm3754, %v2714
        %5056 = vst.msk [vmem:[#allocation2 + $0x188] sm:$0xff] %vm3754, %v2715
        %5057 = vst.msk [vmem:[#allocation2 + $0x190] sm:$0xff] %vm3754, %v2716
        %5058 = vst.msk [vmem:[#allocation2 + $0x198] sm:$0xff] %vm3754, %v2717
        %5059 = vst.msk [vmem:[#allocation2 + $0x1a0] sm:$0xff] %vm3754, %v2718
        %5060 = vst.msk [vmem:[#allocation2 + $0x1a8] sm:$0xff] %vm3754, %v2719
        %5061 = vst.msk [vmem:[#allocation2 + $0x1b0] sm:$0xff] %vm3754, %v2720
        %5062 = vst.msk [vmem:[#allocation2 + $0x1b8] sm:$0xff] %vm3754, %v2721
        %5063 = vst.msk [vmem:[#allocation2 + $0x1c0] sm:$0xff] %vm3754, %v2722
        %5064 = vst.msk [vmem:[#allocation2 + $0x1c8] sm:$0xff] %vm3754, %v2723
        %5065 = vst.msk [vmem:[#allocation2 + $0x1d0] sm:$0xff] %vm3754, %v2724
        %5066 = vst.msk [vmem:[#allocation2 + $0x1d8] sm:$0xff] %vm3754, %v2725
        %5067 = vst.msk [vmem:[#allocation2 + $0x1e0] sm:$0xff] %vm3754, %v2726
        %5068 = vst.msk [vmem:[#allocation2 + $0x1e8] sm:$0xff] %vm3754, %v2727
        %5069 = vst.msk [vmem:[#allocation2 + $0x1f0] sm:$0xff] %vm3754, %v2728
        %5070 = vst.msk [vmem:[#allocation2 + $0x1f8] sm:$0xff] %vm3754, %v2729
        %p5071 = scmp.eq.s32.totalorder %s26, 1
        // Predicated region
        $region168: #{attention_pallas.3} parent=150 // pred_check
          %p5072 = pneg %p5071
        $region169: #{attention_pallas.3} parent=150 // pred_check_branch
          %5074 = sbr.rel (%p5072) target = $region171
        $region170: #{attention_pallas.3} parent=150 // pred_region
          %v5075 = vld [vmem:[#allocation3] sm:$0xff]
          %v5076 = vld [vmem:[#allocation3 + $0x8] sm:$0xff]
          %v5077 = vld [vmem:[#allocation3 + $0x10] sm:$0xff]
          %v5078 = vld [vmem:[#allocation3 + $0x18] sm:$0xff]
          %v5079 = vld [vmem:[#allocation3 + $0x20] sm:$0xff]
          %v5080 = vld [vmem:[#allocation3 + $0x28] sm:$0xff]
          %v5081 = vld [vmem:[#allocation3 + $0x30] sm:$0xff]
          %v5082 = vld [vmem:[#allocation3 + $0x38] sm:$0xff]
          %v5083 = vld [vmem:[#allocation3 + $0x40] sm:$0xff]
          %v5084 = vld [vmem:[#allocation3 + $0x48] sm:$0xff]
          %v5085 = vld [vmem:[#allocation3 + $0x50] sm:$0xff]
          %v5086 = vld [vmem:[#allocation3 + $0x58] sm:$0xff]
          %v5087 = vld [vmem:[#allocation3 + $0x60] sm:$0xff]
          %v5088 = vld [vmem:[#allocation3 + $0x68] sm:$0xff]
          %v5089 = vld [vmem:[#allocation3 + $0x70] sm:$0xff]
          %v5090 = vld [vmem:[#allocation3 + $0x78] sm:$0xff]
          %v5091 = vld [vmem:[#allocation3 + $0x80] sm:$0xff]
          %v5092 = vld [vmem:[#allocation3 + $0x88] sm:$0xff]
          %v5093 = vld [vmem:[#allocation3 + $0x90] sm:$0xff]
          %v5094 = vld [vmem:[#allocation3 + $0x98] sm:$0xff]
          %v5095 = vld [vmem:[#allocation3 + $0xa0] sm:$0xff]
          %v5096 = vld [vmem:[#allocation3 + $0xa8] sm:$0xff]
          %v5097 = vld [vmem:[#allocation3 + $0xb0] sm:$0xff]
          %v5098 = vld [vmem:[#allocation3 + $0xb8] sm:$0xff]
          %v5099 = vld [vmem:[#allocation3 + $0xc0] sm:$0xff]
          %v5100 = vld [vmem:[#allocation3 + $0xc8] sm:$0xff]
          %v5101 = vld [vmem:[#allocation3 + $0xd0] sm:$0xff]
          %v5102 = vld [vmem:[#allocation3 + $0xd8] sm:$0xff]
          %v5103 = vld [vmem:[#allocation3 + $0xe0] sm:$0xff]
          %v5104 = vld [vmem:[#allocation3 + $0xe8] sm:$0xff]
          %v5105 = vld [vmem:[#allocation3 + $0xf0] sm:$0xff]
          %v5106 = vld [vmem:[#allocation3 + $0xf8] sm:$0xff]
          %v5107 = vld [vmem:[#allocation3 + $0x100] sm:$0xff]
          %v5108 = vld [vmem:[#allocation3 + $0x108] sm:$0xff]
          %v5109 = vld [vmem:[#allocation3 + $0x110] sm:$0xff]
          %v5110 = vld [vmem:[#allocation3 + $0x118] sm:$0xff]
          %v5111 = vld [vmem:[#allocation3 + $0x120] sm:$0xff]
          %v5112 = vld [vmem:[#allocation3 + $0x128] sm:$0xff]
          %v5113 = vld [vmem:[#allocation3 + $0x130] sm:$0xff]
          %v5114 = vld [vmem:[#allocation3 + $0x138] sm:$0xff]
          %v5115 = vld [vmem:[#allocation3 + $0x140] sm:$0xff]
          %v5116 = vld [vmem:[#allocation3 + $0x148] sm:$0xff]
          %v5117 = vld [vmem:[#allocation3 + $0x150] sm:$0xff]
          %v5118 = vld [vmem:[#allocation3 + $0x158] sm:$0xff]
          %v5119 = vld [vmem:[#allocation3 + $0x160] sm:$0xff]
          %v5120 = vld [vmem:[#allocation3 + $0x168] sm:$0xff]
          %v5121 = vld [vmem:[#allocation3 + $0x170] sm:$0xff]
          %v5122 = vld [vmem:[#allocation3 + $0x178] sm:$0xff]
          %v5123 = vld [vmem:[#allocation3 + $0x180] sm:$0xff]
          %v5124 = vld [vmem:[#allocation3 + $0x188] sm:$0xff]
          %v5125 = vld [vmem:[#allocation3 + $0x190] sm:$0xff]
          %v5126 = vld [vmem:[#allocation3 + $0x198] sm:$0xff]
          %v5127 = vld [vmem:[#allocation3 + $0x1a0] sm:$0xff]
          %v5128 = vld [vmem:[#allocation3 + $0x1a8] sm:$0xff]
          %v5129 = vld [vmem:[#allocation3 + $0x1b0] sm:$0xff]
          %v5130 = vld [vmem:[#allocation3 + $0x1b8] sm:$0xff]
          %v5131 = vld [vmem:[#allocation3 + $0x1c0] sm:$0xff]
          %v5132 = vld [vmem:[#allocation3 + $0x1c8] sm:$0xff]
          %v5133 = vld [vmem:[#allocation3 + $0x1d0] sm:$0xff]
          %v5134 = vld [vmem:[#allocation3 + $0x1d8] sm:$0xff]
          %v5135 = vld [vmem:[#allocation3 + $0x1e0] sm:$0xff]
          %v5136 = vld [vmem:[#allocation3 + $0x1e8] sm:$0xff]
          %v5137 = vld [vmem:[#allocation3 + $0x1f0] sm:$0xff]
          %v5138 = vld [vmem:[#allocation3 + $0x1f8] sm:$0xff]
          %v5139 = vrcp.pop %v5075
          %v5140 = vrcp.pop %v5076
          %v5141 = vrcp.pop %v5077
          %v5142 = vrcp.pop %v5078
          %v5143 = vrcp.pop %v5079
          %v5144 = vrcp.pop %v5080
          %v5145 = vrcp.pop %v5081
          %v5146 = vrcp.pop %v5082
          %v5147 = vrcp.pop %v5083
          %v5148 = vrcp.pop %v5084
          %v5149 = vrcp.pop %v5085
          %v5150 = vrcp.pop %v5086
          %v5151 = vrcp.pop %v5087
          %v5152 = vrcp.pop %v5088
          %v5153 = vrcp.pop %v5089
          %v5154 = vrcp.pop %v5090
          %v5155 = vrcp.pop %v5091
          %v5156 = vrcp.pop %v5092
          %v5157 = vrcp.pop %v5093
          %v5158 = vrcp.pop %v5094
          %v5159 = vrcp.pop %v5095
          %v5160 = vrcp.pop %v5096
          %v5161 = vrcp.pop %v5097
          %v5162 = vrcp.pop %v5098
          %v5163 = vrcp.pop %v5099
          %v5164 = vrcp.pop %v5100
          %v5165 = vrcp.pop %v5101
          %v5166 = vrcp.pop %v5102
          %v5167 = vrcp.pop %v5103
          %v5168 = vrcp.pop %v5104
          %v5169 = vrcp.pop %v5105
          %v5170 = vrcp.pop %v5106
          %v5171 = vrcp.pop %v5107
          %v5172 = vrcp.pop %v5108
          %v5173 = vrcp.pop %v5109
          %v5174 = vrcp.pop %v5110
          %v5175 = vrcp.pop %v5111
          %v5176 = vrcp.pop %v5112
          %v5177 = vrcp.pop %v5113
          %v5178 = vrcp.pop %v5114
          %v5179 = vrcp.pop %v5115
          %v5180 = vrcp.pop %v5116
          %v5181 = vrcp.pop %v5117
          %v5182 = vrcp.pop %v5118
          %v5183 = vrcp.pop %v5119
          %v5184 = vrcp.pop %v5120
          %v5185 = vrcp.pop %v5121
          %v5186 = vrcp.pop %v5122
          %v5187 = vrcp.pop %v5123
          %v5188 = vrcp.pop %v5124
          %v5189 = vrcp.pop %v5125
          %v5190 = vrcp.pop %v5126
          %v5191 = vrcp.pop %v5127
          %v5192 = vrcp.pop %v5128
          %v5193 = vrcp.pop %v5129
          %v5194 = vrcp.pop %v5130
          %v5195 = vrcp.pop %v5131
          %v5196 = vrcp.pop %v5132
          %v5197 = vrcp.pop %v5133
          %v5198 = vrcp.pop %v5134
          %v5199 = vrcp.pop %v5135
          %v5200 = vrcp.pop %v5136
          %v5201 = vrcp.pop %v5137
          %v5202 = vrcp.pop %v5138
          %v5203 = vld [vmem:[#allocation4] sm:$0xff]
          %v5204 = vld [vmem:[#allocation4 + $0x8] sm:$0xff]
          %v5205 = vld [vmem:[#allocation4 + $0x10] sm:$0xff]
          %v5206 = vld [vmem:[#allocation4 + $0x18] sm:$0xff]
          %v5207 = vld [vmem:[#allocation4 + $0x20] sm:$0xff]
          %v5208 = vld [vmem:[#allocation4 + $0x28] sm:$0xff]
          %v5209 = vld [vmem:[#allocation4 + $0x30] sm:$0xff]
          %v5210 = vld [vmem:[#allocation4 + $0x38] sm:$0xff]
          %v5211 = vld [vmem:[#allocation4 + $0x40] sm:$0xff]
          %v5212 = vld [vmem:[#allocation4 + $0x48] sm:$0xff]
          %v5213 = vld [vmem:[#allocation4 + $0x50] sm:$0xff]
          %v5214 = vld [vmem:[#allocation4 + $0x58] sm:$0xff]
          %v5215 = vld [vmem:[#allocation4 + $0x60] sm:$0xff]
          %v5216 = vld [vmem:[#allocation4 + $0x68] sm:$0xff]
          %v5217 = vld [vmem:[#allocation4 + $0x70] sm:$0xff]
          %v5218 = vld [vmem:[#allocation4 + $0x78] sm:$0xff]
          %v5219 = vld [vmem:[#allocation4 + $0x80] sm:$0xff]
          %v5220 = vld [vmem:[#allocation4 + $0x88] sm:$0xff]
          %v5221 = vld [vmem:[#allocation4 + $0x90] sm:$0xff]
          %v5222 = vld [vmem:[#allocation4 + $0x98] sm:$0xff]
          %v5223 = vld [vmem:[#allocation4 + $0xa0] sm:$0xff]
          %v5224 = vld [vmem:[#allocation4 + $0xa8] sm:$0xff]
          %v5225 = vld [vmem:[#allocation4 + $0xb0] sm:$0xff]
          %v5226 = vld [vmem:[#allocation4 + $0xb8] sm:$0xff]
          %v5227 = vld [vmem:[#allocation4 + $0xc0] sm:$0xff]
          %v5228 = vld [vmem:[#allocation4 + $0xc8] sm:$0xff]
          %v5229 = vld [vmem:[#allocation4 + $0xd0] sm:$0xff]
          %v5230 = vld [vmem:[#allocation4 + $0xd8] sm:$0xff]
          %v5231 = vld [vmem:[#allocation4 + $0xe0] sm:$0xff]
          %v5232 = vld [vmem:[#allocation4 + $0xe8] sm:$0xff]
          %v5233 = vld [vmem:[#allocation4 + $0xf0] sm:$0xff]
          %v5234 = vld [vmem:[#allocation4 + $0xf8] sm:$0xff]
          %v5235 = vld [vmem:[#allocation4 + $0x100] sm:$0xff]
          %v5236 = vld [vmem:[#allocation4 + $0x108] sm:$0xff]
          %v5237 = vld [vmem:[#allocation4 + $0x110] sm:$0xff]
          %v5238 = vld [vmem:[#allocation4 + $0x118] sm:$0xff]
          %v5239 = vld [vmem:[#allocation4 + $0x120] sm:$0xff]
          %v5240 = vld [vmem:[#allocation4 + $0x128] sm:$0xff]
          %v5241 = vld [vmem:[#allocation4 + $0x130] sm:$0xff]
          %v5242 = vld [vmem:[#allocation4 + $0x138] sm:$0xff]
          %v5243 = vld [vmem:[#allocation4 + $0x140] sm:$0xff]
          %v5244 = vld [vmem:[#allocation4 + $0x148] sm:$0xff]
          %v5245 = vld [vmem:[#allocation4 + $0x150] sm:$0xff]
          %v5246 = vld [vmem:[#allocation4 + $0x158] sm:$0xff]
          %v5247 = vld [vmem:[#allocation4 + $0x160] sm:$0xff]
          %v5248 = vld [vmem:[#allocation4 + $0x168] sm:$0xff]
          %v5249 = vld [vmem:[#allocation4 + $0x170] sm:$0xff]
          %v5250 = vld [vmem:[#allocation4 + $0x178] sm:$0xff]
          %v5251 = vld [vmem:[#allocation4 + $0x180] sm:$0xff]
          %v5252 = vld [vmem:[#allocation4 + $0x188] sm:$0xff]
          %v5253 = vld [vmem:[#allocation4 + $0x190] sm:$0xff]
          %v5254 = vld [vmem:[#allocation4 + $0x198] sm:$0xff]
          %v5255 = vld [vmem:[#allocation4 + $0x1a0] sm:$0xff]
          %v5256 = vld [vmem:[#allocation4 + $0x1a8] sm:$0xff]
          %v5257 = vld [vmem:[#allocation4 + $0x1b0] sm:$0xff]
          %v5258 = vld [vmem:[#allocation4 + $0x1b8] sm:$0xff]
          %v5259 = vld [vmem:[#allocation4 + $0x1c0] sm:$0xff]
          %v5260 = vld [vmem:[#allocation4 + $0x1c8] sm:$0xff]
          %v5261 = vld [vmem:[#allocation4 + $0x1d0] sm:$0xff]
          %v5262 = vld [vmem:[#allocation4 + $0x1d8] sm:$0xff]
          %v5263 = vld [vmem:[#allocation4 + $0x1e0] sm:$0xff]
          %v5264 = vld [vmem:[#allocation4 + $0x1e8] sm:$0xff]
          %v5265 = vld [vmem:[#allocation4 + $0x1f0] sm:$0xff]
          %v5266 = vld [vmem:[#allocation4 + $0x1f8] sm:$0xff]
          %5268 = vset.pattern.permute.xlu0 0
          %5269 = vperm.xlu0 %5268, %v5139
          %v5270 = vpop.permute.xlu0 %5269
          %5273 = vset.pattern.permute.xlu0 0
          %5274 = vperm.xlu0 %5273, %v5140
          %v5275 = vpop.permute.xlu0 %5274
          %5278 = vset.pattern.permute.xlu0 0
          %5279 = vperm.xlu0 %5278, %v5141
          %v5280 = vpop.permute.xlu0 %5279
          %5283 = vset.pattern.permute.xlu0 0
          %5284 = vperm.xlu0 %5283, %v5142
          %v5285 = vpop.permute.xlu0 %5284
          %5288 = vset.pattern.permute.xlu0 0
          %5289 = vperm.xlu0 %5288, %v5143
          %v5290 = vpop.permute.xlu0 %5289
          %5293 = vset.pattern.permute.xlu0 0
          %5294 = vperm.xlu0 %5293, %v5144
          %v5295 = vpop.permute.xlu0 %5294
          %5298 = vset.pattern.permute.xlu0 0
          %5299 = vperm.xlu0 %5298, %v5145
          %v5300 = vpop.permute.xlu0 %5299
          %5303 = vset.pattern.permute.xlu0 0
          %5304 = vperm.xlu0 %5303, %v5146
          %v5305 = vpop.permute.xlu0 %5304
          %5308 = vset.pattern.permute.xlu0 0
          %5309 = vperm.xlu0 %5308, %v5147
          %v5310 = vpop.permute.xlu0 %5309
          %5313 = vset.pattern.permute.xlu0 0
          %5314 = vperm.xlu0 %5313, %v5148
          %v5315 = vpop.permute.xlu0 %5314
          %5318 = vset.pattern.permute.xlu0 0
          %5319 = vperm.xlu0 %5318, %v5149
          %v5320 = vpop.permute.xlu0 %5319
          %5323 = vset.pattern.permute.xlu0 0
          %5324 = vperm.xlu0 %5323, %v5150
          %v5325 = vpop.permute.xlu0 %5324
          %5328 = vset.pattern.permute.xlu0 0
          %5329 = vperm.xlu0 %5328, %v5151
          %v5330 = vpop.permute.xlu0 %5329
          %5333 = vset.pattern.permute.xlu0 0
          %5334 = vperm.xlu0 %5333, %v5152
          %v5335 = vpop.permute.xlu0 %5334
          %5338 = vset.pattern.permute.xlu0 0
          %5339 = vperm.xlu0 %5338, %v5153
          %v5340 = vpop.permute.xlu0 %5339
          %5343 = vset.pattern.permute.xlu0 0
          %5344 = vperm.xlu0 %5343, %v5154
          %v5345 = vpop.permute.xlu0 %5344
          %5348 = vset.pattern.permute.xlu0 0
          %5349 = vperm.xlu0 %5348, %v5155
          %v5350 = vpop.permute.xlu0 %5349
          %5353 = vset.pattern.permute.xlu0 0
          %5354 = vperm.xlu0 %5353, %v5156
          %v5355 = vpop.permute.xlu0 %5354
          %5358 = vset.pattern.permute.xlu0 0
          %5359 = vperm.xlu0 %5358, %v5157
          %v5360 = vpop.permute.xlu0 %5359
          %5363 = vset.pattern.permute.xlu0 0
          %5364 = vperm.xlu0 %5363, %v5158
          %v5365 = vpop.permute.xlu0 %5364
          %5368 = vset.pattern.permute.xlu0 0
          %5369 = vperm.xlu0 %5368, %v5159
          %v5370 = vpop.permute.xlu0 %5369
          %5373 = vset.pattern.permute.xlu0 0
          %5374 = vperm.xlu0 %5373, %v5160
          %v5375 = vpop.permute.xlu0 %5374
          %5378 = vset.pattern.permute.xlu0 0
          %5379 = vperm.xlu0 %5378, %v5161
          %v5380 = vpop.permute.xlu0 %5379
          %5383 = vset.pattern.permute.xlu0 0
          %5384 = vperm.xlu0 %5383, %v5162
          %v5385 = vpop.permute.xlu0 %5384
          %5388 = vset.pattern.permute.xlu0 0
          %5389 = vperm.xlu0 %5388, %v5163
          %v5390 = vpop.permute.xlu0 %5389
          %5393 = vset.pattern.permute.xlu0 0
          %5394 = vperm.xlu0 %5393, %v5164
          %v5395 = vpop.permute.xlu0 %5394
          %5398 = vset.pattern.permute.xlu0 0
          %5399 = vperm.xlu0 %5398, %v5165
          %v5400 = vpop.permute.xlu0 %5399
          %5403 = vset.pattern.permute.xlu0 0
          %5404 = vperm.xlu0 %5403, %v5166
          %v5405 = vpop.permute.xlu0 %5404
          %5408 = vset.pattern.permute.xlu0 0
          %5409 = vperm.xlu0 %5408, %v5167
          %v5410 = vpop.permute.xlu0 %5409
          %5413 = vset.pattern.permute.xlu0 0
          %5414 = vperm.xlu0 %5413, %v5168
          %v5415 = vpop.permute.xlu0 %5414
          %5418 = vset.pattern.permute.xlu0 0
          %5419 = vperm.xlu0 %5418, %v5169
          %v5420 = vpop.permute.xlu0 %5419
          %5423 = vset.pattern.permute.xlu0 0
          %5424 = vperm.xlu0 %5423, %v5170
          %v5425 = vpop.permute.xlu0 %5424
          %5428 = vset.pattern.permute.xlu0 0
          %5429 = vperm.xlu0 %5428, %v5171
          %v5430 = vpop.permute.xlu0 %5429
          %5433 = vset.pattern.permute.xlu0 0
          %5434 = vperm.xlu0 %5433, %v5172
          %v5435 = vpop.permute.xlu0 %5434
          %5438 = vset.pattern.permute.xlu0 0
          %5439 = vperm.xlu0 %5438, %v5173
          %v5440 = vpop.permute.xlu0 %5439
          %5443 = vset.pattern.permute.xlu0 0
          %5444 = vperm.xlu0 %5443, %v5174
          %v5445 = vpop.permute.xlu0 %5444
          %5448 = vset.pattern.permute.xlu0 0
          %5449 = vperm.xlu0 %5448, %v5175
          %v5450 = vpop.permute.xlu0 %5449
          %5453 = vset.pattern.permute.xlu0 0
          %5454 = vperm.xlu0 %5453, %v5176
          %v5455 = vpop.permute.xlu0 %5454
          %5458 = vset.pattern.permute.xlu0 0
          %5459 = vperm.xlu0 %5458, %v5177
          %v5460 = vpop.permute.xlu0 %5459
          %5463 = vset.pattern.permute.xlu0 0
          %5464 = vperm.xlu0 %5463, %v5178
          %v5465 = vpop.permute.xlu0 %5464
          %5468 = vset.pattern.permute.xlu0 0
          %5469 = vperm.xlu0 %5468, %v5179
          %v5470 = vpop.permute.xlu0 %5469
          %5473 = vset.pattern.permute.xlu0 0
          %5474 = vperm.xlu0 %5473, %v5180
          %v5475 = vpop.permute.xlu0 %5474
          %5478 = vset.pattern.permute.xlu0 0
          %5479 = vperm.xlu0 %5478, %v5181
          %v5480 = vpop.permute.xlu0 %5479
          %5483 = vset.pattern.permute.xlu0 0
          %5484 = vperm.xlu0 %5483, %v5182
          %v5485 = vpop.permute.xlu0 %5484
          %5488 = vset.pattern.permute.xlu0 0
          %5489 = vperm.xlu0 %5488, %v5183
          %v5490 = vpop.permute.xlu0 %5489
          %5493 = vset.pattern.permute.xlu0 0
          %5494 = vperm.xlu0 %5493, %v5184
          %v5495 = vpop.permute.xlu0 %5494
          %5498 = vset.pattern.permute.xlu0 0
          %5499 = vperm.xlu0 %5498, %v5185
          %v5500 = vpop.permute.xlu0 %5499
          %5503 = vset.pattern.permute.xlu0 0
          %5504 = vperm.xlu0 %5503, %v5186
          %v5505 = vpop.permute.xlu0 %5504
          %5508 = vset.pattern.permute.xlu0 0
          %5509 = vperm.xlu0 %5508, %v5187
          %v5510 = vpop.permute.xlu0 %5509
          %5513 = vset.pattern.permute.xlu0 0
          %5514 = vperm.xlu0 %5513, %v5188
          %v5515 = vpop.permute.xlu0 %5514
          %5518 = vset.pattern.permute.xlu0 0
          %5519 = vperm.xlu0 %5518, %v5189
          %v5520 = vpop.permute.xlu0 %5519
          %5523 = vset.pattern.permute.xlu0 0
          %5524 = vperm.xlu0 %5523, %v5190
          %v5525 = vpop.permute.xlu0 %5524
          %5528 = vset.pattern.permute.xlu0 0
          %5529 = vperm.xlu0 %5528, %v5191
          %v5530 = vpop.permute.xlu0 %5529
          %5533 = vset.pattern.permute.xlu0 0
          %5534 = vperm.xlu0 %5533, %v5192
          %v5535 = vpop.permute.xlu0 %5534
          %5538 = vset.pattern.permute.xlu0 0
          %5539 = vperm.xlu0 %5538, %v5193
          %v5540 = vpop.permute.xlu0 %5539
          %5543 = vset.pattern.permute.xlu0 0
          %5544 = vperm.xlu0 %5543, %v5194
          %v5545 = vpop.permute.xlu0 %5544
          %5548 = vset.pattern.permute.xlu0 0
          %5549 = vperm.xlu0 %5548, %v5195
          %v5550 = vpop.permute.xlu0 %5549
          %5553 = vset.pattern.permute.xlu0 0
          %5554 = vperm.xlu0 %5553, %v5196
          %v5555 = vpop.permute.xlu0 %5554
          %5558 = vset.pattern.permute.xlu0 0
          %5559 = vperm.xlu0 %5558, %v5197
          %v5560 = vpop.permute.xlu0 %5559
          %5563 = vset.pattern.permute.xlu0 0
          %5564 = vperm.xlu0 %5563, %v5198
          %v5565 = vpop.permute.xlu0 %5564
          %5568 = vset.pattern.permute.xlu0 0
          %5569 = vperm.xlu0 %5568, %v5199
          %v5570 = vpop.permute.xlu0 %5569
          %5573 = vset.pattern.permute.xlu0 0
          %5574 = vperm.xlu0 %5573, %v5200
          %v5575 = vpop.permute.xlu0 %5574
          %5578 = vset.pattern.permute.xlu0 0
          %5579 = vperm.xlu0 %5578, %v5201
          %v5580 = vpop.permute.xlu0 %5579
          %5583 = vset.pattern.permute.xlu0 0
          %5584 = vperm.xlu0 %5583, %v5202
          %v5585 = vpop.permute.xlu0 %5584
          %v5587 = vmul.f32 %v5203, %v5270
          %v5588 = vmul.f32 %v5204, %v5275
          %v5589 = vmul.f32 %v5205, %v5280
          %v5590 = vmul.f32 %v5206, %v5285
          %v5591 = vmul.f32 %v5207, %v5290
          %v5592 = vmul.f32 %v5208, %v5295
          %v5593 = vmul.f32 %v5209, %v5300
          %v5594 = vmul.f32 %v5210, %v5305
          %v5595 = vmul.f32 %v5211, %v5310
          %v5596 = vmul.f32 %v5212, %v5315
          %v5597 = vmul.f32 %v5213, %v5320
          %v5598 = vmul.f32 %v5214, %v5325
          %v5599 = vmul.f32 %v5215, %v5330
          %v5600 = vmul.f32 %v5216, %v5335
          %v5601 = vmul.f32 %v5217, %v5340
          %v5602 = vmul.f32 %v5218, %v5345
          %v5603 = vmul.f32 %v5219, %v5350
          %v5604 = vmul.f32 %v5220, %v5355
          %v5605 = vmul.f32 %v5221, %v5360
          %v5606 = vmul.f32 %v5222, %v5365
          %v5607 = vmul.f32 %v5223, %v5370
          %v5608 = vmul.f32 %v5224, %v5375
          %v5609 = vmul.f32 %v5225, %v5380
          %v5610 = vmul.f32 %v5226, %v5385
          %v5611 = vmul.f32 %v5227, %v5390
          %v5612 = vmul.f32 %v5228, %v5395
          %v5613 = vmul.f32 %v5229, %v5400
          %v5614 = vmul.f32 %v5230, %v5405
          %v5615 = vmul.f32 %v5231, %v5410
          %v5616 = vmul.f32 %v5232, %v5415
          %v5617 = vmul.f32 %v5233, %v5420
          %v5618 = vmul.f32 %v5234, %v5425
          %v5619 = vmul.f32 %v5235, %v5430
          %v5620 = vmul.f32 %v5236, %v5435
          %v5621 = vmul.f32 %v5237, %v5440
          %v5622 = vmul.f32 %v5238, %v5445
          %v5623 = vmul.f32 %v5239, %v5450
          %v5624 = vmul.f32 %v5240, %v5455
          %v5625 = vmul.f32 %v5241, %v5460
          %v5626 = vmul.f32 %v5242, %v5465
          %v5627 = vmul.f32 %v5243, %v5470
          %v5628 = vmul.f32 %v5244, %v5475
          %v5629 = vmul.f32 %v5245, %v5480
          %v5630 = vmul.f32 %v5246, %v5485
          %v5631 = vmul.f32 %v5247, %v5490
          %v5632 = vmul.f32 %v5248, %v5495
          %v5633 = vmul.f32 %v5249, %v5500
          %v5634 = vmul.f32 %v5250, %v5505
          %v5635 = vmul.f32 %v5251, %v5510
          %v5636 = vmul.f32 %v5252, %v5515
          %v5637 = vmul.f32 %v5253, %v5520
          %v5638 = vmul.f32 %v5254, %v5525
          %v5639 = vmul.f32 %v5255, %v5530
          %v5640 = vmul.f32 %v5256, %v5535
          %v5641 = vmul.f32 %v5257, %v5540
          %v5642 = vmul.f32 %v5258, %v5545
          %v5643 = vmul.f32 %v5259, %v5550
          %v5644 = vmul.f32 %v5260, %v5555
          %v5645 = vmul.f32 %v5261, %v5560
          %v5646 = vmul.f32 %v5262, %v5565
          %v5647 = vmul.f32 %v5263, %v5570
          %v5648 = vmul.f32 %v5264, %v5575
          %v5649 = vmul.f32 %v5265, %v5580
          %v5650 = vmul.f32 %v5266, %v5585
          %5667 = vrot.lane.b32.xlu0 %v5603, 64
          %v5668 = vpop.permute.xlu0 %5667
          %5669 = vrot.lane.b32.xlu0 %v5604, 64
          %v5670 = vpop.permute.xlu0 %5669
          %5671 = vrot.lane.b32.xlu0 %v5605, 64
          %v5672 = vpop.permute.xlu0 %5671
          %5673 = vrot.lane.b32.xlu0 %v5606, 64
          %v5674 = vpop.permute.xlu0 %5673
          %5675 = vrot.lane.b32.xlu0 %v5607, 64
          %v5676 = vpop.permute.xlu0 %5675
          %5677 = vrot.lane.b32.xlu0 %v5608, 64
          %v5678 = vpop.permute.xlu0 %5677
          %5679 = vrot.lane.b32.xlu0 %v5609, 64
          %v5680 = vpop.permute.xlu0 %5679
          %5681 = vrot.lane.b32.xlu0 %v5610, 64
          %v5682 = vpop.permute.xlu0 %5681
          %5683 = vrot.lane.b32.xlu0 %v5611, 64
          %v5684 = vpop.permute.xlu0 %5683
          %5685 = vrot.lane.b32.xlu0 %v5612, 64
          %v5686 = vpop.permute.xlu0 %5685
          %5687 = vrot.lane.b32.xlu0 %v5613, 64
          %v5688 = vpop.permute.xlu0 %5687
          %5689 = vrot.lane.b32.xlu0 %v5614, 64
          %v5690 = vpop.permute.xlu0 %5689
          %5691 = vrot.lane.b32.xlu0 %v5615, 64
          %v5692 = vpop.permute.xlu0 %5691
          %5693 = vrot.lane.b32.xlu0 %v5616, 64
          %v5694 = vpop.permute.xlu0 %5693
          %5695 = vrot.lane.b32.xlu0 %v5617, 64
          %v5696 = vpop.permute.xlu0 %5695
          %5697 = vrot.lane.b32.xlu0 %v5618, 64
          %v5698 = vpop.permute.xlu0 %5697
          %5731 = vrot.lane.b32.xlu0 %v5635, 64
          %v5732 = vpop.permute.xlu0 %5731
          %5733 = vrot.lane.b32.xlu0 %v5636, 64
          %v5734 = vpop.permute.xlu0 %5733
          %5735 = vrot.lane.b32.xlu0 %v5637, 64
          %v5736 = vpop.permute.xlu0 %5735
          %5737 = vrot.lane.b32.xlu0 %v5638, 64
          %v5738 = vpop.permute.xlu0 %5737
          %5739 = vrot.lane.b32.xlu0 %v5639, 64
          %v5740 = vpop.permute.xlu0 %5739
          %5741 = vrot.lane.b32.xlu0 %v5640, 64
          %v5742 = vpop.permute.xlu0 %5741
          %5743 = vrot.lane.b32.xlu0 %v5641, 64
          %v5744 = vpop.permute.xlu0 %5743
          %5745 = vrot.lane.b32.xlu0 %v5642, 64
          %v5746 = vpop.permute.xlu0 %5745
          %5747 = vrot.lane.b32.xlu0 %v5643, 64
          %v5748 = vpop.permute.xlu0 %5747
          %5749 = vrot.lane.b32.xlu0 %v5644, 64
          %v5750 = vpop.permute.xlu0 %5749
          %5751 = vrot.lane.b32.xlu0 %v5645, 64
          %v5752 = vpop.permute.xlu0 %5751
          %5753 = vrot.lane.b32.xlu0 %v5646, 64
          %v5754 = vpop.permute.xlu0 %5753
          %5755 = vrot.lane.b32.xlu0 %v5647, 64
          %v5756 = vpop.permute.xlu0 %5755
          %5757 = vrot.lane.b32.xlu0 %v5648, 64
          %v5758 = vpop.permute.xlu0 %5757
          %5759 = vrot.lane.b32.xlu0 %v5649, 64
          %v5760 = vpop.permute.xlu0 %5759
          %5761 = vrot.lane.b32.xlu0 %v5650, 64
          %v5762 = vpop.permute.xlu0 %5761
          %v5779 = vsel %vm1653, %v5587, %v5668
          %v5780 = vsel %vm1653, %v5588, %v5670
          %v5781 = vsel %vm1653, %v5589, %v5672
          %v5782 = vsel %vm1653, %v5590, %v5674
          %v5783 = vsel %vm1653, %v5591, %v5676
          %v5784 = vsel %vm1653, %v5592, %v5678
          %v5785 = vsel %vm1653, %v5593, %v5680
          %v5786 = vsel %vm1653, %v5594, %v5682
          %v5787 = vsel %vm1653, %v5595, %v5684
          %v5788 = vsel %vm1653, %v5596, %v5686
          %v5789 = vsel %vm1653, %v5597, %v5688
          %v5790 = vsel %vm1653, %v5598, %v5690
          %v5791 = vsel %vm1653, %v5599, %v5692
          %v5792 = vsel %vm1653, %v5600, %v5694
          %v5793 = vsel %vm1653, %v5601, %v5696
          %v5794 = vsel %vm1653, %v5602, %v5698
          %v5795 = vsel %vm1653, %v5619, %v5732
          %v5796 = vsel %vm1653, %v5620, %v5734
          %v5797 = vsel %vm1653, %v5621, %v5736
          %v5798 = vsel %vm1653, %v5622, %v5738
          %v5799 = vsel %vm1653, %v5623, %v5740
          %v5800 = vsel %vm1653, %v5624, %v5742
          %v5801 = vsel %vm1653, %v5625, %v5744
          %v5802 = vsel %vm1653, %v5626, %v5746
          %v5803 = vsel %vm1653, %v5627, %v5748
          %v5804 = vsel %vm1653, %v5628, %v5750
          %v5805 = vsel %vm1653, %v5629, %v5752
          %v5806 = vsel %vm1653, %v5630, %v5754
          %v5807 = vsel %vm1653, %v5631, %v5756
          %v5808 = vsel %vm1653, %v5632, %v5758
          %v5809 = vsel %vm1653, %v5633, %v5760
          %v5810 = vsel %vm1653, %v5634, %v5762
          %v5811 = vpack.c.bf16 %v5780, %v5779
          %v5812 = vpack.c.bf16 %v5796, %v5795
          %v5813 = vpack.c.bf16 %v5782, %v5781
          %v5814 = vpack.c.bf16 %v5798, %v5797
          %v5815 = vpack.c.bf16 %v5784, %v5783
          %v5816 = vpack.c.bf16 %v5800, %v5799
          %v5817 = vpack.c.bf16 %v5786, %v5785
          %v5818 = vpack.c.bf16 %v5802, %v5801
          %v5819 = vpack.c.bf16 %v5788, %v5787
          %v5820 = vpack.c.bf16 %v5804, %v5803
          %v5821 = vpack.c.bf16 %v5790, %v5789
          %v5822 = vpack.c.bf16 %v5806, %v5805
          %v5823 = vpack.c.bf16 %v5792, %v5791
          %v5824 = vpack.c.bf16 %v5808, %v5807
          %v5825 = vpack.c.bf16 %v5794, %v5793
          %v5826 = vpack.c.bf16 %v5810, %v5809
          %v5827 = vld [vmem:[%s3] sm:$0xff]
          %v5828 = vld [vmem:[%s3 + $0x8] sm:$0xff]
          %v5829 = vld [vmem:[%s3 + $0x10] sm:$0xff]
          %v5830 = vld [vmem:[%s3 + $0x18] sm:$0xff]
          %v5831 = vld [vmem:[%s3 + $0x20] sm:$0xff]
          %v5832 = vld [vmem:[%s3 + $0x28] sm:$0xff]
          %v5833 = vld [vmem:[%s3 + $0x30] sm:$0xff]
          %v5834 = vld [vmem:[%s3 + $0x38] sm:$0xff]
          %v5835 = vld [vmem:[%s3 + $0x40] sm:$0xff]
          %v5836 = vld [vmem:[%s3 + $0x48] sm:$0xff]
          %v5837 = vld [vmem:[%s3 + $0x50] sm:$0xff]
          %v5838 = vld [vmem:[%s3 + $0x58] sm:$0xff]
          %v5839 = vld [vmem:[%s3 + $0x60] sm:$0xff]
          %v5840 = vld [vmem:[%s3 + $0x68] sm:$0xff]
          %v5841 = vld [vmem:[%s3 + $0x70] sm:$0xff]
          %v5842 = vld [vmem:[%s3 + $0x78] sm:$0xff]
          %v5843 = vld [vmem:[%s3 + $0x80] sm:$0xff]
          %v5844 = vld [vmem:[%s3 + $0x88] sm:$0xff]
          %v5845 = vld [vmem:[%s3 + $0x90] sm:$0xff]
          %v5846 = vld [vmem:[%s3 + $0x98] sm:$0xff]
          %v5847 = vld [vmem:[%s3 + $0xa0] sm:$0xff]
          %v5848 = vld [vmem:[%s3 + $0xa8] sm:$0xff]
          %v5849 = vld [vmem:[%s3 + $0xb0] sm:$0xff]
          %v5850 = vld [vmem:[%s3 + $0xb8] sm:$0xff]
          %v5851 = vld [vmem:[%s3 + $0xc0] sm:$0xff]
          %v5852 = vld [vmem:[%s3 + $0xc8] sm:$0xff]
          %v5853 = vld [vmem:[%s3 + $0xd0] sm:$0xff]
          %v5854 = vld [vmem:[%s3 + $0xd8] sm:$0xff]
          %v5855 = vld [vmem:[%s3 + $0xe0] sm:$0xff]
          %v5856 = vld [vmem:[%s3 + $0xe8] sm:$0xff]
          %v5857 = vld [vmem:[%s3 + $0xf0] sm:$0xff]
          %v5858 = vld [vmem:[%s3 + $0xf8] sm:$0xff]
          %v5859 = vld [vmem:[%s4] sm:$0x3]
          %v5861 = vlaneseq
          %v5862 = vshrl.u32 %v5861, 7
          %v5863 = vsub.s32 0, %v5862
          %v5864 = vrot.slane %v5859, %v5863
          %v5865 = vlaneseq
          %v5866 = vshrl.u32 %v5865, 7
          %v5867 = vsub.s32 1, %v5866
          %v5868 = vrot.slane %v5859, %v5867
          %v5903 = vunpack.c.l.b16 %v5827
          %v5904 = vunpack.c.h.b16 %v5827
          %v5905 = vunpack.c.l.b16 %v5828
          %v5906 = vunpack.c.h.b16 %v5828
          %v5907 = vunpack.c.l.b16 %v5829
          %v5908 = vunpack.c.h.b16 %v5829
          %v5909 = vunpack.c.l.b16 %v5830
          %v5910 = vunpack.c.h.b16 %v5830
          %v5911 = vunpack.c.l.b16 %v5831
          %v5912 = vunpack.c.h.b16 %v5831
          %v5913 = vunpack.c.l.b16 %v5832
          %v5914 = vunpack.c.h.b16 %v5832
          %v5915 = vunpack.c.l.b16 %v5833
          %v5916 = vunpack.c.h.b16 %v5833
          %v5917 = vunpack.c.l.b16 %v5834
          %v5918 = vunpack.c.h.b16 %v5834
          %v5919 = vunpack.c.l.b16 %v5835
          %v5920 = vunpack.c.h.b16 %v5835
          %v5921 = vunpack.c.l.b16 %v5836
          %v5922 = vunpack.c.h.b16 %v5836
          %v5923 = vunpack.c.l.b16 %v5837
          %v5924 = vunpack.c.h.b16 %v5837
          %v5925 = vunpack.c.l.b16 %v5838
          %v5926 = vunpack.c.h.b16 %v5838
          %v5927 = vunpack.c.l.b16 %v5839
          %v5928 = vunpack.c.h.b16 %v5839
          %v5929 = vunpack.c.l.b16 %v5840
          %v5930 = vunpack.c.h.b16 %v5840
          %v5931 = vunpack.c.l.b16 %v5841
          %v5932 = vunpack.c.h.b16 %v5841
          %v5933 = vunpack.c.l.b16 %v5842
          %v5934 = vunpack.c.h.b16 %v5842
          %v5935 = vunpack.c.l.b16 %v5843
          %v5936 = vunpack.c.h.b16 %v5843
          %v5937 = vunpack.c.l.b16 %v5844
          %v5938 = vunpack.c.h.b16 %v5844
          %v5939 = vunpack.c.l.b16 %v5845
          %v5940 = vunpack.c.h.b16 %v5845
          %v5941 = vunpack.c.l.b16 %v5846
          %v5942 = vunpack.c.h.b16 %v5846
          %v5943 = vunpack.c.l.b16 %v5847
          %v5944 = vunpack.c.h.b16 %v5847
          %v5945 = vunpack.c.l.b16 %v5848
          %v5946 = vunpack.c.h.b16 %v5848
          %v5947 = vunpack.c.l.b16 %v5849
          %v5948 = vunpack.c.h.b16 %v5849
          %v5949 = vunpack.c.l.b16 %v5850
          %v5950 = vunpack.c.h.b16 %v5850
          %v5951 = vunpack.c.l.b16 %v5851
          %v5952 = vunpack.c.h.b16 %v5851
          %v5953 = vunpack.c.l.b16 %v5852
          %v5954 = vunpack.c.h.b16 %v5852
          %v5955 = vunpack.c.l.b16 %v5853
          %v5956 = vunpack.c.h.b16 %v5853
          %v5957 = vunpack.c.l.b16 %v5854
          %v5958 = vunpack.c.h.b16 %v5854
          %v5959 = vunpack.c.l.b16 %v5855
          %v5960 = vunpack.c.h.b16 %v5855
          %v5961 = vunpack.c.l.b16 %v5856
          %v5962 = vunpack.c.h.b16 %v5856
          %v5963 = vunpack.c.l.b16 %v5857
          %v5964 = vunpack.c.h.b16 %v5857
          %v5965 = vunpack.c.l.b16 %v5858
          %v5966 = vunpack.c.h.b16 %v5858
          %v5967 = vpack.c.b16 %v5905, %v5903
          %v5968 = vpack.c.b16 %v5906, %v5904
          %v5969 = vpack.c.b16 %v5909, %v5907
          %v5970 = vpack.c.b16 %v5910, %v5908
          %v5971 = vpack.c.b16 %v5913, %v5911
          %v5972 = vpack.c.b16 %v5914, %v5912
          %v5973 = vpack.c.b16 %v5917, %v5915
          %v5974 = vpack.c.b16 %v5918, %v5916
          %v5975 = vpack.c.b16 %v5921, %v5919
          %v5976 = vpack.c.b16 %v5922, %v5920
          %v5977 = vpack.c.b16 %v5925, %v5923
          %v5978 = vpack.c.b16 %v5926, %v5924
          %v5979 = vpack.c.b16 %v5929, %v5927
          %v5980 = vpack.c.b16 %v5930, %v5928
          %v5981 = vpack.c.b16 %v5933, %v5931
          %v5982 = vpack.c.b16 %v5934, %v5932
          %v5983 = vpack.c.b16 %v5937, %v5935
          %v5984 = vpack.c.b16 %v5938, %v5936
          %v5985 = vpack.c.b16 %v5941, %v5939
          %v5986 = vpack.c.b16 %v5942, %v5940
          %v5987 = vpack.c.b16 %v5945, %v5943
          %v5988 = vpack.c.b16 %v5946, %v5944
          %v5989 = vpack.c.b16 %v5949, %v5947
          %v5990 = vpack.c.b16 %v5950, %v5948
          %v5991 = vpack.c.b16 %v5953, %v5951
          %v5992 = vpack.c.b16 %v5954, %v5952
          %v5993 = vpack.c.b16 %v5957, %v5955
          %v5994 = vpack.c.b16 %v5958, %v5956
          %v5995 = vpack.c.b16 %v5961, %v5959
          %v5996 = vpack.c.b16 %v5962, %v5960
          %v5997 = vpack.c.b16 %v5965, %v5963
          %v5998 = vpack.c.b16 %v5966, %v5964
          %6031 = vmatprep.subr.bf16.mxu0 %v5968
          %6032 = vmatpush1.bf16.msra.mxu0 %v5967
          %6033 = vmatprep.subr.bf16.mxu0 %v5970
          %6034 = vmatpush1.bf16.msra.mxu0 %v5969
          %6035 = vmatprep.subr.bf16.mxu0 %v5972
          %6036 = vmatpush1.bf16.msra.mxu0 %v5971
          %6037 = vmatprep.subr.bf16.mxu0 %v5974
          %6038 = vmatpush1.bf16.msra.mxu0 %v5973
          %6039 = vmatprep.subr.bf16.mxu0 %v5976
          %6040 = vmatpush1.bf16.msra.mxu0 %v5975
          %6041 = vmatprep.subr.bf16.mxu0 %v5978
          %6042 = vmatpush1.bf16.msra.mxu0 %v5977
          %6043 = vmatprep.subr.bf16.mxu0 %v5980
          %6044 = vmatpush1.bf16.msra.mxu0 %v5979
          %6045 = vmatprep.subr.bf16.mxu0 %v5982
          %6046 = vmatpush1.bf16.msra.mxu0 %v5981
          %6047 = vmatprep.subr.bf16.mxu0 %v5984
          %6048 = vmatpush1.bf16.msra.mxu0 %v5983
          %6049 = vmatprep.subr.bf16.mxu0 %v5986
          %6050 = vmatpush1.bf16.msra.mxu0 %v5985
          %6051 = vmatprep.subr.bf16.mxu0 %v5988
          %6052 = vmatpush1.bf16.msra.mxu0 %v5987
          %6053 = vmatprep.subr.bf16.mxu0 %v5990
          %6054 = vmatpush1.bf16.msra.mxu0 %v5989
          %6055 = vmatprep.subr.bf16.mxu0 %v5992
          %6056 = vmatpush1.bf16.msra.mxu0 %v5991
          %6057 = vmatprep.subr.bf16.mxu0 %v5994
          %6058 = vmatpush1.bf16.msra.mxu0 %v5993
          %6059 = vmatprep.subr.bf16.mxu0 %v5996
          %6060 = vmatpush1.bf16.msra.mxu0 %v5995
          %6061 = vmatprep.subr.bf16.mxu0 %v5998
          %6062 = vmatpush1.bf16.msra.mxu0 %v5997
          %6063 = vmatprep.mubr.bf16.mxu0 %v5812
          %6064 = vmatmul.mubr.bf16.gmra.mrb[0].mxu0 %v5811
          %v6065 = vpop.f32.mrb[0].mxu0
          %v6066 = vadd.f32 %v5864, %v6065
          %v6067 = vpop.f32.mrb[0].mxu0
          %v6068 = vadd.f32 %v5868, %v6067
          %v6069 = vpop.f32.mrb[0].mxu0
          %v6070 = vadd.f32 %v5864, %v6069
          %v6071 = vpop.f32.mrb[0].mxu0
          %v6072 = vadd.f32 %v5868, %v6071
          %6073 = vmatprep.mubr.bf16.mxu0 %v5814
          %6074 = vmatmul.mubr.bf16.gmra.mrb[0].mxu0 %v5813
          %v6075 = vpop.f32.mrb[0].mxu0
          %v6076 = vadd.f32 %v5864, %v6075
          %v6077 = vpop.f32.mrb[0].mxu0
          %v6078 = vadd.f32 %v5868, %v6077
          %v6079 = vpop.f32.mrb[0].mxu0
          %v6080 = vadd.f32 %v5864, %v6079
          %v6081 = vpop.f32.mrb[0].mxu0
          %v6082 = vadd.f32 %v5868, %v6081
          %6083 = vmatprep.mubr.bf16.mxu0 %v5816
          %6084 = vmatmul.mubr.bf16.gmra.mrb[0].mxu0 %v5815
          %v6085 = vpop.f32.mrb[0].mxu0
          %v6086 = vadd.f32 %v5864, %v6085
          %v6087 = vpop.f32.mrb[0].mxu0
          %v6088 = vadd.f32 %v5868, %v6087
          %v6089 = vpop.f32.mrb[0].mxu0
          %v6090 = vadd.f32 %v5864, %v6089
          %v6091 = vpop.f32.mrb[0].mxu0
          %v6092 = vadd.f32 %v5868, %v6091
          %6093 = vmatprep.mubr.bf16.mxu0 %v5818
          %6094 = vmatmul.mubr.bf16.gmra.mrb[0].mxu0 %v5817
          %v6095 = vpop.f32.mrb[0].mxu0
          %v6096 = vadd.f32 %v5864, %v6095
          %v6097 = vpop.f32.mrb[0].mxu0
          %v6098 = vadd.f32 %v5868, %v6097
          %v6099 = vpop.f32.mrb[0].mxu0
          %v6100 = vadd.f32 %v5864, %v6099
          %v6101 = vpop.f32.mrb[0].mxu0
          %v6102 = vadd.f32 %v5868, %v6101
          %6103 = vmatprep.mubr.bf16.mxu0 %v5820
          %6104 = vmatmul.mubr.bf16.gmra.mrb[0].mxu0 %v5819
          %v6105 = vpop.f32.mrb[0].mxu0
          %v6106 = vadd.f32 %v5864, %v6105
          %v6107 = vpop.f32.mrb[0].mxu0
          %v6108 = vadd.f32 %v5868, %v6107
          %v6109 = vpop.f32.mrb[0].mxu0
          %v6110 = vadd.f32 %v5864, %v6109
          %v6111 = vpop.f32.mrb[0].mxu0
          %v6112 = vadd.f32 %v5868, %v6111
          %6113 = vmatprep.mubr.bf16.mxu0 %v5822
          %6114 = vmatmul.mubr.bf16.gmra.mrb[0].mxu0 %v5821
          %v6115 = vpop.f32.mrb[0].mxu0
          %v6116 = vadd.f32 %v5864, %v6115
          %v6117 = vpop.f32.mrb[0].mxu0
          %v6118 = vadd.f32 %v5868, %v6117
          %v6119 = vpop.f32.mrb[0].mxu0
          %v6120 = vadd.f32 %v5864, %v6119
          %v6121 = vpop.f32.mrb[0].mxu0
          %v6122 = vadd.f32 %v5868, %v6121
          %6123 = vmatprep.mubr.bf16.mxu0 %v5824
          %6124 = vmatmul.mubr.bf16.gmra.mrb[0].mxu0 %v5823
          %v6125 = vpop.f32.mrb[0].mxu0
          %v6126 = vadd.f32 %v5864, %v6125
          %v6127 = vpop.f32.mrb[0].mxu0
          %v6128 = vadd.f32 %v5868, %v6127
          %v6129 = vpop.f32.mrb[0].mxu0
          %v6130 = vadd.f32 %v5864, %v6129
          %v6131 = vpop.f32.mrb[0].mxu0
          %v6132 = vadd.f32 %v5868, %v6131
          %6133 = vmatprep.mubr.bf16.mxu0 %v5826
          %6134 = vmatmul.mubr.bf16.gmra.mrb[0].mxu0 %v5825
          %v6135 = vpop.f32.mrb[0].mxu0
          %v6136 = vadd.f32 %v5864, %v6135
          %v6137 = vpop.f32.mrb[0].mxu0
          %v6138 = vadd.f32 %v5868, %v6137
          %v6139 = vpop.f32.mrb[0].mxu0
          %v6140 = vadd.f32 %v5864, %v6139
          %v6141 = vpop.f32.mrb[0].mxu0
          %v6142 = vadd.f32 %v5868, %v6141
          %6143 = vdwg.mxu0
          %6144 = vst [vmem:[%s1177] sm:$0xff] %v6066
          %6145 = vst [vmem:[%s1177 + $0x8] sm:$0xff] %v6068
          %6146 = vst [vmem:[%s1177 + $0x10] sm:$0xff] %v6070
          %6147 = vst [vmem:[%s1177 + $0x18] sm:$0xff] %v6072
          %6148 = vst [vmem:[%s1177 + $0x20] sm:$0xff] %v6076
          %6149 = vst [vmem:[%s1177 + $0x28] sm:$0xff] %v6078
          %6150 = vst [vmem:[%s1177 + $0x30] sm:$0xff] %v6080
          %6151 = vst [vmem:[%s1177 + $0x38] sm:$0xff] %v6082
          %6152 = vst [vmem:[%s1177 + $0x40] sm:$0xff] %v6086
          %6153 = vst [vmem:[%s1177 + $0x48] sm:$0xff] %v6088
          %6154 = vst [vmem:[%s1177 + $0x50] sm:$0xff] %v6090
          %6155 = vst [vmem:[%s1177 + $0x58] sm:$0xff] %v6092
          %6156 = vst [vmem:[%s1177 + $0x60] sm:$0xff] %v6096
          %6157 = vst [vmem:[%s1177 + $0x68] sm:$0xff] %v6098
          %6158 = vst [vmem:[%s1177 + $0x70] sm:$0xff] %v6100
          %6159 = vst [vmem:[%s1177 + $0x78] sm:$0xff] %v6102
          %6160 = vst [vmem:[%s1177 + $0x80] sm:$0xff] %v6106
          %6161 = vst [vmem:[%s1177 + $0x88] sm:$0xff] %v6108
          %6162 = vst [vmem:[%s1177 + $0x90] sm:$0xff] %v6110
          %6163 = vst [vmem:[%s1177 + $0x98] sm:$0xff] %v6112
          %6164 = vst [vmem:[%s1177 + $0xa0] sm:$0xff] %v6116
          %6165 = vst [vmem:[%s1177 + $0xa8] sm:$0xff] %v6118
          %6166 = vst [vmem:[%s1177 + $0xb0] sm:$0xff] %v6120
          %6167 = vst [vmem:[%s1177 + $0xb8] sm:$0xff] %v6122
          %6168 = vst [vmem:[%s1177 + $0xc0] sm:$0xff] %v6126
          %6169 = vst [vmem:[%s1177 + $0xc8] sm:$0xff] %v6128
          %6170 = vst [vmem:[%s1177 + $0xd0] sm:$0xff] %v6130
          %6171 = vst [vmem:[%s1177 + $0xd8] sm:$0xff] %v6132
          %6172 = vst [vmem:[%s1177 + $0xe0] sm:$0xff] %v6136
          %6173 = vst [vmem:[%s1177 + $0xe8] sm:$0xff] %v6138
          %6174 = vst [vmem:[%s1177 + $0xf0] sm:$0xff] %v6140
          %6175 = vst [vmem:[%s1177 + $0xf8] sm:$0xff] %v6142
        $region171: #{attention_pallas.3} parent=150 // pred_fallthru
          _
        %s6176 = sand.u32 %s174, 1
        %s6177 = scalar_lea.sflag [#allocation9], %s6176
        %s6178 = sand.u32 %s174, 1
        %s6179 = smul.addr %s6178, 256
        %s6180 = scalar_lea.vmem [#allocation8], %s6179
        // Predicated region
        $region172: #{attention_pallas.3} parent=150 // pred_check
          %p6181 = pneg %p184
        $region173: #{attention_pallas.3} parent=150 // pred_check_branch
          %6183 = sbr.rel (%p6181) target = $region175
        $region174: #{attention_pallas.3} parent=150 // pred_region
          %s6184 = smul.u32 16, %s25
          %s6186 = ssub.s32 4096, 4096
          %6187 = vsyncadd %s6177, %s6186
          %s6188 = smul.addr %s6184, 2
          %s6189 = smul.addr %s24, 64
          %s6190 = sadd.s32 %s6188, %s6189
          %s6191 = smul.addr %s6190, 128
          %s6192 = scalar_lea.hbm %s5, %s6191
          %s6193 = sshll.u32 %s6180, 4
          %s6194 = int_to_ptr.vmem [resolvable:$true] %s6193
          %6199 = dma.vmem_to_hbm [thread:$0]  %s6194, 4096, %s6192, %s6177, 256, 256, 16
        $region175: #{attention_pallas.3} parent=150 // pred_fallthru
          _
      $region151: #{attention_pallas.3} parent=5 // pred_fallthru
        _
      %p6200 = scmp.le.s32.totalorder 2, %s14
      // Predicated region
      $region176: #{attention_pallas.3} parent=5 // pred_check
        %p6201 = pneg %p6200
      $region177: #{attention_pallas.3} parent=5 // pred_check_branch
        %6203 = sbr.rel (%p6201) target = $region179
      $region178: #{attention_pallas.3} parent=5 // pred_region
        %s6204 = ssub.s32 %s14, 2
        // Predicated region
        $region180: #{attention_pallas.3} parent=178 // pred_check
          %p6205 = pneg %p190
        $region181: #{attention_pallas.3} parent=178 // pred_check_branch
          %6207 = sbr.rel (%p6205) target = $region183
        $region182: #{attention_pallas.3} parent=178 // pred_region
          %s6208 = sand.u32 %s175, 1
          %s6209 = scalar_lea.sflag [#allocation9], %s6208
          %s6210 = sand.u32 %s175, 1
          %s6211 = smul.addr %s6210, 256
          %s6212 = scalar_lea.vmem [#allocation8], %s6211
          %6213 = dma.done %s6209, 4096
        $region183: #{attention_pallas.3} parent=178 // pred_fallthru
          _
      $region179: #{attention_pallas.3} parent=5 // pred_fallthru
        _
    $region6: #{attention_pallas.3} parent=1 // loop_footer
      %s18 = sadd.s32 1, %s14
    $region7: #{attention_pallas.3} parent=1 // loop_footer_branch
      %13 = sbr.rel target = $region3
    $region8: #{attention_pallas.3} parent=1 // loop_exit
      _
    %6214 = vsyncpa [#allocation9], 1
    %s6215 = scalar_lea.sflag [#allocation9], 1
    %6216 = vsyncpa %s6215, 1

</llo_original>
